<compile_context>
chip_gen: v5e
topology: v5e:2x2
jax: 0.10.0
libtpu: 0.0.40
codegen_flags: <defaults>
</compile_context>

<pallas_src>
import math

import jax
import jax.numpy as jnp
from jax import lax
from jax.experimental import pallas as pl
from jax.experimental.pallas import tpu as pltpu

NHEAD = 4
NLAYERS = 2
FFN_DIM = 2048          # nn.TransformerEncoderLayer default dim_feedforward
LN_EPS = 1e-5
FF_CHUNK = 512          # lane chunk for the FFN hidden dimension
NEG_INF = -1e30
TARGET_ROWS = 256       # MXU row target per grid step (v6e/v7x 256-wide MXU)


def _round_up(x, m):
    return (x + m - 1) // m * m


def _cdiv(a, b):
    return -(-a // b)


def _layer_norm(x, gamma, beta):
    mu = jnp.mean(x, axis=-1, keepdims=True)
    xc = x - mu
    var = jnp.mean(xc * xc, axis=-1, keepdims=True)
    return xc * lax.rsqrt(var + LN_EPS) * gamma + beta


def _make_kernel(bb, T, Tf, D, Sp):
    """Build the kernel for a batch block of `bb` elements."""
    S = T + Tf
    hd = D // NHEAD
    scale = 1.0 / math.sqrt(hd)
    ff_chunk = FF_CHUNK if FFN_DIM % FF_CHUNK == 0 else FFN_DIM
    n_chunks = FFN_DIM // ff_chunk
    M = bb * Sp                      # rows fed to every big matmul

    def kernel(x_ref, fus_ref, pe_ref,                    # data
               win_ref, bin_ref,                          # TimeDistributed Linear
               qkvw_ref, qkvb_ref, outw_ref, outb_ref,    # attention (stacked L)
               ln1g_ref, ln1b_ref, ln2g_ref, ln2b_ref,    # layer norms (stacked L)
               ff1w_ref, ff1b_ref, ff2w_ref, ff2b_ref,    # feed-forward (stacked L)
               o_ref,                                     # (1, bb, D) output block
               xc_ref):                                   # (bb*Sp, D) VMEM scratch
        # ---- input projection (single batched matmul) + concat + positional
        #      encoding, written straight into the sequence scratch via row
        #      slices (no sublane concat).
        pe_lo = pe_ref[0:T, :]
        pe_hi = pe_ref[T:S, :]
        xe = jnp.dot(x_ref[...].reshape(bb * T, -1), win_ref[...],
                     preferred_element_type=jnp.float32) + bin_ref[...]
        pad_zeros = (jnp.zeros((Sp - S, D), jnp.float32) if Sp > S else None)
        for b in range(bb):
            xc_ref[b * Sp: b * Sp + T, :] = xe[b * T:(b + 1) * T, :] + pe_lo
            xc_ref[b * Sp + T: b * Sp + S, :] = fus_ref[b] + pe_hi
            if Sp > S:
                xc_ref[b * Sp + S: (b + 1) * Sp, :] = pad_zeros

        x2 = xc_ref[...]                                   # (M, D) f32

        # key-padding mask for the Sp - S padded positions
        kmask = None
        if Sp > S:
            kmask = lax.broadcasted_iota(jnp.int32, (1, 1, Sp), 2) < S

        for l in range(NLAYERS):
            # ---- multi-head self attention (post-LN encoder layer) ----
            qkv = jnp.dot(x2.astype(jnp.bfloat16), qkvw_ref[l],
                          preferred_element_type=jnp.float32) + qkvb_ref[l]
            qkv3 = qkv.reshape(bb, Sp, 3 * D)              # tile-aligned split

            heads = []
            for h in range(NHEAD):
                qh = qkv3[:, :, h * hd:(h + 1) * hd].astype(jnp.bfloat16)
                kh = qkv3[:, :, D + h * hd: D + (h + 1) * hd].astype(jnp.bfloat16)
                vh = qkv3[:, :, 2 * D + h * hd: 2 * D + (h + 1) * hd]
                s = jnp.einsum('bqd,bkd->bqk', qh, kh,
                               preferred_element_type=jnp.float32) * scale
                if kmask is not None:
                    s = jnp.where(kmask, s, NEG_INF)
                s = s - jnp.max(s, axis=-1, keepdims=True)
                p = jnp.exp(s)
                den = jnp.sum(p, axis=-1, keepdims=True)
                p = p * pl.reciprocal(den, approx=True)
                ctx = jnp.einsum('bqk,bkd->bqd',
                                 p.astype(jnp.bfloat16),
                                 vh.astype(jnp.bfloat16),
                                 preferred_element_type=jnp.float32)
                heads.append(ctx.reshape(M, hd))           # tile-aligned merge
            attn = jnp.concatenate(heads, axis=-1)         # (M, D)
            attn = jnp.dot(attn.astype(jnp.bfloat16), outw_ref[l],
                           preferred_element_type=jnp.float32) + outb_ref[l]

            x2 = _layer_norm(x2 + attn, ln1g_ref[l], ln1b_ref[l])

            # ---- feed-forward, chunked over the 2048-wide hidden dim ----
            xb = x2.astype(jnp.bfloat16)
            acc = jnp.zeros((M, D), jnp.float32)
            for c in range(n_chunks):
                c0, c1 = c * ff_chunk, (c + 1) * ff_chunk
                h1 = jnp.dot(xb, ff1w_ref[l, :, c0:c1],
                             preferred_element_type=jnp.float32)
                h1 = h1 + ff1b_ref[l, :, c0:c1]
                h1 = jnp.maximum(h1, 0.0)
                acc = acc + jnp.dot(h1.astype(jnp.bfloat16), ff2w_ref[l, c0:c1, :],
                                    preferred_element_type=jnp.float32)
            h2 = acc + ff2b_ref[l]

            x2 = _layer_norm(x2 + h2, ln2g_ref[l], ln2b_ref[l])

        # return emb[:, -1, :]  -> last *real* position of each batch element
        for b in range(bb):
            o_ref[0, b:b + 1, :] = x2[b * Sp + S - 1: b * Sp + S, :]

    return kernel


def sinusoidal_pe(seq_len, dim):
    pos = jnp.arange(seq_len, dtype=jnp.float32)[:, None]
    div = jnp.exp(jnp.arange(0, dim, 2, dtype=jnp.float32) *
                  (-math.log(10000.0) / dim))
    pe = jnp.zeros((seq_len, dim), jnp.float32)
    pe = pe.at[:, 0::2].set(jnp.sin(pos * div))
    pe = pe.at[:, 1::2].set(jnp.cos(pos * div))
    return pe


def init_params(key, num_vars, dim, ffn_dim=FFN_DIM, nlayers=NLAYERS,
                mxu_dtype=jnp.bfloat16):
    ks = jax.random.split(key, 8)
    scale = 0.05
    p = {}
    p["win"] = scale * jax.random.normal(ks[0], (num_vars, dim), jnp.float32)
    p["bin"] = scale * jax.random.normal(ks[1], (1, dim), jnp.float32)
    # Large MXU weights stored in bf16 (f32 accumulation inside the kernel).
    p["qkvw"] = (scale * jax.random.normal(ks[2], (nlayers, dim, 3 * dim),
                                           jnp.float32)).astype(mxu_dtype)
    p["qkvb"] = jnp.zeros((nlayers, 1, 3 * dim), jnp.float32)
    p["outw"] = (scale * jax.random.normal(ks[3], (nlayers, dim, dim),
                                           jnp.float32)).astype(mxu_dtype)
    p["outb"] = jnp.zeros((nlayers, 1, dim), jnp.float32)
    p["ln1g"] = jnp.ones((nlayers, 1, dim), jnp.float32)
    p["ln1b"] = jnp.zeros((nlayers, 1, dim), jnp.float32)
    p["ln2g"] = jnp.ones((nlayers, 1, dim), jnp.float32)
    p["ln2b"] = jnp.zeros((nlayers, 1, dim), jnp.float32)
    p["ff1w"] = (scale * jax.random.normal(ks[4], (nlayers, dim, ffn_dim),
                                           jnp.float32)).astype(mxu_dtype)
    p["ff1b"] = jnp.zeros((nlayers, 1, ffn_dim), jnp.float32)
    p["ff2w"] = (scale * jax.random.normal(ks[5], (nlayers, ffn_dim, dim),
                                           jnp.float32)).astype(mxu_dtype)
    p["ff2b"] = jnp.zeros((nlayers, 1, dim), jnp.float32)
    return p


_PARAM_ORDER = ("win", "bin", "qkvw", "qkvb", "outw", "outb",
                "ln1g", "ln1b", "ln2g", "ln2b",
                "ff1w", "ff1b", "ff2w", "ff2b")


def endogenous_encoder(inputs, fusion_emb, params, block_b=None):
    """inputs: (B, T, num_vars)  fusion_emb: (B, Tf, D)  -> (B, D)."""
    if inputs.ndim <= 2:                       # mirrors inputs.unsqueeze(-1)
        inputs = inputs[..., None]
    inputs = inputs.astype(jnp.float32)
    fusion_emb = fusion_emb.astype(jnp.float32)

    B, T, V = inputs.shape
    _, Tf, D = fusion_emb.shape
    assert D % NHEAD == 0
    S = T + Tf
    Sp = _round_up(S, 8)                       # tile-aligned padded sequence

    if block_b is None:
        # Fold enough batch elements into M to approach ~TARGET_ROWS MXU rows.
        block_b = max(1, min(B, _cdiv(TARGET_ROWS, Sp)))
    bb = block_b
    G = _cdiv(B, bb)
    Bp = G * bb
    if Bp != B:
        pad = Bp - B
        inputs = jnp.pad(inputs, ((0, pad), (0, 0), (0, 0)))
        fusion_emb = jnp.pad(fusion_emb, ((0, pad), (0, 0), (0, 0)))

    pe = sinusoidal_pe(S, D)
    weights = [params[name] for name in _PARAM_ORDER]

    def _full_spec(arr):
        nd = arr.ndim
        return pl.BlockSpec(arr.shape, lambda i, _nd=nd: (0,) * _nd)

    in_specs = [
        pl.BlockSpec((bb, T, V), lambda i: (i, 0, 0)),
        pl.BlockSpec((bb, Tf, D), lambda i: (i, 0, 0)),
        pl.BlockSpec((S, D), lambda i: (0, 0)),
    ] + [_full_spec(w) for w in weights]

    kernel = _make_kernel(bb, T, Tf, D, Sp)

    out = pl.pallas_call(
        kernel,
        out_shape=jax.ShapeDtypeStruct((G, bb, D), jnp.float32),
        grid_spec=pltpu.PrefetchScalarGridSpec(
            num_scalar_prefetch=0,
            grid=(G,),
            in_specs=in_specs,
            out_specs=pl.BlockSpec((1, bb, D), lambda i: (i, 0, 0)),
            scratch_shapes=[pltpu.VMEM((bb * Sp, D), jnp.float32)],
        ),
        compiler_params=pltpu.CompilerParams(
            dimension_semantics=("parallel",),
            vmem_limit_bytes=64 * 1024 * 1024),
    )(inputs, fusion_emb, pe, *weights)

    return out.reshape(Bp, D)[:B]


if __name__ == "__main__":
    # batch, input_len, num_vars, embedding_dim, fusion len
    B, T, V, D, Tf = 2, 8, 4, 32, 4
    key = jax.random.PRNGKey(0)
    k_in, k_fus, k_par = jax.random.split(key, 3)

    inputs = jax.random.normal(k_in, (B, T, V), jnp.float32)
    fusion_emb = jax.random.normal(k_fus, (B, Tf, D), jnp.float32)
    params = init_params(k_par, V, D)

    out = endogenous_encoder(inputs, fusion_emb, params)
    out = jax.block_until_ready(out)

    assert out.shape == (B, D), out.shape
    assert bool(jnp.all(jnp.isfinite(out)))
    print("KERNEL_OK")
</pallas_src>

<mosaic_0001>
module attributes {stable_mosaic.version = 11 : i64} {
  func.func @kernel(%arg0: i32, %arg1: memref<2x8x4xf32, #tpu.memory_space<vmem>>, %arg2: memref<2x4x32xf32, #tpu.memory_space<vmem>>, %arg3: memref<12x32xf32, #tpu.memory_space<vmem>>, %arg4: memref<4x32xf32, #tpu.memory_space<vmem>>, %arg5: memref<1x32xf32, #tpu.memory_space<vmem>>, %arg6: memref<2x32x96xbf16, #tpu.memory_space<vmem>>, %arg7: memref<2x1x96xf32, #tpu.memory_space<vmem>>, %arg8: memref<2x32x32xbf16, #tpu.memory_space<vmem>>, %arg9: memref<2x1x32xf32, #tpu.memory_space<vmem>>, %arg10: memref<2x1x32xf32, #tpu.memory_space<vmem>>, %arg11: memref<2x1x32xf32, #tpu.memory_space<vmem>>, %arg12: memref<2x1x32xf32, #tpu.memory_space<vmem>>, %arg13: memref<2x1x32xf32, #tpu.memory_space<vmem>>, %arg14: memref<2x32x2048xbf16, #tpu.memory_space<vmem>>, %arg15: memref<2x1x2048xf32, #tpu.memory_space<vmem>>, %arg16: memref<2x2048x32xbf16, #tpu.memory_space<vmem>>, %arg17: memref<2x1x32xf32, #tpu.memory_space<vmem>>, %arg18: memref<1x2x32xf32, #tpu.memory_space<vmem>>, %arg19: memref<32x32xf32, #tpu.memory_space<vmem>>) attributes {dimension_semantics = [#tpu.dimension_semantics<parallel>], iteration_bounds = array<i64: 1>, scalar_prefetch = 0 : i64, scratch_operands = 1 : i64, tpu.core_type = #tpu.core_type<tc>, window_params = [{transform_indices = @transform_0, window_bounds = array<i64: 2, 8, 4>}, {transform_indices = @transform_1, window_bounds = array<i64: 2, 4, 32>}, {pipeline_mode = #tpu.pipeline_mode<synchronous>, transform_indices = @transform_2, window_bounds = array<i64: 12, 32>}, {pipeline_mode = #tpu.pipeline_mode<synchronous>, transform_indices = @transform_3, window_bounds = array<i64: 4, 32>}, {pipeline_mode = #tpu.pipeline_mode<synchronous>, transform_indices = @transform_4, window_bounds = array<i64: 1, 32>}, {pipeline_mode = #tpu.pipeline_mode<synchronous>, transform_indices = @transform_5, window_bounds = array<i64: 2, 32, 96>}, {pipeline_mode = #tpu.pipeline_mode<synchronous>, transform_indices = @transform_6, window_bounds = array<i64: 2, 1, 96>}, {pipeline_mode = #tpu.pipeline_mode<synchronous>, transform_indices = @transform_7, window_bounds = array<i64: 2, 32, 32>}, {pipeline_mode = #tpu.pipeline_mode<synchronous>, transform_indices = @transform_8, window_bounds = array<i64: 2, 1, 32>}, {pipeline_mode = #tpu.pipeline_mode<synchronous>, transform_indices = @transform_9, window_bounds = array<i64: 2, 1, 32>}, {pipeline_mode = #tpu.pipeline_mode<synchronous>, transform_indices = @transform_10, window_bounds = array<i64: 2, 1, 32>}, {pipeline_mode = #tpu.pipeline_mode<synchronous>, transform_indices = @transform_11, window_bounds = array<i64: 2, 1, 32>}, {pipeline_mode = #tpu.pipeline_mode<synchronous>, transform_indices = @transform_12, window_bounds = array<i64: 2, 1, 32>}, {pipeline_mode = #tpu.pipeline_mode<synchronous>, transform_indices = @transform_13, window_bounds = array<i64: 2, 32, 2048>}, {pipeline_mode = #tpu.pipeline_mode<synchronous>, transform_indices = @transform_14, window_bounds = array<i64: 2, 1, 2048>}, {pipeline_mode = #tpu.pipeline_mode<synchronous>, transform_indices = @transform_15, window_bounds = array<i64: 2, 2048, 32>}, {pipeline_mode = #tpu.pipeline_mode<synchronous>, transform_indices = @transform_16, window_bounds = array<i64: 2, 1, 32>}, {transform_indices = @transform_17, window_bounds = array<i64: 1, 2, 32>}]} {
    %c0 = arith.constant 0 : index
    %c0_0 = arith.constant 0 : index
    %0 = vector.load %arg3[%c0, %c0_0] : memref<12x32xf32, #tpu.memory_space<vmem>>, vector<8x32xf32>
    %c8 = arith.constant 8 : index
    %c0_1 = arith.constant 0 : index
    %1 = vector.load %arg3[%c8, %c0_1] : memref<12x32xf32, #tpu.memory_space<vmem>>, vector<4x32xf32>
    %c0_2 = arith.constant 0 : index
    %c0_3 = arith.constant 0 : index
    %c0_4 = arith.constant 0 : index
    %2 = vector.load %arg1[%c0_2, %c0_3, %c0_4] : memref<2x8x4xf32, #tpu.memory_space<vmem>>, vector<2x8x4xf32>
    %3 = vector.shape_cast %2 : vector<2x8x4xf32> to vector<16x4xf32>
    %c0_5 = arith.constant 0 : index
    %c0_6 = arith.constant 0 : index
    %4 = vector.load %arg4[%c0_5, %c0_6] : memref<4x32xf32, #tpu.memory_space<vmem>>, vector<4x32xf32>
    %cst = arith.constant dense<0.000000e+00> : vector<16x32xf32>
    %5 = tpu.matmul %3, %4, %cst {dimension_numbers = #tpu.dot_dimension_numbers<[1], [0], [0], [1], [0, 0, 1, 1], [], []>} : vector<16x4xf32>, vector<4x32xf32>, vector<16x32xf32> -> vector<16x32xf32>
    %c0_7 = arith.constant 0 : index
    %c0_8 = arith.constant 0 : index
    %6 = vector.load %arg5[%c0_7, %c0_8] : memref<1x32xf32, #tpu.memory_space<vmem>>, vector<1x32xf32>
    %7 = vector.broadcast %6 : vector<1x32xf32> to vector<16x32xf32>
    %8 = arith.addf %5, %7 : vector<16x32xf32>
    %cst_9 = arith.constant 0.000000e+00 : f32
    %9 = vector.broadcast %cst_9 : f32 to vector<4x32xf32>
    %10 = vector.extract_strided_slice %8 {offsets = [0, 0], sizes = [8, 32], strides = [1, 1]} : vector<16x32xf32> to vector<8x32xf32>
    %11 = arith.addf %10, %0 : vector<8x32xf32>
    %c0_10 = arith.constant 0 : index
    %c0_11 = arith.constant 0 : index
    %12 = vector.load %arg19[%c0_10, %c0_11] : memref<32x32xf32, #tpu.memory_space<vmem>>, vector<8x32xf32>
    tpu.vector_store %arg19[%c0_10, %c0_11], %11 {strides = array<i32>} : memref<32x32xf32, #tpu.memory_space<vmem>>, vector<8x32xf32>,
    %c0_12 = arith.constant 0 : index
    %c0_13 = arith.constant 0 : index
    %c0_14 = arith.constant 0 : index
    %13 = vector.load %arg2[%c0_12, %c0_13, %c0_14] : memref<2x4x32xf32, #tpu.memory_space<vmem>>, vector<1x4x32xf32>
    %14 = vector.shape_cast %13 : vector<1x4x32xf32> to vector<4x32xf32>
    %15 = arith.addf %14, %1 : vector<4x32xf32>
    %c8_15 = arith.constant 8 : index
    %c0_16 = arith.constant 0 : index
    %16 = vector.load %arg19[%c8_15, %c0_16] : memref<32x32xf32, #tpu.memory_space<vmem>>, vector<4x32xf32>
    tpu.vector_store %arg19[%c8_15, %c0_16], %15 {strides = array<i32>} : memref<32x32xf32, #tpu.memory_space<vmem>>, vector<4x32xf32>,
    %c12 = arith.constant 12 : index
    %c0_17 = arith.constant 0 : index
    %17 = vector.load %arg19[%c12, %c0_17] : memref<32x32xf32, #tpu.memory_space<vmem>>, vector<4x32xf32>
    tpu.vector_store %arg19[%c12, %c0_17], %9 {strides = array<i32>} : memref<32x32xf32, #tpu.memory_space<vmem>>, vector<4x32xf32>,
    %18 = vector.extract_strided_slice %8 {offsets = [8, 0], sizes = [8, 32], strides = [1, 1]} : vector<16x32xf32> to vector<8x32xf32>
    %19 = arith.addf %18, %0 : vector<8x32xf32>
    %c16 = arith.constant 16 : index
    %c0_18 = arith.constant 0 : index
    %20 = vector.load %arg19[%c16, %c0_18] : memref<32x32xf32, #tpu.memory_space<vmem>>, vector<8x32xf32>
    tpu.vector_store %arg19[%c16, %c0_18], %19 {strides = array<i32>} : memref<32x32xf32, #tpu.memory_space<vmem>>, vector<8x32xf32>,
    %c1 = arith.constant 1 : index
    %c0_19 = arith.constant 0 : index
    %c0_20 = arith.constant 0 : index
    %21 = vector.load %arg2[%c1, %c0_19, %c0_20] : memref<2x4x32xf32, #tpu.memory_space<vmem>>, vector<1x4x32xf32>
    %22 = vector.shape_cast %21 : vector<1x4x32xf32> to vector<4x32xf32>
    %23 = arith.addf %22, %1 : vector<4x32xf32>
    %c24 = arith.constant 24 : index
    %c0_21 = arith.constant 0 : index
    %24 = vector.load %arg19[%c24, %c0_21] : memref<32x32xf32, #tpu.memory_space<vmem>>, vector<4x32xf32>
    tpu.vector_store %arg19[%c24, %c0_21], %23 {strides = array<i32>} : memref<32x32xf32, #tpu.memory_space<vmem>>, vector<4x32xf32>,
    %c28 = arith.constant 28 : index
    %c0_22 = arith.constant 0 : index
    %25 = vector.load %arg19[%c28, %c0_22] : memref<32x32xf32, #tpu.memory_space<vmem>>, vector<4x32xf32>
    tpu.vector_store %arg19[%c28, %c0_22], %9 {strides = array<i32>} : memref<32x32xf32, #tpu.memory_space<vmem>>, vector<4x32xf32>,
    %c0_23 = arith.constant 0 : index
    %c0_24 = arith.constant 0 : index
    %26 = vector.load %arg19[%c0_23, %c0_24] : memref<32x32xf32, #tpu.memory_space<vmem>>, vector<32x32xf32>
    %27 = tpu.iota {dimensions = array<i32: 2>} : vector<1x1x16xi32>
    %c12_i32 = arith.constant 12 : i32
    %28 = vector.broadcast %c12_i32 : i32 to vector<1x1x16xi32>
    %29 = arith.cmpi slt, %27, %28 : vector<1x1x16xi32>
    %30 = arith.truncf %26 : vector<32x32xf32> to vector<32x32xbf16>
    %c0_25 = arith.constant 0 : index
    %c0_26 = arith.constant 0 : index
    %c0_27 = arith.constant 0 : index
    %31 = vector.load %arg6[%c0_25, %c0_26, %c0_27] : memref<2x32x96xbf16, #tpu.memory_space<vmem>>, vector<1x32x96xbf16>
    %32 = vector.shape_cast %31 : vector<1x32x96xbf16> to vector<32x96xbf16>
    %cst_28 = arith.constant dense<0.000000e+00> : vector<32x96xf32>
    %33 = tpu.matmul %30, %32, %cst_28 {dimension_numbers = #tpu.dot_dimension_numbers<[1], [0], [0], [1], [0, 0, 1, 1], [], []>} : vector<32x32xbf16>, vector<32x96xbf16>, vector<32x96xf32> -> vector<32x96xf32>
    %c0_29 = arith.constant 0 : index
    %c0_30 = arith.constant 0 : index
    %c0_31 = arith.constant 0 : index
    %34 = vector.load %arg7[%c0_29, %c0_30, %c0_31] : memref<2x1x96xf32, #tpu.memory_space<vmem>>, vector<1x1x96xf32>
    %35 = vector.shape_cast %34 : vector<1x1x96xf32> to vector<1x96xf32>
    %36 = vector.broadcast %35 : vector<1x96xf32> to vector<32x96xf32>
    %37 = arith.addf %33, %36 : vector<32x96xf32>
    %38 = vector.shape_cast %37 : vector<32x96xf32> to vector<2x16x96xf32>
    %39 = vector.extract_strided_slice %38 {offsets = [0, 0, 0], sizes = [2, 16, 8], strides = [1, 1, 1]} : vector<2x16x96xf32> to vector<2x16x8xf32>
    %40 = arith.truncf %39 : vector<2x16x8xf32> to vector<2x16x8xbf16>
    %41 = vector.extract_strided_slice %38 {offsets = [0, 0, 32], sizes = [2, 16, 8], strides = [1, 1, 1]} : vector<2x16x96xf32> to vector<2x16x8xf32>
    %42 = arith.truncf %41 : vector<2x16x8xf32> to vector<2x16x8xbf16>
    %43 = vector.extract_strided_slice %38 {offsets = [0, 0, 64], sizes = [2, 16, 8], strides = [1, 1, 1]} : vector<2x16x96xf32> to vector<2x16x8xf32>
    "tpu.trace_start"() <{level = 10 : i32, message = "bqd,bkd->bqk"}> : () -> ()
    %cst_32 = arith.constant dense<0.000000e+00> : vector<2x16x16xf32>
    %44 = tpu.matmul %40, %42, %cst_32 {dimension_numbers = #tpu.dot_dimension_numbers<[2], [2], [1], [1], [0, 0, 0, 1, 1, 1], [0], [0]>} : vector<2x16x8xbf16>, vector<2x16x8xbf16>, vector<2x16x16xf32> -> vector<2x16x16xf32>
    "tpu.trace_stop"() : () -> ()
    %cst_33 = arith.constant 0.353553385 : f32
    %45 = vector.broadcast %cst_33 : f32 to vector<2x16x16xf32>
    %46 = arith.mulf %44, %45 : vector<2x16x16xf32>
    %cst_34 = arith.constant -1.000000e+30 : f32
    %47 = vector.shape_cast %29 : vector<1x1x16xi1> to vector<1x1x16xi1>
    %48 = vector.broadcast %47 : vector<1x1x16xi1> to vector<2x16x16xi1>
    %49 = vector.broadcast %cst_34 : f32 to vector<2x16x16xf32>
    %50 = arith.select %48, %46, %49 : vector<2x16x16xi1>, vector<2x16x16xf32>
    %cst_35 = arith.constant dense<0xFF800000> : vector<2x16xf32>
    %51 = vector.multi_reduction <maximumf>, %50, %cst_35 [2] : vector<2x16x16xf32> to vector<2x16xf32>
    %52 = vector.shape_cast %51 : vector<2x16xf32> to vector<2x16x1xf32>
    %53 = vector.broadcast %52 : vector<2x16x1xf32> to vector<2x16x16xf32>
    %54 = arith.subf %50, %53 : vector<2x16x16xf32>
    %55 = math.exp %54 : vector<2x16x16xf32>
    %cst_36 = arith.constant dense<0.000000e+00> : vector<2x16xf32>
    %56 = vector.multi_reduction <add>, %55, %cst_36 [2] : vector<2x16x16xf32> to vector<2x16xf32>
    %57 = vector.shape_cast %56 : vector<2x16xf32> to vector<2x16x1xf32>
    %58 = tpu.reciprocal %57 {approx = true} : vector<2x16x1xf32> -> vector<2x16x1xf32>
    %59 = vector.broadcast %58 : vector<2x16x1xf32> to vector<2x16x16xf32>
    %60 = arith.mulf %55, %59 : vector<2x16x16xf32>
    %61 = arith.truncf %60 : vector<2x16x16xf32> to vector<2x16x16xbf16>
    %62 = arith.truncf %43 : vector<2x16x8xf32> to vector<2x16x8xbf16>
    "tpu.trace_start"() <{level = 10 : i32, message = "bqk,bkd->bqd"}> : () -> ()
    %cst_37 = arith.constant dense<0.000000e+00> : vector<2x16x8xf32>
    %63 = tpu.matmul %61, %62, %cst_37 {dimension_numbers = #tpu.dot_dimension_numbers<[2], [1], [1], [2], [0, 0, 0, 1, 1, 2], [0], [0]>} : vector<2x16x16xbf16>, vector<2x16x8xbf16>, vector<2x16x8xf32> -> vector<2x16x8xf32>
    "tpu.trace_stop"() : () -> ()
    %64 = vector.shape_cast %63 : vector<2x16x8xf32> to vector<32x8xf32>
    %65 = vector.extract_strided_slice %38 {offsets = [0, 0, 8], sizes = [2, 16, 8], strides = [1, 1, 1]} : vector<2x16x96xf32> to vector<2x16x8xf32>
    %66 = arith.truncf %65 : vector<2x16x8xf32> to vector<2x16x8xbf16>
    %67 = vector.extract_strided_slice %38 {offsets = [0, 0, 40], sizes = [2, 16, 8], strides = [1, 1, 1]} : vector<2x16x96xf32> to vector<2x16x8xf32>
    %68 = arith.truncf %67 : vector<2x16x8xf32> to vector<2x16x8xbf16>
    %69 = vector.extract_strided_slice %38 {offsets = [0, 0, 72], sizes = [2, 16, 8], strides = [1, 1, 1]} : vector<2x16x96xf32> to vector<2x16x8xf32>
    "tpu.trace_start"() <{level = 10 : i32, message = "bqd,bkd->bqk"}> : () -> ()
    %cst_38 = arith.constant dense<0.000000e+00> : vector<2x16x16xf32>
    %70 = tpu.matmul %66, %68, %cst_38 {dimension_numbers = #tpu.dot_dimension_numbers<[2], [2], [1], [1], [0, 0, 0, 1, 1, 1], [0], [0]>} : vector<2x16x8xbf16>, vector<2x16x8xbf16>, vector<2x16x16xf32> -> vector<2x16x16xf32>
    "tpu.trace_stop"() : () -> ()
    %cst_39 = arith.constant 0.353553385 : f32
    %71 = vector.broadcast %cst_39 : f32 to vector<2x16x16xf32>
    %72 = arith.mulf %70, %71 : vector<2x16x16xf32>
    %cst_40 = arith.constant -1.000000e+30 : f32
    %73 = vector.shape_cast %29 : vector<1x1x16xi1> to vector<1x1x16xi1>
    %74 = vector.broadcast %73 : vector<1x1x16xi1> to vector<2x16x16xi1>
    %75 = vector.broadcast %cst_40 : f32 to vector<2x16x16xf32>
    %76 = arith.select %74, %72, %75 : vector<2x16x16xi1>, vector<2x16x16xf32>
    %cst_41 = arith.constant dense<0xFF800000> : vector<2x16xf32>
    %77 = vector.multi_reduction <maximumf>, %76, %cst_41 [2] : vector<2x16x16xf32> to vector<2x16xf32>
    %78 = vector.shape_cast %77 : vector<2x16xf32> to vector<2x16x1xf32>
    %79 = vector.broadcast %78 : vector<2x16x1xf32> to vector<2x16x16xf32>
    %80 = arith.subf %76, %79 : vector<2x16x16xf32>
    %81 = math.exp %80 : vector<2x16x16xf32>
    %cst_42 = arith.constant dense<0.000000e+00> : vector<2x16xf32>
    %82 = vector.multi_reduction <add>, %81, %cst_42 [2] : vector<2x16x16xf32> to vector<2x16xf32>
    %83 = vector.shape_cast %82 : vector<2x16xf32> to vector<2x16x1xf32>
    %84 = tpu.reciprocal %83 {approx = true} : vector<2x16x1xf32> -> vector<2x16x1xf32>
    %85 = vector.broadcast %84 : vector<2x16x1xf32> to vector<2x16x16xf32>
    %86 = arith.mulf %81, %85 : vector<2x16x16xf32>
    %87 = arith.truncf %86 : vector<2x16x16xf32> to vector<2x16x16xbf16>
    %88 = arith.truncf %69 : vector<2x16x8xf32> to vector<2x16x8xbf16>
    "tpu.trace_start"() <{level = 10 : i32, message = "bqk,bkd->bqd"}> : () -> ()
    %cst_43 = arith.constant dense<0.000000e+00> : vector<2x16x8xf32>
    %89 = tpu.matmul %87, %88, %cst_43 {dimension_numbers = #tpu.dot_dimension_numbers<[2], [1], [1], [2], [0, 0, 0, 1, 1, 2], [0], [0]>} : vector<2x16x16xbf16>, vector<2x16x8xbf16>, vector<2x16x8xf32> -> vector<2x16x8xf32>
    "tpu.trace_stop"() : () -> ()
    %90 = vector.shape_cast %89 : vector<2x16x8xf32> to vector<32x8xf32>
    %91 = vector.extract_strided_slice %38 {offsets = [0, 0, 16], sizes = [2, 16, 8], strides = [1, 1, 1]} : vector<2x16x96xf32> to vector<2x16x8xf32>
    %92 = arith.truncf %91 : vector<2x16x8xf32> to vector<2x16x8xbf16>
    %93 = vector.extract_strided_slice %38 {offsets = [0, 0, 48], sizes = [2, 16, 8], strides = [1, 1, 1]} : vector<2x16x96xf32> to vector<2x16x8xf32>
    %94 = arith.truncf %93 : vector<2x16x8xf32> to vector<2x16x8xbf16>
    %95 = vector.extract_strided_slice %38 {offsets = [0, 0, 80], sizes = [2, 16, 8], strides = [1, 1, 1]} : vector<2x16x96xf32> to vector<2x16x8xf32>
    "tpu.trace_start"() <{level = 10 : i32, message = "bqd,bkd->bqk"}> : () -> ()
    %cst_44 = arith.constant dense<0.000000e+00> : vector<2x16x16xf32>
    %96 = tpu.matmul %92, %94, %cst_44 {dimension_numbers = #tpu.dot_dimension_numbers<[2], [2], [1], [1], [0, 0, 0, 1, 1, 1], [0], [0]>} : vector<2x16x8xbf16>, vector<2x16x8xbf16>, vector<2x16x16xf32> -> vector<2x16x16xf32>
    "tpu.trace_stop"() : () -> ()
    %cst_45 = arith.constant 0.353553385 : f32
    %97 = vector.broadcast %cst_45 : f32 to vector<2x16x16xf32>
    %98 = arith.mulf %96, %97 : vector<2x16x16xf32>
    %cst_46 = arith.constant -1.000000e+30 : f32
    %99 = vector.shape_cast %29 : vector<1x1x16xi1> to vector<1x1x16xi1>
    %100 = vector.broadcast %99 : vector<1x1x16xi1> to vector<2x16x16xi1>
    %101 = vector.broadcast %cst_46 : f32 to vector<2x16x16xf32>
    %102 = arith.select %100, %98, %101 : vector<2x16x16xi1>, vector<2x16x16xf32>
    %cst_47 = arith.constant dense<0xFF800000> : vector<2x16xf32>
    %103 = vector.multi_reduction <maximumf>, %102, %cst_47 [2] : vector<2x16x16xf32> to vector<2x16xf32>
    %104 = vector.shape_cast %103 : vector<2x16xf32> to vector<2x16x1xf32>
    %105 = vector.broadcast %104 : vector<2x16x1xf32> to vector<2x16x16xf32>
    %106 = arith.subf %102, %105 : vector<2x16x16xf32>
    %107 = math.exp %106 : vector<2x16x16xf32>
    %cst_48 = arith.constant dense<0.000000e+00> : vector<2x16xf32>
    %108 = vector.multi_reduction <add>, %107, %cst_48 [2] : vector<2x16x16xf32> to vector<2x16xf32>
    %109 = vector.shape_cast %108 : vector<2x16xf32> to vector<2x16x1xf32>
    %110 = tpu.reciprocal %109 {approx = true} : vector<2x16x1xf32> -> vector<2x16x1xf32>
    %111 = vector.broadcast %110 : vector<2x16x1xf32> to vector<2x16x16xf32>
    %112 = arith.mulf %107, %111 : vector<2x16x16xf32>
    %113 = arith.truncf %112 : vector<2x16x16xf32> to vector<2x16x16xbf16>
    %114 = arith.truncf %95 : vector<2x16x8xf32> to vector<2x16x8xbf16>
    "tpu.trace_start"() <{level = 10 : i32, message = "bqk,bkd->bqd"}> : () -> ()
    %cst_49 = arith.constant dense<0.000000e+00> : vector<2x16x8xf32>
    %115 = tpu.matmul %113, %114, %cst_49 {dimension_numbers = #tpu.dot_dimension_numbers<[2], [1], [1], [2], [0, 0, 0, 1, 1, 2], [0], [0]>} : vector<2x16x16xbf16>, vector<2x16x8xbf16>, vector<2x16x8xf32> -> vector<2x16x8xf32>
    "tpu.trace_stop"() : () -> ()
    %116 = vector.shape_cast %115 : vector<2x16x8xf32> to vector<32x8xf32>
    %117 = vector.extract_strided_slice %38 {offsets = [0, 0, 24], sizes = [2, 16, 8], strides = [1, 1, 1]} : vector<2x16x96xf32> to vector<2x16x8xf32>
    %118 = arith.truncf %117 : vector<2x16x8xf32> to vector<2x16x8xbf16>
    %119 = vector.extract_strided_slice %38 {offsets = [0, 0, 56], sizes = [2, 16, 8], strides = [1, 1, 1]} : vector<2x16x96xf32> to vector<2x16x8xf32>
    %120 = arith.truncf %119 : vector<2x16x8xf32> to vector<2x16x8xbf16>
    %121 = vector.extract_strided_slice %38 {offsets = [0, 0, 88], sizes = [2, 16, 8], strides = [1, 1, 1]} : vector<2x16x96xf32> to vector<2x16x8xf32>
    "tpu.trace_start"() <{level = 10 : i32, message = "bqd,bkd->bqk"}> : () -> ()
    %cst_50 = arith.constant dense<0.000000e+00> : vector<2x16x16xf32>
    %122 = tpu.matmul %118, %120, %cst_50 {dimension_numbers = #tpu.dot_dimension_numbers<[2], [2], [1], [1], [0, 0, 0, 1, 1, 1], [0], [0]>} : vector<2x16x8xbf16>, vector<2x16x8xbf16>, vector<2x16x16xf32> -> vector<2x16x16xf32>
    "tpu.trace_stop"() : () -> ()
    %cst_51 = arith.constant 0.353553385 : f32
    %123 = vector.broadcast %cst_51 : f32 to vector<2x16x16xf32>
    %124 = arith.mulf %122, %123 : vector<2x16x16xf32>
    %cst_52 = arith.constant -1.000000e+30 : f32
    %125 = vector.shape_cast %29 : vector<1x1x16xi1> to vector<1x1x16xi1>
    %126 = vector.broadcast %125 : vector<1x1x16xi1> to vector<2x16x16xi1>
    %127 = vector.broadcast %cst_52 : f32 to vector<2x16x16xf32>
    %128 = arith.select %126, %124, %127 : vector<2x16x16xi1>, vector<2x16x16xf32>
    %cst_53 = arith.constant dense<0xFF800000> : vector<2x16xf32>
    %129 = vector.multi_reduction <maximumf>, %128, %cst_53 [2] : vector<2x16x16xf32> to vector<2x16xf32>
    %130 = vector.shape_cast %129 : vector<2x16xf32> to vector<2x16x1xf32>
    %131 = vector.broadcast %130 : vector<2x16x1xf32> to vector<2x16x16xf32>
    %132 = arith.subf %128, %131 : vector<2x16x16xf32>
    %133 = math.exp %132 : vector<2x16x16xf32>
    %cst_54 = arith.constant dense<0.000000e+00> : vector<2x16xf32>
    %134 = vector.multi_reduction <add>, %133, %cst_54 [2] : vector<2x16x16xf32> to vector<2x16xf32>
    %135 = vector.shape_cast %134 : vector<2x16xf32> to vector<2x16x1xf32>
    %136 = tpu.reciprocal %135 {approx = true} : vector<2x16x1xf32> -> vector<2x16x1xf32>
    %137 = vector.broadcast %136 : vector<2x16x1xf32> to vector<2x16x16xf32>
    %138 = arith.mulf %133, %137 : vector<2x16x16xf32>
    %139 = arith.truncf %138 : vector<2x16x16xf32> to vector<2x16x16xbf16>
    %140 = arith.truncf %121 : vector<2x16x8xf32> to vector<2x16x8xbf16>
    "tpu.trace_start"() <{level = 10 : i32, message = "bqk,bkd->bqd"}> : () -> ()
    %cst_55 = arith.constant dense<0.000000e+00> : vector<2x16x8xf32>
    %141 = tpu.matmul %139, %140, %cst_55 {dimension_numbers = #tpu.dot_dimension_numbers<[2], [1], [1], [2], [0, 0, 0, 1, 1, 2], [0], [0]>} : vector<2x16x16xbf16>, vector<2x16x8xbf16>, vector<2x16x8xf32> -> vector<2x16x8xf32>
    "tpu.trace_stop"() : () -> ()
    %142 = vector.shape_cast %141 : vector<2x16x8xf32> to vector<32x8xf32>
    %143 = tpu.concatenate %64, %90, %116, %142 in 1 : vector<32x8xf32>, vector<32x8xf32>, vector<32x8xf32>, vector<32x8xf32> -> vector<32x32xf32>
    %144 = arith.truncf %143 : vector<32x32xf32> to vector<32x32xbf16>
    %c0_56 = arith.constant 0 : index
    %c0_57 = arith.constant 0 : index
    %c0_58 = arith.constant 0 : index
    %145 = vector.load %arg8[%c0_56, %c0_57, %c0_58] : memref<2x32x32xbf16, #tpu.memory_space<vmem>>, vector<1x32x32xbf16>
    %146 = vector.shape_cast %145 : vector<1x32x32xbf16> to vector<32x32xbf16>
    %cst_59 = arith.constant dense<0.000000e+00> : vector<32x32xf32>
    %147 = tpu.matmul %144, %146, %cst_59 {dimension_numbers = #tpu.dot_dimension_numbers<[1], [0], [0], [1], [0, 0, 1, 1], [], []>} : vector<32x32xbf16>, vector<32x32xbf16>, vector<32x32xf32> -> vector<32x32xf32>
    %c0_60 = arith.constant 0 : index
    %c0_61 = arith.constant 0 : index
    %c0_62 = arith.constant 0 : index
    %148 = vector.load %arg9[%c0_60, %c0_61, %c0_62] : memref<2x1x32xf32, #tpu.memory_space<vmem>>, vector<1x1x32xf32>
    %149 = vector.shape_cast %148 : vector<1x1x32xf32> to vector<1x32xf32>
    %150 = vector.broadcast %149 : vector<1x32xf32> to vector<32x32xf32>
    %151 = arith.addf %147, %150 : vector<32x32xf32>
    %152 = arith.addf %26, %151 : vector<32x32xf32>
    %c0_63 = arith.constant 0 : index
    %c0_64 = arith.constant 0 : index
    %c0_65 = arith.constant 0 : index
    %153 = vector.load %arg10[%c0_63, %c0_64, %c0_65] : memref<2x1x32xf32, #tpu.memory_space<vmem>>, vector<1x1x32xf32>
    %154 = vector.shape_cast %153 : vector<1x1x32xf32> to vector<1x32xf32>
    %c0_66 = arith.constant 0 : index
    %c0_67 = arith.constant 0 : index
    %c0_68 = arith.constant 0 : index
    %155 = vector.load %arg11[%c0_66, %c0_67, %c0_68] : memref<2x1x32xf32, #tpu.memory_space<vmem>>, vector<1x1x32xf32>
    %156 = vector.shape_cast %155 : vector<1x1x32xf32> to vector<1x32xf32>
    %cst_69 = arith.constant dense<0.000000e+00> : vector<32xf32>
    %157 = vector.multi_reduction <add>, %152, %cst_69 [1] : vector<32x32xf32> to vector<32xf32>
    %158 = vector.shape_cast %157 : vector<32xf32> to vector<32x1xf32>
    %cst_70 = arith.constant 3.200000e+01 : f32
    %159 = vector.broadcast %cst_70 : f32 to vector<32x1xf32>
    %160 = arith.divf %158, %159 : vector<32x1xf32>
    %161 = vector.broadcast %160 : vector<32x1xf32> to vector<32x32xf32>
    %162 = arith.subf %152, %161 : vector<32x32xf32>
    %163 = arith.mulf %162, %162 : vector<32x32xf32>
    %cst_71 = arith.constant dense<0.000000e+00> : vector<32xf32>
    %164 = vector.multi_reduction <add>, %163, %cst_71 [1] : vector<32x32xf32> to vector<32xf32>
    %165 = vector.shape_cast %164 : vector<32xf32> to vector<32x1xf32>
    %cst_72 = arith.constant 3.200000e+01 : f32
    %166 = vector.broadcast %cst_72 : f32 to vector<32x1xf32>
    %167 = arith.divf %165, %166 : vector<32x1xf32>
    %cst_73 = arith.constant 9.99999974E-6 : f32
    %168 = vector.broadcast %cst_73 : f32 to vector<32x1xf32>
    %169 = arith.addf %167, %168 : vector<32x1xf32>
    %170 = math.rsqrt %169 : vector<32x1xf32>
    %171 = vector.broadcast %170 : vector<32x1xf32> to vector<32x32xf32>
    %172 = arith.mulf %162, %171 : vector<32x32xf32>
    %173 = vector.broadcast %154 : vector<1x32xf32> to vector<32x32xf32>
    %174 = arith.mulf %172, %173 : vector<32x32xf32>
    %175 = vector.broadcast %156 : vector<1x32xf32> to vector<32x32xf32>
    %176 = arith.addf %174, %175 : vector<32x32xf32>
    %177 = arith.truncf %176 : vector<32x32xf32> to vector<32x32xbf16>
    %cst_74 = arith.constant 0.000000e+00 : f32
    %178 = vector.broadcast %cst_74 : f32 to vector<32x32xf32>
    %c0_75 = arith.constant 0 : index
    %c0_76 = arith.constant 0 : index
    %c0_77 = arith.constant 0 : index
    %179 = vector.load %arg14[%c0_75, %c0_76, %c0_77] : memref<2x32x2048xbf16, #tpu.memory_space<vmem>>, vector<1x32x512xbf16>
    %180 = vector.shape_cast %179 : vector<1x32x512xbf16> to vector<32x512xbf16>
    %cst_78 = arith.constant dense<0.000000e+00> : vector<32x512xf32>
    %181 = tpu.matmul %177, %180, %cst_78 {dimension_numbers = #tpu.dot_dimension_numbers<[1], [0], [0], [1], [0, 0, 1, 1], [], []>} : vector<32x32xbf16>, vector<32x512xbf16>, vector<32x512xf32> -> vector<32x512xf32>
    %c0_79 = arith.constant 0 : index
    %c0_80 = arith.constant 0 : index
    %c0_81 = arith.constant 0 : index
    %182 = vector.load %arg15[%c0_79, %c0_80, %c0_81] : memref<2x1x2048xf32, #tpu.memory_space<vmem>>, vector<1x1x512xf32>
    %183 = vector.shape_cast %182 : vector<1x1x512xf32> to vector<1x512xf32>
    %184 = vector.broadcast %183 : vector<1x512xf32> to vector<32x512xf32>
    %185 = arith.addf %181, %184 : vector<32x512xf32>
    %cst_82 = arith.constant 0.000000e+00 : f32
    %186 = vector.broadcast %cst_82 : f32 to vector<32x512xf32>
    %187 = arith.maximumf %185, %186 : vector<32x512xf32>
    %188 = arith.truncf %187 : vector<32x512xf32> to vector<32x512xbf16>
    %c0_83 = arith.constant 0 : index
    %c0_84 = arith.constant 0 : index
    %c0_85 = arith.constant 0 : index
    %189 = vector.load %arg16[%c0_83, %c0_84, %c0_85] : memref<2x2048x32xbf16, #tpu.memory_space<vmem>>, vector<1x512x32xbf16>
    %190 = vector.shape_cast %189 : vector<1x512x32xbf16> to vector<512x32xbf16>
    %cst_86 = arith.constant dense<0.000000e+00> : vector<32x32xf32>
    %191 = tpu.matmul %188, %190, %cst_86 {dimension_numbers = #tpu.dot_dimension_numbers<[1], [0], [0], [1], [0, 0, 1, 1], [], []>} : vector<32x512xbf16>, vector<512x32xbf16>, vector<32x32xf32> -> vector<32x32xf32>
    %192 = arith.addf %178, %191 : vector<32x32xf32>
    %c0_87 = arith.constant 0 : index
    %c0_88 = arith.constant 0 : index
    %c512 = arith.constant 512 : index
    %193 = vector.load %arg14[%c0_87, %c0_88, %c512] : memref<2x32x2048xbf16, #tpu.memory_space<vmem>>, vector<1x32x512xbf16>
    %194 = vector.shape_cast %193 : vector<1x32x512xbf16> to vector<32x512xbf16>
    %cst_89 = arith.constant dense<0.000000e+00> : vector<32x512xf32>
    %195 = tpu.matmul %177, %194, %cst_89 {dimension_numbers = #tpu.dot_dimension_numbers<[1], [0], [0], [1], [0, 0, 1, 1], [], []>} : vector<32x32xbf16>, vector<32x512xbf16>, vector<32x512xf32> -> vector<32x512xf32>
    %c0_90 = arith.constant 0 : index
    %c0_91 = arith.constant 0 : index
    %c512_92 = arith.constant 512 : index
    %196 = vector.load %arg15[%c0_90, %c0_91, %c512_92] : memref<2x1x2048xf32, #tpu.memory_space<vmem>>, vector<1x1x512xf32>
    %197 = vector.shape_cast %196 : vector<1x1x512xf32> to vector<1x512xf32>
    %198 = vector.broadcast %197 : vector<1x512xf32> to vector<32x512xf32>
    %199 = arith.addf %195, %198 : vector<32x512xf32>
    %cst_93 = arith.constant 0.000000e+00 : f32
    %200 = vector.broadcast %cst_93 : f32 to vector<32x512xf32>
    %201 = arith.maximumf %199, %200 : vector<32x512xf32>
    %202 = arith.truncf %201 : vector<32x512xf32> to vector<32x512xbf16>
    %c0_94 = arith.constant 0 : index
    %c512_95 = arith.constant 512 : index
    %c0_96 = arith.constant 0 : index
    %203 = vector.load %arg16[%c0_94, %c512_95, %c0_96] : memref<2x2048x32xbf16, #tpu.memory_space<vmem>>, vector<1x512x32xbf16>
    %204 = vector.shape_cast %203 : vector<1x512x32xbf16> to vector<512x32xbf16>
    %cst_97 = arith.constant dense<0.000000e+00> : vector<32x32xf32>
    %205 = tpu.matmul %202, %204, %cst_97 {dimension_numbers = #tpu.dot_dimension_numbers<[1], [0], [0], [1], [0, 0, 1, 1], [], []>} : vector<32x512xbf16>, vector<512x32xbf16>, vector<32x32xf32> -> vector<32x32xf32>
    %206 = arith.addf %192, %205 : vector<32x32xf32>
    %c0_98 = arith.constant 0 : index
    %c0_99 = arith.constant 0 : index
    %c1024 = arith.constant 1024 : index
    %207 = vector.load %arg14[%c0_98, %c0_99, %c1024] : memref<2x32x2048xbf16, #tpu.memory_space<vmem>>, vector<1x32x512xbf16>
    %208 = vector.shape_cast %207 : vector<1x32x512xbf16> to vector<32x512xbf16>
    %cst_100 = arith.constant dense<0.000000e+00> : vector<32x512xf32>
    %209 = tpu.matmul %177, %208, %cst_100 {dimension_numbers = #tpu.dot_dimension_numbers<[1], [0], [0], [1], [0, 0, 1, 1], [], []>} : vector<32x32xbf16>, vector<32x512xbf16>, vector<32x512xf32> -> vector<32x512xf32>
    %c0_101 = arith.constant 0 : index
    %c0_102 = arith.constant 0 : index
    %c1024_103 = arith.constant 1024 : index
    %210 = vector.load %arg15[%c0_101, %c0_102, %c1024_103] : memref<2x1x2048xf32, #tpu.memory_space<vmem>>, vector<1x1x512xf32>
    %211 = vector.shape_cast %210 : vector<1x1x512xf32> to vector<1x512xf32>
    %212 = vector.broadcast %211 : vector<1x512xf32> to vector<32x512xf32>
    %213 = arith.addf %209, %212 : vector<32x512xf32>
    %cst_104 = arith.constant 0.000000e+00 : f32
    %214 = vector.broadcast %cst_104 : f32 to vector<32x512xf32>
    %215 = arith.maximumf %213, %214 : vector<32x512xf32>
    %216 = arith.truncf %215 : vector<32x512xf32> to vector<32x512xbf16>
    %c0_105 = arith.constant 0 : index
    %c1024_106 = arith.constant 1024 : index
    %c0_107 = arith.constant 0 : index
    %217 = vector.load %arg16[%c0_105, %c1024_106, %c0_107] : memref<2x2048x32xbf16, #tpu.memory_space<vmem>>, vector<1x512x32xbf16>
    %218 = vector.shape_cast %217 : vector<1x512x32xbf16> to vector<512x32xbf16>
    %cst_108 = arith.constant dense<0.000000e+00> : vector<32x32xf32>
    %219 = tpu.matmul %216, %218, %cst_108 {dimension_numbers = #tpu.dot_dimension_numbers<[1], [0], [0], [1], [0, 0, 1, 1], [], []>} : vector<32x512xbf16>, vector<512x32xbf16>, vector<32x32xf32> -> vector<32x32xf32>
    %220 = arith.addf %206, %219 : vector<32x32xf32>
    %c0_109 = arith.constant 0 : index
    %c0_110 = arith.constant 0 : index
    %c1536 = arith.constant 1536 : index
    %221 = vector.load %arg14[%c0_109, %c0_110, %c1536] : memref<2x32x2048xbf16, #tpu.memory_space<vmem>>, vector<1x32x512xbf16>
    %222 = vector.shape_cast %221 : vector<1x32x512xbf16> to vector<32x512xbf16>
    %cst_111 = arith.constant dense<0.000000e+00> : vector<32x512xf32>
    %223 = tpu.matmul %177, %222, %cst_111 {dimension_numbers = #tpu.dot_dimension_numbers<[1], [0], [0], [1], [0, 0, 1, 1], [], []>} : vector<32x32xbf16>, vector<32x512xbf16>, vector<32x512xf32> -> vector<32x512xf32>
    %c0_112 = arith.constant 0 : index
    %c0_113 = arith.constant 0 : index
    %c1536_114 = arith.constant 1536 : index
    %224 = vector.load %arg15[%c0_112, %c0_113, %c1536_114] : memref<2x1x2048xf32, #tpu.memory_space<vmem>>, vector<1x1x512xf32>
    %225 = vector.shape_cast %224 : vector<1x1x512xf32> to vector<1x512xf32>
    %226 = vector.broadcast %225 : vector<1x512xf32> to vector<32x512xf32>
    %227 = arith.addf %223, %226 : vector<32x512xf32>
    %cst_115 = arith.constant 0.000000e+00 : f32
    %228 = vector.broadcast %cst_115 : f32 to vector<32x512xf32>
    %229 = arith.maximumf %227, %228 : vector<32x512xf32>
    %230 = arith.truncf %229 : vector<32x512xf32> to vector<32x512xbf16>
    %c0_116 = arith.constant 0 : index
    %c1536_117 = arith.constant 1536 : index
    %c0_118 = arith.constant 0 : index
    %231 = vector.load %arg16[%c0_116, %c1536_117, %c0_118] : memref<2x2048x32xbf16, #tpu.memory_space<vmem>>, vector<1x512x32xbf16>
    %232 = vector.shape_cast %231 : vector<1x512x32xbf16> to vector<512x32xbf16>
    %cst_119 = arith.constant dense<0.000000e+00> : vector<32x32xf32>
    %233 = tpu.matmul %230, %232, %cst_119 {dimension_numbers = #tpu.dot_dimension_numbers<[1], [0], [0], [1], [0, 0, 1, 1], [], []>} : vector<32x512xbf16>, vector<512x32xbf16>, vector<32x32xf32> -> vector<32x32xf32>
    %234 = arith.addf %220, %233 : vector<32x32xf32>
    %c0_120 = arith.constant 0 : index
    %c0_121 = arith.constant 0 : index
    %c0_122 = arith.constant 0 : index
    %235 = vector.load %arg17[%c0_120, %c0_121, %c0_122] : memref<2x1x32xf32, #tpu.memory_space<vmem>>, vector<1x1x32xf32>
    %236 = vector.shape_cast %235 : vector<1x1x32xf32> to vector<1x32xf32>
    %237 = vector.broadcast %236 : vector<1x32xf32> to vector<32x32xf32>
    %238 = arith.addf %234, %237 : vector<32x32xf32>
    %239 = arith.addf %176, %238 : vector<32x32xf32>
    %c0_123 = arith.constant 0 : index
    %c0_124 = arith.constant 0 : index
    %c0_125 = arith.constant 0 : index
    %240 = vector.load %arg12[%c0_123, %c0_124, %c0_125] : memref<2x1x32xf32, #tpu.memory_space<vmem>>, vector<1x1x32xf32>
    %241 = vector.shape_cast %240 : vector<1x1x32xf32> to vector<1x32xf32>
    %c0_126 = arith.constant 0 : index
    %c0_127 = arith.constant 0 : index
    %c0_128 = arith.constant 0 : index
    %242 = vector.load %arg13[%c0_126, %c0_127, %c0_128] : memref<2x1x32xf32, #tpu.memory_space<vmem>>, vector<1x1x32xf32>
    %243 = vector.shape_cast %242 : vector<1x1x32xf32> to vector<1x32xf32>
    %cst_129 = arith.constant dense<0.000000e+00> : vector<32xf32>
    %244 = vector.multi_reduction <add>, %239, %cst_129 [1] : vector<32x32xf32> to vector<32xf32>
    %245 = vector.shape_cast %244 : vector<32xf32> to vector<32x1xf32>
    %cst_130 = arith.constant 3.200000e+01 : f32
    %246 = vector.broadcast %cst_130 : f32 to vector<32x1xf32>
    %247 = arith.divf %245, %246 : vector<32x1xf32>
    %248 = vector.broadcast %247 : vector<32x1xf32> to vector<32x32xf32>
    %249 = arith.subf %239, %248 : vector<32x32xf32>
    %250 = arith.mulf %249, %249 : vector<32x32xf32>
    %cst_131 = arith.constant dense<0.000000e+00> : vector<32xf32>
    %251 = vector.multi_reduction <add>, %250, %cst_131 [1] : vector<32x32xf32> to vector<32xf32>
    %252 = vector.shape_cast %251 : vector<32xf32> to vector<32x1xf32>
    %cst_132 = arith.constant 3.200000e+01 : f32
    %253 = vector.broadcast %cst_132 : f32 to vector<32x1xf32>
    %254 = arith.divf %252, %253 : vector<32x1xf32>
    %cst_133 = arith.constant 9.99999974E-6 : f32
    %255 = vector.broadcast %cst_133 : f32 to vector<32x1xf32>
    %256 = arith.addf %254, %255 : vector<32x1xf32>
    %257 = math.rsqrt %256 : vector<32x1xf32>
    %258 = vector.broadcast %257 : vector<32x1xf32> to vector<32x32xf32>
    %259 = arith.mulf %249, %258 : vector<32x32xf32>
    %260 = vector.broadcast %241 : vector<1x32xf32> to vector<32x32xf32>
    %261 = arith.mulf %259, %260 : vector<32x32xf32>
    %262 = vector.broadcast %243 : vector<1x32xf32> to vector<32x32xf32>
    %263 = arith.addf %261, %262 : vector<32x32xf32>
    %264 = arith.truncf %263 : vector<32x32xf32> to vector<32x32xbf16>
    %c1_134 = arith.constant 1 : index
    %c0_135 = arith.constant 0 : index
    %c0_136 = arith.constant 0 : index
    %265 = vector.load %arg6[%c1_134, %c0_135, %c0_136] : memref<2x32x96xbf16, #tpu.memory_space<vmem>>, vector<1x32x96xbf16>
    %266 = vector.shape_cast %265 : vector<1x32x96xbf16> to vector<32x96xbf16>
    %cst_137 = arith.constant dense<0.000000e+00> : vector<32x96xf32>
    %267 = tpu.matmul %264, %266, %cst_137 {dimension_numbers = #tpu.dot_dimension_numbers<[1], [0], [0], [1], [0, 0, 1, 1], [], []>} : vector<32x32xbf16>, vector<32x96xbf16>, vector<32x96xf32> -> vector<32x96xf32>
    %c1_138 = arith.constant 1 : index
    %c0_139 = arith.constant 0 : index
    %c0_140 = arith.constant 0 : index
    %268 = vector.load %arg7[%c1_138, %c0_139, %c0_140] : memref<2x1x96xf32, #tpu.memory_space<vmem>>, vector<1x1x96xf32>
    %269 = vector.shape_cast %268 : vector<1x1x96xf32> to vector<1x96xf32>
    %270 = vector.broadcast %269 : vector<1x96xf32> to vector<32x96xf32>
    %271 = arith.addf %267, %270 : vector<32x96xf32>
    %272 = vector.shape_cast %271 : vector<32x96xf32> to vector<2x16x96xf32>
    %273 = vector.extract_strided_slice %272 {offsets = [0, 0, 0], sizes = [2, 16, 8], strides = [1, 1, 1]} : vector<2x16x96xf32> to vector<2x16x8xf32>
    %274 = arith.truncf %273 : vector<2x16x8xf32> to vector<2x16x8xbf16>
    %275 = vector.extract_strided_slice %272 {offsets = [0, 0, 32], sizes = [2, 16, 8], strides = [1, 1, 1]} : vector<2x16x96xf32> to vector<2x16x8xf32>
    %276 = arith.truncf %275 : vector<2x16x8xf32> to vector<2x16x8xbf16>
    %277 = vector.extract_strided_slice %272 {offsets = [0, 0, 64], sizes = [2, 16, 8], strides = [1, 1, 1]} : vector<2x16x96xf32> to vector<2x16x8xf32>
    "tpu.trace_start"() <{level = 10 : i32, message = "bqd,bkd->bqk"}> : () -> ()
    %cst_141 = arith.constant dense<0.000000e+00> : vector<2x16x16xf32>
    %278 = tpu.matmul %274, %276, %cst_141 {dimension_numbers = #tpu.dot_dimension_numbers<[2], [2], [1], [1], [0, 0, 0, 1, 1, 1], [0], [0]>} : vector<2x16x8xbf16>, vector<2x16x8xbf16>, vector<2x16x16xf32> -> vector<2x16x16xf32>
    "tpu.trace_stop"() : () -> ()
    %cst_142 = arith.constant 0.353553385 : f32
    %279 = vector.broadcast %cst_142 : f32 to vector<2x16x16xf32>
    %280 = arith.mulf %278, %279 : vector<2x16x16xf32>
    %cst_143 = arith.constant -1.000000e+30 : f32
    %281 = vector.shape_cast %29 : vector<1x1x16xi1> to vector<1x1x16xi1>
    %282 = vector.broadcast %281 : vector<1x1x16xi1> to vector<2x16x16xi1>
    %283 = vector.broadcast %cst_143 : f32 to vector<2x16x16xf32>
    %284 = arith.select %282, %280, %283 : vector<2x16x16xi1>, vector<2x16x16xf32>
    %cst_144 = arith.constant dense<0xFF800000> : vector<2x16xf32>
    %285 = vector.multi_reduction <maximumf>, %284, %cst_144 [2] : vector<2x16x16xf32> to vector<2x16xf32>
    %286 = vector.shape_cast %285 : vector<2x16xf32> to vector<2x16x1xf32>
    %287 = vector.broadcast %286 : vector<2x16x1xf32> to vector<2x16x16xf32>
    %288 = arith.subf %284, %287 : vector<2x16x16xf32>
    %289 = math.exp %288 : vector<2x16x16xf32>
    %cst_145 = arith.constant dense<0.000000e+00> : vector<2x16xf32>
    %290 = vector.multi_reduction <add>, %289, %cst_145 [2] : vector<2x16x16xf32> to vector<2x16xf32>
    %291 = vector.shape_cast %290 : vector<2x16xf32> to vector<2x16x1xf32>
    %292 = tpu.reciprocal %291 {approx = true} : vector<2x16x1xf32> -> vector<2x16x1xf32>
    %293 = vector.broadcast %292 : vector<2x16x1xf32> to vector<2x16x16xf32>
    %294 = arith.mulf %289, %293 : vector<2x16x16xf32>
    %295 = arith.truncf %294 : vector<2x16x16xf32> to vector<2x16x16xbf16>
    %296 = arith.truncf %277 : vector<2x16x8xf32> to vector<2x16x8xbf16>
    "tpu.trace_start"() <{level = 10 : i32, message = "bqk,bkd->bqd"}> : () -> ()
    %cst_146 = arith.constant dense<0.000000e+00> : vector<2x16x8xf32>
    %297 = tpu.matmul %295, %296, %cst_146 {dimension_numbers = #tpu.dot_dimension_numbers<[2], [1], [1], [2], [0, 0, 0, 1, 1, 2], [0], [0]>} : vector<2x16x16xbf16>, vector<2x16x8xbf16>, vector<2x16x8xf32> -> vector<2x16x8xf32>
    "tpu.trace_stop"() : () -> ()
    %298 = vector.shape_cast %297 : vector<2x16x8xf32> to vector<32x8xf32>
    %299 = vector.extract_strided_slice %272 {offsets = [0, 0, 8], sizes = [2, 16, 8], strides = [1, 1, 1]} : vector<2x16x96xf32> to vector<2x16x8xf32>
    %300 = arith.truncf %299 : vector<2x16x8xf32> to vector<2x16x8xbf16>
    %301 = vector.extract_strided_slice %272 {offsets = [0, 0, 40], sizes = [2, 16, 8], strides = [1, 1, 1]} : vector<2x16x96xf32> to vector<2x16x8xf32>
    %302 = arith.truncf %301 : vector<2x16x8xf32> to vector<2x16x8xbf16>
    %303 = vector.extract_strided_slice %272 {offsets = [0, 0, 72], sizes = [2, 16, 8], strides = [1, 1, 1]} : vector<2x16x96xf32> to vector<2x16x8xf32>
    "tpu.trace_start"() <{level = 10 : i32, message = "bqd,bkd->bqk"}> : () -> ()
    %cst_147 = arith.constant dense<0.000000e+00> : vector<2x16x16xf32>
    %304 = tpu.matmul %300, %302, %cst_147 {dimension_numbers = #tpu.dot_dimension_numbers<[2], [2], [1], [1], [0, 0, 0, 1, 1, 1], [0], [0]>} : vector<2x16x8xbf16>, vector<2x16x8xbf16>, vector<2x16x16xf32> -> vector<2x16x16xf32>
    "tpu.trace_stop"() : () -> ()
    %cst_148 = arith.constant 0.353553385 : f32
    %305 = vector.broadcast %cst_148 : f32 to vector<2x16x16xf32>
    %306 = arith.mulf %304, %305 : vector<2x16x16xf32>
    %cst_149 = arith.constant -1.000000e+30 : f32
    %307 = vector.shape_cast %29 : vector<1x1x16xi1> to vector<1x1x16xi1>
    %308 = vector.broadcast %307 : vector<1x1x16xi1> to vector<2x16x16xi1>
    %309 = vector.broadcast %cst_149 : f32 to vector<2x16x16xf32>
    %310 = arith.select %308, %306, %309 : vector<2x16x16xi1>, vector<2x16x16xf32>
    %cst_150 = arith.constant dense<0xFF800000> : vector<2x16xf32>
    %311 = vector.multi_reduction <maximumf>, %310, %cst_150 [2] : vector<2x16x16xf32> to vector<2x16xf32>
    %312 = vector.shape_cast %311 : vector<2x16xf32> to vector<2x16x1xf32>
    %313 = vector.broadcast %312 : vector<2x16x1xf32> to vector<2x16x16xf32>
    %314 = arith.subf %310, %313 : vector<2x16x16xf32>
    %315 = math.exp %314 : vector<2x16x16xf32>
    %cst_151 = arith.constant dense<0.000000e+00> : vector<2x16xf32>
    %316 = vector.multi_reduction <add>, %315, %cst_151 [2] : vector<2x16x16xf32> to vector<2x16xf32>
    %317 = vector.shape_cast %316 : vector<2x16xf32> to vector<2x16x1xf32>
    %318 = tpu.reciprocal %317 {approx = true} : vector<2x16x1xf32> -> vector<2x16x1xf32>
    %319 = vector.broadcast %318 : vector<2x16x1xf32> to vector<2x16x16xf32>
    %320 = arith.mulf %315, %319 : vector<2x16x16xf32>
    %321 = arith.truncf %320 : vector<2x16x16xf32> to vector<2x16x16xbf16>
    %322 = arith.truncf %303 : vector<2x16x8xf32> to vector<2x16x8xbf16>
    "tpu.trace_start"() <{level = 10 : i32, message = "bqk,bkd->bqd"}> : () -> ()
    %cst_152 = arith.constant dense<0.000000e+00> : vector<2x16x8xf32>
    %323 = tpu.matmul %321, %322, %cst_152 {dimension_numbers = #tpu.dot_dimension_numbers<[2], [1], [1], [2], [0, 0, 0, 1, 1, 2], [0], [0]>} : vector<2x16x16xbf16>, vector<2x16x8xbf16>, vector<2x16x8xf32> -> vector<2x16x8xf32>
    "tpu.trace_stop"() : () -> ()
    %324 = vector.shape_cast %323 : vector<2x16x8xf32> to vector<32x8xf32>
    %325 = vector.extract_strided_slice %272 {offsets = [0, 0, 16], sizes = [2, 16, 8], strides = [1, 1, 1]} : vector<2x16x96xf32> to vector<2x16x8xf32>
    %326 = arith.truncf %325 : vector<2x16x8xf32> to vector<2x16x8xbf16>
    %327 = vector.extract_strided_slice %272 {offsets = [0, 0, 48], sizes = [2, 16, 8], strides = [1, 1, 1]} : vector<2x16x96xf32> to vector<2x16x8xf32>
    %328 = arith.truncf %327 : vector<2x16x8xf32> to vector<2x16x8xbf16>
    %329 = vector.extract_strided_slice %272 {offsets = [0, 0, 80], sizes = [2, 16, 8], strides = [1, 1, 1]} : vector<2x16x96xf32> to vector<2x16x8xf32>
    "tpu.trace_start"() <{level = 10 : i32, message = "bqd,bkd->bqk"}> : () -> ()
    %cst_153 = arith.constant dense<0.000000e+00> : vector<2x16x16xf32>
    %330 = tpu.matmul %326, %328, %cst_153 {dimension_numbers = #tpu.dot_dimension_numbers<[2], [2], [1], [1], [0, 0, 0, 1, 1, 1], [0], [0]>} : vector<2x16x8xbf16>, vector<2x16x8xbf16>, vector<2x16x16xf32> -> vector<2x16x16xf32>
    "tpu.trace_stop"() : () -> ()
    %cst_154 = arith.constant 0.353553385 : f32
    %331 = vector.broadcast %cst_154 : f32 to vector<2x16x16xf32>
    %332 = arith.mulf %330, %331 : vector<2x16x16xf32>
    %cst_155 = arith.constant -1.000000e+30 : f32
    %333 = vector.shape_cast %29 : vector<1x1x16xi1> to vector<1x1x16xi1>
    %334 = vector.broadcast %333 : vector<1x1x16xi1> to vector<2x16x16xi1>
    %335 = vector.broadcast %cst_155 : f32 to vector<2x16x16xf32>
    %336 = arith.select %334, %332, %335 : vector<2x16x16xi1>, vector<2x16x16xf32>
    %cst_156 = arith.constant dense<0xFF800000> : vector<2x16xf32>
    %337 = vector.multi_reduction <maximumf>, %336, %cst_156 [2] : vector<2x16x16xf32> to vector<2x16xf32>
    %338 = vector.shape_cast %337 : vector<2x16xf32> to vector<2x16x1xf32>
    %339 = vector.broadcast %338 : vector<2x16x1xf32> to vector<2x16x16xf32>
    %340 = arith.subf %336, %339 : vector<2x16x16xf32>
    %341 = math.exp %340 : vector<2x16x16xf32>
    %cst_157 = arith.constant dense<0.000000e+00> : vector<2x16xf32>
    %342 = vector.multi_reduction <add>, %341, %cst_157 [2] : vector<2x16x16xf32> to vector<2x16xf32>
    %343 = vector.shape_cast %342 : vector<2x16xf32> to vector<2x16x1xf32>
    %344 = tpu.reciprocal %343 {approx = true} : vector<2x16x1xf32> -> vector<2x16x1xf32>
    %345 = vector.broadcast %344 : vector<2x16x1xf32> to vector<2x16x16xf32>
    %346 = arith.mulf %341, %345 : vector<2x16x16xf32>
    %347 = arith.truncf %346 : vector<2x16x16xf32> to vector<2x16x16xbf16>
    %348 = arith.truncf %329 : vector<2x16x8xf32> to vector<2x16x8xbf16>
    "tpu.trace_start"() <{level = 10 : i32, message = "bqk,bkd->bqd"}> : () -> ()
    %cst_158 = arith.constant dense<0.000000e+00> : vector<2x16x8xf32>
    %349 = tpu.matmul %347, %348, %cst_158 {dimension_numbers = #tpu.dot_dimension_numbers<[2], [1], [1], [2], [0, 0, 0, 1, 1, 2], [0], [0]>} : vector<2x16x16xbf16>, vector<2x16x8xbf16>, vector<2x16x8xf32> -> vector<2x16x8xf32>
    "tpu.trace_stop"() : () -> ()
    %350 = vector.shape_cast %349 : vector<2x16x8xf32> to vector<32x8xf32>
    %351 = vector.extract_strided_slice %272 {offsets = [0, 0, 24], sizes = [2, 16, 8], strides = [1, 1, 1]} : vector<2x16x96xf32> to vector<2x16x8xf32>
    %352 = arith.truncf %351 : vector<2x16x8xf32> to vector<2x16x8xbf16>
    %353 = vector.extract_strided_slice %272 {offsets = [0, 0, 56], sizes = [2, 16, 8], strides = [1, 1, 1]} : vector<2x16x96xf32> to vector<2x16x8xf32>
    %354 = arith.truncf %353 : vector<2x16x8xf32> to vector<2x16x8xbf16>
    %355 = vector.extract_strided_slice %272 {offsets = [0, 0, 88], sizes = [2, 16, 8], strides = [1, 1, 1]} : vector<2x16x96xf32> to vector<2x16x8xf32>
    "tpu.trace_start"() <{level = 10 : i32, message = "bqd,bkd->bqk"}> : () -> ()
    %cst_159 = arith.constant dense<0.000000e+00> : vector<2x16x16xf32>
    %356 = tpu.matmul %352, %354, %cst_159 {dimension_numbers = #tpu.dot_dimension_numbers<[2], [2], [1], [1], [0, 0, 0, 1, 1, 1], [0], [0]>} : vector<2x16x8xbf16>, vector<2x16x8xbf16>, vector<2x16x16xf32> -> vector<2x16x16xf32>
    "tpu.trace_stop"() : () -> ()
    %cst_160 = arith.constant 0.353553385 : f32
    %357 = vector.broadcast %cst_160 : f32 to vector<2x16x16xf32>
    %358 = arith.mulf %356, %357 : vector<2x16x16xf32>
    %cst_161 = arith.constant -1.000000e+30 : f32
    %359 = vector.shape_cast %29 : vector<1x1x16xi1> to vector<1x1x16xi1>
    %360 = vector.broadcast %359 : vector<1x1x16xi1> to vector<2x16x16xi1>
    %361 = vector.broadcast %cst_161 : f32 to vector<2x16x16xf32>
    %362 = arith.select %360, %358, %361 : vector<2x16x16xi1>, vector<2x16x16xf32>
    %cst_162 = arith.constant dense<0xFF800000> : vector<2x16xf32>
    %363 = vector.multi_reduction <maximumf>, %362, %cst_162 [2] : vector<2x16x16xf32> to vector<2x16xf32>
    %364 = vector.shape_cast %363 : vector<2x16xf32> to vector<2x16x1xf32>
    %365 = vector.broadcast %364 : vector<2x16x1xf32> to vector<2x16x16xf32>
    %366 = arith.subf %362, %365 : vector<2x16x16xf32>
    %367 = math.exp %366 : vector<2x16x16xf32>
    %cst_163 = arith.constant dense<0.000000e+00> : vector<2x16xf32>
    %368 = vector.multi_reduction <add>, %367, %cst_163 [2] : vector<2x16x16xf32> to vector<2x16xf32>
    %369 = vector.shape_cast %368 : vector<2x16xf32> to vector<2x16x1xf32>
    %370 = tpu.reciprocal %369 {approx = true} : vector<2x16x1xf32> -> vector<2x16x1xf32>
    %371 = vector.broadcast %370 : vector<2x16x1xf32> to vector<2x16x16xf32>
    %372 = arith.mulf %367, %371 : vector<2x16x16xf32>
    %373 = arith.truncf %372 : vector<2x16x16xf32> to vector<2x16x16xbf16>
    %374 = arith.truncf %355 : vector<2x16x8xf32> to vector<2x16x8xbf16>
    "tpu.trace_start"() <{level = 10 : i32, message = "bqk,bkd->bqd"}> : () -> ()
    %cst_164 = arith.constant dense<0.000000e+00> : vector<2x16x8xf32>
    %375 = tpu.matmul %373, %374, %cst_164 {dimension_numbers = #tpu.dot_dimension_numbers<[2], [1], [1], [2], [0, 0, 0, 1, 1, 2], [0], [0]>} : vector<2x16x16xbf16>, vector<2x16x8xbf16>, vector<2x16x8xf32> -> vector<2x16x8xf32>
    "tpu.trace_stop"() : () -> ()
    %376 = vector.shape_cast %375 : vector<2x16x8xf32> to vector<32x8xf32>
    %377 = tpu.concatenate %298, %324, %350, %376 in 1 : vector<32x8xf32>, vector<32x8xf32>, vector<32x8xf32>, vector<32x8xf32> -> vector<32x32xf32>
    %378 = arith.truncf %377 : vector<32x32xf32> to vector<32x32xbf16>
    %c1_165 = arith.constant 1 : index
    %c0_166 = arith.constant 0 : index
    %c0_167 = arith.constant 0 : index
    %379 = vector.load %arg8[%c1_165, %c0_166, %c0_167] : memref<2x32x32xbf16, #tpu.memory_space<vmem>>, vector<1x32x32xbf16>
    %380 = vector.shape_cast %379 : vector<1x32x32xbf16> to vector<32x32xbf16>
    %cst_168 = arith.constant dense<0.000000e+00> : vector<32x32xf32>
    %381 = tpu.matmul %378, %380, %cst_168 {dimension_numbers = #tpu.dot_dimension_numbers<[1], [0], [0], [1], [0, 0, 1, 1], [], []>} : vector<32x32xbf16>, vector<32x32xbf16>, vector<32x32xf32> -> vector<32x32xf32>
    %c1_169 = arith.constant 1 : index
    %c0_170 = arith.constant 0 : index
    %c0_171 = arith.constant 0 : index
    %382 = vector.load %arg9[%c1_169, %c0_170, %c0_171] : memref<2x1x32xf32, #tpu.memory_space<vmem>>, vector<1x1x32xf32>
    %383 = vector.shape_cast %382 : vector<1x1x32xf32> to vector<1x32xf32>
    %384 = vector.broadcast %383 : vector<1x32xf32> to vector<32x32xf32>
    %385 = arith.addf %381, %384 : vector<32x32xf32>
    %386 = arith.addf %263, %385 : vector<32x32xf32>
    %c1_172 = arith.constant 1 : index
    %c0_173 = arith.constant 0 : index
    %c0_174 = arith.constant 0 : index
    %387 = vector.load %arg10[%c1_172, %c0_173, %c0_174] : memref<2x1x32xf32, #tpu.memory_space<vmem>>, vector<1x1x32xf32>
    %388 = vector.shape_cast %387 : vector<1x1x32xf32> to vector<1x32xf32>
    %c1_175 = arith.constant 1 : index
    %c0_176 = arith.constant 0 : index
    %c0_177 = arith.constant 0 : index
    %389 = vector.load %arg11[%c1_175, %c0_176, %c0_177] : memref<2x1x32xf32, #tpu.memory_space<vmem>>, vector<1x1x32xf32>
    %390 = vector.shape_cast %389 : vector<1x1x32xf32> to vector<1x32xf32>
    %cst_178 = arith.constant dense<0.000000e+00> : vector<32xf32>
    %391 = vector.multi_reduction <add>, %386, %cst_178 [1] : vector<32x32xf32> to vector<32xf32>
    %392 = vector.shape_cast %391 : vector<32xf32> to vector<32x1xf32>
    %cst_179 = arith.constant 3.200000e+01 : f32
    %393 = vector.broadcast %cst_179 : f32 to vector<32x1xf32>
    %394 = arith.divf %392, %393 : vector<32x1xf32>
    %395 = vector.broadcast %394 : vector<32x1xf32> to vector<32x32xf32>
    %396 = arith.subf %386, %395 : vector<32x32xf32>
    %397 = arith.mulf %396, %396 : vector<32x32xf32>
    %cst_180 = arith.constant dense<0.000000e+00> : vector<32xf32>
    %398 = vector.multi_reduction <add>, %397, %cst_180 [1] : vector<32x32xf32> to vector<32xf32>
    %399 = vector.shape_cast %398 : vector<32xf32> to vector<32x1xf32>
    %cst_181 = arith.constant 3.200000e+01 : f32
    %400 = vector.broadcast %cst_181 : f32 to vector<32x1xf32>
    %401 = arith.divf %399, %400 : vector<32x1xf32>
    %cst_182 = arith.constant 9.99999974E-6 : f32
    %402 = vector.broadcast %cst_182 : f32 to vector<32x1xf32>
    %403 = arith.addf %401, %402 : vector<32x1xf32>
    %404 = math.rsqrt %403 : vector<32x1xf32>
    %405 = vector.broadcast %404 : vector<32x1xf32> to vector<32x32xf32>
    %406 = arith.mulf %396, %405 : vector<32x32xf32>
    %407 = vector.broadcast %388 : vector<1x32xf32> to vector<32x32xf32>
    %408 = arith.mulf %406, %407 : vector<32x32xf32>
    %409 = vector.broadcast %390 : vector<1x32xf32> to vector<32x32xf32>
    %410 = arith.addf %408, %409 : vector<32x32xf32>
    %411 = arith.truncf %410 : vector<32x32xf32> to vector<32x32xbf16>
    %cst_183 = arith.constant 0.000000e+00 : f32
    %412 = vector.broadcast %cst_183 : f32 to vector<32x32xf32>
    %c1_184 = arith.constant 1 : index
    %c0_185 = arith.constant 0 : index
    %c0_186 = arith.constant 0 : index
    %413 = vector.load %arg14[%c1_184, %c0_185, %c0_186] : memref<2x32x2048xbf16, #tpu.memory_space<vmem>>, vector<1x32x512xbf16>
    %414 = vector.shape_cast %413 : vector<1x32x512xbf16> to vector<32x512xbf16>
    %cst_187 = arith.constant dense<0.000000e+00> : vector<32x512xf32>
    %415 = tpu.matmul %411, %414, %cst_187 {dimension_numbers = #tpu.dot_dimension_numbers<[1], [0], [0], [1], [0, 0, 1, 1], [], []>} : vector<32x32xbf16>, vector<32x512xbf16>, vector<32x512xf32> -> vector<32x512xf32>
    %c1_188 = arith.constant 1 : index
    %c0_189 = arith.constant 0 : index
    %c0_190 = arith.constant 0 : index
    %416 = vector.load %arg15[%c1_188, %c0_189, %c0_190] : memref<2x1x2048xf32, #tpu.memory_space<vmem>>, vector<1x1x512xf32>
    %417 = vector.shape_cast %416 : vector<1x1x512xf32> to vector<1x512xf32>
    %418 = vector.broadcast %417 : vector<1x512xf32> to vector<32x512xf32>
    %419 = arith.addf %415, %418 : vector<32x512xf32>
    %cst_191 = arith.constant 0.000000e+00 : f32
    %420 = vector.broadcast %cst_191 : f32 to vector<32x512xf32>
    %421 = arith.maximumf %419, %420 : vector<32x512xf32>
    %422 = arith.truncf %421 : vector<32x512xf32> to vector<32x512xbf16>
    %c1_192 = arith.constant 1 : index
    %c0_193 = arith.constant 0 : index
    %c0_194 = arith.constant 0 : index
    %423 = vector.load %arg16[%c1_192, %c0_193, %c0_194] : memref<2x2048x32xbf16, #tpu.memory_space<vmem>>, vector<1x512x32xbf16>
    %424 = vector.shape_cast %423 : vector<1x512x32xbf16> to vector<512x32xbf16>
    %cst_195 = arith.constant dense<0.000000e+00> : vector<32x32xf32>
    %425 = tpu.matmul %422, %424, %cst_195 {dimension_numbers = #tpu.dot_dimension_numbers<[1], [0], [0], [1], [0, 0, 1, 1], [], []>} : vector<32x512xbf16>, vector<512x32xbf16>, vector<32x32xf32> -> vector<32x32xf32>
    %426 = arith.addf %412, %425 : vector<32x32xf32>
    %c1_196 = arith.constant 1 : index
    %c0_197 = arith.constant 0 : index
    %c512_198 = arith.constant 512 : index
    %427 = vector.load %arg14[%c1_196, %c0_197, %c512_198] : memref<2x32x2048xbf16, #tpu.memory_space<vmem>>, vector<1x32x512xbf16>
    %428 = vector.shape_cast %427 : vector<1x32x512xbf16> to vector<32x512xbf16>
    %cst_199 = arith.constant dense<0.000000e+00> : vector<32x512xf32>
    %429 = tpu.matmul %411, %428, %cst_199 {dimension_numbers = #tpu.dot_dimension_numbers<[1], [0], [0], [1], [0, 0, 1, 1], [], []>} : vector<32x32xbf16>, vector<32x512xbf16>, vector<32x512xf32> -> vector<32x512xf32>
    %c1_200 = arith.constant 1 : index
    %c0_201 = arith.constant 0 : index
    %c512_202 = arith.constant 512 : index
    %430 = vector.load %arg15[%c1_200, %c0_201, %c512_202] : memref<2x1x2048xf32, #tpu.memory_space<vmem>>, vector<1x1x512xf32>
    %431 = vector.shape_cast %430 : vector<1x1x512xf32> to vector<1x512xf32>
    %432 = vector.broadcast %431 : vector<1x512xf32> to vector<32x512xf32>
    %433 = arith.addf %429, %432 : vector<32x512xf32>
    %cst_203 = arith.constant 0.000000e+00 : f32
    %434 = vector.broadcast %cst_203 : f32 to vector<32x512xf32>
    %435 = arith.maximumf %433, %434 : vector<32x512xf32>
    %436 = arith.truncf %435 : vector<32x512xf32> to vector<32x512xbf16>
    %c1_204 = arith.constant 1 : index
    %c512_205 = arith.constant 512 : index
    %c0_206 = arith.constant 0 : index
    %437 = vector.load %arg16[%c1_204, %c512_205, %c0_206] : memref<2x2048x32xbf16, #tpu.memory_space<vmem>>, vector<1x512x32xbf16>
    %438 = vector.shape_cast %437 : vector<1x512x32xbf16> to vector<512x32xbf16>
    %cst_207 = arith.constant dense<0.000000e+00> : vector<32x32xf32>
    %439 = tpu.matmul %436, %438, %cst_207 {dimension_numbers = #tpu.dot_dimension_numbers<[1], [0], [0], [1], [0, 0, 1, 1], [], []>} : vector<32x512xbf16>, vector<512x32xbf16>, vector<32x32xf32> -> vector<32x32xf32>
    %440 = arith.addf %426, %439 : vector<32x32xf32>
    %c1_208 = arith.constant 1 : index
    %c0_209 = arith.constant 0 : index
    %c1024_210 = arith.constant 1024 : index
    %441 = vector.load %arg14[%c1_208, %c0_209, %c1024_210] : memref<2x32x2048xbf16, #tpu.memory_space<vmem>>, vector<1x32x512xbf16>
    %442 = vector.shape_cast %441 : vector<1x32x512xbf16> to vector<32x512xbf16>
    %cst_211 = arith.constant dense<0.000000e+00> : vector<32x512xf32>
    %443 = tpu.matmul %411, %442, %cst_211 {dimension_numbers = #tpu.dot_dimension_numbers<[1], [0], [0], [1], [0, 0, 1, 1], [], []>} : vector<32x32xbf16>, vector<32x512xbf16>, vector<32x512xf32> -> vector<32x512xf32>
    %c1_212 = arith.constant 1 : index
    %c0_213 = arith.constant 0 : index
    %c1024_214 = arith.constant 1024 : index
    %444 = vector.load %arg15[%c1_212, %c0_213, %c1024_214] : memref<2x1x2048xf32, #tpu.memory_space<vmem>>, vector<1x1x512xf32>
    %445 = vector.shape_cast %444 : vector<1x1x512xf32> to vector<1x512xf32>
    %446 = vector.broadcast %445 : vector<1x512xf32> to vector<32x512xf32>
    %447 = arith.addf %443, %446 : vector<32x512xf32>
    %cst_215 = arith.constant 0.000000e+00 : f32
    %448 = vector.broadcast %cst_215 : f32 to vector<32x512xf32>
    %449 = arith.maximumf %447, %448 : vector<32x512xf32>
    %450 = arith.truncf %449 : vector<32x512xf32> to vector<32x512xbf16>
    %c1_216 = arith.constant 1 : index
    %c1024_217 = arith.constant 1024 : index
    %c0_218 = arith.constant 0 : index
    %451 = vector.load %arg16[%c1_216, %c1024_217, %c0_218] : memref<2x2048x32xbf16, #tpu.memory_space<vmem>>, vector<1x512x32xbf16>
    %452 = vector.shape_cast %451 : vector<1x512x32xbf16> to vector<512x32xbf16>
    %cst_219 = arith.constant dense<0.000000e+00> : vector<32x32xf32>
    %453 = tpu.matmul %450, %452, %cst_219 {dimension_numbers = #tpu.dot_dimension_numbers<[1], [0], [0], [1], [0, 0, 1, 1], [], []>} : vector<32x512xbf16>, vector<512x32xbf16>, vector<32x32xf32> -> vector<32x32xf32>
    %454 = arith.addf %440, %453 : vector<32x32xf32>
    %c1_220 = arith.constant 1 : index
    %c0_221 = arith.constant 0 : index
    %c1536_222 = arith.constant 1536 : index
    %455 = vector.load %arg14[%c1_220, %c0_221, %c1536_222] : memref<2x32x2048xbf16, #tpu.memory_space<vmem>>, vector<1x32x512xbf16>
    %456 = vector.shape_cast %455 : vector<1x32x512xbf16> to vector<32x512xbf16>
    %cst_223 = arith.constant dense<0.000000e+00> : vector<32x512xf32>
    %457 = tpu.matmul %411, %456, %cst_223 {dimension_numbers = #tpu.dot_dimension_numbers<[1], [0], [0], [1], [0, 0, 1, 1], [], []>} : vector<32x32xbf16>, vector<32x512xbf16>, vector<32x512xf32> -> vector<32x512xf32>
    %c1_224 = arith.constant 1 : index
    %c0_225 = arith.constant 0 : index
    %c1536_226 = arith.constant 1536 : index
    %458 = vector.load %arg15[%c1_224, %c0_225, %c1536_226] : memref<2x1x2048xf32, #tpu.memory_space<vmem>>, vector<1x1x512xf32>
    %459 = vector.shape_cast %458 : vector<1x1x512xf32> to vector<1x512xf32>
    %460 = vector.broadcast %459 : vector<1x512xf32> to vector<32x512xf32>
    %461 = arith.addf %457, %460 : vector<32x512xf32>
    %cst_227 = arith.constant 0.000000e+00 : f32
    %462 = vector.broadcast %cst_227 : f32 to vector<32x512xf32>
    %463 = arith.maximumf %461, %462 : vector<32x512xf32>
    %464 = arith.truncf %463 : vector<32x512xf32> to vector<32x512xbf16>
    %c1_228 = arith.constant 1 : index
    %c1536_229 = arith.constant 1536 : index
    %c0_230 = arith.constant 0 : index
    %465 = vector.load %arg16[%c1_228, %c1536_229, %c0_230] : memref<2x2048x32xbf16, #tpu.memory_space<vmem>>, vector<1x512x32xbf16>
    %466 = vector.shape_cast %465 : vector<1x512x32xbf16> to vector<512x32xbf16>
    %cst_231 = arith.constant dense<0.000000e+00> : vector<32x32xf32>
    %467 = tpu.matmul %464, %466, %cst_231 {dimension_numbers = #tpu.dot_dimension_numbers<[1], [0], [0], [1], [0, 0, 1, 1], [], []>} : vector<32x512xbf16>, vector<512x32xbf16>, vector<32x32xf32> -> vector<32x32xf32>
    %468 = arith.addf %454, %467 : vector<32x32xf32>
    %c1_232 = arith.constant 1 : index
    %c0_233 = arith.constant 0 : index
    %c0_234 = arith.constant 0 : index
    %469 = vector.load %arg17[%c1_232, %c0_233, %c0_234] : memref<2x1x32xf32, #tpu.memory_space<vmem>>, vector<1x1x32xf32>
    %470 = vector.shape_cast %469 : vector<1x1x32xf32> to vector<1x32xf32>
    %471 = vector.broadcast %470 : vector<1x32xf32> to vector<32x32xf32>
    %472 = arith.addf %468, %471 : vector<32x32xf32>
    %473 = arith.addf %410, %472 : vector<32x32xf32>
    %c1_235 = arith.constant 1 : index
    %c0_236 = arith.constant 0 : index
    %c0_237 = arith.constant 0 : index
    %474 = vector.load %arg12[%c1_235, %c0_236, %c0_237] : memref<2x1x32xf32, #tpu.memory_space<vmem>>, vector<1x1x32xf32>
    %475 = vector.shape_cast %474 : vector<1x1x32xf32> to vector<1x32xf32>
    %c1_238 = arith.constant 1 : index
    %c0_239 = arith.constant 0 : index
    %c0_240 = arith.constant 0 : index
    %476 = vector.load %arg13[%c1_238, %c0_239, %c0_240] : memref<2x1x32xf32, #tpu.memory_space<vmem>>, vector<1x1x32xf32>
    %477 = vector.shape_cast %476 : vector<1x1x32xf32> to vector<1x32xf32>
    %cst_241 = arith.constant dense<0.000000e+00> : vector<32xf32>
    %478 = vector.multi_reduction <add>, %473, %cst_241 [1] : vector<32x32xf32> to vector<32xf32>
    %479 = vector.shape_cast %478 : vector<32xf32> to vector<32x1xf32>
    %cst_242 = arith.constant 3.200000e+01 : f32
    %480 = vector.broadcast %cst_242 : f32 to vector<32x1xf32>
    %481 = arith.divf %479, %480 : vector<32x1xf32>
    %482 = vector.broadcast %481 : vector<32x1xf32> to vector<32x32xf32>
    %483 = arith.subf %473, %482 : vector<32x32xf32>
    %484 = arith.mulf %483, %483 : vector<32x32xf32>
    %cst_243 = arith.constant dense<0.000000e+00> : vector<32xf32>
    %485 = vector.multi_reduction <add>, %484, %cst_243 [1] : vector<32x32xf32> to vector<32xf32>
    %486 = vector.shape_cast %485 : vector<32xf32> to vector<32x1xf32>
    %cst_244 = arith.constant 3.200000e+01 : f32
    %487 = vector.broadcast %cst_244 : f32 to vector<32x1xf32>
    %488 = arith.divf %486, %487 : vector<32x1xf32>
    %cst_245 = arith.constant 9.99999974E-6 : f32
    %489 = vector.broadcast %cst_245 : f32 to vector<32x1xf32>
    %490 = arith.addf %488, %489 : vector<32x1xf32>
    %491 = math.rsqrt %490 : vector<32x1xf32>
    %492 = vector.broadcast %491 : vector<32x1xf32> to vector<32x32xf32>
    %493 = arith.mulf %483, %492 : vector<32x32xf32>
    %494 = vector.broadcast %475 : vector<1x32xf32> to vector<32x32xf32>
    %495 = arith.mulf %493, %494 : vector<32x32xf32>
    %496 = vector.broadcast %477 : vector<1x32xf32> to vector<32x32xf32>
    %497 = arith.addf %495, %496 : vector<32x32xf32>
    %498 = vector.extract_strided_slice %497 {offsets = [11, 0], sizes = [1, 32], strides = [1, 1]} : vector<32x32xf32> to vector<1x32xf32>
    %c0_246 = arith.constant 0 : index
    %c0_247 = arith.constant 0 : index
    %c0_248 = arith.constant 0 : index
    %499 = vector.load %arg18[%c0_246, %c0_247, %c0_248] : memref<1x2x32xf32, #tpu.memory_space<vmem>>, vector<1x1x32xf32>
    %500 = vector.shape_cast %499 : vector<1x1x32xf32> to vector<1x32xf32>
    %501 = vector.shape_cast %498 : vector<1x32xf32> to vector<1x1x32xf32>
    tpu.vector_store %arg18[%c0_246, %c0_247, %c0_248], %501 {strides = array<i32>} : memref<1x2x32xf32, #tpu.memory_space<vmem>>, vector<1x1x32xf32>,
    %502 = vector.extract_strided_slice %497 {offsets = [27, 0], sizes = [1, 32], strides = [1, 1]} : vector<32x32xf32> to vector<1x32xf32>
    %c0_249 = arith.constant 0 : index
    %c1_250 = arith.constant 1 : index
    %c0_251 = arith.constant 0 : index
    %503 = vector.load %arg18[%c0_249, %c1_250, %c0_251] : memref<1x2x32xf32, #tpu.memory_space<vmem>>, vector<1x1x32xf32>
    %504 = vector.shape_cast %503 : vector<1x1x32xf32> to vector<1x32xf32>
    %505 = vector.shape_cast %502 : vector<1x32xf32> to vector<1x1x32xf32>
    tpu.vector_store %arg18[%c0_249, %c1_250, %c0_251], %505 {strides = array<i32>} : memref<1x2x32xf32, #tpu.memory_space<vmem>>, vector<1x1x32xf32>,
    return
  }
  func.func @transform_0(%arg0: i32) -> (i32, i32, i32) {
    %c0_i32 = arith.constant 0 : i32
    %c0_i32_0 = arith.constant 0 : i32
    %c0_i32_1 = arith.constant 0 : i32
    return %arg0, %c0_i32, %c0_i32_0 : i32, i32, i32
  }
  func.func @transform_1(%arg0: i32) -> (i32, i32, i32) {
    %c0_i32 = arith.constant 0 : i32
    %c0_i32_0 = arith.constant 0 : i32
    %c0_i32_1 = arith.constant 0 : i32
    return %arg0, %c0_i32, %c0_i32_0 : i32, i32, i32
  }
  func.func @transform_2(%arg0: i32) -> (i32, i32) {
    %c0_i32 = arith.constant 0 : i32
    %c0_i32_0 = arith.constant 0 : i32
    %c0_i32_1 = arith.constant 0 : i32
    return %c0_i32, %c0_i32_0 : i32, i32
  }
  func.func @transform_3(%arg0: i32) -> (i32, i32) {
    %c0_i32 = arith.constant 0 : i32
    %c0_i32_0 = arith.constant 0 : i32
    %c0_i32_1 = arith.constant 0 : i32
    return %c0_i32, %c0_i32_0 : i32, i32
  }
  func.func @transform_4(%arg0: i32) -> (i32, i32) {
    %c0_i32 = arith.constant 0 : i32
    %c0_i32_0 = arith.constant 0 : i32
    %c0_i32_1 = arith.constant 0 : i32
    return %c0_i32, %c0_i32_0 : i32, i32
  }
  func.func @transform_5(%arg0: i32) -> (i32, i32, i32) {
    %c0_i32 = arith.constant 0 : i32
    %c0_i32_0 = arith.constant 0 : i32
    %c0_i32_1 = arith.constant 0 : i32
    %c0_i32_2 = arith.constant 0 : i32
    return %c0_i32, %c0_i32_0, %c0_i32_1 : i32, i32, i32
  }
  func.func @transform_6(%arg0: i32) -> (i32, i32, i32) {
    %c0_i32 = arith.constant 0 : i32
    %c0_i32_0 = arith.constant 0 : i32
    %c0_i32_1 = arith.constant 0 : i32
    %c0_i32_2 = arith.constant 0 : i32
    return %c0_i32, %c0_i32_0, %c0_i32_1 : i32, i32, i32
  }
  func.func @transform_7(%arg0: i32) -> (i32, i32, i32) {
    %c0_i32 = arith.constant 0 : i32
    %c0_i32_0 = arith.constant 0 : i32
    %c0_i32_1 = arith.constant 0 : i32
    %c0_i32_2 = arith.constant 0 : i32
    return %c0_i32, %c0_i32_0, %c0_i32_1 : i32, i32, i32
  }
  func.func @transform_8(%arg0: i32) -> (i32, i32, i32) {
    %c0_i32 = arith.constant 0 : i32
    %c0_i32_0 = arith.constant 0 : i32
    %c0_i32_1 = arith.constant 0 : i32
    %c0_i32_2 = arith.constant 0 : i32
    return %c0_i32, %c0_i32_0, %c0_i32_1 : i32, i32, i32
  }
  func.func @transform_9(%arg0: i32) -> (i32, i32, i32) {
    %c0_i32 = arith.constant 0 : i32
    %c0_i32_0 = arith.constant 0 : i32
    %c0_i32_1 = arith.constant 0 : i32
    %c0_i32_2 = arith.constant 0 : i32
    return %c0_i32, %c0_i32_0, %c0_i32_1 : i32, i32, i32
  }
  func.func @transform_10(%arg0: i32) -> (i32, i32, i32) {
    %c0_i32 = arith.constant 0 : i32
    %c0_i32_0 = arith.constant 0 : i32
    %c0_i32_1 = arith.constant 0 : i32
    %c0_i32_2 = arith.constant 0 : i32
    return %c0_i32, %c0_i32_0, %c0_i32_1 : i32, i32, i32
  }
  func.func @transform_11(%arg0: i32) -> (i32, i32, i32) {
    %c0_i32 = arith.constant 0 : i32
    %c0_i32_0 = arith.constant 0 : i32
    %c0_i32_1 = arith.constant 0 : i32
    %c0_i32_2 = arith.constant 0 : i32
    return %c0_i32, %c0_i32_0, %c0_i32_1 : i32, i32, i32
  }
  func.func @transform_12(%arg0: i32) -> (i32, i32, i32) {
    %c0_i32 = arith.constant 0 : i32
    %c0_i32_0 = arith.constant 0 : i32
    %c0_i32_1 = arith.constant 0 : i32
    %c0_i32_2 = arith.constant 0 : i32
    return %c0_i32, %c0_i32_0, %c0_i32_1 : i32, i32, i32
  }
  func.func @transform_13(%arg0: i32) -> (i32, i32, i32) {
    %c0_i32 = arith.constant 0 : i32
    %c0_i32_0 = arith.constant 0 : i32
    %c0_i32_1 = arith.constant 0 : i32
    %c0_i32_2 = arith.constant 0 : i32
    return %c0_i32, %c0_i32_0, %c0_i32_1 : i32, i32, i32
  }
  func.func @transform_14(%arg0: i32) -> (i32, i32, i32) {
    %c0_i32 = arith.constant 0 : i32
    %c0_i32_0 = arith.constant 0 : i32
    %c0_i32_1 = arith.constant 0 : i32
    %c0_i32_2 = arith.constant 0 : i32
    return %c0_i32, %c0_i32_0, %c0_i32_1 : i32, i32, i32
  }
  func.func @transform_15(%arg0: i32) -> (i32, i32, i32) {
    %c0_i32 = arith.constant 0 : i32
    %c0_i32_0 = arith.constant 0 : i32
    %c0_i32_1 = arith.constant 0 : i32
    %c0_i32_2 = arith.constant 0 : i32
    return %c0_i32, %c0_i32_0, %c0_i32_1 : i32, i32, i32
  }
  func.func @transform_16(%arg0: i32) -> (i32, i32, i32) {
    %c0_i32 = arith.constant 0 : i32
    %c0_i32_0 = arith.constant 0 : i32
    %c0_i32_1 = arith.constant 0 : i32
    %c0_i32_2 = arith.constant 0 : i32
    return %c0_i32, %c0_i32_0, %c0_i32_1 : i32, i32, i32
  }
  func.func @transform_17(%arg0: i32) -> (i32, i32, i32) {
    %c0_i32 = arith.constant 0 : i32
    %c0_i32_0 = arith.constant 0 : i32
    %c0_i32_1 = arith.constant 0 : i32
    return %arg0, %c0_i32, %c0_i32_0 : i32, i32, i32
  }
}

</mosaic_0001>

<llo_original>
// kernel: tpu_custom_call.1
$region0: #{tpu_custom_call.1}
  #allocation0 [shape = 'u32[]', space=smem, size = 0x4, offset = 0x4, fixed_abs, tag = 'smem constant byte address 0x4 - core index']
  #allocation1 [shape = 'u32[72,128]{1,0:T(1,128)}', space=vmem, size = 0x9000, scoped, tag = 'internal scratch']
  #allocation2 [shape = 'f32[32,32]{1,0:T(8,128)}', space=vmem, size = 0x4000, scoped, tag = 'scratch operand']
  %s0 = inlined_call_operand.vmem [shape: f32[2,8,4], index: 0, kind: input, shape index: {}]
  %s1 = inlined_call_operand.vmem [shape: f32[2,4,32], index: 1, kind: input, shape index: {}]
  %s2 = inlined_call_operand.vmem [shape: f32[12,32], index: 2, kind: input, shape index: {}]
  %s3 = inlined_call_operand.vmem [shape: f32[4,32], index: 3, kind: input, shape index: {}]
  %s4 = inlined_call_operand.vmem [shape: f32[1,32], index: 4, kind: input, shape index: {}]
  %s5 = inlined_call_operand.vmem [shape: bf16[2,32,96], index: 5, kind: input, shape index: {}]
  %s6 = inlined_call_operand.vmem [shape: f32[2,1,96], index: 6, kind: input, shape index: {}]
  %s7 = inlined_call_operand.vmem [shape: bf16[2,32,32], index: 7, kind: input, shape index: {}]
  %s8 = inlined_call_operand.vmem [shape: f32[2,1,32], index: 8, kind: input, shape index: {}]
  %s9 = inlined_call_operand.vmem [shape: f32[2,1,32], index: 9, kind: input, shape index: {}]
  %s10 = inlined_call_operand.vmem [shape: f32[2,1,32], index: 10, kind: input, shape index: {}]
  %s11 = inlined_call_operand.vmem [shape: f32[2,1,32], index: 11, kind: input, shape index: {}]
  %s12 = inlined_call_operand.vmem [shape: f32[2,1,32], index: 12, kind: input, shape index: {}]
  %s13 = inlined_call_operand.vmem [shape: bf16[2,32,2048], index: 13, kind: input, shape index: {}]
  %s14 = inlined_call_operand.vmem [shape: f32[2,1,2048], index: 14, kind: input, shape index: {}]
  %s15 = inlined_call_operand.vmem [shape: bf16[2,2048,32], index: 15, kind: input, shape index: {}]
  %s16 = inlined_call_operand.vmem [shape: f32[2,1,32], index: 16, kind: input, shape index: {}]
  %s17 = inlined_call_operand.hbm [shape: f32[1,2,32], index: 17, kind: output, shape index: {}]
  %s18 = sld [smem:[#allocation0]]
  $region78: #{tpu_custom_call.1} parent=0
    _
  %s20 = ssub.s32 1, %s18
  %s21 = scalar_select 0, %s20, %s18
  $region1: #{tpu_custom_call.1} parent=0
    #allocation3 [shape = 'u8[1024]{0}', space=vmem, size = 0x400, scoped, tag = 'output window, operand 0, single buffered']
    #allocation4 [shape = 's32[1]{0}', space=sflag, size = 0x4, scoped, tag = 'scoped memory for tpu_custom_call.1']
    %22 = vsyncpa [#allocation4], 0
    // Predicated region
    $region2: #{tpu_custom_call.1} parent=1 // pred_check
      _
    $region3: #{tpu_custom_call.1} parent=1 // pred_check_branch
      %24 = sbr.rel (0) target = $region5
    $region4: #{tpu_custom_call.1} parent=1 // pred_region
      _
    $region5: #{tpu_custom_call.1} parent=1 // pred_fallthru
      _
    // Predicated region
    $region6: #{tpu_custom_call.1} parent=1 // pred_check
      _
    $region7: #{tpu_custom_call.1} parent=1 // pred_check_branch
      %26 = sbr.rel (0) target = $region9
    $region8: #{tpu_custom_call.1} parent=1 // pred_region
      _
    $region9: #{tpu_custom_call.1} parent=1 // pred_fallthru
      _
    // Predicated region
    $region10: #{tpu_custom_call.1} parent=1 // pred_check
      _
    $region11: #{tpu_custom_call.1} parent=1 // pred_check_branch
      %28 = sbr.rel (0) target = $region13
    $region12: #{tpu_custom_call.1} parent=1 // pred_region
      _
    $region13: #{tpu_custom_call.1} parent=1 // pred_fallthru
      _
    // Predicated region
    $region14: #{tpu_custom_call.1} parent=1 // pred_check
      _
    $region15: #{tpu_custom_call.1} parent=1 // pred_check_branch
      %30 = sbr.rel (0) target = $region17
    $region16: #{tpu_custom_call.1} parent=1 // pred_region
      _
    $region17: #{tpu_custom_call.1} parent=1 // pred_fallthru
      _
    // Predicated region
    $region18: #{tpu_custom_call.1} parent=1 // pred_check
      _
    $region19: #{tpu_custom_call.1} parent=1 // pred_check_branch
      %32 = sbr.rel (0) target = $region21
    $region20: #{tpu_custom_call.1} parent=1 // pred_region
      _
    $region21: #{tpu_custom_call.1} parent=1 // pred_fallthru
      _
    // Predicated region
    $region22: #{tpu_custom_call.1} parent=1 // pred_check
      _
    $region23: #{tpu_custom_call.1} parent=1 // pred_check_branch
      %34 = sbr.rel (0) target = $region25
    $region24: #{tpu_custom_call.1} parent=1 // pred_region
      _
    $region25: #{tpu_custom_call.1} parent=1 // pred_fallthru
      _
    // Predicated region
    $region26: #{tpu_custom_call.1} parent=1 // pred_check
      _
    $region27: #{tpu_custom_call.1} parent=1 // pred_check_branch
      %36 = sbr.rel (0) target = $region29
    $region28: #{tpu_custom_call.1} parent=1 // pred_region
      _
    $region29: #{tpu_custom_call.1} parent=1 // pred_fallthru
      _
    // Predicated region
    $region30: #{tpu_custom_call.1} parent=1 // pred_check
      _
    $region31: #{tpu_custom_call.1} parent=1 // pred_check_branch
      %38 = sbr.rel (0) target = $region33
    $region32: #{tpu_custom_call.1} parent=1 // pred_region
      _
    $region33: #{tpu_custom_call.1} parent=1 // pred_fallthru
      _
    // Predicated region
    $region34: #{tpu_custom_call.1} parent=1 // pred_check
      _
    $region35: #{tpu_custom_call.1} parent=1 // pred_check_branch
      %40 = sbr.rel (0) target = $region37
    $region36: #{tpu_custom_call.1} parent=1 // pred_region
      _
    $region37: #{tpu_custom_call.1} parent=1 // pred_fallthru
      _
    // Predicated region
    $region38: #{tpu_custom_call.1} parent=1 // pred_check
      _
    $region39: #{tpu_custom_call.1} parent=1 // pred_check_branch
      %42 = sbr.rel (0) target = $region41
    $region40: #{tpu_custom_call.1} parent=1 // pred_region
      _
    $region41: #{tpu_custom_call.1} parent=1 // pred_fallthru
      _
    // Predicated region
    $region42: #{tpu_custom_call.1} parent=1 // pred_check
      _
    $region43: #{tpu_custom_call.1} parent=1 // pred_check_branch
      %44 = sbr.rel (0) target = $region45
    $region44: #{tpu_custom_call.1} parent=1 // pred_region
      _
    $region45: #{tpu_custom_call.1} parent=1 // pred_fallthru
      _
    // Predicated region
    $region46: #{tpu_custom_call.1} parent=1 // pred_check
      _
    $region47: #{tpu_custom_call.1} parent=1 // pred_check_branch
      %46 = sbr.rel (0) target = $region49
    $region48: #{tpu_custom_call.1} parent=1 // pred_region
      _
    $region49: #{tpu_custom_call.1} parent=1 // pred_fallthru
      _
    // Predicated region
    $region50: #{tpu_custom_call.1} parent=1 // pred_check
      _
    $region51: #{tpu_custom_call.1} parent=1 // pred_check_branch
      %48 = sbr.rel (0) target = $region53
    $region52: #{tpu_custom_call.1} parent=1 // pred_region
      _
    $region53: #{tpu_custom_call.1} parent=1 // pred_fallthru
      _
    // Predicated region
    $region54: #{tpu_custom_call.1} parent=1 // pred_check
      _
    $region55: #{tpu_custom_call.1} parent=1 // pred_check_branch
      %50 = sbr.rel (0) target = $region57
    $region56: #{tpu_custom_call.1} parent=1 // pred_region
      _
    $region57: #{tpu_custom_call.1} parent=1 // pred_fallthru
      _
    // Predicated region
    $region58: #{tpu_custom_call.1} parent=1 // pred_check
      _
    $region59: #{tpu_custom_call.1} parent=1 // pred_check_branch
      %52 = sbr.rel (0) target = $region61
    $region60: #{tpu_custom_call.1} parent=1 // pred_region
      _
    $region61: #{tpu_custom_call.1} parent=1 // pred_fallthru
      _
    // Predicated region
    $region62: #{tpu_custom_call.1} parent=1 // pred_check
      _
    $region63: #{tpu_custom_call.1} parent=1 // pred_check_branch
      %54 = sbr.rel (0) target = $region65
    $region64: #{tpu_custom_call.1} parent=1 // pred_region
      _
    $region65: #{tpu_custom_call.1} parent=1 // pred_fallthru
      _
    // Predicated region
    $region66: #{tpu_custom_call.1} parent=1 // pred_check
      _
    $region67: #{tpu_custom_call.1} parent=1 // pred_check_branch
      %56 = sbr.rel (0) target = $region69
    $region68: #{tpu_custom_call.1} parent=1 // pred_region
      _
    $region69: #{tpu_custom_call.1} parent=1 // pred_fallthru
      _
    %v58 = vld [vmem:[%s2] sm:$0xff]
    %v59 = vld [vmem:[%s2 + $0x8] sm:$0xf]
    %v60 = vld [vmem:[%s0] sm:$0xff]
    %v61 = vld [vmem:[%s0 + $0x8] sm:$0xff]
    %v62 = vld [vmem:[%s3] sm:$0xf]
    %v63 = vld [vmem:[%s4] sm:$0x1]
    %v65 = vperm.slane %v63, 0
    %vm67 = vcmask 31744
    %v69 = vsel %vm67, %v60, 0
    %v72 = vsel %vm67, %v61, 0
    %vm74 = vcmask 1043456
    %v76 = vsel %vm74, %v62, 0
    %78 = vmatpush.msra.mxu0 0.0
    %79 = vmatpush.msra.mxu0 0.0
    %80 = vmatpush.msra.mxu0 0.0
    %81 = vmatpush.msra.mxu0 0.0
    %82 = vmatpush.msra.mxu0 0.0
    %83 = vmatpush.msra.mxu0 0.0
    %84 = vmatpush.msra.mxu0 0.0
    %85 = vmatpush.msra.mxu0 0.0
    %86 = vmatpush.msra.mxu0 0.0
    %87 = vmatpush.msra.mxu0 0.0
    %88 = vmatpush.msra.mxu0 0.0
    %89 = vmatpush.msra.mxu0 0.0
    %90 = vmatpush.msra.mxu0 0.0
    %91 = vmatpush.msra.mxu0 0.0
    %92 = vmatpush.msra.mxu0 0.0
    %93 = vmatpush.msra.mxu0 %v76
    %94 = vmatmul.f32.gmra.mxu0 %v69
    %v95 = vpop.f32.mrf.mxu0
    %v96 = vadd.f32 %v65, %v95
    %97 = vmatmul.f32.gmra.mxu0 %v72
    %v98 = vpop.f32.mrf.mxu0
    %v99 = vadd.f32 %v65, %v98
    %100 = vdwg.mxu0
    %v101 = vadd.f32 %v96, %v58
    %vm102 = vcmask 261120
    %103 = vst.msk [vmem:[#allocation2] sm:$0xff] %vm102, %v101
    %v104 = vld [vmem:[%s1] sm:$0xf]
    %v105 = vadd.f32 %v104, %v59
    %vm106 = vcmask 257024
    %107 = vst.msk [vmem:[#allocation2 + $0x8] sm:$0xf] %vm106, %v105
    %108 = vst.msk [vmem:[#allocation2 + $0xc] sm:$0xf] %vm106, 0.0
    %v109 = vadd.f32 %v99, %v58
    %110 = vst.msk [vmem:[#allocation2 + $0x10] sm:$0xff] %vm102, %v109
    %s111 = scalar_lea.vmem %s1, 4
    %v112 = vld [vmem:[%s111] sm:$0xf]
    %v113 = vadd.f32 %v112, %v59
    %114 = vst.msk [vmem:[#allocation2 + $0x18] sm:$0xf] %vm106, %v113
    %115 = vst.msk [vmem:[#allocation2 + $0x1c] sm:$0xf] %vm106, 0.0
    %v116 = vld [vmem:[#allocation2] sm:$0xff]
    %v117 = vld [vmem:[#allocation2 + $0x8] sm:$0xff]
    %v118 = vld [vmem:[#allocation2 + $0x10] sm:$0xff]
    %v119 = vld [vmem:[#allocation2 + $0x18] sm:$0xff]
    %v120 = vlaneseq
    %v121 = vand.u32 %v120, 127
    %vm122 = vcmp.lt.s32.totalorder %v121, 12
    %v123 = vpack.c.bf16 %v117, %v116
    %v124 = vpack.c.bf16 %v119, %v118
    %v125 = vld [vmem:[%s5] sm:$0xf]
    %v126 = vld [vmem:[%s5 + $0x4] sm:$0xf]
    %v127 = vld [vmem:[%s5 + $0x8] sm:$0xf]
    %v128 = vld [vmem:[%s5 + $0xc] sm:$0xf]
    %v129 = vld [vmem:[%s6] sm:$0x1]
    %v131 = vperm.slane %v129, 0
    %v137 = vunpack.c.l.b16 %v125
    %v138 = vunpack.c.l.b16 %v126
    %v139 = vunpack.c.l.b16 %v127
    %v140 = vunpack.c.l.b16 %v128
    %v141 = vpack.c.b16 %v138, %v137
    %v142 = vpack.c.b16 %v140, %v139
    %v146 = vsel %vm102, %v123, 0
    %v149 = vsel %vm102, %v124, 0
    %151 = vmatpush.bf16.msra.mxu0 0
    %152 = vmatpush.bf16.msra.mxu0 0
    %153 = vmatpush.bf16.msra.mxu0 0
    %154 = vmatpush.bf16.msra.mxu0 0
    %155 = vmatpush.bf16.msra.mxu0 0
    %156 = vmatpush.bf16.msra.mxu0 0
    %157 = vmatpush.bf16.msra.mxu0 %v142
    %158 = vmatpush.bf16.msra.mxu0 %v141
    %159 = vmatmul.bf16.gmra.mxu0 %v146
    %v160 = vpop.f32.mrf.mxu0
    %v161 = vadd.f32 %v131, %v160
    %v162 = vpop.f32.mrf.mxu0
    %v163 = vadd.f32 %v131, %v162
    %164 = vmatmul.bf16.gmra.mxu0 %v149
    %v165 = vpop.f32.mrf.mxu0
    %v166 = vadd.f32 %v131, %v165
    %v167 = vpop.f32.mrf.mxu0
    %v168 = vadd.f32 %v131, %v167
    %169 = vdwg.mxu0
    %v170 = vpack.c.bf16 %v161, %v161
    %v171 = vpack.c.bf16 %v163, %v163
    %v172 = vpack.c.bf16 %v166, %v166
    %v173 = vpack.c.bf16 %v168, %v168
    %v176 = vunpack.c.l.b16 %v170
    %v177 = vunpack.c.l.b16 %v171
    %v178 = vpack.c.b16 %v177, %v176
    %179 = vrot.lane.b32.xlu0 %v178, 96
    %v180 = vpop.permute.xlu0 %179
    %vm181 = vcmask 64512
    %v183 = vsel %vm181, %v178, 0
    %v186 = vsel %vm181, %v180, 0
    %188 = vmatpush.bf16.xpose.msra.mxu0 0
    %189 = vmatpush.bf16.xpose.msra.mxu0 0
    %190 = vmatpush.bf16.xpose.msra.mxu0 0
    %191 = vmatpush.bf16.xpose.msra.mxu0 0
    %192 = vmatpush.bf16.xpose.msra.mxu0 0
    %193 = vmatpush.bf16.xpose.msra.mxu0 0
    %194 = vmatpush.bf16.xpose.msra.mxu0 0
    %195 = vmatpush.bf16.xpose.msra.mxu0 %v186
    %196 = vmatmul.bf16.gmra.mxu0 %v183
    %v197 = vpop.f32.mrf.mxu0
    %v198 = vadd.f32 0.0, %v197
    %v199 = vpop.f32.mrf.mxu0
    %v200 = vadd.f32 0.0, %v199
    %201 = vdwg.mxu0
    %v204 = vunpack.c.l.b16 %v172
    %v205 = vunpack.c.l.b16 %v173
    %v206 = vpack.c.b16 %v205, %v204
    %207 = vrot.lane.b32.xlu0 %v206, 96
    %v208 = vpop.permute.xlu0 %207
    %v210 = vsel %vm181, %v206, 0
    %v213 = vsel %vm181, %v208, 0
    %215 = vmatpush.bf16.xpose.msra.mxu0 0
    %216 = vmatpush.bf16.xpose.msra.mxu0 0
    %217 = vmatpush.bf16.xpose.msra.mxu0 0
    %218 = vmatpush.bf16.xpose.msra.mxu0 0
    %219 = vmatpush.bf16.xpose.msra.mxu0 0
    %220 = vmatpush.bf16.xpose.msra.mxu0 0
    %221 = vmatpush.bf16.xpose.msra.mxu0 0
    %222 = vmatpush.bf16.xpose.msra.mxu0 %v213
    %223 = vmatmul.bf16.gmra.mxu0 %v210
    %v224 = vpop.f32.mrf.mxu0
    %v225 = vadd.f32 0.0, %v224
    %v226 = vpop.f32.mrf.mxu0
    %v227 = vadd.f32 0.0, %v226
    %228 = vdwg.mxu0
    %v229 = vmul.f32 %v198, 0.35355338
    %v230 = vmul.f32 %v200, 0.35355338
    %v231 = vmul.f32 %v225, 0.35355338
    %v232 = vmul.f32 %v227, 0.35355338
    %v233 = vsel %vm122, 1, 0
    %vm234 = vcmp.eq.s32.totalorder %v233, 1
    %v235 = vsel %vm234, %v229, -1e+30
    %v236 = vsel %vm234, %v230, -1e+30
    %v237 = vsel %vm234, %v231, -1e+30
    %v238 = vsel %vm234, %v232, -1e+30
    %vm239 = vcmask 130048
    %v240 = vsel %vm239, %v235, -inf
    %241 = vmax.xlane.f32.xlu0 %v240
    %v242 = vpop.xlane.xlu0 %241
    %v243 = vsel %vm239, %v236, -inf
    %244 = vmax.xlane.f32.xlu0 %v243
    %v245 = vpop.xlane.xlu0 %244
    %v246 = vsel %vm239, %v237, -inf
    %247 = vmax.xlane.f32.xlu0 %v246
    %v248 = vpop.xlane.xlu0 %247
    %v249 = vsel %vm239, %v238, -inf
    %250 = vmax.xlane.f32.xlu0 %v249
    %v251 = vpop.xlane.xlu0 %250
    %v252 = vsub.f32 %v235, %v242
    %v253 = vsub.f32 %v236, %v245
    %v254 = vsub.f32 %v237, %v248
    %v255 = vsub.f32 %v238, %v251
    %v256 = vmul.f32 %v252, 1.442695
    %v257 = vpow.pop %v256
    %v258 = vmul.f32 %v253, 1.442695
    %v259 = vpow.pop %v258
    %v260 = vmul.f32 %v254, 1.442695
    %v261 = vpow.pop %v260
    %v262 = vmul.f32 %v255, 1.442695
    %v263 = vpow.pop %v262
    %v264 = vsel %vm239, %v257, 0.0
    %265 = vadd.xlane.f32.xlu0 %v264
    %v266 = vpop.xlane.xlu0 %265
    %v267 = vsel %vm239, %v259, 0.0
    %268 = vadd.xlane.f32.xlu0 %v267
    %v269 = vpop.xlane.xlu0 %268
    %v270 = vsel %vm239, %v261, 0.0
    %271 = vadd.xlane.f32.xlu0 %v270
    %v272 = vpop.xlane.xlu0 %271
    %v273 = vsel %vm239, %v263, 0.0
    %274 = vadd.xlane.f32.xlu0 %v273
    %v275 = vpop.xlane.xlu0 %274
    %v276 = vrcp.pop %v266
    %v277 = vrcp.pop %v269
    %v278 = vrcp.pop %v272
    %v279 = vrcp.pop %v275
    %v280 = vmul.f32 %v257, %v276
    %v281 = vmul.f32 %v259, %v277
    %v282 = vmul.f32 %v261, %v278
    %v283 = vmul.f32 %v263, %v279
    %v284 = vpack.c.bf16 %v280, %v280
    %v285 = vpack.c.bf16 %v281, %v281
    %v286 = vpack.c.bf16 %v282, %v282
    %v287 = vpack.c.bf16 %v283, %v283
    %v290 = vunpack.c.l.b16 %v284
    %v291 = vunpack.c.l.b16 %v285
    %v292 = vpack.c.b16 %v291, %v290
    %293 = vrot.lane.b32.xlu0 %v178, 64
    %v294 = vpop.permute.xlu0 %293
    %v297 = vsel %vm239, %v292, 0
    %299 = vmatpush.bf16.msra.mxu0 0
    %300 = vmatpush.bf16.msra.mxu0 0
    %301 = vmatpush.bf16.msra.mxu0 0
    %302 = vmatpush.bf16.msra.mxu0 0
    %303 = vmatpush.bf16.msra.mxu0 0
    %304 = vmatpush.bf16.msra.mxu0 0
    %305 = vmatpush.bf16.msra.mxu0 0
    %306 = vmatpush.bf16.msra.mxu0 %v294
    %307 = vmatmul.bf16.gmra.mxu0 %v297
    %v308 = vpop.f32.mrf.mxu0
    %v309 = vadd.f32 0.0, %v308
    %v310 = vpop.f32.mrf.mxu0
    %v311 = vadd.f32 0.0, %v310
    %312 = vdwg.mxu0
    %v315 = vunpack.c.l.b16 %v286
    %v316 = vunpack.c.l.b16 %v287
    %v317 = vpack.c.b16 %v316, %v315
    %318 = vrot.lane.b32.xlu0 %v206, 64
    %v319 = vpop.permute.xlu0 %318
    %v322 = vsel %vm239, %v317, 0
    %324 = vmatpush.bf16.msra.mxu0 0
    %325 = vmatpush.bf16.msra.mxu0 0
    %326 = vmatpush.bf16.msra.mxu0 0
    %327 = vmatpush.bf16.msra.mxu0 0
    %328 = vmatpush.bf16.msra.mxu0 0
    %329 = vmatpush.bf16.msra.mxu0 0
    %330 = vmatpush.bf16.msra.mxu0 0
    %331 = vmatpush.bf16.msra.mxu0 %v319
    %332 = vmatmul.bf16.gmra.mxu0 %v322
    %v333 = vpop.f32.mrf.mxu0
    %v334 = vadd.f32 0.0, %v333
    %v335 = vpop.f32.mrf.mxu0
    %v336 = vadd.f32 0.0, %v335
    %337 = vdwg.mxu0
    %338 = vrot.lane.b32.xlu0 %v178, 120
    %v339 = vpop.permute.xlu0 %338
    %340 = vrot.lane.b32.xlu0 %v178, 88
    %v341 = vpop.permute.xlu0 %340
    %v343 = vsel %vm181, %v339, 0
    %v346 = vsel %vm181, %v341, 0
    %348 = vmatpush.bf16.xpose.msra.mxu0 0
    %349 = vmatpush.bf16.xpose.msra.mxu0 0
    %350 = vmatpush.bf16.xpose.msra.mxu0 0
    %351 = vmatpush.bf16.xpose.msra.mxu0 0
    %352 = vmatpush.bf16.xpose.msra.mxu0 0
    %353 = vmatpush.bf16.xpose.msra.mxu0 0
    %354 = vmatpush.bf16.xpose.msra.mxu0 0
    %355 = vmatpush.bf16.xpose.msra.mxu0 %v346
    %356 = vmatmul.bf16.gmra.mxu0 %v343
    %v357 = vpop.f32.mrf.mxu0
    %v358 = vadd.f32 0.0, %v357
    %v359 = vpop.f32.mrf.mxu0
    %v360 = vadd.f32 0.0, %v359
    %361 = vdwg.mxu0
    %362 = vrot.lane.b32.xlu0 %v206, 120
    %v363 = vpop.permute.xlu0 %362
    %364 = vrot.lane.b32.xlu0 %v206, 88
    %v365 = vpop.permute.xlu0 %364
    %v367 = vsel %vm181, %v363, 0
    %v370 = vsel %vm181, %v365, 0
    %372 = vmatpush.bf16.xpose.msra.mxu0 0
    %373 = vmatpush.bf16.xpose.msra.mxu0 0
    %374 = vmatpush.bf16.xpose.msra.mxu0 0
    %375 = vmatpush.bf16.xpose.msra.mxu0 0
    %376 = vmatpush.bf16.xpose.msra.mxu0 0
    %377 = vmatpush.bf16.xpose.msra.mxu0 0
    %378 = vmatpush.bf16.xpose.msra.mxu0 0
    %379 = vmatpush.bf16.xpose.msra.mxu0 %v370
    %380 = vmatmul.bf16.gmra.mxu0 %v367
    %v381 = vpop.f32.mrf.mxu0
    %v382 = vadd.f32 0.0, %v381
    %v383 = vpop.f32.mrf.mxu0
    %v384 = vadd.f32 0.0, %v383
    %385 = vdwg.mxu0
    %v386 = vmul.f32 %v358, 0.35355338
    %v387 = vmul.f32 %v360, 0.35355338
    %v388 = vmul.f32 %v382, 0.35355338
    %v389 = vmul.f32 %v384, 0.35355338
    %v390 = vsel %vm234, %v386, -1e+30
    %v391 = vsel %vm234, %v387, -1e+30
    %v392 = vsel %vm234, %v388, -1e+30
    %v393 = vsel %vm234, %v389, -1e+30
    %v394 = vsel %vm239, %v390, -inf
    %395 = vmax.xlane.f32.xlu0 %v394
    %v396 = vpop.xlane.xlu0 %395
    %v397 = vsel %vm239, %v391, -inf
    %398 = vmax.xlane.f32.xlu0 %v397
    %v399 = vpop.xlane.xlu0 %398
    %v400 = vsel %vm239, %v392, -inf
    %401 = vmax.xlane.f32.xlu0 %v400
    %v402 = vpop.xlane.xlu0 %401
    %v403 = vsel %vm239, %v393, -inf
    %404 = vmax.xlane.f32.xlu0 %v403
    %v405 = vpop.xlane.xlu0 %404
    %v406 = vsub.f32 %v390, %v396
    %v407 = vsub.f32 %v391, %v399
    %v408 = vsub.f32 %v392, %v402
    %v409 = vsub.f32 %v393, %v405
    %v410 = vmul.f32 %v406, 1.442695
    %v411 = vpow.pop %v410
    %v412 = vmul.f32 %v407, 1.442695
    %v413 = vpow.pop %v412
    %v414 = vmul.f32 %v408, 1.442695
    %v415 = vpow.pop %v414
    %v416 = vmul.f32 %v409, 1.442695
    %v417 = vpow.pop %v416
    %v418 = vsel %vm239, %v411, 0.0
    %419 = vadd.xlane.f32.xlu0 %v418
    %v420 = vpop.xlane.xlu0 %419
    %v421 = vsel %vm239, %v413, 0.0
    %422 = vadd.xlane.f32.xlu0 %v421
    %v423 = vpop.xlane.xlu0 %422
    %v424 = vsel %vm239, %v415, 0.0
    %425 = vadd.xlane.f32.xlu0 %v424
    %v426 = vpop.xlane.xlu0 %425
    %v427 = vsel %vm239, %v417, 0.0
    %428 = vadd.xlane.f32.xlu0 %v427
    %v429 = vpop.xlane.xlu0 %428
    %v430 = vrcp.pop %v420
    %v431 = vrcp.pop %v423
    %v432 = vrcp.pop %v426
    %v433 = vrcp.pop %v429
    %v434 = vmul.f32 %v411, %v430
    %v435 = vmul.f32 %v413, %v431
    %v436 = vmul.f32 %v415, %v432
    %v437 = vmul.f32 %v417, %v433
    %v438 = vpack.c.bf16 %v434, %v434
    %v439 = vpack.c.bf16 %v435, %v435
    %v440 = vpack.c.bf16 %v436, %v436
    %v441 = vpack.c.bf16 %v437, %v437
    %v444 = vunpack.c.l.b16 %v438
    %v445 = vunpack.c.l.b16 %v439
    %v446 = vpack.c.b16 %v445, %v444
    %447 = vrot.lane.b32.xlu0 %v178, 56
    %v448 = vpop.permute.xlu0 %447
    %v451 = vsel %vm239, %v446, 0
    %453 = vmatpush.bf16.msra.mxu0 0
    %454 = vmatpush.bf16.msra.mxu0 0
    %455 = vmatpush.bf16.msra.mxu0 0
    %456 = vmatpush.bf16.msra.mxu0 0
    %457 = vmatpush.bf16.msra.mxu0 0
    %458 = vmatpush.bf16.msra.mxu0 0
    %459 = vmatpush.bf16.msra.mxu0 0
    %460 = vmatpush.bf16.msra.mxu0 %v448
    %461 = vmatmul.bf16.gmra.mxu0 %v451
    %v462 = vpop.f32.mrf.mxu0
    %v463 = vadd.f32 0.0, %v462
    %v464 = vpop.f32.mrf.mxu0
    %v465 = vadd.f32 0.0, %v464
    %466 = vdwg.mxu0
    %v469 = vunpack.c.l.b16 %v440
    %v470 = vunpack.c.l.b16 %v441
    %v471 = vpack.c.b16 %v470, %v469
    %472 = vrot.lane.b32.xlu0 %v206, 56
    %v473 = vpop.permute.xlu0 %472
    %v476 = vsel %vm239, %v471, 0
    %478 = vmatpush.bf16.msra.mxu0 0
    %479 = vmatpush.bf16.msra.mxu0 0
    %480 = vmatpush.bf16.msra.mxu0 0
    %481 = vmatpush.bf16.msra.mxu0 0
    %482 = vmatpush.bf16.msra.mxu0 0
    %483 = vmatpush.bf16.msra.mxu0 0
    %484 = vmatpush.bf16.msra.mxu0 0
    %485 = vmatpush.bf16.msra.mxu0 %v473
    %486 = vmatmul.bf16.gmra.mxu0 %v476
    %v487 = vpop.f32.mrf.mxu0
    %v488 = vadd.f32 0.0, %v487
    %v489 = vpop.f32.mrf.mxu0
    %v490 = vadd.f32 0.0, %v489
    %491 = vdwg.mxu0
    %492 = vrot.lane.b32.xlu0 %v178, 112
    %v493 = vpop.permute.xlu0 %492
    %494 = vrot.lane.b32.xlu0 %v178, 80
    %v495 = vpop.permute.xlu0 %494
    %v497 = vsel %vm181, %v493, 0
    %v500 = vsel %vm181, %v495, 0
    %502 = vmatpush.bf16.xpose.msra.mxu0 0
    %503 = vmatpush.bf16.xpose.msra.mxu0 0
    %504 = vmatpush.bf16.xpose.msra.mxu0 0
    %505 = vmatpush.bf16.xpose.msra.mxu0 0
    %506 = vmatpush.bf16.xpose.msra.mxu0 0
    %507 = vmatpush.bf16.xpose.msra.mxu0 0
    %508 = vmatpush.bf16.xpose.msra.mxu0 0
    %509 = vmatpush.bf16.xpose.msra.mxu0 %v500
    %510 = vmatmul.bf16.gmra.mxu0 %v497
    %v511 = vpop.f32.mrf.mxu0
    %v512 = vadd.f32 0.0, %v511
    %v513 = vpop.f32.mrf.mxu0
    %v514 = vadd.f32 0.0, %v513
    %515 = vdwg.mxu0
    %516 = vrot.lane.b32.xlu0 %v206, 112
    %v517 = vpop.permute.xlu0 %516
    %518 = vrot.lane.b32.xlu0 %v206, 80
    %v519 = vpop.permute.xlu0 %518
    %v521 = vsel %vm181, %v517, 0
    %v524 = vsel %vm181, %v519, 0
    %526 = vmatpush.bf16.xpose.msra.mxu0 0
    %527 = vmatpush.bf16.xpose.msra.mxu0 0
    %528 = vmatpush.bf16.xpose.msra.mxu0 0
    %529 = vmatpush.bf16.xpose.msra.mxu0 0
    %530 = vmatpush.bf16.xpose.msra.mxu0 0
    %531 = vmatpush.bf16.xpose.msra.mxu0 0
    %532 = vmatpush.bf16.xpose.msra.mxu0 0
    %533 = vmatpush.bf16.xpose.msra.mxu0 %v524
    %534 = vmatmul.bf16.gmra.mxu0 %v521
    %v535 = vpop.f32.mrf.mxu0
    %v536 = vadd.f32 0.0, %v535
    %v537 = vpop.f32.mrf.mxu0
    %v538 = vadd.f32 0.0, %v537
    %539 = vdwg.mxu0
    %v540 = vmul.f32 %v512, 0.35355338
    %v541 = vmul.f32 %v514, 0.35355338
    %v542 = vmul.f32 %v536, 0.35355338
    %v543 = vmul.f32 %v538, 0.35355338
    %v544 = vsel %vm234, %v540, -1e+30
    %v545 = vsel %vm234, %v541, -1e+30
    %v546 = vsel %vm234, %v542, -1e+30
    %v547 = vsel %vm234, %v543, -1e+30
    %v548 = vsel %vm239, %v544, -inf
    %549 = vmax.xlane.f32.xlu0 %v548
    %v550 = vpop.xlane.xlu0 %549
    %v551 = vsel %vm239, %v545, -inf
    %552 = vmax.xlane.f32.xlu0 %v551
    %v553 = vpop.xlane.xlu0 %552
    %v554 = vsel %vm239, %v546, -inf
    %555 = vmax.xlane.f32.xlu0 %v554
    %v556 = vpop.xlane.xlu0 %555
    %v557 = vsel %vm239, %v547, -inf
    %558 = vmax.xlane.f32.xlu0 %v557
    %v559 = vpop.xlane.xlu0 %558
    %v560 = vsub.f32 %v544, %v550
    %v561 = vsub.f32 %v545, %v553
    %v562 = vsub.f32 %v546, %v556
    %v563 = vsub.f32 %v547, %v559
    %v564 = vmul.f32 %v560, 1.442695
    %v565 = vpow.pop %v564
    %v566 = vmul.f32 %v561, 1.442695
    %v567 = vpow.pop %v566
    %v568 = vmul.f32 %v562, 1.442695
    %v569 = vpow.pop %v568
    %v570 = vmul.f32 %v563, 1.442695
    %v571 = vpow.pop %v570
    %v572 = vsel %vm239, %v565, 0.0
    %573 = vadd.xlane.f32.xlu0 %v572
    %v574 = vpop.xlane.xlu0 %573
    %v575 = vsel %vm239, %v567, 0.0
    %576 = vadd.xlane.f32.xlu0 %v575
    %v577 = vpop.xlane.xlu0 %576
    %v578 = vsel %vm239, %v569, 0.0
    %579 = vadd.xlane.f32.xlu0 %v578
    %v580 = vpop.xlane.xlu0 %579
    %v581 = vsel %vm239, %v571, 0.0
    %582 = vadd.xlane.f32.xlu0 %v581
    %v583 = vpop.xlane.xlu0 %582
    %v584 = vrcp.pop %v574
    %v585 = vrcp.pop %v577
    %v586 = vrcp.pop %v580
    %v587 = vrcp.pop %v583
    %v588 = vmul.f32 %v565, %v584
    %v589 = vmul.f32 %v567, %v585
    %v590 = vmul.f32 %v569, %v586
    %v591 = vmul.f32 %v571, %v587
    %v592 = vpack.c.bf16 %v588, %v588
    %v593 = vpack.c.bf16 %v589, %v589
    %v594 = vpack.c.bf16 %v590, %v590
    %v595 = vpack.c.bf16 %v591, %v591
    %v598 = vunpack.c.l.b16 %v592
    %v599 = vunpack.c.l.b16 %v593
    %v600 = vpack.c.b16 %v599, %v598
    %601 = vrot.lane.b32.xlu0 %v178, 48
    %v602 = vpop.permute.xlu0 %601
    %v605 = vsel %vm239, %v600, 0
    %607 = vmatpush.bf16.msra.mxu0 0
    %608 = vmatpush.bf16.msra.mxu0 0
    %609 = vmatpush.bf16.msra.mxu0 0
    %610 = vmatpush.bf16.msra.mxu0 0
    %611 = vmatpush.bf16.msra.mxu0 0
    %612 = vmatpush.bf16.msra.mxu0 0
    %613 = vmatpush.bf16.msra.mxu0 0
    %614 = vmatpush.bf16.msra.mxu0 %v602
    %615 = vmatmul.bf16.gmra.mxu0 %v605
    %v616 = vpop.f32.mrf.mxu0
    %v617 = vadd.f32 0.0, %v616
    %v618 = vpop.f32.mrf.mxu0
    %v619 = vadd.f32 0.0, %v618
    %620 = vdwg.mxu0
    %v623 = vunpack.c.l.b16 %v594
    %v624 = vunpack.c.l.b16 %v595
    %v625 = vpack.c.b16 %v624, %v623
    %626 = vrot.lane.b32.xlu0 %v206, 48
    %v627 = vpop.permute.xlu0 %626
    %v630 = vsel %vm239, %v625, 0
    %632 = vmatpush.bf16.msra.mxu0 0
    %633 = vmatpush.bf16.msra.mxu0 0
    %634 = vmatpush.bf16.msra.mxu0 0
    %635 = vmatpush.bf16.msra.mxu0 0
    %636 = vmatpush.bf16.msra.mxu0 0
    %637 = vmatpush.bf16.msra.mxu0 0
    %638 = vmatpush.bf16.msra.mxu0 0
    %639 = vmatpush.bf16.msra.mxu0 %v627
    %640 = vmatmul.bf16.gmra.mxu0 %v630
    %v641 = vpop.f32.mrf.mxu0
    %v642 = vadd.f32 0.0, %v641
    %v643 = vpop.f32.mrf.mxu0
    %v644 = vadd.f32 0.0, %v643
    %645 = vdwg.mxu0
    %646 = vrot.lane.b32.xlu0 %v178, 104
    %v647 = vpop.permute.xlu0 %646
    %648 = vrot.lane.b32.xlu0 %v178, 72
    %v649 = vpop.permute.xlu0 %648
    %v651 = vsel %vm181, %v647, 0
    %v654 = vsel %vm181, %v649, 0
    %656 = vmatpush.bf16.xpose.msra.mxu0 0
    %657 = vmatpush.bf16.xpose.msra.mxu0 0
    %658 = vmatpush.bf16.xpose.msra.mxu0 0
    %659 = vmatpush.bf16.xpose.msra.mxu0 0
    %660 = vmatpush.bf16.xpose.msra.mxu0 0
    %661 = vmatpush.bf16.xpose.msra.mxu0 0
    %662 = vmatpush.bf16.xpose.msra.mxu0 0
    %663 = vmatpush.bf16.xpose.msra.mxu0 %v654
    %664 = vmatmul.bf16.gmra.mxu0 %v651
    %v665 = vpop.f32.mrf.mxu0
    %v666 = vadd.f32 0.0, %v665
    %v667 = vpop.f32.mrf.mxu0
    %v668 = vadd.f32 0.0, %v667
    %669 = vdwg.mxu0
    %670 = vrot.lane.b32.xlu0 %v206, 104
    %v671 = vpop.permute.xlu0 %670
    %672 = vrot.lane.b32.xlu0 %v206, 72
    %v673 = vpop.permute.xlu0 %672
    %v675 = vsel %vm181, %v671, 0
    %v678 = vsel %vm181, %v673, 0
    %680 = vmatpush.bf16.xpose.msra.mxu0 0
    %681 = vmatpush.bf16.xpose.msra.mxu0 0
    %682 = vmatpush.bf16.xpose.msra.mxu0 0
    %683 = vmatpush.bf16.xpose.msra.mxu0 0
    %684 = vmatpush.bf16.xpose.msra.mxu0 0
    %685 = vmatpush.bf16.xpose.msra.mxu0 0
    %686 = vmatpush.bf16.xpose.msra.mxu0 0
    %687 = vmatpush.bf16.xpose.msra.mxu0 %v678
    %688 = vmatmul.bf16.gmra.mxu0 %v675
    %v689 = vpop.f32.mrf.mxu0
    %v690 = vadd.f32 0.0, %v689
    %v691 = vpop.f32.mrf.mxu0
    %v692 = vadd.f32 0.0, %v691
    %693 = vdwg.mxu0
    %v694 = vmul.f32 %v666, 0.35355338
    %v695 = vmul.f32 %v668, 0.35355338
    %v696 = vmul.f32 %v690, 0.35355338
    %v697 = vmul.f32 %v692, 0.35355338
    %v698 = vsel %vm234, %v694, -1e+30
    %v699 = vsel %vm234, %v695, -1e+30
    %v700 = vsel %vm234, %v696, -1e+30
    %v701 = vsel %vm234, %v697, -1e+30
    %v702 = vsel %vm239, %v698, -inf
    %703 = vmax.xlane.f32.xlu0 %v702
    %v704 = vpop.xlane.xlu0 %703
    %v705 = vsel %vm239, %v699, -inf
    %706 = vmax.xlane.f32.xlu0 %v705
    %v707 = vpop.xlane.xlu0 %706
    %v708 = vsel %vm239, %v700, -inf
    %709 = vmax.xlane.f32.xlu0 %v708
    %v710 = vpop.xlane.xlu0 %709
    %v711 = vsel %vm239, %v701, -inf
    %712 = vmax.xlane.f32.xlu0 %v711
    %v713 = vpop.xlane.xlu0 %712
    %v714 = vsub.f32 %v698, %v704
    %v715 = vsub.f32 %v699, %v707
    %v716 = vsub.f32 %v700, %v710
    %v717 = vsub.f32 %v701, %v713
    %v718 = vmul.f32 %v714, 1.442695
    %v719 = vpow.pop %v718
    %v720 = vmul.f32 %v715, 1.442695
    %v721 = vpow.pop %v720
    %v722 = vmul.f32 %v716, 1.442695
    %v723 = vpow.pop %v722
    %v724 = vmul.f32 %v717, 1.442695
    %v725 = vpow.pop %v724
    %v726 = vsel %vm239, %v719, 0.0
    %727 = vadd.xlane.f32.xlu0 %v726
    %v728 = vpop.xlane.xlu0 %727
    %v729 = vsel %vm239, %v721, 0.0
    %730 = vadd.xlane.f32.xlu0 %v729
    %v731 = vpop.xlane.xlu0 %730
    %v732 = vsel %vm239, %v723, 0.0
    %733 = vadd.xlane.f32.xlu0 %v732
    %v734 = vpop.xlane.xlu0 %733
    %v735 = vsel %vm239, %v725, 0.0
    %736 = vadd.xlane.f32.xlu0 %v735
    %v737 = vpop.xlane.xlu0 %736
    %v738 = vrcp.pop %v728
    %v739 = vrcp.pop %v731
    %v740 = vrcp.pop %v734
    %v741 = vrcp.pop %v737
    %v742 = vmul.f32 %v719, %v738
    %v743 = vmul.f32 %v721, %v739
    %v744 = vmul.f32 %v723, %v740
    %v745 = vmul.f32 %v725, %v741
    %v746 = vpack.c.bf16 %v742, %v742
    %v747 = vpack.c.bf16 %v743, %v743
    %v748 = vpack.c.bf16 %v744, %v744
    %v749 = vpack.c.bf16 %v745, %v745
    %v752 = vunpack.c.l.b16 %v746
    %v753 = vunpack.c.l.b16 %v747
    %v754 = vpack.c.b16 %v753, %v752
    %755 = vrot.lane.b32.xlu0 %v178, 40
    %v756 = vpop.permute.xlu0 %755
    %v759 = vsel %vm239, %v754, 0
    %761 = vmatpush.bf16.msra.mxu0 0
    %762 = vmatpush.bf16.msra.mxu0 0
    %763 = vmatpush.bf16.msra.mxu0 0
    %764 = vmatpush.bf16.msra.mxu0 0
    %765 = vmatpush.bf16.msra.mxu0 0
    %766 = vmatpush.bf16.msra.mxu0 0
    %767 = vmatpush.bf16.msra.mxu0 0
    %768 = vmatpush.bf16.msra.mxu0 %v756
    %769 = vmatmul.bf16.gmra.mxu0 %v759
    %v770 = vpop.f32.mrf.mxu0
    %v771 = vadd.f32 0.0, %v770
    %v772 = vpop.f32.mrf.mxu0
    %v773 = vadd.f32 0.0, %v772
    %774 = vdwg.mxu0
    %v777 = vunpack.c.l.b16 %v748
    %v778 = vunpack.c.l.b16 %v749
    %v779 = vpack.c.b16 %v778, %v777
    %780 = vrot.lane.b32.xlu0 %v206, 40
    %v781 = vpop.permute.xlu0 %780
    %v784 = vsel %vm239, %v779, 0
    %786 = vmatpush.bf16.msra.mxu0 0
    %787 = vmatpush.bf16.msra.mxu0 0
    %788 = vmatpush.bf16.msra.mxu0 0
    %789 = vmatpush.bf16.msra.mxu0 0
    %790 = vmatpush.bf16.msra.mxu0 0
    %791 = vmatpush.bf16.msra.mxu0 0
    %792 = vmatpush.bf16.msra.mxu0 0
    %793 = vmatpush.bf16.msra.mxu0 %v781
    %794 = vmatmul.bf16.gmra.mxu0 %v784
    %v795 = vpop.f32.mrf.mxu0
    %v796 = vadd.f32 0.0, %v795
    %v797 = vpop.f32.mrf.mxu0
    %v798 = vadd.f32 0.0, %v797
    %799 = vdwg.mxu0
    %804 = vrot.lane.b32.xlu0 %v463, 8
    %v805 = vpop.permute.xlu0 %804
    %806 = vrot.lane.b32.xlu0 %v465, 8
    %v807 = vpop.permute.xlu0 %806
    %808 = vrot.lane.b32.xlu0 %v488, 8
    %v809 = vpop.permute.xlu0 %808
    %810 = vrot.lane.b32.xlu0 %v490, 8
    %v811 = vpop.permute.xlu0 %810
    %820 = vrot.lane.b32.xlu0 %v617, 16
    %v821 = vpop.permute.xlu0 %820
    %822 = vrot.lane.b32.xlu0 %v619, 16
    %v823 = vpop.permute.xlu0 %822
    %824 = vrot.lane.b32.xlu0 %v642, 16
    %v825 = vpop.permute.xlu0 %824
    %826 = vrot.lane.b32.xlu0 %v644, 16
    %v827 = vpop.permute.xlu0 %826
    %836 = vrot.lane.b32.xlu0 %v771, 24
    %v837 = vpop.permute.xlu0 %836
    %838 = vrot.lane.b32.xlu0 %v773, 24
    %v839 = vpop.permute.xlu0 %838
    %840 = vrot.lane.b32.xlu0 %v796, 24
    %v841 = vpop.permute.xlu0 %840
    %842 = vrot.lane.b32.xlu0 %v798, 24
    %v843 = vpop.permute.xlu0 %842
    %v848 = vsel %vm181, %v309, %v805
    %v849 = vsel %vm181, %v311, %v807
    %v850 = vsel %vm181, %v334, %v809
    %v851 = vsel %vm181, %v336, %v811
    %v852 = vsel %vm239, %v848, %v821
    %v853 = vsel %vm239, %v849, %v823
    %v854 = vsel %vm239, %v850, %v825
    %v855 = vsel %vm239, %v851, %v827
    %vm856 = vcmask 195584
    %v857 = vsel %vm856, %v852, %v837
    %v858 = vsel %vm856, %v853, %v839
    %v859 = vsel %vm856, %v854, %v841
    %v860 = vsel %vm856, %v855, %v843
    %v861 = vpack.c.bf16 %v858, %v857
    %v862 = vpack.c.bf16 %v860, %v859
    %v863 = vld [vmem:[%s7] sm:$0xf]
    %v864 = vld [vmem:[%s7 + $0x4] sm:$0xf]
    %v865 = vld [vmem:[%s7 + $0x8] sm:$0xf]
    %v866 = vld [vmem:[%s7 + $0xc] sm:$0xf]
    %v867 = vld [vmem:[%s8] sm:$0x1]
    %v869 = vperm.slane %v867, 0
    %v875 = vunpack.c.l.b16 %v863
    %v876 = vunpack.c.l.b16 %v864
    %v877 = vunpack.c.l.b16 %v865
    %v878 = vunpack.c.l.b16 %v866
    %v879 = vpack.c.b16 %v876, %v875
    %v880 = vpack.c.b16 %v878, %v877
    %v884 = vsel %vm102, %v861, 0
    %v887 = vsel %vm102, %v862, 0
    %889 = vmatpush.bf16.msra.mxu0 0
    %890 = vmatpush.bf16.msra.mxu0 0
    %891 = vmatpush.bf16.msra.mxu0 0
    %892 = vmatpush.bf16.msra.mxu0 0
    %893 = vmatpush.bf16.msra.mxu0 0
    %894 = vmatpush.bf16.msra.mxu0 0
    %895 = vmatpush.bf16.msra.mxu0 %v880
    %896 = vmatpush.bf16.msra.mxu0 %v879
    %897 = vmatmul.bf16.gmra.mxu0 %v884
    %v898 = vpop.f32.mrf.mxu0
    %v899 = vadd.f32 %v869, %v898
    %v900 = vpop.f32.mrf.mxu0
    %v901 = vadd.f32 %v869, %v900
    %902 = vmatmul.bf16.gmra.mxu0 %v887
    %v903 = vpop.f32.mrf.mxu0
    %v904 = vadd.f32 %v869, %v903
    %v905 = vpop.f32.mrf.mxu0
    %v906 = vadd.f32 %v869, %v905
    %907 = vdwg.mxu0
    %v908 = vadd.f32 %v116, %v899
    %v909 = vadd.f32 %v117, %v901
    %v910 = vadd.f32 %v118, %v904
    %v911 = vadd.f32 %v119, %v906
    %v912 = vld [vmem:[%s9] sm:$0x1]
    %v913 = vld [vmem:[%s10] sm:$0x1]
    %v914 = vsel %vm102, %v908, 0.0
    %915 = vadd.xlane.f32.xlu0 %v914
    %v916 = vpop.xlane.xlu0 %915
    %v917 = vsel %vm102, %v909, 0.0
    %918 = vadd.xlane.f32.xlu0 %v917
    %v919 = vpop.xlane.xlu0 %918
    %v920 = vsel %vm102, %v910, 0.0
    %921 = vadd.xlane.f32.xlu0 %v920
    %v922 = vpop.xlane.xlu0 %921
    %v923 = vsel %vm102, %v911, 0.0
    %924 = vadd.xlane.f32.xlu0 %v923
    %v925 = vpop.xlane.xlu0 %924
    %v926 = vrcp.pop 32.0
    %v927 = vmul.f32 32.0, %v926
    %v928 = vsub.f32 1.0, %v927
    %v929 = vmul.f32 %v926, %v928
    %v930 = vadd.f32 %v926, %v929
    %vm931 = vweird.f32 %v926
    %v932 = vsel %vm931, %v926, %v930
    %v933 = vmul.f32 %v916, %v932
    %v934 = vmul.f32 %v919, %v932
    %v935 = vmul.f32 %v922, %v932
    %v936 = vmul.f32 %v925, %v932
    %v937 = vsub.f32 %v908, %v933
    %v938 = vsub.f32 %v909, %v934
    %v939 = vsub.f32 %v910, %v935
    %v940 = vsub.f32 %v911, %v936
    %v941 = vmul.f32 %v937, %v937
    %v942 = vmul.f32 %v938, %v938
    %v943 = vmul.f32 %v939, %v939
    %v944 = vmul.f32 %v940, %v940
    %v945 = vsel %vm102, %v941, 0.0
    %946 = vadd.xlane.f32.xlu0 %v945
    %v947 = vpop.xlane.xlu0 %946
    %v948 = vsel %vm102, %v942, 0.0
    %949 = vadd.xlane.f32.xlu0 %v948
    %v950 = vpop.xlane.xlu0 %949
    %v951 = vsel %vm102, %v943, 0.0
    %952 = vadd.xlane.f32.xlu0 %v951
    %v953 = vpop.xlane.xlu0 %952
    %v954 = vsel %vm102, %v944, 0.0
    %955 = vadd.xlane.f32.xlu0 %v954
    %v956 = vpop.xlane.xlu0 %955
    %v957 = vmul.f32 %v947, %v932
    %v958 = vmul.f32 %v950, %v932
    %v959 = vmul.f32 %v953, %v932
    %v960 = vmul.f32 %v956, %v932
    %v961 = vadd.f32 %v957, 1e-05
    %v962 = vadd.f32 %v958, 1e-05
    %v963 = vadd.f32 %v959, 1e-05
    %v964 = vadd.f32 %v960, 1e-05
    %v965 = vrsqrt.pop %v961
    %v966 = vmul.f32 %v965, %v961
    %v967 = vmul.f32 %v966, %v965
    %v968 = vmul.f32 0.5, %v967
    %v969 = vsub.f32 1.5, %v968
    %v970 = vmul.f32 %v965, %v969
    %vm971 = vweird.f32 %v961
    %vm972 = vweird.f32 %v965
    %vm973 = vmor %vm971, %vm972
    %v974 = vsel %vm973, %v965, %v970
    %v975 = vrsqrt.pop %v962
    %v976 = vmul.f32 %v975, %v962
    %v977 = vmul.f32 %v976, %v975
    %v978 = vmul.f32 0.5, %v977
    %v979 = vsub.f32 1.5, %v978
    %v980 = vmul.f32 %v975, %v979
    %vm981 = vweird.f32 %v962
    %vm982 = vweird.f32 %v975
    %vm983 = vmor %vm981, %vm982
    %v984 = vsel %vm983, %v975, %v980
    %v985 = vrsqrt.pop %v963
    %v986 = vmul.f32 %v985, %v963
    %v987 = vmul.f32 %v986, %v985
    %v988 = vmul.f32 0.5, %v987
    %v989 = vsub.f32 1.5, %v988
    %v990 = vmul.f32 %v985, %v989
    %vm991 = vweird.f32 %v963
    %vm992 = vweird.f32 %v985
    %vm993 = vmor %vm991, %vm992
    %v994 = vsel %vm993, %v985, %v990
    %v995 = vrsqrt.pop %v964
    %v996 = vmul.f32 %v995, %v964
    %v997 = vmul.f32 %v996, %v995
    %v998 = vmul.f32 0.5, %v997
    %v999 = vsub.f32 1.5, %v998
    %v1000 = vmul.f32 %v995, %v999
    %vm1001 = vweird.f32 %v964
    %vm1002 = vweird.f32 %v995
    %vm1003 = vmor %vm1001, %vm1002
    %v1004 = vsel %vm1003, %v995, %v1000
    %v1005 = vmul.f32 %v937, %v974
    %v1006 = vmul.f32 %v938, %v984
    %v1007 = vmul.f32 %v939, %v994
    %v1008 = vmul.f32 %v940, %v1004
    %v1010 = vperm.slane %v912, 0
    %v1012 = vmul.f32 %v1005, %v1010
    %v1013 = vmul.f32 %v1006, %v1010
    %v1014 = vmul.f32 %v1007, %v1010
    %v1015 = vmul.f32 %v1008, %v1010
    %v1017 = vperm.slane %v913, 0
    %v1019 = vadd.f32 %v1012, %v1017
    %v1020 = vadd.f32 %v1013, %v1017
    %v1021 = vadd.f32 %v1014, %v1017
    %v1022 = vadd.f32 %v1015, %v1017
    %v1023 = vpack.c.bf16 %v1020, %v1019
    %v1024 = vpack.c.bf16 %v1022, %v1021
    %v1025 = vld [vmem:[%s13] sm:$0xff]
    %v1026 = vld [vmem:[%s13 + $0x8] sm:$0xff]
    %v1027 = vld [vmem:[%s13 + $0x40] sm:$0xff]
    %v1028 = vld [vmem:[%s13 + $0x48] sm:$0xff]
    %v1029 = vld [vmem:[%s13 + $0x80] sm:$0xff]
    %v1030 = vld [vmem:[%s13 + $0x88] sm:$0xff]
    %v1031 = vld [vmem:[%s13 + $0xc0] sm:$0xff]
    %v1032 = vld [vmem:[%s13 + $0xc8] sm:$0xff]
    %v1033 = vld [vmem:[%s14] sm:$0xf]
    %v1035 = vperm.slane %v1033, 0
    %v1036 = vperm.slane %v1033, 1
    %v1037 = vperm.slane %v1033, 2
    %v1038 = vperm.slane %v1033, 3
    %v1051 = vunpack.c.l.b16 %v1025
    %v1052 = vunpack.c.h.b16 %v1025
    %v1053 = vunpack.c.l.b16 %v1026
    %v1054 = vunpack.c.h.b16 %v1026
    %v1055 = vunpack.c.l.b16 %v1027
    %v1056 = vunpack.c.h.b16 %v1027
    %v1057 = vunpack.c.l.b16 %v1028
    %v1058 = vunpack.c.h.b16 %v1028
    %v1059 = vunpack.c.l.b16 %v1029
    %v1060 = vunpack.c.h.b16 %v1029
    %v1061 = vunpack.c.l.b16 %v1030
    %v1062 = vunpack.c.h.b16 %v1030
    %v1063 = vunpack.c.l.b16 %v1031
    %v1064 = vunpack.c.h.b16 %v1031
    %v1065 = vunpack.c.l.b16 %v1032
    %v1066 = vunpack.c.h.b16 %v1032
    %v1067 = vpack.c.b16 %v1055, %v1051
    %v1068 = vpack.c.b16 %v1056, %v1052
    %v1069 = vpack.c.b16 %v1057, %v1053
    %v1070 = vpack.c.b16 %v1058, %v1054
    %v1071 = vpack.c.b16 %v1063, %v1059
    %v1072 = vpack.c.b16 %v1064, %v1060
    %v1073 = vpack.c.b16 %v1065, %v1061
    %v1074 = vpack.c.b16 %v1066, %v1062
    %v1084 = vsel %vm102, %v1023, 0
    %v1087 = vsel %vm102, %v1024, 0
    %1089 = vmatpush.bf16.msra.mxu0 0
    %1090 = vmatpush.bf16.msra.mxu0 0
    %1091 = vmatpush.bf16.msra.mxu0 0
    %1092 = vmatpush.bf16.msra.mxu0 0
    %1093 = vmatpush.bf16.msra.mxu0 0
    %1094 = vmatpush.bf16.msra.mxu0 0
    %1095 = vmatpush.bf16.msra.mxu0 %v1071
    %1096 = vmatpush.bf16.msra.mxu0 %v1067
    %1097 = vmatmul.bf16.gmra.mxu0 %v1084
    %v1098 = vpop.f32.mrf.mxu0
    %v1099 = vadd.f32 %v1035, %v1098
    %v1100 = vpop.f32.mrf.mxu0
    %v1101 = vadd.f32 %v1035, %v1100
    %1102 = vmatmul.bf16.gmra.mxu0 %v1087
    %v1103 = vpop.f32.mrf.mxu0
    %v1104 = vadd.f32 %v1035, %v1103
    %v1105 = vpop.f32.mrf.mxu0
    %v1106 = vadd.f32 %v1035, %v1105
    %1107 = vdwg.mxu0
    %1108 = vmatpush.bf16.msra.mxu0 0
    %1109 = vmatpush.bf16.msra.mxu0 0
    %1110 = vmatpush.bf16.msra.mxu0 0
    %1111 = vmatpush.bf16.msra.mxu0 0
    %1112 = vmatpush.bf16.msra.mxu0 0
    %1113 = vmatpush.bf16.msra.mxu0 0
    %1114 = vmatpush.bf16.msra.mxu0 %v1072
    %1115 = vmatpush.bf16.msra.mxu0 %v1068
    %1116 = vmatmul.bf16.gmra.mxu0 %v1084
    %v1117 = vpop.f32.mrf.mxu0
    %v1118 = vadd.f32 %v1036, %v1117
    %v1119 = vpop.f32.mrf.mxu0
    %v1120 = vadd.f32 %v1036, %v1119
    %1121 = vmatmul.bf16.gmra.mxu0 %v1087
    %v1122 = vpop.f32.mrf.mxu0
    %v1123 = vadd.f32 %v1036, %v1122
    %v1124 = vpop.f32.mrf.mxu0
    %v1125 = vadd.f32 %v1036, %v1124
    %1126 = vdwg.mxu0
    %1127 = vmatpush.bf16.msra.mxu0 0
    %1128 = vmatpush.bf16.msra.mxu0 0
    %1129 = vmatpush.bf16.msra.mxu0 0
    %1130 = vmatpush.bf16.msra.mxu0 0
    %1131 = vmatpush.bf16.msra.mxu0 0
    %1132 = vmatpush.bf16.msra.mxu0 0
    %1133 = vmatpush.bf16.msra.mxu0 %v1073
    %1134 = vmatpush.bf16.msra.mxu0 %v1069
    %1135 = vmatmul.bf16.gmra.mxu0 %v1084
    %v1136 = vpop.f32.mrf.mxu0
    %v1137 = vadd.f32 %v1037, %v1136
    %v1138 = vpop.f32.mrf.mxu0
    %v1139 = vadd.f32 %v1037, %v1138
    %1140 = vmatmul.bf16.gmra.mxu0 %v1087
    %v1141 = vpop.f32.mrf.mxu0
    %v1142 = vadd.f32 %v1037, %v1141
    %v1143 = vpop.f32.mrf.mxu0
    %v1144 = vadd.f32 %v1037, %v1143
    %1145 = vdwg.mxu0
    %1146 = vmatpush.bf16.msra.mxu0 0
    %1147 = vmatpush.bf16.msra.mxu0 0
    %1148 = vmatpush.bf16.msra.mxu0 0
    %1149 = vmatpush.bf16.msra.mxu0 0
    %1150 = vmatpush.bf16.msra.mxu0 0
    %1151 = vmatpush.bf16.msra.mxu0 0
    %1152 = vmatpush.bf16.msra.mxu0 %v1074
    %1153 = vmatpush.bf16.msra.mxu0 %v1070
    %1154 = vmatmul.bf16.gmra.mxu0 %v1084
    %v1155 = vpop.f32.mrf.mxu0
    %v1156 = vadd.f32 %v1038, %v1155
    %v1157 = vpop.f32.mrf.mxu0
    %v1158 = vadd.f32 %v1038, %v1157
    %1159 = vmatmul.bf16.gmra.mxu0 %v1087
    %v1160 = vpop.f32.mrf.mxu0
    %v1161 = vadd.f32 %v1038, %v1160
    %v1162 = vpop.f32.mrf.mxu0
    %v1163 = vadd.f32 %v1038, %v1162
    %1164 = vdwg.mxu0
    %v1165 = vmax.f32 %v1099, 0.0
    %v1166 = vmax.f32 %v1118, 0.0
    %v1167 = vmax.f32 %v1137, 0.0
    %v1168 = vmax.f32 %v1156, 0.0
    %v1169 = vmax.f32 %v1101, 0.0
    %v1170 = vmax.f32 %v1120, 0.0
    %v1171 = vmax.f32 %v1139, 0.0
    %v1172 = vmax.f32 %v1158, 0.0
    %v1173 = vmax.f32 %v1104, 0.0
    %v1174 = vmax.f32 %v1123, 0.0
    %v1175 = vmax.f32 %v1142, 0.0
    %v1176 = vmax.f32 %v1161, 0.0
    %v1177 = vmax.f32 %v1106, 0.0
    %v1178 = vmax.f32 %v1125, 0.0
    %v1179 = vmax.f32 %v1144, 0.0
    %v1180 = vmax.f32 %v1163, 0.0
    %v1181 = vpack.c.bf16 %v1169, %v1165
    %v1182 = vpack.c.bf16 %v1170, %v1166
    %v1183 = vpack.c.bf16 %v1171, %v1167
    %v1184 = vpack.c.bf16 %v1172, %v1168
    %v1185 = vpack.c.bf16 %v1177, %v1173
    %v1186 = vpack.c.bf16 %v1178, %v1174
    %v1187 = vpack.c.bf16 %v1179, %v1175
    %v1188 = vpack.c.bf16 %v1180, %v1176
    %v1189 = vld [vmem:[%s15] sm:$0xf]
    %v1190 = vld [vmem:[%s15 + $0x4] sm:$0xf]
    %v1191 = vld [vmem:[%s15 + $0x8] sm:$0xf]
    %v1192 = vld [vmem:[%s15 + $0xc] sm:$0xf]
    %v1193 = vld [vmem:[%s15 + $0x10] sm:$0xf]
    %v1194 = vld [vmem:[%s15 + $0x14] sm:$0xf]
    %v1195 = vld [vmem:[%s15 + $0x18] sm:$0xf]
    %v1196 = vld [vmem:[%s15 + $0x1c] sm:$0xf]
    %v1197 = vld [vmem:[%s15 + $0x20] sm:$0xf]
    %v1198 = vld [vmem:[%s15 + $0x24] sm:$0xf]
    %v1199 = vld [vmem:[%s15 + $0x28] sm:$0xf]
    %v1200 = vld [vmem:[%s15 + $0x2c] sm:$0xf]
    %v1201 = vld [vmem:[%s15 + $0x30] sm:$0xf]
    %v1202 = vld [vmem:[%s15 + $0x34] sm:$0xf]
    %v1203 = vld [vmem:[%s15 + $0x38] sm:$0xf]
    %v1204 = vld [vmem:[%s15 + $0x3c] sm:$0xf]
    %v1205 = vld [vmem:[%s15 + $0x40] sm:$0xf]
    %v1206 = vld [vmem:[%s15 + $0x44] sm:$0xf]
    %v1207 = vld [vmem:[%s15 + $0x48] sm:$0xf]
    %v1208 = vld [vmem:[%s15 + $0x4c] sm:$0xf]
    %v1209 = vld [vmem:[%s15 + $0x50] sm:$0xf]
    %v1210 = vld [vmem:[%s15 + $0x54] sm:$0xf]
    %v1211 = vld [vmem:[%s15 + $0x58] sm:$0xf]
    %v1212 = vld [vmem:[%s15 + $0x5c] sm:$0xf]
    %v1213 = vld [vmem:[%s15 + $0x60] sm:$0xf]
    %v1214 = vld [vmem:[%s15 + $0x64] sm:$0xf]
    %v1215 = vld [vmem:[%s15 + $0x68] sm:$0xf]
    %v1216 = vld [vmem:[%s15 + $0x6c] sm:$0xf]
    %v1217 = vld [vmem:[%s15 + $0x70] sm:$0xf]
    %v1218 = vld [vmem:[%s15 + $0x74] sm:$0xf]
    %v1219 = vld [vmem:[%s15 + $0x78] sm:$0xf]
    %v1220 = vld [vmem:[%s15 + $0x7c] sm:$0xf]
    %v1221 = vld [vmem:[%s15 + $0x80] sm:$0xf]
    %v1222 = vld [vmem:[%s15 + $0x84] sm:$0xf]
    %v1223 = vld [vmem:[%s15 + $0x88] sm:$0xf]
    %v1224 = vld [vmem:[%s15 + $0x8c] sm:$0xf]
    %v1225 = vld [vmem:[%s15 + $0x90] sm:$0xf]
    %v1226 = vld [vmem:[%s15 + $0x94] sm:$0xf]
    %v1227 = vld [vmem:[%s15 + $0x98] sm:$0xf]
    %v1228 = vld [vmem:[%s15 + $0x9c] sm:$0xf]
    %v1229 = vld [vmem:[%s15 + $0xa0] sm:$0xf]
    %v1230 = vld [vmem:[%s15 + $0xa4] sm:$0xf]
    %v1231 = vld [vmem:[%s15 + $0xa8] sm:$0xf]
    %v1232 = vld [vmem:[%s15 + $0xac] sm:$0xf]
    %v1233 = vld [vmem:[%s15 + $0xb0] sm:$0xf]
    %v1234 = vld [vmem:[%s15 + $0xb4] sm:$0xf]
    %v1235 = vld [vmem:[%s15 + $0xb8] sm:$0xf]
    %v1236 = vld [vmem:[%s15 + $0xbc] sm:$0xf]
    %v1237 = vld [vmem:[%s15 + $0xc0] sm:$0xf]
    %v1238 = vld [vmem:[%s15 + $0xc4] sm:$0xf]
    %v1239 = vld [vmem:[%s15 + $0xc8] sm:$0xf]
    %v1240 = vld [vmem:[%s15 + $0xcc] sm:$0xf]
    %v1241 = vld [vmem:[%s15 + $0xd0] sm:$0xf]
    %v1242 = vld [vmem:[%s15 + $0xd4] sm:$0xf]
    %v1243 = vld [vmem:[%s15 + $0xd8] sm:$0xf]
    %v1244 = vld [vmem:[%s15 + $0xdc] sm:$0xf]
    %v1245 = vld [vmem:[%s15 + $0xe0] sm:$0xf]
    %v1246 = vld [vmem:[%s15 + $0xe4] sm:$0xf]
    %v1247 = vld [vmem:[%s15 + $0xe8] sm:$0xf]
    %v1248 = vld [vmem:[%s15 + $0xec] sm:$0xf]
    %v1249 = vld [vmem:[%s15 + $0xf0] sm:$0xf]
    %v1250 = vld [vmem:[%s15 + $0xf4] sm:$0xf]
    %v1251 = vld [vmem:[%s15 + $0xf8] sm:$0xf]
    %v1252 = vld [vmem:[%s15 + $0xfc] sm:$0xf]
    %v1253 = vld [vmem:[%s13 + $0x10] sm:$0xff]
    %v1254 = vld [vmem:[%s13 + $0x18] sm:$0xff]
    %v1255 = vld [vmem:[%s13 + $0x50] sm:$0xff]
    %v1256 = vld [vmem:[%s13 + $0x58] sm:$0xff]
    %v1257 = vld [vmem:[%s13 + $0x90] sm:$0xff]
    %v1258 = vld [vmem:[%s13 + $0x98] sm:$0xff]
    %v1259 = vld [vmem:[%s13 + $0xd0] sm:$0xff]
    %v1260 = vld [vmem:[%s13 + $0xd8] sm:$0xff]
    %v1261 = vld [vmem:[%s14 + $0x4] sm:$0xf]
    %v1263 = vperm.slane %v1261, 0
    %v1264 = vperm.slane %v1261, 1
    %v1265 = vperm.slane %v1261, 2
    %v1266 = vperm.slane %v1261, 3
    %v1279 = vunpack.c.l.b16 %v1253
    %v1280 = vunpack.c.h.b16 %v1253
    %v1281 = vunpack.c.l.b16 %v1254
    %v1282 = vunpack.c.h.b16 %v1254
    %v1283 = vunpack.c.l.b16 %v1255
    %v1284 = vunpack.c.h.b16 %v1255
    %v1285 = vunpack.c.l.b16 %v1256
    %v1286 = vunpack.c.h.b16 %v1256
    %v1287 = vunpack.c.l.b16 %v1257
    %v1288 = vunpack.c.h.b16 %v1257
    %v1289 = vunpack.c.l.b16 %v1258
    %v1290 = vunpack.c.h.b16 %v1258
    %v1291 = vunpack.c.l.b16 %v1259
    %v1292 = vunpack.c.h.b16 %v1259
    %v1293 = vunpack.c.l.b16 %v1260
    %v1294 = vunpack.c.h.b16 %v1260
    %v1295 = vpack.c.b16 %v1283, %v1279
    %v1296 = vpack.c.b16 %v1284, %v1280
    %v1297 = vpack.c.b16 %v1285, %v1281
    %v1298 = vpack.c.b16 %v1286, %v1282
    %v1299 = vpack.c.b16 %v1291, %v1287
    %v1300 = vpack.c.b16 %v1292, %v1288
    %v1301 = vpack.c.b16 %v1293, %v1289
    %v1302 = vpack.c.b16 %v1294, %v1290
    %1311 = vmatpush.bf16.msra.mxu0 0
    %1312 = vmatpush.bf16.msra.mxu0 0
    %1313 = vmatpush.bf16.msra.mxu0 0
    %1314 = vmatpush.bf16.msra.mxu0 0
    %1315 = vmatpush.bf16.msra.mxu0 0
    %1316 = vmatpush.bf16.msra.mxu0 0
    %1317 = vmatpush.bf16.msra.mxu0 %v1299
    %1318 = vmatpush.bf16.msra.mxu0 %v1295
    %1319 = vmatmul.bf16.gmra.mxu0 %v1084
    %v1320 = vpop.f32.mrf.mxu0
    %v1321 = vadd.f32 %v1263, %v1320
    %v1322 = vpop.f32.mrf.mxu0
    %v1323 = vadd.f32 %v1263, %v1322
    %1324 = vmatmul.bf16.gmra.mxu0 %v1087
    %v1325 = vpop.f32.mrf.mxu0
    %v1326 = vadd.f32 %v1263, %v1325
    %v1327 = vpop.f32.mrf.mxu0
    %v1328 = vadd.f32 %v1263, %v1327
    %1329 = vdwg.mxu0
    %1330 = vmatpush.bf16.msra.mxu0 0
    %1331 = vmatpush.bf16.msra.mxu0 0
    %1332 = vmatpush.bf16.msra.mxu0 0
    %1333 = vmatpush.bf16.msra.mxu0 0
    %1334 = vmatpush.bf16.msra.mxu0 0
    %1335 = vmatpush.bf16.msra.mxu0 0
    %1336 = vmatpush.bf16.msra.mxu0 %v1300
    %1337 = vmatpush.bf16.msra.mxu0 %v1296
    %1338 = vmatmul.bf16.gmra.mxu0 %v1084
    %v1339 = vpop.f32.mrf.mxu0
    %v1340 = vadd.f32 %v1264, %v1339
    %v1341 = vpop.f32.mrf.mxu0
    %v1342 = vadd.f32 %v1264, %v1341
    %1343 = vmatmul.bf16.gmra.mxu0 %v1087
    %v1344 = vpop.f32.mrf.mxu0
    %v1345 = vadd.f32 %v1264, %v1344
    %v1346 = vpop.f32.mrf.mxu0
    %v1347 = vadd.f32 %v1264, %v1346
    %1348 = vdwg.mxu0
    %1349 = vmatpush.bf16.msra.mxu0 0
    %1350 = vmatpush.bf16.msra.mxu0 0
    %1351 = vmatpush.bf16.msra.mxu0 0
    %1352 = vmatpush.bf16.msra.mxu0 0
    %1353 = vmatpush.bf16.msra.mxu0 0
    %1354 = vmatpush.bf16.msra.mxu0 0
    %1355 = vmatpush.bf16.msra.mxu0 %v1301
    %1356 = vmatpush.bf16.msra.mxu0 %v1297
    %1357 = vmatmul.bf16.gmra.mxu0 %v1084
    %v1358 = vpop.f32.mrf.mxu0
    %v1359 = vadd.f32 %v1265, %v1358
    %v1360 = vpop.f32.mrf.mxu0
    %v1361 = vadd.f32 %v1265, %v1360
    %1362 = vmatmul.bf16.gmra.mxu0 %v1087
    %v1363 = vpop.f32.mrf.mxu0
    %v1364 = vadd.f32 %v1265, %v1363
    %v1365 = vpop.f32.mrf.mxu0
    %v1366 = vadd.f32 %v1265, %v1365
    %1367 = vdwg.mxu0
    %1368 = vmatpush.bf16.msra.mxu0 0
    %1369 = vmatpush.bf16.msra.mxu0 0
    %1370 = vmatpush.bf16.msra.mxu0 0
    %1371 = vmatpush.bf16.msra.mxu0 0
    %1372 = vmatpush.bf16.msra.mxu0 0
    %1373 = vmatpush.bf16.msra.mxu0 0
    %1374 = vmatpush.bf16.msra.mxu0 %v1302
    %1375 = vmatpush.bf16.msra.mxu0 %v1298
    %1376 = vmatmul.bf16.gmra.mxu0 %v1084
    %v1377 = vpop.f32.mrf.mxu0
    %v1378 = vadd.f32 %v1266, %v1377
    %v1379 = vpop.f32.mrf.mxu0
    %v1380 = vadd.f32 %v1266, %v1379
    %1381 = vmatmul.bf16.gmra.mxu0 %v1087
    %v1382 = vpop.f32.mrf.mxu0
    %v1383 = vadd.f32 %v1266, %v1382
    %v1384 = vpop.f32.mrf.mxu0
    %v1385 = vadd.f32 %v1266, %v1384
    %1386 = vdwg.mxu0
    %v1387 = vmax.f32 %v1321, 0.0
    %v1388 = vmax.f32 %v1340, 0.0
    %v1389 = vmax.f32 %v1359, 0.0
    %v1390 = vmax.f32 %v1378, 0.0
    %v1391 = vmax.f32 %v1323, 0.0
    %v1392 = vmax.f32 %v1342, 0.0
    %v1393 = vmax.f32 %v1361, 0.0
    %v1394 = vmax.f32 %v1380, 0.0
    %v1395 = vmax.f32 %v1326, 0.0
    %v1396 = vmax.f32 %v1345, 0.0
    %v1397 = vmax.f32 %v1364, 0.0
    %v1398 = vmax.f32 %v1383, 0.0
    %v1399 = vmax.f32 %v1328, 0.0
    %v1400 = vmax.f32 %v1347, 0.0
    %v1401 = vmax.f32 %v1366, 0.0
    %v1402 = vmax.f32 %v1385, 0.0
    %v1403 = vpack.c.bf16 %v1391, %v1387
    %v1404 = vpack.c.bf16 %v1392, %v1388
    %v1405 = vpack.c.bf16 %v1393, %v1389
    %v1406 = vpack.c.bf16 %v1394, %v1390
    %v1407 = vpack.c.bf16 %v1399, %v1395
    %v1408 = vpack.c.bf16 %v1400, %v1396
    %v1409 = vpack.c.bf16 %v1401, %v1397
    %v1410 = vpack.c.bf16 %v1402, %v1398
    %v1411 = vld [vmem:[%s15 + $0x100] sm:$0xf]
    %v1412 = vld [vmem:[%s15 + $0x104] sm:$0xf]
    %v1413 = vld [vmem:[%s15 + $0x108] sm:$0xf]
    %v1414 = vld [vmem:[%s15 + $0x10c] sm:$0xf]
    %v1415 = vld [vmem:[%s15 + $0x110] sm:$0xf]
    %v1416 = vld [vmem:[%s15 + $0x114] sm:$0xf]
    %v1417 = vld [vmem:[%s15 + $0x118] sm:$0xf]
    %v1418 = vld [vmem:[%s15 + $0x11c] sm:$0xf]
    %v1419 = vld [vmem:[%s15 + $0x120] sm:$0xf]
    %v1420 = vld [vmem:[%s15 + $0x124] sm:$0xf]
    %v1421 = vld [vmem:[%s15 + $0x128] sm:$0xf]
    %v1422 = vld [vmem:[%s15 + $0x12c] sm:$0xf]
    %v1423 = vld [vmem:[%s15 + $0x130] sm:$0xf]
    %v1424 = vld [vmem:[%s15 + $0x134] sm:$0xf]
    %v1425 = vld [vmem:[%s15 + $0x138] sm:$0xf]
    %v1426 = vld [vmem:[%s15 + $0x13c] sm:$0xf]
    %v1427 = vld [vmem:[%s15 + $0x140] sm:$0xf]
    %v1428 = vld [vmem:[%s15 + $0x144] sm:$0xf]
    %v1429 = vld [vmem:[%s15 + $0x148] sm:$0xf]
    %v1430 = vld [vmem:[%s15 + $0x14c] sm:$0xf]
    %v1431 = vld [vmem:[%s15 + $0x150] sm:$0xf]
    %v1432 = vld [vmem:[%s15 + $0x154] sm:$0xf]
    %v1433 = vld [vmem:[%s15 + $0x158] sm:$0xf]
    %v1434 = vld [vmem:[%s15 + $0x15c] sm:$0xf]
    %v1435 = vld [vmem:[%s15 + $0x160] sm:$0xf]
    %v1436 = vld [vmem:[%s15 + $0x164] sm:$0xf]
    %v1437 = vld [vmem:[%s15 + $0x168] sm:$0xf]
    %v1438 = vld [vmem:[%s15 + $0x16c] sm:$0xf]
    %v1439 = vld [vmem:[%s15 + $0x170] sm:$0xf]
    %v1440 = vld [vmem:[%s15 + $0x174] sm:$0xf]
    %v1441 = vld [vmem:[%s15 + $0x178] sm:$0xf]
    %v1442 = vld [vmem:[%s15 + $0x17c] sm:$0xf]
    %v1443 = vld [vmem:[%s15 + $0x180] sm:$0xf]
    %v1444 = vld [vmem:[%s15 + $0x184] sm:$0xf]
    %v1445 = vld [vmem:[%s15 + $0x188] sm:$0xf]
    %v1446 = vld [vmem:[%s15 + $0x18c] sm:$0xf]
    %v1447 = vld [vmem:[%s15 + $0x190] sm:$0xf]
    %v1448 = vld [vmem:[%s15 + $0x194] sm:$0xf]
    %v1449 = vld [vmem:[%s15 + $0x198] sm:$0xf]
    %v1450 = vld [vmem:[%s15 + $0x19c] sm:$0xf]
    %v1451 = vld [vmem:[%s15 + $0x1a0] sm:$0xf]
    %v1452 = vld [vmem:[%s15 + $0x1a4] sm:$0xf]
    %v1453 = vld [vmem:[%s15 + $0x1a8] sm:$0xf]
    %v1454 = vld [vmem:[%s15 + $0x1ac] sm:$0xf]
    %v1455 = vld [vmem:[%s15 + $0x1b0] sm:$0xf]
    %v1456 = vld [vmem:[%s15 + $0x1b4] sm:$0xf]
    %v1457 = vld [vmem:[%s15 + $0x1b8] sm:$0xf]
    %v1458 = vld [vmem:[%s15 + $0x1bc] sm:$0xf]
    %v1459 = vld [vmem:[%s15 + $0x1c0] sm:$0xf]
    %v1460 = vld [vmem:[%s15 + $0x1c4] sm:$0xf]
    %v1461 = vld [vmem:[%s15 + $0x1c8] sm:$0xf]
    %v1462 = vld [vmem:[%s15 + $0x1cc] sm:$0xf]
    %v1463 = vld [vmem:[%s15 + $0x1d0] sm:$0xf]
    %v1464 = vld [vmem:[%s15 + $0x1d4] sm:$0xf]
    %v1465 = vld [vmem:[%s15 + $0x1d8] sm:$0xf]
    %v1466 = vld [vmem:[%s15 + $0x1dc] sm:$0xf]
    %v1467 = vld [vmem:[%s15 + $0x1e0] sm:$0xf]
    %v1468 = vld [vmem:[%s15 + $0x1e4] sm:$0xf]
    %v1469 = vld [vmem:[%s15 + $0x1e8] sm:$0xf]
    %v1470 = vld [vmem:[%s15 + $0x1ec] sm:$0xf]
    %v1471 = vld [vmem:[%s15 + $0x1f0] sm:$0xf]
    %v1472 = vld [vmem:[%s15 + $0x1f4] sm:$0xf]
    %v1473 = vld [vmem:[%s15 + $0x1f8] sm:$0xf]
    %v1474 = vld [vmem:[%s15 + $0x1fc] sm:$0xf]
    %v1539 = vunpack.c.l.b16 %v1411
    %v1540 = vunpack.c.l.b16 %v1412
    %v1541 = vunpack.c.l.b16 %v1413
    %v1542 = vunpack.c.l.b16 %v1414
    %v1543 = vunpack.c.l.b16 %v1415
    %v1544 = vunpack.c.l.b16 %v1416
    %v1545 = vunpack.c.l.b16 %v1417
    %v1546 = vunpack.c.l.b16 %v1418
    %v1547 = vunpack.c.l.b16 %v1419
    %v1548 = vunpack.c.l.b16 %v1420
    %v1549 = vunpack.c.l.b16 %v1421
    %v1550 = vunpack.c.l.b16 %v1422
    %v1551 = vunpack.c.l.b16 %v1423
    %v1552 = vunpack.c.l.b16 %v1424
    %v1553 = vunpack.c.l.b16 %v1425
    %v1554 = vunpack.c.l.b16 %v1426
    %v1555 = vunpack.c.l.b16 %v1427
    %v1556 = vunpack.c.l.b16 %v1428
    %v1557 = vunpack.c.l.b16 %v1429
    %v1558 = vunpack.c.l.b16 %v1430
    %v1559 = vunpack.c.l.b16 %v1431
    %v1560 = vunpack.c.l.b16 %v1432
    %v1561 = vunpack.c.l.b16 %v1433
    %v1562 = vunpack.c.l.b16 %v1434
    %v1563 = vunpack.c.l.b16 %v1435
    %v1564 = vunpack.c.l.b16 %v1436
    %v1565 = vunpack.c.l.b16 %v1437
    %v1566 = vunpack.c.l.b16 %v1438
    %v1567 = vunpack.c.l.b16 %v1439
    %v1568 = vunpack.c.l.b16 %v1440
    %v1569 = vunpack.c.l.b16 %v1441
    %v1570 = vunpack.c.l.b16 %v1442
    %v1571 = vunpack.c.l.b16 %v1443
    %v1572 = vunpack.c.l.b16 %v1444
    %v1573 = vunpack.c.l.b16 %v1445
    %v1574 = vunpack.c.l.b16 %v1446
    %v1575 = vunpack.c.l.b16 %v1447
    %v1576 = vunpack.c.l.b16 %v1448
    %v1577 = vunpack.c.l.b16 %v1449
    %v1578 = vunpack.c.l.b16 %v1450
    %v1579 = vunpack.c.l.b16 %v1451
    %v1580 = vunpack.c.l.b16 %v1452
    %v1581 = vunpack.c.l.b16 %v1453
    %v1582 = vunpack.c.l.b16 %v1454
    %v1583 = vunpack.c.l.b16 %v1455
    %v1584 = vunpack.c.l.b16 %v1456
    %v1585 = vunpack.c.l.b16 %v1457
    %v1586 = vunpack.c.l.b16 %v1458
    %v1587 = vunpack.c.l.b16 %v1459
    %v1588 = vunpack.c.l.b16 %v1460
    %v1589 = vunpack.c.l.b16 %v1461
    %v1590 = vunpack.c.l.b16 %v1462
    %v1591 = vunpack.c.l.b16 %v1463
    %v1592 = vunpack.c.l.b16 %v1464
    %v1593 = vunpack.c.l.b16 %v1465
    %v1594 = vunpack.c.l.b16 %v1466
    %v1595 = vunpack.c.l.b16 %v1467
    %v1596 = vunpack.c.l.b16 %v1468
    %v1597 = vunpack.c.l.b16 %v1469
    %v1598 = vunpack.c.l.b16 %v1470
    %v1599 = vunpack.c.l.b16 %v1471
    %v1600 = vunpack.c.l.b16 %v1472
    %v1601 = vunpack.c.l.b16 %v1473
    %v1602 = vunpack.c.l.b16 %v1474
    %v1603 = vpack.c.b16 %v1540, %v1539
    %v1604 = vpack.c.b16 %v1542, %v1541
    %v1605 = vpack.c.b16 %v1544, %v1543
    %v1606 = vpack.c.b16 %v1546, %v1545
    %v1607 = vpack.c.b16 %v1548, %v1547
    %v1608 = vpack.c.b16 %v1550, %v1549
    %v1609 = vpack.c.b16 %v1552, %v1551
    %v1610 = vpack.c.b16 %v1554, %v1553
    %v1611 = vpack.c.b16 %v1556, %v1555
    %v1612 = vpack.c.b16 %v1558, %v1557
    %v1613 = vpack.c.b16 %v1560, %v1559
    %v1614 = vpack.c.b16 %v1562, %v1561
    %v1615 = vpack.c.b16 %v1564, %v1563
    %v1616 = vpack.c.b16 %v1566, %v1565
    %v1617 = vpack.c.b16 %v1568, %v1567
    %v1618 = vpack.c.b16 %v1570, %v1569
    %v1619 = vpack.c.b16 %v1572, %v1571
    %v1620 = vpack.c.b16 %v1574, %v1573
    %v1621 = vpack.c.b16 %v1576, %v1575
    %v1622 = vpack.c.b16 %v1578, %v1577
    %v1623 = vpack.c.b16 %v1580, %v1579
    %v1624 = vpack.c.b16 %v1582, %v1581
    %v1625 = vpack.c.b16 %v1584, %v1583
    %v1626 = vpack.c.b16 %v1586, %v1585
    %v1627 = vpack.c.b16 %v1588, %v1587
    %v1628 = vpack.c.b16 %v1590, %v1589
    %v1629 = vpack.c.b16 %v1592, %v1591
    %v1630 = vpack.c.b16 %v1594, %v1593
    %v1631 = vpack.c.b16 %v1596, %v1595
    %v1632 = vpack.c.b16 %v1598, %v1597
    %v1633 = vpack.c.b16 %v1600, %v1599
    %v1634 = vpack.c.b16 %v1602, %v1601
    %1667 = vmatpush.bf16.msra.mxu0 %v1610
    %1668 = vmatpush.bf16.msra.mxu0 %v1609
    %1669 = vmatpush.bf16.msra.mxu0 %v1608
    %1670 = vmatpush.bf16.msra.mxu0 %v1607
    %1671 = vmatpush.bf16.msra.mxu0 %v1606
    %1672 = vmatpush.bf16.msra.mxu0 %v1605
    %1673 = vmatpush.bf16.msra.mxu0 %v1604
    %1674 = vmatpush.bf16.msra.mxu0 %v1603
    %1675 = vmatmul.bf16.gmra.mxu0 %v1403
    %v1676 = vpop.f32.mrf.mxu0
    %v1677 = vadd.f32 0.0, %v1676
    %v1678 = vpop.f32.mrf.mxu0
    %v1679 = vadd.f32 0.0, %v1678
    %1680 = vmatmul.bf16.gmra.mxu0 %v1407
    %v1681 = vpop.f32.mrf.mxu0
    %v1682 = vadd.f32 0.0, %v1681
    %v1683 = vpop.f32.mrf.mxu0
    %v1684 = vadd.f32 0.0, %v1683
    %1685 = vdwg.mxu0
    %1686 = vmatpush.bf16.msra.mxu0 %v1618
    %1687 = vmatpush.bf16.msra.mxu0 %v1617
    %1688 = vmatpush.bf16.msra.mxu0 %v1616
    %1689 = vmatpush.bf16.msra.mxu0 %v1615
    %1690 = vmatpush.bf16.msra.mxu0 %v1614
    %1691 = vmatpush.bf16.msra.mxu0 %v1613
    %1692 = vmatpush.bf16.msra.mxu0 %v1612
    %1693 = vmatpush.bf16.msra.mxu0 %v1611
    %1694 = vmatmul.bf16.gmra.mxu0 %v1404
    %v1695 = vpop.f32.mrf.mxu0
    %v1696 = vadd.f32 %v1677, %v1695
    %v1697 = vpop.f32.mrf.mxu0
    %v1698 = vadd.f32 %v1679, %v1697
    %1699 = vmatmul.bf16.gmra.mxu0 %v1408
    %v1700 = vpop.f32.mrf.mxu0
    %v1701 = vadd.f32 %v1682, %v1700
    %v1702 = vpop.f32.mrf.mxu0
    %v1703 = vadd.f32 %v1684, %v1702
    %1704 = vdwg.mxu0
    %1705 = vmatpush.bf16.msra.mxu0 %v1626
    %1706 = vmatpush.bf16.msra.mxu0 %v1625
    %1707 = vmatpush.bf16.msra.mxu0 %v1624
    %1708 = vmatpush.bf16.msra.mxu0 %v1623
    %1709 = vmatpush.bf16.msra.mxu0 %v1622
    %1710 = vmatpush.bf16.msra.mxu0 %v1621
    %1711 = vmatpush.bf16.msra.mxu0 %v1620
    %1712 = vmatpush.bf16.msra.mxu0 %v1619
    %1713 = vmatmul.bf16.gmra.mxu0 %v1405
    %v1714 = vpop.f32.mrf.mxu0
    %v1715 = vadd.f32 %v1696, %v1714
    %v1716 = vpop.f32.mrf.mxu0
    %v1717 = vadd.f32 %v1698, %v1716
    %1718 = vmatmul.bf16.gmra.mxu0 %v1409
    %v1719 = vpop.f32.mrf.mxu0
    %v1720 = vadd.f32 %v1701, %v1719
    %v1721 = vpop.f32.mrf.mxu0
    %v1722 = vadd.f32 %v1703, %v1721
    %1723 = vdwg.mxu0
    %1724 = vmatpush.bf16.msra.mxu0 %v1634
    %1725 = vmatpush.bf16.msra.mxu0 %v1633
    %1726 = vmatpush.bf16.msra.mxu0 %v1632
    %1727 = vmatpush.bf16.msra.mxu0 %v1631
    %1728 = vmatpush.bf16.msra.mxu0 %v1630
    %1729 = vmatpush.bf16.msra.mxu0 %v1629
    %1730 = vmatpush.bf16.msra.mxu0 %v1628
    %1731 = vmatpush.bf16.msra.mxu0 %v1627
    %1732 = vmatmul.bf16.gmra.mxu0 %v1406
    %v1733 = vpop.f32.mrf.mxu0
    %v1734 = vadd.f32 %v1715, %v1733
    %v1735 = vpop.f32.mrf.mxu0
    %v1736 = vadd.f32 %v1717, %v1735
    %1737 = vmatmul.bf16.gmra.mxu0 %v1410
    %v1738 = vpop.f32.mrf.mxu0
    %v1739 = vadd.f32 %v1720, %v1738
    %v1740 = vpop.f32.mrf.mxu0
    %v1741 = vadd.f32 %v1722, %v1740
    %1742 = vdwg.mxu0
    %v1807 = vunpack.c.l.b16 %v1189
    %v1808 = vunpack.c.l.b16 %v1190
    %v1809 = vunpack.c.l.b16 %v1191
    %v1810 = vunpack.c.l.b16 %v1192
    %v1811 = vunpack.c.l.b16 %v1193
    %v1812 = vunpack.c.l.b16 %v1194
    %v1813 = vunpack.c.l.b16 %v1195
    %v1814 = vunpack.c.l.b16 %v1196
    %v1815 = vunpack.c.l.b16 %v1197
    %v1816 = vunpack.c.l.b16 %v1198
    %v1817 = vunpack.c.l.b16 %v1199
    %v1818 = vunpack.c.l.b16 %v1200
    %v1819 = vunpack.c.l.b16 %v1201
    %v1820 = vunpack.c.l.b16 %v1202
    %v1821 = vunpack.c.l.b16 %v1203
    %v1822 = vunpack.c.l.b16 %v1204
    %v1823 = vunpack.c.l.b16 %v1205
    %v1824 = vunpack.c.l.b16 %v1206
    %v1825 = vunpack.c.l.b16 %v1207
    %v1826 = vunpack.c.l.b16 %v1208
    %v1827 = vunpack.c.l.b16 %v1209
    %v1828 = vunpack.c.l.b16 %v1210
    %v1829 = vunpack.c.l.b16 %v1211
    %v1830 = vunpack.c.l.b16 %v1212
    %v1831 = vunpack.c.l.b16 %v1213
    %v1832 = vunpack.c.l.b16 %v1214
    %v1833 = vunpack.c.l.b16 %v1215
    %v1834 = vunpack.c.l.b16 %v1216
    %v1835 = vunpack.c.l.b16 %v1217
    %v1836 = vunpack.c.l.b16 %v1218
    %v1837 = vunpack.c.l.b16 %v1219
    %v1838 = vunpack.c.l.b16 %v1220
    %v1839 = vunpack.c.l.b16 %v1221
    %v1840 = vunpack.c.l.b16 %v1222
    %v1841 = vunpack.c.l.b16 %v1223
    %v1842 = vunpack.c.l.b16 %v1224
    %v1843 = vunpack.c.l.b16 %v1225
    %v1844 = vunpack.c.l.b16 %v1226
    %v1845 = vunpack.c.l.b16 %v1227
    %v1846 = vunpack.c.l.b16 %v1228
    %v1847 = vunpack.c.l.b16 %v1229
    %v1848 = vunpack.c.l.b16 %v1230
    %v1849 = vunpack.c.l.b16 %v1231
    %v1850 = vunpack.c.l.b16 %v1232
    %v1851 = vunpack.c.l.b16 %v1233
    %v1852 = vunpack.c.l.b16 %v1234
    %v1853 = vunpack.c.l.b16 %v1235
    %v1854 = vunpack.c.l.b16 %v1236
    %v1855 = vunpack.c.l.b16 %v1237
    %v1856 = vunpack.c.l.b16 %v1238
    %v1857 = vunpack.c.l.b16 %v1239
    %v1858 = vunpack.c.l.b16 %v1240
    %v1859 = vunpack.c.l.b16 %v1241
    %v1860 = vunpack.c.l.b16 %v1242
    %v1861 = vunpack.c.l.b16 %v1243
    %v1862 = vunpack.c.l.b16 %v1244
    %v1863 = vunpack.c.l.b16 %v1245
    %v1864 = vunpack.c.l.b16 %v1246
    %v1865 = vunpack.c.l.b16 %v1247
    %v1866 = vunpack.c.l.b16 %v1248
    %v1867 = vunpack.c.l.b16 %v1249
    %v1868 = vunpack.c.l.b16 %v1250
    %v1869 = vunpack.c.l.b16 %v1251
    %v1870 = vunpack.c.l.b16 %v1252
    %v1871 = vpack.c.b16 %v1808, %v1807
    %v1872 = vpack.c.b16 %v1810, %v1809
    %v1873 = vpack.c.b16 %v1812, %v1811
    %v1874 = vpack.c.b16 %v1814, %v1813
    %v1875 = vpack.c.b16 %v1816, %v1815
    %v1876 = vpack.c.b16 %v1818, %v1817
    %v1877 = vpack.c.b16 %v1820, %v1819
    %v1878 = vpack.c.b16 %v1822, %v1821
    %v1879 = vpack.c.b16 %v1824, %v1823
    %v1880 = vpack.c.b16 %v1826, %v1825
    %v1881 = vpack.c.b16 %v1828, %v1827
    %v1882 = vpack.c.b16 %v1830, %v1829
    %v1883 = vpack.c.b16 %v1832, %v1831
    %v1884 = vpack.c.b16 %v1834, %v1833
    %v1885 = vpack.c.b16 %v1836, %v1835
    %v1886 = vpack.c.b16 %v1838, %v1837
    %v1887 = vpack.c.b16 %v1840, %v1839
    %v1888 = vpack.c.b16 %v1842, %v1841
    %v1889 = vpack.c.b16 %v1844, %v1843
    %v1890 = vpack.c.b16 %v1846, %v1845
    %v1891 = vpack.c.b16 %v1848, %v1847
    %v1892 = vpack.c.b16 %v1850, %v1849
    %v1893 = vpack.c.b16 %v1852, %v1851
    %v1894 = vpack.c.b16 %v1854, %v1853
    %v1895 = vpack.c.b16 %v1856, %v1855
    %v1896 = vpack.c.b16 %v1858, %v1857
    %v1897 = vpack.c.b16 %v1860, %v1859
    %v1898 = vpack.c.b16 %v1862, %v1861
    %v1899 = vpack.c.b16 %v1864, %v1863
    %v1900 = vpack.c.b16 %v1866, %v1865
    %v1901 = vpack.c.b16 %v1868, %v1867
    %v1902 = vpack.c.b16 %v1870, %v1869
    %1935 = vmatpush.bf16.msra.mxu0 %v1878
    %1936 = vmatpush.bf16.msra.mxu0 %v1877
    %1937 = vmatpush.bf16.msra.mxu0 %v1876
    %1938 = vmatpush.bf16.msra.mxu0 %v1875
    %1939 = vmatpush.bf16.msra.mxu0 %v1874
    %1940 = vmatpush.bf16.msra.mxu0 %v1873
    %1941 = vmatpush.bf16.msra.mxu0 %v1872
    %1942 = vmatpush.bf16.msra.mxu0 %v1871
    %1943 = vmatmul.bf16.gmra.mxu0 %v1181
    %v1944 = vpop.f32.mrf.mxu0
    %v1945 = vadd.f32 %v1734, %v1944
    %v1946 = vpop.f32.mrf.mxu0
    %v1947 = vadd.f32 %v1736, %v1946
    %1948 = vmatmul.bf16.gmra.mxu0 %v1185
    %v1949 = vpop.f32.mrf.mxu0
    %v1950 = vadd.f32 %v1739, %v1949
    %v1951 = vpop.f32.mrf.mxu0
    %v1952 = vadd.f32 %v1741, %v1951
    %1953 = vdwg.mxu0
    %1954 = vmatpush.bf16.msra.mxu0 %v1886
    %1955 = vmatpush.bf16.msra.mxu0 %v1885
    %1956 = vmatpush.bf16.msra.mxu0 %v1884
    %1957 = vmatpush.bf16.msra.mxu0 %v1883
    %1958 = vmatpush.bf16.msra.mxu0 %v1882
    %1959 = vmatpush.bf16.msra.mxu0 %v1881
    %1960 = vmatpush.bf16.msra.mxu0 %v1880
    %1961 = vmatpush.bf16.msra.mxu0 %v1879
    %1962 = vmatmul.bf16.gmra.mxu0 %v1182
    %v1963 = vpop.f32.mrf.mxu0
    %v1964 = vadd.f32 %v1945, %v1963
    %v1965 = vpop.f32.mrf.mxu0
    %v1966 = vadd.f32 %v1947, %v1965
    %1967 = vmatmul.bf16.gmra.mxu0 %v1186
    %v1968 = vpop.f32.mrf.mxu0
    %v1969 = vadd.f32 %v1950, %v1968
    %v1970 = vpop.f32.mrf.mxu0
    %v1971 = vadd.f32 %v1952, %v1970
    %1972 = vdwg.mxu0
    %1973 = vmatpush.bf16.msra.mxu0 %v1894
    %1974 = vmatpush.bf16.msra.mxu0 %v1893
    %1975 = vmatpush.bf16.msra.mxu0 %v1892
    %1976 = vmatpush.bf16.msra.mxu0 %v1891
    %1977 = vmatpush.bf16.msra.mxu0 %v1890
    %1978 = vmatpush.bf16.msra.mxu0 %v1889
    %1979 = vmatpush.bf16.msra.mxu0 %v1888
    %1980 = vmatpush.bf16.msra.mxu0 %v1887
    %1981 = vmatmul.bf16.gmra.mxu0 %v1183
    %v1982 = vpop.f32.mrf.mxu0
    %v1983 = vadd.f32 %v1964, %v1982
    %v1984 = vpop.f32.mrf.mxu0
    %v1985 = vadd.f32 %v1966, %v1984
    %1986 = vmatmul.bf16.gmra.mxu0 %v1187
    %v1987 = vpop.f32.mrf.mxu0
    %v1988 = vadd.f32 %v1969, %v1987
    %v1989 = vpop.f32.mrf.mxu0
    %v1990 = vadd.f32 %v1971, %v1989
    %1991 = vdwg.mxu0
    %1992 = vmatpush.bf16.msra.mxu0 %v1902
    %1993 = vmatpush.bf16.msra.mxu0 %v1901
    %1994 = vmatpush.bf16.msra.mxu0 %v1900
    %1995 = vmatpush.bf16.msra.mxu0 %v1899
    %1996 = vmatpush.bf16.msra.mxu0 %v1898
    %1997 = vmatpush.bf16.msra.mxu0 %v1897
    %1998 = vmatpush.bf16.msra.mxu0 %v1896
    %1999 = vmatpush.bf16.msra.mxu0 %v1895
    %2000 = vmatmul.bf16.gmra.mxu0 %v1184
    %v2001 = vpop.f32.mrf.mxu0
    %v2002 = vadd.f32 %v1983, %v2001
    %v2003 = vpop.f32.mrf.mxu0
    %v2004 = vadd.f32 %v1985, %v2003
    %2005 = vmatmul.bf16.gmra.mxu0 %v1188
    %v2006 = vpop.f32.mrf.mxu0
    %v2007 = vadd.f32 %v1988, %v2006
    %v2008 = vpop.f32.mrf.mxu0
    %v2009 = vadd.f32 %v1990, %v2008
    %2010 = vdwg.mxu0
    %v2011 = vld [vmem:[%s13 + $0x20] sm:$0xff]
    %v2012 = vld [vmem:[%s13 + $0x28] sm:$0xff]
    %v2013 = vld [vmem:[%s13 + $0x60] sm:$0xff]
    %v2014 = vld [vmem:[%s13 + $0x68] sm:$0xff]
    %v2015 = vld [vmem:[%s13 + $0xa0] sm:$0xff]
    %v2016 = vld [vmem:[%s13 + $0xa8] sm:$0xff]
    %v2017 = vld [vmem:[%s13 + $0xe0] sm:$0xff]
    %v2018 = vld [vmem:[%s13 + $0xe8] sm:$0xff]
    %v2019 = vld [vmem:[%s14 + $0x8] sm:$0xf]
    %v2021 = vperm.slane %v2019, 0
    %v2022 = vperm.slane %v2019, 1
    %v2023 = vperm.slane %v2019, 2
    %v2024 = vperm.slane %v2019, 3
    %v2037 = vunpack.c.l.b16 %v2011
    %v2038 = vunpack.c.h.b16 %v2011
    %v2039 = vunpack.c.l.b16 %v2012
    %v2040 = vunpack.c.h.b16 %v2012
    %v2041 = vunpack.c.l.b16 %v2013
    %v2042 = vunpack.c.h.b16 %v2013
    %v2043 = vunpack.c.l.b16 %v2014
    %v2044 = vunpack.c.h.b16 %v2014
    %v2045 = vunpack.c.l.b16 %v2015
    %v2046 = vunpack.c.h.b16 %v2015
    %v2047 = vunpack.c.l.b16 %v2016
    %v2048 = vunpack.c.h.b16 %v2016
    %v2049 = vunpack.c.l.b16 %v2017
    %v2050 = vunpack.c.h.b16 %v2017
    %v2051 = vunpack.c.l.b16 %v2018
    %v2052 = vunpack.c.h.b16 %v2018
    %v2053 = vpack.c.b16 %v2041, %v2037
    %v2054 = vpack.c.b16 %v2042, %v2038
    %v2055 = vpack.c.b16 %v2043, %v2039
    %v2056 = vpack.c.b16 %v2044, %v2040
    %v2057 = vpack.c.b16 %v2049, %v2045
    %v2058 = vpack.c.b16 %v2050, %v2046
    %v2059 = vpack.c.b16 %v2051, %v2047
    %v2060 = vpack.c.b16 %v2052, %v2048
    %2069 = vmatpush.bf16.msra.mxu0 0
    %2070 = vmatpush.bf16.msra.mxu0 0
    %2071 = vmatpush.bf16.msra.mxu0 0
    %2072 = vmatpush.bf16.msra.mxu0 0
    %2073 = vmatpush.bf16.msra.mxu0 0
    %2074 = vmatpush.bf16.msra.mxu0 0
    %2075 = vmatpush.bf16.msra.mxu0 %v2057
    %2076 = vmatpush.bf16.msra.mxu0 %v2053
    %2077 = vmatmul.bf16.gmra.mxu0 %v1084
    %v2078 = vpop.f32.mrf.mxu0
    %v2079 = vadd.f32 %v2021, %v2078
    %v2080 = vpop.f32.mrf.mxu0
    %v2081 = vadd.f32 %v2021, %v2080
    %2082 = vmatmul.bf16.gmra.mxu0 %v1087
    %v2083 = vpop.f32.mrf.mxu0
    %v2084 = vadd.f32 %v2021, %v2083
    %v2085 = vpop.f32.mrf.mxu0
    %v2086 = vadd.f32 %v2021, %v2085
    %2087 = vdwg.mxu0
    %2088 = vmatpush.bf16.msra.mxu0 0
    %2089 = vmatpush.bf16.msra.mxu0 0
    %2090 = vmatpush.bf16.msra.mxu0 0
    %2091 = vmatpush.bf16.msra.mxu0 0
    %2092 = vmatpush.bf16.msra.mxu0 0
    %2093 = vmatpush.bf16.msra.mxu0 0
    %2094 = vmatpush.bf16.msra.mxu0 %v2058
    %2095 = vmatpush.bf16.msra.mxu0 %v2054
    %2096 = vmatmul.bf16.gmra.mxu0 %v1084
    %v2097 = vpop.f32.mrf.mxu0
    %v2098 = vadd.f32 %v2022, %v2097
    %v2099 = vpop.f32.mrf.mxu0
    %v2100 = vadd.f32 %v2022, %v2099
    %2101 = vmatmul.bf16.gmra.mxu0 %v1087
    %v2102 = vpop.f32.mrf.mxu0
    %v2103 = vadd.f32 %v2022, %v2102
    %v2104 = vpop.f32.mrf.mxu0
    %v2105 = vadd.f32 %v2022, %v2104
    %2106 = vdwg.mxu0
    %2107 = vmatpush.bf16.msra.mxu0 0
    %2108 = vmatpush.bf16.msra.mxu0 0
    %2109 = vmatpush.bf16.msra.mxu0 0
    %2110 = vmatpush.bf16.msra.mxu0 0
    %2111 = vmatpush.bf16.msra.mxu0 0
    %2112 = vmatpush.bf16.msra.mxu0 0
    %2113 = vmatpush.bf16.msra.mxu0 %v2059
    %2114 = vmatpush.bf16.msra.mxu0 %v2055
    %2115 = vmatmul.bf16.gmra.mxu0 %v1084
    %v2116 = vpop.f32.mrf.mxu0
    %v2117 = vadd.f32 %v2023, %v2116
    %v2118 = vpop.f32.mrf.mxu0
    %v2119 = vadd.f32 %v2023, %v2118
    %2120 = vmatmul.bf16.gmra.mxu0 %v1087
    %v2121 = vpop.f32.mrf.mxu0
    %v2122 = vadd.f32 %v2023, %v2121
    %v2123 = vpop.f32.mrf.mxu0
    %v2124 = vadd.f32 %v2023, %v2123
    %2125 = vdwg.mxu0
    %2126 = vmatpush.bf16.msra.mxu0 0
    %2127 = vmatpush.bf16.msra.mxu0 0
    %2128 = vmatpush.bf16.msra.mxu0 0
    %2129 = vmatpush.bf16.msra.mxu0 0
    %2130 = vmatpush.bf16.msra.mxu0 0
    %2131 = vmatpush.bf16.msra.mxu0 0
    %2132 = vmatpush.bf16.msra.mxu0 %v2060
    %2133 = vmatpush.bf16.msra.mxu0 %v2056
    %2134 = vmatmul.bf16.gmra.mxu0 %v1084
    %v2135 = vpop.f32.mrf.mxu0
    %v2136 = vadd.f32 %v2024, %v2135
    %v2137 = vpop.f32.mrf.mxu0
    %v2138 = vadd.f32 %v2024, %v2137
    %2139 = vmatmul.bf16.gmra.mxu0 %v1087
    %v2140 = vpop.f32.mrf.mxu0
    %v2141 = vadd.f32 %v2024, %v2140
    %v2142 = vpop.f32.mrf.mxu0
    %v2143 = vadd.f32 %v2024, %v2142
    %2144 = vdwg.mxu0
    %v2145 = vmax.f32 %v2079, 0.0
    %v2146 = vmax.f32 %v2098, 0.0
    %v2147 = vmax.f32 %v2117, 0.0
    %v2148 = vmax.f32 %v2136, 0.0
    %v2149 = vmax.f32 %v2081, 0.0
    %v2150 = vmax.f32 %v2100, 0.0
    %v2151 = vmax.f32 %v2119, 0.0
    %v2152 = vmax.f32 %v2138, 0.0
    %v2153 = vmax.f32 %v2084, 0.0
    %v2154 = vmax.f32 %v2103, 0.0
    %v2155 = vmax.f32 %v2122, 0.0
    %v2156 = vmax.f32 %v2141, 0.0
    %v2157 = vmax.f32 %v2086, 0.0
    %v2158 = vmax.f32 %v2105, 0.0
    %v2159 = vmax.f32 %v2124, 0.0
    %v2160 = vmax.f32 %v2143, 0.0
    %v2161 = vpack.c.bf16 %v2149, %v2145
    %v2162 = vpack.c.bf16 %v2150, %v2146
    %v2163 = vpack.c.bf16 %v2151, %v2147
    %v2164 = vpack.c.bf16 %v2152, %v2148
    %v2165 = vpack.c.bf16 %v2157, %v2153
    %v2166 = vpack.c.bf16 %v2158, %v2154
    %v2167 = vpack.c.bf16 %v2159, %v2155
    %v2168 = vpack.c.bf16 %v2160, %v2156
    %v2169 = vld [vmem:[%s15 + $0x200] sm:$0xf]
    %v2170 = vld [vmem:[%s15 + $0x204] sm:$0xf]
    %v2171 = vld [vmem:[%s15 + $0x208] sm:$0xf]
    %v2172 = vld [vmem:[%s15 + $0x20c] sm:$0xf]
    %v2173 = vld [vmem:[%s15 + $0x210] sm:$0xf]
    %v2174 = vld [vmem:[%s15 + $0x214] sm:$0xf]
    %v2175 = vld [vmem:[%s15 + $0x218] sm:$0xf]
    %v2176 = vld [vmem:[%s15 + $0x21c] sm:$0xf]
    %v2177 = vld [vmem:[%s15 + $0x220] sm:$0xf]
    %v2178 = vld [vmem:[%s15 + $0x224] sm:$0xf]
    %v2179 = vld [vmem:[%s15 + $0x228] sm:$0xf]
    %v2180 = vld [vmem:[%s15 + $0x22c] sm:$0xf]
    %v2181 = vld [vmem:[%s15 + $0x230] sm:$0xf]
    %v2182 = vld [vmem:[%s15 + $0x234] sm:$0xf]
    %v2183 = vld [vmem:[%s15 + $0x238] sm:$0xf]
    %v2184 = vld [vmem:[%s15 + $0x23c] sm:$0xf]
    %v2185 = vld [vmem:[%s15 + $0x240] sm:$0xf]
    %v2186 = vld [vmem:[%s15 + $0x244] sm:$0xf]
    %v2187 = vld [vmem:[%s15 + $0x248] sm:$0xf]
    %v2188 = vld [vmem:[%s15 + $0x24c] sm:$0xf]
    %v2189 = vld [vmem:[%s15 + $0x250] sm:$0xf]
    %v2190 = vld [vmem:[%s15 + $0x254] sm:$0xf]
    %v2191 = vld [vmem:[%s15 + $0x258] sm:$0xf]
    %v2192 = vld [vmem:[%s15 + $0x25c] sm:$0xf]
    %v2193 = vld [vmem:[%s15 + $0x260] sm:$0xf]
    %v2194 = vld [vmem:[%s15 + $0x264] sm:$0xf]
    %v2195 = vld [vmem:[%s15 + $0x268] sm:$0xf]
    %v2196 = vld [vmem:[%s15 + $0x26c] sm:$0xf]
    %v2197 = vld [vmem:[%s15 + $0x270] sm:$0xf]
    %v2198 = vld [vmem:[%s15 + $0x274] sm:$0xf]
    %v2199 = vld [vmem:[%s15 + $0x278] sm:$0xf]
    %v2200 = vld [vmem:[%s15 + $0x27c] sm:$0xf]
    %v2201 = vld [vmem:[%s15 + $0x280] sm:$0xf]
    %v2202 = vld [vmem:[%s15 + $0x284] sm:$0xf]
    %v2203 = vld [vmem:[%s15 + $0x288] sm:$0xf]
    %v2204 = vld [vmem:[%s15 + $0x28c] sm:$0xf]
    %v2205 = vld [vmem:[%s15 + $0x290] sm:$0xf]
    %v2206 = vld [vmem:[%s15 + $0x294] sm:$0xf]
    %v2207 = vld [vmem:[%s15 + $0x298] sm:$0xf]
    %v2208 = vld [vmem:[%s15 + $0x29c] sm:$0xf]
    %v2209 = vld [vmem:[%s15 + $0x2a0] sm:$0xf]
    %v2210 = vld [vmem:[%s15 + $0x2a4] sm:$0xf]
    %v2211 = vld [vmem:[%s15 + $0x2a8] sm:$0xf]
    %v2212 = vld [vmem:[%s15 + $0x2ac] sm:$0xf]
    %v2213 = vld [vmem:[%s15 + $0x2b0] sm:$0xf]
    %v2214 = vld [vmem:[%s15 + $0x2b4] sm:$0xf]
    %v2215 = vld [vmem:[%s15 + $0x2b8] sm:$0xf]
    %v2216 = vld [vmem:[%s15 + $0x2bc] sm:$0xf]
    %v2217 = vld [vmem:[%s15 + $0x2c0] sm:$0xf]
    %v2218 = vld [vmem:[%s15 + $0x2c4] sm:$0xf]
    %v2219 = vld [vmem:[%s15 + $0x2c8] sm:$0xf]
    %v2220 = vld [vmem:[%s15 + $0x2cc] sm:$0xf]
    %v2221 = vld [vmem:[%s15 + $0x2d0] sm:$0xf]
    %v2222 = vld [vmem:[%s15 + $0x2d4] sm:$0xf]
    %v2223 = vld [vmem:[%s15 + $0x2d8] sm:$0xf]
    %v2224 = vld [vmem:[%s15 + $0x2dc] sm:$0xf]
    %v2225 = vld [vmem:[%s15 + $0x2e0] sm:$0xf]
    %v2226 = vld [vmem:[%s15 + $0x2e4] sm:$0xf]
    %v2227 = vld [vmem:[%s15 + $0x2e8] sm:$0xf]
    %v2228 = vld [vmem:[%s15 + $0x2ec] sm:$0xf]
    %v2229 = vld [vmem:[%s15 + $0x2f0] sm:$0xf]
    %v2230 = vld [vmem:[%s15 + $0x2f4] sm:$0xf]
    %v2231 = vld [vmem:[%s15 + $0x2f8] sm:$0xf]
    %v2232 = vld [vmem:[%s15 + $0x2fc] sm:$0xf]
    %v2297 = vunpack.c.l.b16 %v2169
    %v2298 = vunpack.c.l.b16 %v2170
    %v2299 = vunpack.c.l.b16 %v2171
    %v2300 = vunpack.c.l.b16 %v2172
    %v2301 = vunpack.c.l.b16 %v2173
    %v2302 = vunpack.c.l.b16 %v2174
    %v2303 = vunpack.c.l.b16 %v2175
    %v2304 = vunpack.c.l.b16 %v2176
    %v2305 = vunpack.c.l.b16 %v2177
    %v2306 = vunpack.c.l.b16 %v2178
    %v2307 = vunpack.c.l.b16 %v2179
    %v2308 = vunpack.c.l.b16 %v2180
    %v2309 = vunpack.c.l.b16 %v2181
    %v2310 = vunpack.c.l.b16 %v2182
    %v2311 = vunpack.c.l.b16 %v2183
    %v2312 = vunpack.c.l.b16 %v2184
    %v2313 = vunpack.c.l.b16 %v2185
    %v2314 = vunpack.c.l.b16 %v2186
    %v2315 = vunpack.c.l.b16 %v2187
    %v2316 = vunpack.c.l.b16 %v2188
    %v2317 = vunpack.c.l.b16 %v2189
    %v2318 = vunpack.c.l.b16 %v2190
    %v2319 = vunpack.c.l.b16 %v2191
    %v2320 = vunpack.c.l.b16 %v2192
    %v2321 = vunpack.c.l.b16 %v2193
    %v2322 = vunpack.c.l.b16 %v2194
    %v2323 = vunpack.c.l.b16 %v2195
    %v2324 = vunpack.c.l.b16 %v2196
    %v2325 = vunpack.c.l.b16 %v2197
    %v2326 = vunpack.c.l.b16 %v2198
    %v2327 = vunpack.c.l.b16 %v2199
    %v2328 = vunpack.c.l.b16 %v2200
    %v2329 = vunpack.c.l.b16 %v2201
    %v2330 = vunpack.c.l.b16 %v2202
    %v2331 = vunpack.c.l.b16 %v2203
    %v2332 = vunpack.c.l.b16 %v2204
    %v2333 = vunpack.c.l.b16 %v2205
    %v2334 = vunpack.c.l.b16 %v2206
    %v2335 = vunpack.c.l.b16 %v2207
    %v2336 = vunpack.c.l.b16 %v2208
    %v2337 = vunpack.c.l.b16 %v2209
    %v2338 = vunpack.c.l.b16 %v2210
    %v2339 = vunpack.c.l.b16 %v2211
    %v2340 = vunpack.c.l.b16 %v2212
    %v2341 = vunpack.c.l.b16 %v2213
    %v2342 = vunpack.c.l.b16 %v2214
    %v2343 = vunpack.c.l.b16 %v2215
    %v2344 = vunpack.c.l.b16 %v2216
    %v2345 = vunpack.c.l.b16 %v2217
    %v2346 = vunpack.c.l.b16 %v2218
    %v2347 = vunpack.c.l.b16 %v2219
    %v2348 = vunpack.c.l.b16 %v2220
    %v2349 = vunpack.c.l.b16 %v2221
    %v2350 = vunpack.c.l.b16 %v2222
    %v2351 = vunpack.c.l.b16 %v2223
    %v2352 = vunpack.c.l.b16 %v2224
    %v2353 = vunpack.c.l.b16 %v2225
    %v2354 = vunpack.c.l.b16 %v2226
    %v2355 = vunpack.c.l.b16 %v2227
    %v2356 = vunpack.c.l.b16 %v2228
    %v2357 = vunpack.c.l.b16 %v2229
    %v2358 = vunpack.c.l.b16 %v2230
    %v2359 = vunpack.c.l.b16 %v2231
    %v2360 = vunpack.c.l.b16 %v2232
    %v2361 = vpack.c.b16 %v2298, %v2297
    %v2362 = vpack.c.b16 %v2300, %v2299
    %v2363 = vpack.c.b16 %v2302, %v2301
    %v2364 = vpack.c.b16 %v2304, %v2303
    %v2365 = vpack.c.b16 %v2306, %v2305
    %v2366 = vpack.c.b16 %v2308, %v2307
    %v2367 = vpack.c.b16 %v2310, %v2309
    %v2368 = vpack.c.b16 %v2312, %v2311
    %v2369 = vpack.c.b16 %v2314, %v2313
    %v2370 = vpack.c.b16 %v2316, %v2315
    %v2371 = vpack.c.b16 %v2318, %v2317
    %v2372 = vpack.c.b16 %v2320, %v2319
    %v2373 = vpack.c.b16 %v2322, %v2321
    %v2374 = vpack.c.b16 %v2324, %v2323
    %v2375 = vpack.c.b16 %v2326, %v2325
    %v2376 = vpack.c.b16 %v2328, %v2327
    %v2377 = vpack.c.b16 %v2330, %v2329
    %v2378 = vpack.c.b16 %v2332, %v2331
    %v2379 = vpack.c.b16 %v2334, %v2333
    %v2380 = vpack.c.b16 %v2336, %v2335
    %v2381 = vpack.c.b16 %v2338, %v2337
    %v2382 = vpack.c.b16 %v2340, %v2339
    %v2383 = vpack.c.b16 %v2342, %v2341
    %v2384 = vpack.c.b16 %v2344, %v2343
    %v2385 = vpack.c.b16 %v2346, %v2345
    %v2386 = vpack.c.b16 %v2348, %v2347
    %v2387 = vpack.c.b16 %v2350, %v2349
    %v2388 = vpack.c.b16 %v2352, %v2351
    %v2389 = vpack.c.b16 %v2354, %v2353
    %v2390 = vpack.c.b16 %v2356, %v2355
    %v2391 = vpack.c.b16 %v2358, %v2357
    %v2392 = vpack.c.b16 %v2360, %v2359
    %2425 = vmatpush.bf16.msra.mxu0 %v2368
    %2426 = vmatpush.bf16.msra.mxu0 %v2367
    %2427 = vmatpush.bf16.msra.mxu0 %v2366
    %2428 = vmatpush.bf16.msra.mxu0 %v2365
    %2429 = vmatpush.bf16.msra.mxu0 %v2364
    %2430 = vmatpush.bf16.msra.mxu0 %v2363
    %2431 = vmatpush.bf16.msra.mxu0 %v2362
    %2432 = vmatpush.bf16.msra.mxu0 %v2361
    %2433 = vmatmul.bf16.gmra.mxu0 %v2161
    %v2434 = vpop.f32.mrf.mxu0
    %v2435 = vadd.f32 0.0, %v2434
    %v2436 = vpop.f32.mrf.mxu0
    %v2437 = vadd.f32 0.0, %v2436
    %2438 = vmatmul.bf16.gmra.mxu0 %v2165
    %v2439 = vpop.f32.mrf.mxu0
    %v2440 = vadd.f32 0.0, %v2439
    %v2441 = vpop.f32.mrf.mxu0
    %v2442 = vadd.f32 0.0, %v2441
    %2443 = vdwg.mxu0
    %2444 = vmatpush.bf16.msra.mxu0 %v2376
    %2445 = vmatpush.bf16.msra.mxu0 %v2375
    %2446 = vmatpush.bf16.msra.mxu0 %v2374
    %2447 = vmatpush.bf16.msra.mxu0 %v2373
    %2448 = vmatpush.bf16.msra.mxu0 %v2372
    %2449 = vmatpush.bf16.msra.mxu0 %v2371
    %2450 = vmatpush.bf16.msra.mxu0 %v2370
    %2451 = vmatpush.bf16.msra.mxu0 %v2369
    %2452 = vmatmul.bf16.gmra.mxu0 %v2162
    %v2453 = vpop.f32.mrf.mxu0
    %v2454 = vadd.f32 %v2435, %v2453
    %v2455 = vpop.f32.mrf.mxu0
    %v2456 = vadd.f32 %v2437, %v2455
    %2457 = vmatmul.bf16.gmra.mxu0 %v2166
    %v2458 = vpop.f32.mrf.mxu0
    %v2459 = vadd.f32 %v2440, %v2458
    %v2460 = vpop.f32.mrf.mxu0
    %v2461 = vadd.f32 %v2442, %v2460
    %2462 = vdwg.mxu0
    %2463 = vmatpush.bf16.msra.mxu0 %v2384
    %2464 = vmatpush.bf16.msra.mxu0 %v2383
    %2465 = vmatpush.bf16.msra.mxu0 %v2382
    %2466 = vmatpush.bf16.msra.mxu0 %v2381
    %2467 = vmatpush.bf16.msra.mxu0 %v2380
    %2468 = vmatpush.bf16.msra.mxu0 %v2379
    %2469 = vmatpush.bf16.msra.mxu0 %v2378
    %2470 = vmatpush.bf16.msra.mxu0 %v2377
    %2471 = vmatmul.bf16.gmra.mxu0 %v2163
    %v2472 = vpop.f32.mrf.mxu0
    %v2473 = vadd.f32 %v2454, %v2472
    %v2474 = vpop.f32.mrf.mxu0
    %v2475 = vadd.f32 %v2456, %v2474
    %2476 = vmatmul.bf16.gmra.mxu0 %v2167
    %v2477 = vpop.f32.mrf.mxu0
    %v2478 = vadd.f32 %v2459, %v2477
    %v2479 = vpop.f32.mrf.mxu0
    %v2480 = vadd.f32 %v2461, %v2479
    %2481 = vdwg.mxu0
    %2482 = vmatpush.bf16.msra.mxu0 %v2392
    %2483 = vmatpush.bf16.msra.mxu0 %v2391
    %2484 = vmatpush.bf16.msra.mxu0 %v2390
    %2485 = vmatpush.bf16.msra.mxu0 %v2389
    %2486 = vmatpush.bf16.msra.mxu0 %v2388
    %2487 = vmatpush.bf16.msra.mxu0 %v2387
    %2488 = vmatpush.bf16.msra.mxu0 %v2386
    %2489 = vmatpush.bf16.msra.mxu0 %v2385
    %2490 = vmatmul.bf16.gmra.mxu0 %v2164
    %v2491 = vpop.f32.mrf.mxu0
    %v2492 = vadd.f32 %v2473, %v2491
    %v2493 = vpop.f32.mrf.mxu0
    %v2494 = vadd.f32 %v2475, %v2493
    %2495 = vmatmul.bf16.gmra.mxu0 %v2168
    %v2496 = vpop.f32.mrf.mxu0
    %v2497 = vadd.f32 %v2478, %v2496
    %v2498 = vpop.f32.mrf.mxu0
    %v2499 = vadd.f32 %v2480, %v2498
    %2500 = vdwg.mxu0
    %v2501 = vadd.f32 %v2002, %v2492
    %v2502 = vadd.f32 %v2004, %v2494
    %v2503 = vadd.f32 %v2007, %v2497
    %v2504 = vadd.f32 %v2009, %v2499
    %v2505 = vld [vmem:[%s13 + $0x30] sm:$0xff]
    %v2506 = vld [vmem:[%s13 + $0x38] sm:$0xff]
    %v2507 = vld [vmem:[%s13 + $0x70] sm:$0xff]
    %v2508 = vld [vmem:[%s13 + $0x78] sm:$0xff]
    %v2509 = vld [vmem:[%s13 + $0xb0] sm:$0xff]
    %v2510 = vld [vmem:[%s13 + $0xb8] sm:$0xff]
    %v2511 = vld [vmem:[%s13 + $0xf0] sm:$0xff]
    %v2512 = vld [vmem:[%s13 + $0xf8] sm:$0xff]
    %v2513 = vld [vmem:[%s14 + $0xc] sm:$0xf]
    %v2515 = vperm.slane %v2513, 0
    %v2516 = vperm.slane %v2513, 1
    %v2517 = vperm.slane %v2513, 2
    %v2518 = vperm.slane %v2513, 3
    %v2531 = vunpack.c.l.b16 %v2505
    %v2532 = vunpack.c.h.b16 %v2505
    %v2533 = vunpack.c.l.b16 %v2506
    %v2534 = vunpack.c.h.b16 %v2506
    %v2535 = vunpack.c.l.b16 %v2507
    %v2536 = vunpack.c.h.b16 %v2507
    %v2537 = vunpack.c.l.b16 %v2508
    %v2538 = vunpack.c.h.b16 %v2508
    %v2539 = vunpack.c.l.b16 %v2509
    %v2540 = vunpack.c.h.b16 %v2509
    %v2541 = vunpack.c.l.b16 %v2510
    %v2542 = vunpack.c.h.b16 %v2510
    %v2543 = vunpack.c.l.b16 %v2511
    %v2544 = vunpack.c.h.b16 %v2511
    %v2545 = vunpack.c.l.b16 %v2512
    %v2546 = vunpack.c.h.b16 %v2512
    %v2547 = vpack.c.b16 %v2535, %v2531
    %v2548 = vpack.c.b16 %v2536, %v2532
    %v2549 = vpack.c.b16 %v2537, %v2533
    %v2550 = vpack.c.b16 %v2538, %v2534
    %v2551 = vpack.c.b16 %v2543, %v2539
    %v2552 = vpack.c.b16 %v2544, %v2540
    %v2553 = vpack.c.b16 %v2545, %v2541
    %v2554 = vpack.c.b16 %v2546, %v2542
    %2563 = vmatpush.bf16.msra.mxu0 0
    %2564 = vmatpush.bf16.msra.mxu0 0
    %2565 = vmatpush.bf16.msra.mxu0 0
    %2566 = vmatpush.bf16.msra.mxu0 0
    %2567 = vmatpush.bf16.msra.mxu0 0
    %2568 = vmatpush.bf16.msra.mxu0 0
    %2569 = vmatpush.bf16.msra.mxu0 %v2551
    %2570 = vmatpush.bf16.msra.mxu0 %v2547
    %2571 = vmatmul.bf16.gmra.mxu0 %v1084
    %v2572 = vpop.f32.mrf.mxu0
    %v2573 = vadd.f32 %v2515, %v2572
    %v2574 = vpop.f32.mrf.mxu0
    %v2575 = vadd.f32 %v2515, %v2574
    %2576 = vmatmul.bf16.gmra.mxu0 %v1087
    %v2577 = vpop.f32.mrf.mxu0
    %v2578 = vadd.f32 %v2515, %v2577
    %v2579 = vpop.f32.mrf.mxu0
    %v2580 = vadd.f32 %v2515, %v2579
    %2581 = vdwg.mxu0
    %2582 = vmatpush.bf16.msra.mxu0 0
    %2583 = vmatpush.bf16.msra.mxu0 0
    %2584 = vmatpush.bf16.msra.mxu0 0
    %2585 = vmatpush.bf16.msra.mxu0 0
    %2586 = vmatpush.bf16.msra.mxu0 0
    %2587 = vmatpush.bf16.msra.mxu0 0
    %2588 = vmatpush.bf16.msra.mxu0 %v2552
    %2589 = vmatpush.bf16.msra.mxu0 %v2548
    %2590 = vmatmul.bf16.gmra.mxu0 %v1084
    %v2591 = vpop.f32.mrf.mxu0
    %v2592 = vadd.f32 %v2516, %v2591
    %v2593 = vpop.f32.mrf.mxu0
    %v2594 = vadd.f32 %v2516, %v2593
    %2595 = vmatmul.bf16.gmra.mxu0 %v1087
    %v2596 = vpop.f32.mrf.mxu0
    %v2597 = vadd.f32 %v2516, %v2596
    %v2598 = vpop.f32.mrf.mxu0
    %v2599 = vadd.f32 %v2516, %v2598
    %2600 = vdwg.mxu0
    %2601 = vmatpush.bf16.msra.mxu0 0
    %2602 = vmatpush.bf16.msra.mxu0 0
    %2603 = vmatpush.bf16.msra.mxu0 0
    %2604 = vmatpush.bf16.msra.mxu0 0
    %2605 = vmatpush.bf16.msra.mxu0 0
    %2606 = vmatpush.bf16.msra.mxu0 0
    %2607 = vmatpush.bf16.msra.mxu0 %v2553
    %2608 = vmatpush.bf16.msra.mxu0 %v2549
    %2609 = vmatmul.bf16.gmra.mxu0 %v1084
    %v2610 = vpop.f32.mrf.mxu0
    %v2611 = vadd.f32 %v2517, %v2610
    %v2612 = vpop.f32.mrf.mxu0
    %v2613 = vadd.f32 %v2517, %v2612
    %2614 = vmatmul.bf16.gmra.mxu0 %v1087
    %v2615 = vpop.f32.mrf.mxu0
    %v2616 = vadd.f32 %v2517, %v2615
    %v2617 = vpop.f32.mrf.mxu0
    %v2618 = vadd.f32 %v2517, %v2617
    %2619 = vdwg.mxu0
    %2620 = vmatpush.bf16.msra.mxu0 0
    %2621 = vmatpush.bf16.msra.mxu0 0
    %2622 = vmatpush.bf16.msra.mxu0 0
    %2623 = vmatpush.bf16.msra.mxu0 0
    %2624 = vmatpush.bf16.msra.mxu0 0
    %2625 = vmatpush.bf16.msra.mxu0 0
    %2626 = vmatpush.bf16.msra.mxu0 %v2554
    %2627 = vmatpush.bf16.msra.mxu0 %v2550
    %2628 = vmatmul.bf16.gmra.mxu0 %v1084
    %v2629 = vpop.f32.mrf.mxu0
    %v2630 = vadd.f32 %v2518, %v2629
    %v2631 = vpop.f32.mrf.mxu0
    %v2632 = vadd.f32 %v2518, %v2631
    %2633 = vmatmul.bf16.gmra.mxu0 %v1087
    %v2634 = vpop.f32.mrf.mxu0
    %v2635 = vadd.f32 %v2518, %v2634
    %v2636 = vpop.f32.mrf.mxu0
    %v2637 = vadd.f32 %v2518, %v2636
    %2638 = vdwg.mxu0
    %v2639 = vmax.f32 %v2573, 0.0
    %v2640 = vmax.f32 %v2592, 0.0
    %v2641 = vmax.f32 %v2611, 0.0
    %v2642 = vmax.f32 %v2630, 0.0
    %v2643 = vmax.f32 %v2575, 0.0
    %v2644 = vmax.f32 %v2594, 0.0
    %v2645 = vmax.f32 %v2613, 0.0
    %v2646 = vmax.f32 %v2632, 0.0
    %v2647 = vmax.f32 %v2578, 0.0
    %v2648 = vmax.f32 %v2597, 0.0
    %v2649 = vmax.f32 %v2616, 0.0
    %v2650 = vmax.f32 %v2635, 0.0
    %v2651 = vmax.f32 %v2580, 0.0
    %v2652 = vmax.f32 %v2599, 0.0
    %v2653 = vmax.f32 %v2618, 0.0
    %v2654 = vmax.f32 %v2637, 0.0
    %v2655 = vpack.c.bf16 %v2643, %v2639
    %v2656 = vpack.c.bf16 %v2644, %v2640
    %v2657 = vpack.c.bf16 %v2645, %v2641
    %v2658 = vpack.c.bf16 %v2646, %v2642
    %v2659 = vpack.c.bf16 %v2651, %v2647
    %v2660 = vpack.c.bf16 %v2652, %v2648
    %v2661 = vpack.c.bf16 %v2653, %v2649
    %v2662 = vpack.c.bf16 %v2654, %v2650
    %v2663 = vld [vmem:[%s15 + $0x300] sm:$0xf]
    %v2664 = vld [vmem:[%s15 + $0x304] sm:$0xf]
    %v2665 = vld [vmem:[%s15 + $0x308] sm:$0xf]
    %v2666 = vld [vmem:[%s15 + $0x30c] sm:$0xf]
    %v2667 = vld [vmem:[%s15 + $0x310] sm:$0xf]
    %v2668 = vld [vmem:[%s15 + $0x314] sm:$0xf]
    %v2669 = vld [vmem:[%s15 + $0x318] sm:$0xf]
    %v2670 = vld [vmem:[%s15 + $0x31c] sm:$0xf]
    %v2671 = vld [vmem:[%s15 + $0x320] sm:$0xf]
    %v2672 = vld [vmem:[%s15 + $0x324] sm:$0xf]
    %v2673 = vld [vmem:[%s15 + $0x328] sm:$0xf]
    %v2674 = vld [vmem:[%s15 + $0x32c] sm:$0xf]
    %v2675 = vld [vmem:[%s15 + $0x330] sm:$0xf]
    %v2676 = vld [vmem:[%s15 + $0x334] sm:$0xf]
    %v2677 = vld [vmem:[%s15 + $0x338] sm:$0xf]
    %v2678 = vld [vmem:[%s15 + $0x33c] sm:$0xf]
    %v2679 = vld [vmem:[%s15 + $0x340] sm:$0xf]
    %v2680 = vld [vmem:[%s15 + $0x344] sm:$0xf]
    %v2681 = vld [vmem:[%s15 + $0x348] sm:$0xf]
    %v2682 = vld [vmem:[%s15 + $0x34c] sm:$0xf]
    %v2683 = vld [vmem:[%s15 + $0x350] sm:$0xf]
    %v2684 = vld [vmem:[%s15 + $0x354] sm:$0xf]
    %v2685 = vld [vmem:[%s15 + $0x358] sm:$0xf]
    %v2686 = vld [vmem:[%s15 + $0x35c] sm:$0xf]
    %v2687 = vld [vmem:[%s15 + $0x360] sm:$0xf]
    %v2688 = vld [vmem:[%s15 + $0x364] sm:$0xf]
    %v2689 = vld [vmem:[%s15 + $0x368] sm:$0xf]
    %v2690 = vld [vmem:[%s15 + $0x36c] sm:$0xf]
    %v2691 = vld [vmem:[%s15 + $0x370] sm:$0xf]
    %v2692 = vld [vmem:[%s15 + $0x374] sm:$0xf]
    %v2693 = vld [vmem:[%s15 + $0x378] sm:$0xf]
    %v2694 = vld [vmem:[%s15 + $0x37c] sm:$0xf]
    %v2695 = vld [vmem:[%s15 + $0x380] sm:$0xf]
    %v2696 = vld [vmem:[%s15 + $0x384] sm:$0xf]
    %v2697 = vld [vmem:[%s15 + $0x388] sm:$0xf]
    %v2698 = vld [vmem:[%s15 + $0x38c] sm:$0xf]
    %v2699 = vld [vmem:[%s15 + $0x390] sm:$0xf]
    %v2700 = vld [vmem:[%s15 + $0x394] sm:$0xf]
    %v2701 = vld [vmem:[%s15 + $0x398] sm:$0xf]
    %v2702 = vld [vmem:[%s15 + $0x39c] sm:$0xf]
    %v2703 = vld [vmem:[%s15 + $0x3a0] sm:$0xf]
    %v2704 = vld [vmem:[%s15 + $0x3a4] sm:$0xf]
    %v2705 = vld [vmem:[%s15 + $0x3a8] sm:$0xf]
    %v2706 = vld [vmem:[%s15 + $0x3ac] sm:$0xf]
    %v2707 = vld [vmem:[%s15 + $0x3b0] sm:$0xf]
    %v2708 = vld [vmem:[%s15 + $0x3b4] sm:$0xf]
    %v2709 = vld [vmem:[%s15 + $0x3b8] sm:$0xf]
    %v2710 = vld [vmem:[%s15 + $0x3bc] sm:$0xf]
    %v2711 = vld [vmem:[%s15 + $0x3c0] sm:$0xf]
    %v2712 = vld [vmem:[%s15 + $0x3c4] sm:$0xf]
    %v2713 = vld [vmem:[%s15 + $0x3c8] sm:$0xf]
    %v2714 = vld [vmem:[%s15 + $0x3cc] sm:$0xf]
    %v2715 = vld [vmem:[%s15 + $0x3d0] sm:$0xf]
    %v2716 = vld [vmem:[%s15 + $0x3d4] sm:$0xf]
    %v2717 = vld [vmem:[%s15 + $0x3d8] sm:$0xf]
    %v2718 = vld [vmem:[%s15 + $0x3dc] sm:$0xf]
    %v2719 = vld [vmem:[%s15 + $0x3e0] sm:$0xf]
    %v2720 = vld [vmem:[%s15 + $0x3e4] sm:$0xf]
    %v2721 = vld [vmem:[%s15 + $0x3e8] sm:$0xf]
    %v2722 = vld [vmem:[%s15 + $0x3ec] sm:$0xf]
    %v2723 = vld [vmem:[%s15 + $0x3f0] sm:$0xf]
    %v2724 = vld [vmem:[%s15 + $0x3f4] sm:$0xf]
    %v2725 = vld [vmem:[%s15 + $0x3f8] sm:$0xf]
    %v2726 = vld [vmem:[%s15 + $0x3fc] sm:$0xf]
    %v2791 = vunpack.c.l.b16 %v2663
    %v2792 = vunpack.c.l.b16 %v2664
    %v2793 = vunpack.c.l.b16 %v2665
    %v2794 = vunpack.c.l.b16 %v2666
    %v2795 = vunpack.c.l.b16 %v2667
    %v2796 = vunpack.c.l.b16 %v2668
    %v2797 = vunpack.c.l.b16 %v2669
    %v2798 = vunpack.c.l.b16 %v2670
    %v2799 = vunpack.c.l.b16 %v2671
    %v2800 = vunpack.c.l.b16 %v2672
    %v2801 = vunpack.c.l.b16 %v2673
    %v2802 = vunpack.c.l.b16 %v2674
    %v2803 = vunpack.c.l.b16 %v2675
    %v2804 = vunpack.c.l.b16 %v2676
    %v2805 = vunpack.c.l.b16 %v2677
    %v2806 = vunpack.c.l.b16 %v2678
    %v2807 = vunpack.c.l.b16 %v2679
    %v2808 = vunpack.c.l.b16 %v2680
    %v2809 = vunpack.c.l.b16 %v2681
    %v2810 = vunpack.c.l.b16 %v2682
    %v2811 = vunpack.c.l.b16 %v2683
    %v2812 = vunpack.c.l.b16 %v2684
    %v2813 = vunpack.c.l.b16 %v2685
    %v2814 = vunpack.c.l.b16 %v2686
    %v2815 = vunpack.c.l.b16 %v2687
    %v2816 = vunpack.c.l.b16 %v2688
    %v2817 = vunpack.c.l.b16 %v2689
    %v2818 = vunpack.c.l.b16 %v2690
    %v2819 = vunpack.c.l.b16 %v2691
    %v2820 = vunpack.c.l.b16 %v2692
    %v2821 = vunpack.c.l.b16 %v2693
    %v2822 = vunpack.c.l.b16 %v2694
    %v2823 = vunpack.c.l.b16 %v2695
    %v2824 = vunpack.c.l.b16 %v2696
    %v2825 = vunpack.c.l.b16 %v2697
    %v2826 = vunpack.c.l.b16 %v2698
    %v2827 = vunpack.c.l.b16 %v2699
    %v2828 = vunpack.c.l.b16 %v2700
    %v2829 = vunpack.c.l.b16 %v2701
    %v2830 = vunpack.c.l.b16 %v2702
    %v2831 = vunpack.c.l.b16 %v2703
    %v2832 = vunpack.c.l.b16 %v2704
    %v2833 = vunpack.c.l.b16 %v2705
    %v2834 = vunpack.c.l.b16 %v2706
    %v2835 = vunpack.c.l.b16 %v2707
    %v2836 = vunpack.c.l.b16 %v2708
    %v2837 = vunpack.c.l.b16 %v2709
    %v2838 = vunpack.c.l.b16 %v2710
    %v2839 = vunpack.c.l.b16 %v2711
    %v2840 = vunpack.c.l.b16 %v2712
    %v2841 = vunpack.c.l.b16 %v2713
    %v2842 = vunpack.c.l.b16 %v2714
    %v2843 = vunpack.c.l.b16 %v2715
    %v2844 = vunpack.c.l.b16 %v2716
    %v2845 = vunpack.c.l.b16 %v2717
    %v2846 = vunpack.c.l.b16 %v2718
    %v2847 = vunpack.c.l.b16 %v2719
    %v2848 = vunpack.c.l.b16 %v2720
    %v2849 = vunpack.c.l.b16 %v2721
    %v2850 = vunpack.c.l.b16 %v2722
    %v2851 = vunpack.c.l.b16 %v2723
    %v2852 = vunpack.c.l.b16 %v2724
    %v2853 = vunpack.c.l.b16 %v2725
    %v2854 = vunpack.c.l.b16 %v2726
    %v2855 = vpack.c.b16 %v2792, %v2791
    %v2856 = vpack.c.b16 %v2794, %v2793
    %v2857 = vpack.c.b16 %v2796, %v2795
    %v2858 = vpack.c.b16 %v2798, %v2797
    %v2859 = vpack.c.b16 %v2800, %v2799
    %v2860 = vpack.c.b16 %v2802, %v2801
    %v2861 = vpack.c.b16 %v2804, %v2803
    %v2862 = vpack.c.b16 %v2806, %v2805
    %v2863 = vpack.c.b16 %v2808, %v2807
    %v2864 = vpack.c.b16 %v2810, %v2809
    %v2865 = vpack.c.b16 %v2812, %v2811
    %v2866 = vpack.c.b16 %v2814, %v2813
    %v2867 = vpack.c.b16 %v2816, %v2815
    %v2868 = vpack.c.b16 %v2818, %v2817
    %v2869 = vpack.c.b16 %v2820, %v2819
    %v2870 = vpack.c.b16 %v2822, %v2821
    %v2871 = vpack.c.b16 %v2824, %v2823
    %v2872 = vpack.c.b16 %v2826, %v2825
    %v2873 = vpack.c.b16 %v2828, %v2827
    %v2874 = vpack.c.b16 %v2830, %v2829
    %v2875 = vpack.c.b16 %v2832, %v2831
    %v2876 = vpack.c.b16 %v2834, %v2833
    %v2877 = vpack.c.b16 %v2836, %v2835
    %v2878 = vpack.c.b16 %v2838, %v2837
    %v2879 = vpack.c.b16 %v2840, %v2839
    %v2880 = vpack.c.b16 %v2842, %v2841
    %v2881 = vpack.c.b16 %v2844, %v2843
    %v2882 = vpack.c.b16 %v2846, %v2845
    %v2883 = vpack.c.b16 %v2848, %v2847
    %v2884 = vpack.c.b16 %v2850, %v2849
    %v2885 = vpack.c.b16 %v2852, %v2851
    %v2886 = vpack.c.b16 %v2854, %v2853
    %2919 = vmatpush.bf16.msra.mxu0 %v2862
    %2920 = vmatpush.bf16.msra.mxu0 %v2861
    %2921 = vmatpush.bf16.msra.mxu0 %v2860
    %2922 = vmatpush.bf16.msra.mxu0 %v2859
    %2923 = vmatpush.bf16.msra.mxu0 %v2858
    %2924 = vmatpush.bf16.msra.mxu0 %v2857
    %2925 = vmatpush.bf16.msra.mxu0 %v2856
    %2926 = vmatpush.bf16.msra.mxu0 %v2855
    %2927 = vmatmul.bf16.gmra.mxu0 %v2655
    %v2928 = vpop.f32.mrf.mxu0
    %v2929 = vadd.f32 0.0, %v2928
    %v2930 = vpop.f32.mrf.mxu0
    %v2931 = vadd.f32 0.0, %v2930
    %2932 = vmatmul.bf16.gmra.mxu0 %v2659
    %v2933 = vpop.f32.mrf.mxu0
    %v2934 = vadd.f32 0.0, %v2933
    %v2935 = vpop.f32.mrf.mxu0
    %v2936 = vadd.f32 0.0, %v2935
    %2937 = vdwg.mxu0
    %2938 = vmatpush.bf16.msra.mxu0 %v2870
    %2939 = vmatpush.bf16.msra.mxu0 %v2869
    %2940 = vmatpush.bf16.msra.mxu0 %v2868
    %2941 = vmatpush.bf16.msra.mxu0 %v2867
    %2942 = vmatpush.bf16.msra.mxu0 %v2866
    %2943 = vmatpush.bf16.msra.mxu0 %v2865
    %2944 = vmatpush.bf16.msra.mxu0 %v2864
    %2945 = vmatpush.bf16.msra.mxu0 %v2863
    %2946 = vmatmul.bf16.gmra.mxu0 %v2656
    %v2947 = vpop.f32.mrf.mxu0
    %v2948 = vadd.f32 %v2929, %v2947
    %v2949 = vpop.f32.mrf.mxu0
    %v2950 = vadd.f32 %v2931, %v2949
    %2951 = vmatmul.bf16.gmra.mxu0 %v2660
    %v2952 = vpop.f32.mrf.mxu0
    %v2953 = vadd.f32 %v2934, %v2952
    %v2954 = vpop.f32.mrf.mxu0
    %v2955 = vadd.f32 %v2936, %v2954
    %2956 = vdwg.mxu0
    %2957 = vmatpush.bf16.msra.mxu0 %v2878
    %2958 = vmatpush.bf16.msra.mxu0 %v2877
    %2959 = vmatpush.bf16.msra.mxu0 %v2876
    %2960 = vmatpush.bf16.msra.mxu0 %v2875
    %2961 = vmatpush.bf16.msra.mxu0 %v2874
    %2962 = vmatpush.bf16.msra.mxu0 %v2873
    %2963 = vmatpush.bf16.msra.mxu0 %v2872
    %2964 = vmatpush.bf16.msra.mxu0 %v2871
    %2965 = vmatmul.bf16.gmra.mxu0 %v2657
    %v2966 = vpop.f32.mrf.mxu0
    %v2967 = vadd.f32 %v2948, %v2966
    %v2968 = vpop.f32.mrf.mxu0
    %v2969 = vadd.f32 %v2950, %v2968
    %2970 = vmatmul.bf16.gmra.mxu0 %v2661
    %v2971 = vpop.f32.mrf.mxu0
    %v2972 = vadd.f32 %v2953, %v2971
    %v2973 = vpop.f32.mrf.mxu0
    %v2974 = vadd.f32 %v2955, %v2973
    %2975 = vdwg.mxu0
    %2976 = vmatpush.bf16.msra.mxu0 %v2886
    %2977 = vmatpush.bf16.msra.mxu0 %v2885
    %2978 = vmatpush.bf16.msra.mxu0 %v2884
    %2979 = vmatpush.bf16.msra.mxu0 %v2883
    %2980 = vmatpush.bf16.msra.mxu0 %v2882
    %2981 = vmatpush.bf16.msra.mxu0 %v2881
    %2982 = vmatpush.bf16.msra.mxu0 %v2880
    %2983 = vmatpush.bf16.msra.mxu0 %v2879
    %2984 = vmatmul.bf16.gmra.mxu0 %v2658
    %v2985 = vpop.f32.mrf.mxu0
    %v2986 = vadd.f32 %v2967, %v2985
    %v2987 = vpop.f32.mrf.mxu0
    %v2988 = vadd.f32 %v2969, %v2987
    %2989 = vmatmul.bf16.gmra.mxu0 %v2662
    %v2990 = vpop.f32.mrf.mxu0
    %v2991 = vadd.f32 %v2972, %v2990
    %v2992 = vpop.f32.mrf.mxu0
    %v2993 = vadd.f32 %v2974, %v2992
    %2994 = vdwg.mxu0
    %v2995 = vadd.f32 %v2501, %v2986
    %v2996 = vadd.f32 %v2502, %v2988
    %v2997 = vadd.f32 %v2503, %v2991
    %v2998 = vadd.f32 %v2504, %v2993
    %v2999 = vld [vmem:[%s16] sm:$0x1]
    %v3001 = vperm.slane %v2999, 0
    %v3003 = vadd.f32 %v2995, %v3001
    %v3004 = vadd.f32 %v2996, %v3001
    %v3005 = vadd.f32 %v2997, %v3001
    %v3006 = vadd.f32 %v2998, %v3001
    %v3007 = vadd.f32 %v1019, %v3003
    %v3008 = vadd.f32 %v1020, %v3004
    %v3009 = vadd.f32 %v1021, %v3005
    %v3010 = vadd.f32 %v1022, %v3006
    %v3011 = vld [vmem:[%s11] sm:$0x1]
    %v3012 = vld [vmem:[%s12] sm:$0x1]
    %v3013 = vsel %vm102, %v3007, 0.0
    %3014 = vadd.xlane.f32.xlu0 %v3013
    %v3015 = vpop.xlane.xlu0 %3014
    %v3016 = vsel %vm102, %v3008, 0.0
    %3017 = vadd.xlane.f32.xlu0 %v3016
    %v3018 = vpop.xlane.xlu0 %3017
    %v3019 = vsel %vm102, %v3009, 0.0
    %3020 = vadd.xlane.f32.xlu0 %v3019
    %v3021 = vpop.xlane.xlu0 %3020
    %v3022 = vsel %vm102, %v3010, 0.0
    %3023 = vadd.xlane.f32.xlu0 %v3022
    %v3024 = vpop.xlane.xlu0 %3023
    %v3025 = vmul.f32 %v3015, %v932
    %v3026 = vmul.f32 %v3018, %v932
    %v3027 = vmul.f32 %v3021, %v932
    %v3028 = vmul.f32 %v3024, %v932
    %v3029 = vsub.f32 %v3007, %v3025
    %v3030 = vsub.f32 %v3008, %v3026
    %v3031 = vsub.f32 %v3009, %v3027
    %v3032 = vsub.f32 %v3010, %v3028
    %v3033 = vmul.f32 %v3029, %v3029
    %v3034 = vmul.f32 %v3030, %v3030
    %v3035 = vmul.f32 %v3031, %v3031
    %v3036 = vmul.f32 %v3032, %v3032
    %v3037 = vsel %vm102, %v3033, 0.0
    %3038 = vadd.xlane.f32.xlu0 %v3037
    %v3039 = vpop.xlane.xlu0 %3038
    %v3040 = vsel %vm102, %v3034, 0.0
    %3041 = vadd.xlane.f32.xlu0 %v3040
    %v3042 = vpop.xlane.xlu0 %3041
    %v3043 = vsel %vm102, %v3035, 0.0
    %3044 = vadd.xlane.f32.xlu0 %v3043
    %v3045 = vpop.xlane.xlu0 %3044
    %v3046 = vsel %vm102, %v3036, 0.0
    %3047 = vadd.xlane.f32.xlu0 %v3046
    %v3048 = vpop.xlane.xlu0 %3047
    %v3049 = vmul.f32 %v3039, %v932
    %v3050 = vmul.f32 %v3042, %v932
    %v3051 = vmul.f32 %v3045, %v932
    %v3052 = vmul.f32 %v3048, %v932
    %v3053 = vadd.f32 %v3049, 1e-05
    %v3054 = vadd.f32 %v3050, 1e-05
    %v3055 = vadd.f32 %v3051, 1e-05
    %v3056 = vadd.f32 %v3052, 1e-05
    %v3057 = vrsqrt.pop %v3053
    %v3058 = vmul.f32 %v3057, %v3053
    %v3059 = vmul.f32 %v3058, %v3057
    %v3060 = vmul.f32 0.5, %v3059
    %v3061 = vsub.f32 1.5, %v3060
    %v3062 = vmul.f32 %v3057, %v3061
    %vm3063 = vweird.f32 %v3053
    %vm3064 = vweird.f32 %v3057
    %vm3065 = vmor %vm3063, %vm3064
    %v3066 = vsel %vm3065, %v3057, %v3062
    %v3067 = vrsqrt.pop %v3054
    %v3068 = vmul.f32 %v3067, %v3054
    %v3069 = vmul.f32 %v3068, %v3067
    %v3070 = vmul.f32 0.5, %v3069
    %v3071 = vsub.f32 1.5, %v3070
    %v3072 = vmul.f32 %v3067, %v3071
    %vm3073 = vweird.f32 %v3054
    %vm3074 = vweird.f32 %v3067
    %vm3075 = vmor %vm3073, %vm3074
    %v3076 = vsel %vm3075, %v3067, %v3072
    %v3077 = vrsqrt.pop %v3055
    %v3078 = vmul.f32 %v3077, %v3055
    %v3079 = vmul.f32 %v3078, %v3077
    %v3080 = vmul.f32 0.5, %v3079
    %v3081 = vsub.f32 1.5, %v3080
    %v3082 = vmul.f32 %v3077, %v3081
    %vm3083 = vweird.f32 %v3055
    %vm3084 = vweird.f32 %v3077
    %vm3085 = vmor %vm3083, %vm3084
    %v3086 = vsel %vm3085, %v3077, %v3082
    %v3087 = vrsqrt.pop %v3056
    %v3088 = vmul.f32 %v3087, %v3056
    %v3089 = vmul.f32 %v3088, %v3087
    %v3090 = vmul.f32 0.5, %v3089
    %v3091 = vsub.f32 1.5, %v3090
    %v3092 = vmul.f32 %v3087, %v3091
    %vm3093 = vweird.f32 %v3056
    %vm3094 = vweird.f32 %v3087
    %vm3095 = vmor %vm3093, %vm3094
    %v3096 = vsel %vm3095, %v3087, %v3092
    %v3097 = vmul.f32 %v3029, %v3066
    %v3098 = vmul.f32 %v3030, %v3076
    %v3099 = vmul.f32 %v3031, %v3086
    %v3100 = vmul.f32 %v3032, %v3096
    %v3102 = vperm.slane %v3011, 0
    %v3104 = vmul.f32 %v3097, %v3102
    %v3105 = vmul.f32 %v3098, %v3102
    %v3106 = vmul.f32 %v3099, %v3102
    %v3107 = vmul.f32 %v3100, %v3102
    %v3109 = vperm.slane %v3012, 0
    %v3111 = vadd.f32 %v3104, %v3109
    %v3112 = vadd.f32 %v3105, %v3109
    %v3113 = vadd.f32 %v3106, %v3109
    %v3114 = vadd.f32 %v3107, %v3109
    %v3115 = vpack.c.bf16 %v3112, %v3111
    %v3116 = vpack.c.bf16 %v3114, %v3113
    %s3117 = scalar_lea.vmem %s5, 16
    %v3118 = vld [vmem:[%s3117] sm:$0xf]
    %v3119 = vld [vmem:[%s3117 + $0x4] sm:$0xf]
    %v3120 = vld [vmem:[%s3117 + $0x8] sm:$0xf]
    %v3121 = vld [vmem:[%s3117 + $0xc] sm:$0xf]
    %s3122 = scalar_lea.vmem %s6, 1
    %v3123 = vld [vmem:[%s3122] sm:$0x1]
    %v3125 = vperm.slane %v3123, 0
    %v3131 = vunpack.c.l.b16 %v3118
    %v3132 = vunpack.c.l.b16 %v3119
    %v3133 = vunpack.c.l.b16 %v3120
    %v3134 = vunpack.c.l.b16 %v3121
    %v3135 = vpack.c.b16 %v3132, %v3131
    %v3136 = vpack.c.b16 %v3134, %v3133
    %v3140 = vsel %vm102, %v3115, 0
    %v3143 = vsel %vm102, %v3116, 0
    %3145 = vmatpush.bf16.msra.mxu0 0
    %3146 = vmatpush.bf16.msra.mxu0 0
    %3147 = vmatpush.bf16.msra.mxu0 0
    %3148 = vmatpush.bf16.msra.mxu0 0
    %3149 = vmatpush.bf16.msra.mxu0 0
    %3150 = vmatpush.bf16.msra.mxu0 0
    %3151 = vmatpush.bf16.msra.mxu0 %v3136
    %3152 = vmatpush.bf16.msra.mxu0 %v3135
    %3153 = vmatmul.bf16.gmra.mxu0 %v3140
    %v3154 = vpop.f32.mrf.mxu0
    %v3155 = vadd.f32 %v3125, %v3154
    %v3156 = vpop.f32.mrf.mxu0
    %v3157 = vadd.f32 %v3125, %v3156
    %3158 = vmatmul.bf16.gmra.mxu0 %v3143
    %v3159 = vpop.f32.mrf.mxu0
    %v3160 = vadd.f32 %v3125, %v3159
    %v3161 = vpop.f32.mrf.mxu0
    %v3162 = vadd.f32 %v3125, %v3161
    %3163 = vdwg.mxu0
    %v3164 = vpack.c.bf16 %v3155, %v3155
    %v3165 = vpack.c.bf16 %v3157, %v3157
    %v3166 = vpack.c.bf16 %v3160, %v3160
    %v3167 = vpack.c.bf16 %v3162, %v3162
    %v3170 = vunpack.c.l.b16 %v3164
    %v3171 = vunpack.c.l.b16 %v3165
    %v3172 = vpack.c.b16 %v3171, %v3170
    %3173 = vrot.lane.b32.xlu0 %v3172, 96
    %v3174 = vpop.permute.xlu0 %3173
    %v3176 = vsel %vm181, %v3172, 0
    %v3179 = vsel %vm181, %v3174, 0
    %3181 = vmatpush.bf16.xpose.msra.mxu0 0
    %3182 = vmatpush.bf16.xpose.msra.mxu0 0
    %3183 = vmatpush.bf16.xpose.msra.mxu0 0
    %3184 = vmatpush.bf16.xpose.msra.mxu0 0
    %3185 = vmatpush.bf16.xpose.msra.mxu0 0
    %3186 = vmatpush.bf16.xpose.msra.mxu0 0
    %3187 = vmatpush.bf16.xpose.msra.mxu0 0
    %3188 = vmatpush.bf16.xpose.msra.mxu0 %v3179
    %3189 = vmatmul.bf16.gmra.mxu0 %v3176
    %v3190 = vpop.f32.mrf.mxu0
    %v3191 = vadd.f32 0.0, %v3190
    %v3192 = vpop.f32.mrf.mxu0
    %v3193 = vadd.f32 0.0, %v3192
    %3194 = vdwg.mxu0
    %v3197 = vunpack.c.l.b16 %v3166
    %v3198 = vunpack.c.l.b16 %v3167
    %v3199 = vpack.c.b16 %v3198, %v3197
    %3200 = vrot.lane.b32.xlu0 %v3199, 96
    %v3201 = vpop.permute.xlu0 %3200
    %v3203 = vsel %vm181, %v3199, 0
    %v3206 = vsel %vm181, %v3201, 0
    %3208 = vmatpush.bf16.xpose.msra.mxu0 0
    %3209 = vmatpush.bf16.xpose.msra.mxu0 0
    %3210 = vmatpush.bf16.xpose.msra.mxu0 0
    %3211 = vmatpush.bf16.xpose.msra.mxu0 0
    %3212 = vmatpush.bf16.xpose.msra.mxu0 0
    %3213 = vmatpush.bf16.xpose.msra.mxu0 0
    %3214 = vmatpush.bf16.xpose.msra.mxu0 0
    %3215 = vmatpush.bf16.xpose.msra.mxu0 %v3206
    %3216 = vmatmul.bf16.gmra.mxu0 %v3203
    %v3217 = vpop.f32.mrf.mxu0
    %v3218 = vadd.f32 0.0, %v3217
    %v3219 = vpop.f32.mrf.mxu0
    %v3220 = vadd.f32 0.0, %v3219
    %3221 = vdwg.mxu0
    %v3222 = vmul.f32 %v3191, 0.35355338
    %v3223 = vmul.f32 %v3193, 0.35355338
    %v3224 = vmul.f32 %v3218, 0.35355338
    %v3225 = vmul.f32 %v3220, 0.35355338
    %v3226 = vsel %vm234, %v3222, -1e+30
    %v3227 = vsel %vm234, %v3223, -1e+30
    %v3228 = vsel %vm234, %v3224, -1e+30
    %v3229 = vsel %vm234, %v3225, -1e+30
    %v3230 = vsel %vm239, %v3226, -inf
    %3231 = vmax.xlane.f32.xlu0 %v3230
    %v3232 = vpop.xlane.xlu0 %3231
    %v3233 = vsel %vm239, %v3227, -inf
    %3234 = vmax.xlane.f32.xlu0 %v3233
    %v3235 = vpop.xlane.xlu0 %3234
    %v3236 = vsel %vm239, %v3228, -inf
    %3237 = vmax.xlane.f32.xlu0 %v3236
    %v3238 = vpop.xlane.xlu0 %3237
    %v3239 = vsel %vm239, %v3229, -inf
    %3240 = vmax.xlane.f32.xlu0 %v3239
    %v3241 = vpop.xlane.xlu0 %3240
    %v3242 = vsub.f32 %v3226, %v3232
    %v3243 = vsub.f32 %v3227, %v3235
    %v3244 = vsub.f32 %v3228, %v3238
    %v3245 = vsub.f32 %v3229, %v3241
    %v3246 = vmul.f32 %v3242, 1.442695
    %v3247 = vpow.pop %v3246
    %v3248 = vmul.f32 %v3243, 1.442695
    %v3249 = vpow.pop %v3248
    %v3250 = vmul.f32 %v3244, 1.442695
    %v3251 = vpow.pop %v3250
    %v3252 = vmul.f32 %v3245, 1.442695
    %v3253 = vpow.pop %v3252
    %v3254 = vsel %vm239, %v3247, 0.0
    %3255 = vadd.xlane.f32.xlu0 %v3254
    %v3256 = vpop.xlane.xlu0 %3255
    %v3257 = vsel %vm239, %v3249, 0.0
    %3258 = vadd.xlane.f32.xlu0 %v3257
    %v3259 = vpop.xlane.xlu0 %3258
    %v3260 = vsel %vm239, %v3251, 0.0
    %3261 = vadd.xlane.f32.xlu0 %v3260
    %v3262 = vpop.xlane.xlu0 %3261
    %v3263 = vsel %vm239, %v3253, 0.0
    %3264 = vadd.xlane.f32.xlu0 %v3263
    %v3265 = vpop.xlane.xlu0 %3264
    %v3266 = vrcp.pop %v3256
    %v3267 = vrcp.pop %v3259
    %v3268 = vrcp.pop %v3262
    %v3269 = vrcp.pop %v3265
    %v3270 = vmul.f32 %v3247, %v3266
    %v3271 = vmul.f32 %v3249, %v3267
    %v3272 = vmul.f32 %v3251, %v3268
    %v3273 = vmul.f32 %v3253, %v3269
    %v3274 = vpack.c.bf16 %v3270, %v3270
    %v3275 = vpack.c.bf16 %v3271, %v3271
    %v3276 = vpack.c.bf16 %v3272, %v3272
    %v3277 = vpack.c.bf16 %v3273, %v3273
    %v3280 = vunpack.c.l.b16 %v3274
    %v3281 = vunpack.c.l.b16 %v3275
    %v3282 = vpack.c.b16 %v3281, %v3280
    %3283 = vrot.lane.b32.xlu0 %v3172, 64
    %v3284 = vpop.permute.xlu0 %3283
    %v3287 = vsel %vm239, %v3282, 0
    %3289 = vmatpush.bf16.msra.mxu0 0
    %3290 = vmatpush.bf16.msra.mxu0 0
    %3291 = vmatpush.bf16.msra.mxu0 0
    %3292 = vmatpush.bf16.msra.mxu0 0
    %3293 = vmatpush.bf16.msra.mxu0 0
    %3294 = vmatpush.bf16.msra.mxu0 0
    %3295 = vmatpush.bf16.msra.mxu0 0
    %3296 = vmatpush.bf16.msra.mxu0 %v3284
    %3297 = vmatmul.bf16.gmra.mxu0 %v3287
    %v3298 = vpop.f32.mrf.mxu0
    %v3299 = vadd.f32 0.0, %v3298
    %v3300 = vpop.f32.mrf.mxu0
    %v3301 = vadd.f32 0.0, %v3300
    %3302 = vdwg.mxu0
    %v3305 = vunpack.c.l.b16 %v3276
    %v3306 = vunpack.c.l.b16 %v3277
    %v3307 = vpack.c.b16 %v3306, %v3305
    %3308 = vrot.lane.b32.xlu0 %v3199, 64
    %v3309 = vpop.permute.xlu0 %3308
    %v3312 = vsel %vm239, %v3307, 0
    %3314 = vmatpush.bf16.msra.mxu0 0
    %3315 = vmatpush.bf16.msra.mxu0 0
    %3316 = vmatpush.bf16.msra.mxu0 0
    %3317 = vmatpush.bf16.msra.mxu0 0
    %3318 = vmatpush.bf16.msra.mxu0 0
    %3319 = vmatpush.bf16.msra.mxu0 0
    %3320 = vmatpush.bf16.msra.mxu0 0
    %3321 = vmatpush.bf16.msra.mxu0 %v3309
    %3322 = vmatmul.bf16.gmra.mxu0 %v3312
    %v3323 = vpop.f32.mrf.mxu0
    %v3324 = vadd.f32 0.0, %v3323
    %v3325 = vpop.f32.mrf.mxu0
    %v3326 = vadd.f32 0.0, %v3325
    %3327 = vdwg.mxu0
    %3328 = vrot.lane.b32.xlu0 %v3172, 120
    %v3329 = vpop.permute.xlu0 %3328
    %3330 = vrot.lane.b32.xlu0 %v3172, 88
    %v3331 = vpop.permute.xlu0 %3330
    %v3333 = vsel %vm181, %v3329, 0
    %v3336 = vsel %vm181, %v3331, 0
    %3338 = vmatpush.bf16.xpose.msra.mxu0 0
    %3339 = vmatpush.bf16.xpose.msra.mxu0 0
    %3340 = vmatpush.bf16.xpose.msra.mxu0 0
    %3341 = vmatpush.bf16.xpose.msra.mxu0 0
    %3342 = vmatpush.bf16.xpose.msra.mxu0 0
    %3343 = vmatpush.bf16.xpose.msra.mxu0 0
    %3344 = vmatpush.bf16.xpose.msra.mxu0 0
    %3345 = vmatpush.bf16.xpose.msra.mxu0 %v3336
    %3346 = vmatmul.bf16.gmra.mxu0 %v3333
    %v3347 = vpop.f32.mrf.mxu0
    %v3348 = vadd.f32 0.0, %v3347
    %v3349 = vpop.f32.mrf.mxu0
    %v3350 = vadd.f32 0.0, %v3349
    %3351 = vdwg.mxu0
    %3352 = vrot.lane.b32.xlu0 %v3199, 120
    %v3353 = vpop.permute.xlu0 %3352
    %3354 = vrot.lane.b32.xlu0 %v3199, 88
    %v3355 = vpop.permute.xlu0 %3354
    %v3357 = vsel %vm181, %v3353, 0
    %v3360 = vsel %vm181, %v3355, 0
    %3362 = vmatpush.bf16.xpose.msra.mxu0 0
    %3363 = vmatpush.bf16.xpose.msra.mxu0 0
    %3364 = vmatpush.bf16.xpose.msra.mxu0 0
    %3365 = vmatpush.bf16.xpose.msra.mxu0 0
    %3366 = vmatpush.bf16.xpose.msra.mxu0 0
    %3367 = vmatpush.bf16.xpose.msra.mxu0 0
    %3368 = vmatpush.bf16.xpose.msra.mxu0 0
    %3369 = vmatpush.bf16.xpose.msra.mxu0 %v3360
    %3370 = vmatmul.bf16.gmra.mxu0 %v3357
    %v3371 = vpop.f32.mrf.mxu0
    %v3372 = vadd.f32 0.0, %v3371
    %v3373 = vpop.f32.mrf.mxu0
    %v3374 = vadd.f32 0.0, %v3373
    %3375 = vdwg.mxu0
    %v3376 = vmul.f32 %v3348, 0.35355338
    %v3377 = vmul.f32 %v3350, 0.35355338
    %v3378 = vmul.f32 %v3372, 0.35355338
    %v3379 = vmul.f32 %v3374, 0.35355338
    %v3380 = vsel %vm234, %v3376, -1e+30
    %v3381 = vsel %vm234, %v3377, -1e+30
    %v3382 = vsel %vm234, %v3378, -1e+30
    %v3383 = vsel %vm234, %v3379, -1e+30
    %v3384 = vsel %vm239, %v3380, -inf
    %3385 = vmax.xlane.f32.xlu0 %v3384
    %v3386 = vpop.xlane.xlu0 %3385
    %v3387 = vsel %vm239, %v3381, -inf
    %3388 = vmax.xlane.f32.xlu0 %v3387
    %v3389 = vpop.xlane.xlu0 %3388
    %v3390 = vsel %vm239, %v3382, -inf
    %3391 = vmax.xlane.f32.xlu0 %v3390
    %v3392 = vpop.xlane.xlu0 %3391
    %v3393 = vsel %vm239, %v3383, -inf
    %3394 = vmax.xlane.f32.xlu0 %v3393
    %v3395 = vpop.xlane.xlu0 %3394
    %v3396 = vsub.f32 %v3380, %v3386
    %v3397 = vsub.f32 %v3381, %v3389
    %v3398 = vsub.f32 %v3382, %v3392
    %v3399 = vsub.f32 %v3383, %v3395
    %v3400 = vmul.f32 %v3396, 1.442695
    %v3401 = vpow.pop %v3400
    %v3402 = vmul.f32 %v3397, 1.442695
    %v3403 = vpow.pop %v3402
    %v3404 = vmul.f32 %v3398, 1.442695
    %v3405 = vpow.pop %v3404
    %v3406 = vmul.f32 %v3399, 1.442695
    %v3407 = vpow.pop %v3406
    %v3408 = vsel %vm239, %v3401, 0.0
    %3409 = vadd.xlane.f32.xlu0 %v3408
    %v3410 = vpop.xlane.xlu0 %3409
    %v3411 = vsel %vm239, %v3403, 0.0
    %3412 = vadd.xlane.f32.xlu0 %v3411
    %v3413 = vpop.xlane.xlu0 %3412
    %v3414 = vsel %vm239, %v3405, 0.0
    %3415 = vadd.xlane.f32.xlu0 %v3414
    %v3416 = vpop.xlane.xlu0 %3415
    %v3417 = vsel %vm239, %v3407, 0.0
    %3418 = vadd.xlane.f32.xlu0 %v3417
    %v3419 = vpop.xlane.xlu0 %3418
    %v3420 = vrcp.pop %v3410
    %v3421 = vrcp.pop %v3413
    %v3422 = vrcp.pop %v3416
    %v3423 = vrcp.pop %v3419
    %v3424 = vmul.f32 %v3401, %v3420
    %v3425 = vmul.f32 %v3403, %v3421
    %v3426 = vmul.f32 %v3405, %v3422
    %v3427 = vmul.f32 %v3407, %v3423
    %v3428 = vpack.c.bf16 %v3424, %v3424
    %v3429 = vpack.c.bf16 %v3425, %v3425
    %v3430 = vpack.c.bf16 %v3426, %v3426
    %v3431 = vpack.c.bf16 %v3427, %v3427
    %v3434 = vunpack.c.l.b16 %v3428
    %v3435 = vunpack.c.l.b16 %v3429
    %v3436 = vpack.c.b16 %v3435, %v3434
    %3437 = vrot.lane.b32.xlu0 %v3172, 56
    %v3438 = vpop.permute.xlu0 %3437
    %v3441 = vsel %vm239, %v3436, 0
    %3443 = vmatpush.bf16.msra.mxu0 0
    %3444 = vmatpush.bf16.msra.mxu0 0
    %3445 = vmatpush.bf16.msra.mxu0 0
    %3446 = vmatpush.bf16.msra.mxu0 0
    %3447 = vmatpush.bf16.msra.mxu0 0
    %3448 = vmatpush.bf16.msra.mxu0 0
    %3449 = vmatpush.bf16.msra.mxu0 0
    %3450 = vmatpush.bf16.msra.mxu0 %v3438
    %3451 = vmatmul.bf16.gmra.mxu0 %v3441
    %v3452 = vpop.f32.mrf.mxu0
    %v3453 = vadd.f32 0.0, %v3452
    %v3454 = vpop.f32.mrf.mxu0
    %v3455 = vadd.f32 0.0, %v3454
    %3456 = vdwg.mxu0
    %v3459 = vunpack.c.l.b16 %v3430
    %v3460 = vunpack.c.l.b16 %v3431
    %v3461 = vpack.c.b16 %v3460, %v3459
    %3462 = vrot.lane.b32.xlu0 %v3199, 56
    %v3463 = vpop.permute.xlu0 %3462
    %v3466 = vsel %vm239, %v3461, 0
    %3468 = vmatpush.bf16.msra.mxu0 0
    %3469 = vmatpush.bf16.msra.mxu0 0
    %3470 = vmatpush.bf16.msra.mxu0 0
    %3471 = vmatpush.bf16.msra.mxu0 0
    %3472 = vmatpush.bf16.msra.mxu0 0
    %3473 = vmatpush.bf16.msra.mxu0 0
    %3474 = vmatpush.bf16.msra.mxu0 0
    %3475 = vmatpush.bf16.msra.mxu0 %v3463
    %3476 = vmatmul.bf16.gmra.mxu0 %v3466
    %v3477 = vpop.f32.mrf.mxu0
    %v3478 = vadd.f32 0.0, %v3477
    %v3479 = vpop.f32.mrf.mxu0
    %v3480 = vadd.f32 0.0, %v3479
    %3481 = vdwg.mxu0
    %3482 = vrot.lane.b32.xlu0 %v3172, 112
    %v3483 = vpop.permute.xlu0 %3482
    %3484 = vrot.lane.b32.xlu0 %v3172, 80
    %v3485 = vpop.permute.xlu0 %3484
    %v3487 = vsel %vm181, %v3483, 0
    %v3490 = vsel %vm181, %v3485, 0
    %3492 = vmatpush.bf16.xpose.msra.mxu0 0
    %3493 = vmatpush.bf16.xpose.msra.mxu0 0
    %3494 = vmatpush.bf16.xpose.msra.mxu0 0
    %3495 = vmatpush.bf16.xpose.msra.mxu0 0
    %3496 = vmatpush.bf16.xpose.msra.mxu0 0
    %3497 = vmatpush.bf16.xpose.msra.mxu0 0
    %3498 = vmatpush.bf16.xpose.msra.mxu0 0
    %3499 = vmatpush.bf16.xpose.msra.mxu0 %v3490
    %3500 = vmatmul.bf16.gmra.mxu0 %v3487
    %v3501 = vpop.f32.mrf.mxu0
    %v3502 = vadd.f32 0.0, %v3501
    %v3503 = vpop.f32.mrf.mxu0
    %v3504 = vadd.f32 0.0, %v3503
    %3505 = vdwg.mxu0
    %3506 = vrot.lane.b32.xlu0 %v3199, 112
    %v3507 = vpop.permute.xlu0 %3506
    %3508 = vrot.lane.b32.xlu0 %v3199, 80
    %v3509 = vpop.permute.xlu0 %3508
    %v3511 = vsel %vm181, %v3507, 0
    %v3514 = vsel %vm181, %v3509, 0
    %3516 = vmatpush.bf16.xpose.msra.mxu0 0
    %3517 = vmatpush.bf16.xpose.msra.mxu0 0
    %3518 = vmatpush.bf16.xpose.msra.mxu0 0
    %3519 = vmatpush.bf16.xpose.msra.mxu0 0
    %3520 = vmatpush.bf16.xpose.msra.mxu0 0
    %3521 = vmatpush.bf16.xpose.msra.mxu0 0
    %3522 = vmatpush.bf16.xpose.msra.mxu0 0
    %3523 = vmatpush.bf16.xpose.msra.mxu0 %v3514
    %3524 = vmatmul.bf16.gmra.mxu0 %v3511
    %v3525 = vpop.f32.mrf.mxu0
    %v3526 = vadd.f32 0.0, %v3525
    %v3527 = vpop.f32.mrf.mxu0
    %v3528 = vadd.f32 0.0, %v3527
    %3529 = vdwg.mxu0
    %v3530 = vmul.f32 %v3502, 0.35355338
    %v3531 = vmul.f32 %v3504, 0.35355338
    %v3532 = vmul.f32 %v3526, 0.35355338
    %v3533 = vmul.f32 %v3528, 0.35355338
    %v3534 = vsel %vm234, %v3530, -1e+30
    %v3535 = vsel %vm234, %v3531, -1e+30
    %v3536 = vsel %vm234, %v3532, -1e+30
    %v3537 = vsel %vm234, %v3533, -1e+30
    %v3538 = vsel %vm239, %v3534, -inf
    %3539 = vmax.xlane.f32.xlu0 %v3538
    %v3540 = vpop.xlane.xlu0 %3539
    %v3541 = vsel %vm239, %v3535, -inf
    %3542 = vmax.xlane.f32.xlu0 %v3541
    %v3543 = vpop.xlane.xlu0 %3542
    %v3544 = vsel %vm239, %v3536, -inf
    %3545 = vmax.xlane.f32.xlu0 %v3544
    %v3546 = vpop.xlane.xlu0 %3545
    %v3547 = vsel %vm239, %v3537, -inf
    %3548 = vmax.xlane.f32.xlu0 %v3547
    %v3549 = vpop.xlane.xlu0 %3548
    %v3550 = vsub.f32 %v3534, %v3540
    %v3551 = vsub.f32 %v3535, %v3543
    %v3552 = vsub.f32 %v3536, %v3546
    %v3553 = vsub.f32 %v3537, %v3549
    %v3554 = vmul.f32 %v3550, 1.442695
    %v3555 = vpow.pop %v3554
    %v3556 = vmul.f32 %v3551, 1.442695
    %v3557 = vpow.pop %v3556
    %v3558 = vmul.f32 %v3552, 1.442695
    %v3559 = vpow.pop %v3558
    %v3560 = vmul.f32 %v3553, 1.442695
    %v3561 = vpow.pop %v3560
    %v3562 = vsel %vm239, %v3555, 0.0
    %3563 = vadd.xlane.f32.xlu0 %v3562
    %v3564 = vpop.xlane.xlu0 %3563
    %v3565 = vsel %vm239, %v3557, 0.0
    %3566 = vadd.xlane.f32.xlu0 %v3565
    %v3567 = vpop.xlane.xlu0 %3566
    %v3568 = vsel %vm239, %v3559, 0.0
    %3569 = vadd.xlane.f32.xlu0 %v3568
    %v3570 = vpop.xlane.xlu0 %3569
    %v3571 = vsel %vm239, %v3561, 0.0
    %3572 = vadd.xlane.f32.xlu0 %v3571
    %v3573 = vpop.xlane.xlu0 %3572
    %v3574 = vrcp.pop %v3564
    %v3575 = vrcp.pop %v3567
    %v3576 = vrcp.pop %v3570
    %v3577 = vrcp.pop %v3573
    %v3578 = vmul.f32 %v3555, %v3574
    %v3579 = vmul.f32 %v3557, %v3575
    %v3580 = vmul.f32 %v3559, %v3576
    %v3581 = vmul.f32 %v3561, %v3577
    %v3582 = vpack.c.bf16 %v3578, %v3578
    %v3583 = vpack.c.bf16 %v3579, %v3579
    %v3584 = vpack.c.bf16 %v3580, %v3580
    %v3585 = vpack.c.bf16 %v3581, %v3581
    %v3588 = vunpack.c.l.b16 %v3582
    %v3589 = vunpack.c.l.b16 %v3583
    %v3590 = vpack.c.b16 %v3589, %v3588
    %3591 = vrot.lane.b32.xlu0 %v3172, 48
    %v3592 = vpop.permute.xlu0 %3591
    %v3595 = vsel %vm239, %v3590, 0
    %3597 = vmatpush.bf16.msra.mxu0 0
    %3598 = vmatpush.bf16.msra.mxu0 0
    %3599 = vmatpush.bf16.msra.mxu0 0
    %3600 = vmatpush.bf16.msra.mxu0 0
    %3601 = vmatpush.bf16.msra.mxu0 0
    %3602 = vmatpush.bf16.msra.mxu0 0
    %3603 = vmatpush.bf16.msra.mxu0 0
    %3604 = vmatpush.bf16.msra.mxu0 %v3592
    %3605 = vmatmul.bf16.gmra.mxu0 %v3595
    %v3606 = vpop.f32.mrf.mxu0
    %v3607 = vadd.f32 0.0, %v3606
    %v3608 = vpop.f32.mrf.mxu0
    %v3609 = vadd.f32 0.0, %v3608
    %3610 = vdwg.mxu0
    %v3613 = vunpack.c.l.b16 %v3584
    %v3614 = vunpack.c.l.b16 %v3585
    %v3615 = vpack.c.b16 %v3614, %v3613
    %3616 = vrot.lane.b32.xlu0 %v3199, 48
    %v3617 = vpop.permute.xlu0 %3616
    %v3620 = vsel %vm239, %v3615, 0
    %3622 = vmatpush.bf16.msra.mxu0 0
    %3623 = vmatpush.bf16.msra.mxu0 0
    %3624 = vmatpush.bf16.msra.mxu0 0
    %3625 = vmatpush.bf16.msra.mxu0 0
    %3626 = vmatpush.bf16.msra.mxu0 0
    %3627 = vmatpush.bf16.msra.mxu0 0
    %3628 = vmatpush.bf16.msra.mxu0 0
    %3629 = vmatpush.bf16.msra.mxu0 %v3617
    %3630 = vmatmul.bf16.gmra.mxu0 %v3620
    %v3631 = vpop.f32.mrf.mxu0
    %v3632 = vadd.f32 0.0, %v3631
    %v3633 = vpop.f32.mrf.mxu0
    %v3634 = vadd.f32 0.0, %v3633
    %3635 = vdwg.mxu0
    %3636 = vrot.lane.b32.xlu0 %v3172, 104
    %v3637 = vpop.permute.xlu0 %3636
    %3638 = vrot.lane.b32.xlu0 %v3172, 72
    %v3639 = vpop.permute.xlu0 %3638
    %v3641 = vsel %vm181, %v3637, 0
    %v3644 = vsel %vm181, %v3639, 0
    %3646 = vmatpush.bf16.xpose.msra.mxu0 0
    %3647 = vmatpush.bf16.xpose.msra.mxu0 0
    %3648 = vmatpush.bf16.xpose.msra.mxu0 0
    %3649 = vmatpush.bf16.xpose.msra.mxu0 0
    %3650 = vmatpush.bf16.xpose.msra.mxu0 0
    %3651 = vmatpush.bf16.xpose.msra.mxu0 0
    %3652 = vmatpush.bf16.xpose.msra.mxu0 0
    %3653 = vmatpush.bf16.xpose.msra.mxu0 %v3644
    %3654 = vmatmul.bf16.gmra.mxu0 %v3641
    %v3655 = vpop.f32.mrf.mxu0
    %v3656 = vadd.f32 0.0, %v3655
    %v3657 = vpop.f32.mrf.mxu0
    %v3658 = vadd.f32 0.0, %v3657
    %3659 = vdwg.mxu0
    %3660 = vrot.lane.b32.xlu0 %v3199, 104
    %v3661 = vpop.permute.xlu0 %3660
    %3662 = vrot.lane.b32.xlu0 %v3199, 72
    %v3663 = vpop.permute.xlu0 %3662
    %v3665 = vsel %vm181, %v3661, 0
    %v3668 = vsel %vm181, %v3663, 0
    %3670 = vmatpush.bf16.xpose.msra.mxu0 0
    %3671 = vmatpush.bf16.xpose.msra.mxu0 0
    %3672 = vmatpush.bf16.xpose.msra.mxu0 0
    %3673 = vmatpush.bf16.xpose.msra.mxu0 0
    %3674 = vmatpush.bf16.xpose.msra.mxu0 0
    %3675 = vmatpush.bf16.xpose.msra.mxu0 0
    %3676 = vmatpush.bf16.xpose.msra.mxu0 0
    %3677 = vmatpush.bf16.xpose.msra.mxu0 %v3668
    %3678 = vmatmul.bf16.gmra.mxu0 %v3665
    %v3679 = vpop.f32.mrf.mxu0
    %v3680 = vadd.f32 0.0, %v3679
    %v3681 = vpop.f32.mrf.mxu0
    %v3682 = vadd.f32 0.0, %v3681
    %3683 = vdwg.mxu0
    %v3684 = vmul.f32 %v3656, 0.35355338
    %v3685 = vmul.f32 %v3658, 0.35355338
    %v3686 = vmul.f32 %v3680, 0.35355338
    %v3687 = vmul.f32 %v3682, 0.35355338
    %v3688 = vsel %vm234, %v3684, -1e+30
    %v3689 = vsel %vm234, %v3685, -1e+30
    %v3690 = vsel %vm234, %v3686, -1e+30
    %v3691 = vsel %vm234, %v3687, -1e+30
    %v3692 = vsel %vm239, %v3688, -inf
    %3693 = vmax.xlane.f32.xlu0 %v3692
    %v3694 = vpop.xlane.xlu0 %3693
    %v3695 = vsel %vm239, %v3689, -inf
    %3696 = vmax.xlane.f32.xlu0 %v3695
    %v3697 = vpop.xlane.xlu0 %3696
    %v3698 = vsel %vm239, %v3690, -inf
    %3699 = vmax.xlane.f32.xlu0 %v3698
    %v3700 = vpop.xlane.xlu0 %3699
    %v3701 = vsel %vm239, %v3691, -inf
    %3702 = vmax.xlane.f32.xlu0 %v3701
    %v3703 = vpop.xlane.xlu0 %3702
    %v3704 = vsub.f32 %v3688, %v3694
    %v3705 = vsub.f32 %v3689, %v3697
    %v3706 = vsub.f32 %v3690, %v3700
    %v3707 = vsub.f32 %v3691, %v3703
    %v3708 = vmul.f32 %v3704, 1.442695
    %v3709 = vpow.pop %v3708
    %v3710 = vmul.f32 %v3705, 1.442695
    %v3711 = vpow.pop %v3710
    %v3712 = vmul.f32 %v3706, 1.442695
    %v3713 = vpow.pop %v3712
    %v3714 = vmul.f32 %v3707, 1.442695
    %v3715 = vpow.pop %v3714
    %v3716 = vsel %vm239, %v3709, 0.0
    %3717 = vadd.xlane.f32.xlu0 %v3716
    %v3718 = vpop.xlane.xlu0 %3717
    %v3719 = vsel %vm239, %v3711, 0.0
    %3720 = vadd.xlane.f32.xlu0 %v3719
    %v3721 = vpop.xlane.xlu0 %3720
    %v3722 = vsel %vm239, %v3713, 0.0
    %3723 = vadd.xlane.f32.xlu0 %v3722
    %v3724 = vpop.xlane.xlu0 %3723
    %v3725 = vsel %vm239, %v3715, 0.0
    %3726 = vadd.xlane.f32.xlu0 %v3725
    %v3727 = vpop.xlane.xlu0 %3726
    %v3728 = vrcp.pop %v3718
    %v3729 = vrcp.pop %v3721
    %v3730 = vrcp.pop %v3724
    %v3731 = vrcp.pop %v3727
    %v3732 = vmul.f32 %v3709, %v3728
    %v3733 = vmul.f32 %v3711, %v3729
    %v3734 = vmul.f32 %v3713, %v3730
    %v3735 = vmul.f32 %v3715, %v3731
    %v3736 = vpack.c.bf16 %v3732, %v3732
    %v3737 = vpack.c.bf16 %v3733, %v3733
    %v3738 = vpack.c.bf16 %v3734, %v3734
    %v3739 = vpack.c.bf16 %v3735, %v3735
    %v3742 = vunpack.c.l.b16 %v3736
    %v3743 = vunpack.c.l.b16 %v3737
    %v3744 = vpack.c.b16 %v3743, %v3742
    %3745 = vrot.lane.b32.xlu0 %v3172, 40
    %v3746 = vpop.permute.xlu0 %3745
    %v3749 = vsel %vm239, %v3744, 0
    %3751 = vmatpush.bf16.msra.mxu0 0
    %3752 = vmatpush.bf16.msra.mxu0 0
    %3753 = vmatpush.bf16.msra.mxu0 0
    %3754 = vmatpush.bf16.msra.mxu0 0
    %3755 = vmatpush.bf16.msra.mxu0 0
    %3756 = vmatpush.bf16.msra.mxu0 0
    %3757 = vmatpush.bf16.msra.mxu0 0
    %3758 = vmatpush.bf16.msra.mxu0 %v3746
    %3759 = vmatmul.bf16.gmra.mxu0 %v3749
    %v3760 = vpop.f32.mrf.mxu0
    %v3761 = vadd.f32 0.0, %v3760
    %v3762 = vpop.f32.mrf.mxu0
    %v3763 = vadd.f32 0.0, %v3762
    %3764 = vdwg.mxu0
    %v3767 = vunpack.c.l.b16 %v3738
    %v3768 = vunpack.c.l.b16 %v3739
    %v3769 = vpack.c.b16 %v3768, %v3767
    %3770 = vrot.lane.b32.xlu0 %v3199, 40
    %v3771 = vpop.permute.xlu0 %3770
    %v3774 = vsel %vm239, %v3769, 0
    %3776 = vmatpush.bf16.msra.mxu0 0
    %3777 = vmatpush.bf16.msra.mxu0 0
    %3778 = vmatpush.bf16.msra.mxu0 0
    %3779 = vmatpush.bf16.msra.mxu0 0
    %3780 = vmatpush.bf16.msra.mxu0 0
    %3781 = vmatpush.bf16.msra.mxu0 0
    %3782 = vmatpush.bf16.msra.mxu0 0
    %3783 = vmatpush.bf16.msra.mxu0 %v3771
    %3784 = vmatmul.bf16.gmra.mxu0 %v3774
    %v3785 = vpop.f32.mrf.mxu0
    %v3786 = vadd.f32 0.0, %v3785
    %v3787 = vpop.f32.mrf.mxu0
    %v3788 = vadd.f32 0.0, %v3787
    %3789 = vdwg.mxu0
    %3794 = vrot.lane.b32.xlu0 %v3453, 8
    %v3795 = vpop.permute.xlu0 %3794
    %3796 = vrot.lane.b32.xlu0 %v3455, 8
    %v3797 = vpop.permute.xlu0 %3796
    %3798 = vrot.lane.b32.xlu0 %v3478, 8
    %v3799 = vpop.permute.xlu0 %3798
    %3800 = vrot.lane.b32.xlu0 %v3480, 8
    %v3801 = vpop.permute.xlu0 %3800
    %3810 = vrot.lane.b32.xlu0 %v3607, 16
    %v3811 = vpop.permute.xlu0 %3810
    %3812 = vrot.lane.b32.xlu0 %v3609, 16
    %v3813 = vpop.permute.xlu0 %3812
    %3814 = vrot.lane.b32.xlu0 %v3632, 16
    %v3815 = vpop.permute.xlu0 %3814
    %3816 = vrot.lane.b32.xlu0 %v3634, 16
    %v3817 = vpop.permute.xlu0 %3816
    %3826 = vrot.lane.b32.xlu0 %v3761, 24
    %v3827 = vpop.permute.xlu0 %3826
    %3828 = vrot.lane.b32.xlu0 %v3763, 24
    %v3829 = vpop.permute.xlu0 %3828
    %3830 = vrot.lane.b32.xlu0 %v3786, 24
    %v3831 = vpop.permute.xlu0 %3830
    %3832 = vrot.lane.b32.xlu0 %v3788, 24
    %v3833 = vpop.permute.xlu0 %3832
    %v3838 = vsel %vm181, %v3299, %v3795
    %v3839 = vsel %vm181, %v3301, %v3797
    %v3840 = vsel %vm181, %v3324, %v3799
    %v3841 = vsel %vm181, %v3326, %v3801
    %v3842 = vsel %vm239, %v3838, %v3811
    %v3843 = vsel %vm239, %v3839, %v3813
    %v3844 = vsel %vm239, %v3840, %v3815
    %v3845 = vsel %vm239, %v3841, %v3817
    %v3846 = vsel %vm856, %v3842, %v3827
    %v3847 = vsel %vm856, %v3843, %v3829
    %v3848 = vsel %vm856, %v3844, %v3831
    %v3849 = vsel %vm856, %v3845, %v3833
    %v3850 = vpack.c.bf16 %v3847, %v3846
    %v3851 = vpack.c.bf16 %v3849, %v3848
    %s3852 = scalar_lea.vmem %s7, 16
    %v3853 = vld [vmem:[%s3852] sm:$0xf]
    %v3854 = vld [vmem:[%s3852 + $0x4] sm:$0xf]
    %v3855 = vld [vmem:[%s3852 + $0x8] sm:$0xf]
    %v3856 = vld [vmem:[%s3852 + $0xc] sm:$0xf]
    %s3857 = scalar_lea.vmem %s8, 1
    %v3858 = vld [vmem:[%s3857] sm:$0x1]
    %v3860 = vperm.slane %v3858, 0
    %v3866 = vunpack.c.l.b16 %v3853
    %v3867 = vunpack.c.l.b16 %v3854
    %v3868 = vunpack.c.l.b16 %v3855
    %v3869 = vunpack.c.l.b16 %v3856
    %v3870 = vpack.c.b16 %v3867, %v3866
    %v3871 = vpack.c.b16 %v3869, %v3868
    %v3875 = vsel %vm102, %v3850, 0
    %v3878 = vsel %vm102, %v3851, 0
    %3880 = vmatpush.bf16.msra.mxu0 0
    %3881 = vmatpush.bf16.msra.mxu0 0
    %3882 = vmatpush.bf16.msra.mxu0 0
    %3883 = vmatpush.bf16.msra.mxu0 0
    %3884 = vmatpush.bf16.msra.mxu0 0
    %3885 = vmatpush.bf16.msra.mxu0 0
    %3886 = vmatpush.bf16.msra.mxu0 %v3871
    %3887 = vmatpush.bf16.msra.mxu0 %v3870
    %3888 = vmatmul.bf16.gmra.mxu0 %v3875
    %v3889 = vpop.f32.mrf.mxu0
    %v3890 = vadd.f32 %v3860, %v3889
    %v3891 = vpop.f32.mrf.mxu0
    %v3892 = vadd.f32 %v3860, %v3891
    %3893 = vmatmul.bf16.gmra.mxu0 %v3878
    %v3894 = vpop.f32.mrf.mxu0
    %v3895 = vadd.f32 %v3860, %v3894
    %v3896 = vpop.f32.mrf.mxu0
    %v3897 = vadd.f32 %v3860, %v3896
    %3898 = vdwg.mxu0
    %v3899 = vadd.f32 %v3111, %v3890
    %v3900 = vadd.f32 %v3112, %v3892
    %v3901 = vadd.f32 %v3113, %v3895
    %v3902 = vadd.f32 %v3114, %v3897
    %s3903 = scalar_lea.vmem %s9, 1
    %v3904 = vld [vmem:[%s3903] sm:$0x1]
    %s3905 = scalar_lea.vmem %s10, 1
    %v3906 = vld [vmem:[%s3905] sm:$0x1]
    %v3907 = vsel %vm102, %v3899, 0.0
    %3908 = vadd.xlane.f32.xlu0 %v3907
    %v3909 = vpop.xlane.xlu0 %3908
    %v3910 = vsel %vm102, %v3900, 0.0
    %3911 = vadd.xlane.f32.xlu0 %v3910
    %v3912 = vpop.xlane.xlu0 %3911
    %v3913 = vsel %vm102, %v3901, 0.0
    %3914 = vadd.xlane.f32.xlu0 %v3913
    %v3915 = vpop.xlane.xlu0 %3914
    %v3916 = vsel %vm102, %v3902, 0.0
    %3917 = vadd.xlane.f32.xlu0 %v3916
    %v3918 = vpop.xlane.xlu0 %3917
    %v3919 = vmul.f32 %v3909, %v932
    %v3920 = vmul.f32 %v3912, %v932
    %v3921 = vmul.f32 %v3915, %v932
    %v3922 = vmul.f32 %v3918, %v932
    %v3923 = vsub.f32 %v3899, %v3919
    %v3924 = vsub.f32 %v3900, %v3920
    %v3925 = vsub.f32 %v3901, %v3921
    %v3926 = vsub.f32 %v3902, %v3922
    %v3927 = vmul.f32 %v3923, %v3923
    %v3928 = vmul.f32 %v3924, %v3924
    %v3929 = vmul.f32 %v3925, %v3925
    %v3930 = vmul.f32 %v3926, %v3926
    %v3931 = vsel %vm102, %v3927, 0.0
    %3932 = vadd.xlane.f32.xlu0 %v3931
    %v3933 = vpop.xlane.xlu0 %3932
    %v3934 = vsel %vm102, %v3928, 0.0
    %3935 = vadd.xlane.f32.xlu0 %v3934
    %v3936 = vpop.xlane.xlu0 %3935
    %v3937 = vsel %vm102, %v3929, 0.0
    %3938 = vadd.xlane.f32.xlu0 %v3937
    %v3939 = vpop.xlane.xlu0 %3938
    %v3940 = vsel %vm102, %v3930, 0.0
    %3941 = vadd.xlane.f32.xlu0 %v3940
    %v3942 = vpop.xlane.xlu0 %3941
    %v3943 = vmul.f32 %v3933, %v932
    %v3944 = vmul.f32 %v3936, %v932
    %v3945 = vmul.f32 %v3939, %v932
    %v3946 = vmul.f32 %v3942, %v932
    %v3947 = vadd.f32 %v3943, 1e-05
    %v3948 = vadd.f32 %v3944, 1e-05
    %v3949 = vadd.f32 %v3945, 1e-05
    %v3950 = vadd.f32 %v3946, 1e-05
    %v3951 = vrsqrt.pop %v3947
    %v3952 = vmul.f32 %v3951, %v3947
    %v3953 = vmul.f32 %v3952, %v3951
    %v3954 = vmul.f32 0.5, %v3953
    %v3955 = vsub.f32 1.5, %v3954
    %v3956 = vmul.f32 %v3951, %v3955
    %vm3957 = vweird.f32 %v3947
    %vm3958 = vweird.f32 %v3951
    %vm3959 = vmor %vm3957, %vm3958
    %v3960 = vsel %vm3959, %v3951, %v3956
    %v3961 = vrsqrt.pop %v3948
    %v3962 = vmul.f32 %v3961, %v3948
    %v3963 = vmul.f32 %v3962, %v3961
    %v3964 = vmul.f32 0.5, %v3963
    %v3965 = vsub.f32 1.5, %v3964
    %v3966 = vmul.f32 %v3961, %v3965
    %vm3967 = vweird.f32 %v3948
    %vm3968 = vweird.f32 %v3961
    %vm3969 = vmor %vm3967, %vm3968
    %v3970 = vsel %vm3969, %v3961, %v3966
    %v3971 = vrsqrt.pop %v3949
    %v3972 = vmul.f32 %v3971, %v3949
    %v3973 = vmul.f32 %v3972, %v3971
    %v3974 = vmul.f32 0.5, %v3973
    %v3975 = vsub.f32 1.5, %v3974
    %v3976 = vmul.f32 %v3971, %v3975
    %vm3977 = vweird.f32 %v3949
    %vm3978 = vweird.f32 %v3971
    %vm3979 = vmor %vm3977, %vm3978
    %v3980 = vsel %vm3979, %v3971, %v3976
    %v3981 = vrsqrt.pop %v3950
    %v3982 = vmul.f32 %v3981, %v3950
    %v3983 = vmul.f32 %v3982, %v3981
    %v3984 = vmul.f32 0.5, %v3983
    %v3985 = vsub.f32 1.5, %v3984
    %v3986 = vmul.f32 %v3981, %v3985
    %vm3987 = vweird.f32 %v3950
    %vm3988 = vweird.f32 %v3981
    %vm3989 = vmor %vm3987, %vm3988
    %v3990 = vsel %vm3989, %v3981, %v3986
    %v3991 = vmul.f32 %v3923, %v3960
    %v3992 = vmul.f32 %v3924, %v3970
    %v3993 = vmul.f32 %v3925, %v3980
    %v3994 = vmul.f32 %v3926, %v3990
    %v3996 = vperm.slane %v3904, 0
    %v3998 = vmul.f32 %v3991, %v3996
    %v3999 = vmul.f32 %v3992, %v3996
    %v4000 = vmul.f32 %v3993, %v3996
    %v4001 = vmul.f32 %v3994, %v3996
    %v4003 = vperm.slane %v3906, 0
    %v4005 = vadd.f32 %v3998, %v4003
    %v4006 = vadd.f32 %v3999, %v4003
    %v4007 = vadd.f32 %v4000, %v4003
    %v4008 = vadd.f32 %v4001, %v4003
    %v4009 = vpack.c.bf16 %v4006, %v4005
    %v4010 = vpack.c.bf16 %v4008, %v4007
    %s4011 = scalar_lea.vmem %s13, 256
    %v4012 = vld [vmem:[%s4011] sm:$0xff]
    %v4013 = vld [vmem:[%s4011 + $0x8] sm:$0xff]
    %v4014 = vld [vmem:[%s4011 + $0x40] sm:$0xff]
    %v4015 = vld [vmem:[%s4011 + $0x48] sm:$0xff]
    %v4016 = vld [vmem:[%s4011 + $0x80] sm:$0xff]
    %v4017 = vld [vmem:[%s4011 + $0x88] sm:$0xff]
    %v4018 = vld [vmem:[%s4011 + $0xc0] sm:$0xff]
    %v4019 = vld [vmem:[%s4011 + $0xc8] sm:$0xff]
    %s4020 = scalar_lea.vmem %s14, 16
    %v4021 = vld [vmem:[%s4020] sm:$0xf]
    %v4023 = vperm.slane %v4021, 0
    %v4024 = vperm.slane %v4021, 1
    %v4025 = vperm.slane %v4021, 2
    %v4026 = vperm.slane %v4021, 3
    %v4039 = vunpack.c.l.b16 %v4012
    %v4040 = vunpack.c.h.b16 %v4012
    %v4041 = vunpack.c.l.b16 %v4013
    %v4042 = vunpack.c.h.b16 %v4013
    %v4043 = vunpack.c.l.b16 %v4014
    %v4044 = vunpack.c.h.b16 %v4014
    %v4045 = vunpack.c.l.b16 %v4015
    %v4046 = vunpack.c.h.b16 %v4015
    %v4047 = vunpack.c.l.b16 %v4016
    %v4048 = vunpack.c.h.b16 %v4016
    %v4049 = vunpack.c.l.b16 %v4017
    %v4050 = vunpack.c.h.b16 %v4017
    %v4051 = vunpack.c.l.b16 %v4018
    %v4052 = vunpack.c.h.b16 %v4018
    %v4053 = vunpack.c.l.b16 %v4019
    %v4054 = vunpack.c.h.b16 %v4019
    %v4055 = vpack.c.b16 %v4043, %v4039
    %v4056 = vpack.c.b16 %v4044, %v4040
    %v4057 = vpack.c.b16 %v4045, %v4041
    %v4058 = vpack.c.b16 %v4046, %v4042
    %v4059 = vpack.c.b16 %v4051, %v4047
    %v4060 = vpack.c.b16 %v4052, %v4048
    %v4061 = vpack.c.b16 %v4053, %v4049
    %v4062 = vpack.c.b16 %v4054, %v4050
    %v4072 = vsel %vm102, %v4009, 0
    %v4075 = vsel %vm102, %v4010, 0
    %4077 = vmatpush.bf16.msra.mxu0 0
    %4078 = vmatpush.bf16.msra.mxu0 0
    %4079 = vmatpush.bf16.msra.mxu0 0
    %4080 = vmatpush.bf16.msra.mxu0 0
    %4081 = vmatpush.bf16.msra.mxu0 0
    %4082 = vmatpush.bf16.msra.mxu0 0
    %4083 = vmatpush.bf16.msra.mxu0 %v4059
    %4084 = vmatpush.bf16.msra.mxu0 %v4055
    %4085 = vmatmul.bf16.gmra.mxu0 %v4072
    %v4086 = vpop.f32.mrf.mxu0
    %v4087 = vadd.f32 %v4023, %v4086
    %v4088 = vpop.f32.mrf.mxu0
    %v4089 = vadd.f32 %v4023, %v4088
    %4090 = vmatmul.bf16.gmra.mxu0 %v4075
    %v4091 = vpop.f32.mrf.mxu0
    %v4092 = vadd.f32 %v4023, %v4091
    %v4093 = vpop.f32.mrf.mxu0
    %v4094 = vadd.f32 %v4023, %v4093
    %4095 = vdwg.mxu0
    %4096 = vmatpush.bf16.msra.mxu0 0
    %4097 = vmatpush.bf16.msra.mxu0 0
    %4098 = vmatpush.bf16.msra.mxu0 0
    %4099 = vmatpush.bf16.msra.mxu0 0
    %4100 = vmatpush.bf16.msra.mxu0 0
    %4101 = vmatpush.bf16.msra.mxu0 0
    %4102 = vmatpush.bf16.msra.mxu0 %v4060
    %4103 = vmatpush.bf16.msra.mxu0 %v4056
    %4104 = vmatmul.bf16.gmra.mxu0 %v4072
    %v4105 = vpop.f32.mrf.mxu0
    %v4106 = vadd.f32 %v4024, %v4105
    %v4107 = vpop.f32.mrf.mxu0
    %v4108 = vadd.f32 %v4024, %v4107
    %4109 = vmatmul.bf16.gmra.mxu0 %v4075
    %v4110 = vpop.f32.mrf.mxu0
    %v4111 = vadd.f32 %v4024, %v4110
    %v4112 = vpop.f32.mrf.mxu0
    %v4113 = vadd.f32 %v4024, %v4112
    %4114 = vdwg.mxu0
    %4115 = vmatpush.bf16.msra.mxu0 0
    %4116 = vmatpush.bf16.msra.mxu0 0
    %4117 = vmatpush.bf16.msra.mxu0 0
    %4118 = vmatpush.bf16.msra.mxu0 0
    %4119 = vmatpush.bf16.msra.mxu0 0
    %4120 = vmatpush.bf16.msra.mxu0 0
    %4121 = vmatpush.bf16.msra.mxu0 %v4061
    %4122 = vmatpush.bf16.msra.mxu0 %v4057
    %4123 = vmatmul.bf16.gmra.mxu0 %v4072
    %v4124 = vpop.f32.mrf.mxu0
    %v4125 = vadd.f32 %v4025, %v4124
    %v4126 = vpop.f32.mrf.mxu0
    %v4127 = vadd.f32 %v4025, %v4126
    %4128 = vmatmul.bf16.gmra.mxu0 %v4075
    %v4129 = vpop.f32.mrf.mxu0
    %v4130 = vadd.f32 %v4025, %v4129
    %v4131 = vpop.f32.mrf.mxu0
    %v4132 = vadd.f32 %v4025, %v4131
    %4133 = vdwg.mxu0
    %4134 = vmatpush.bf16.msra.mxu0 0
    %4135 = vmatpush.bf16.msra.mxu0 0
    %4136 = vmatpush.bf16.msra.mxu0 0
    %4137 = vmatpush.bf16.msra.mxu0 0
    %4138 = vmatpush.bf16.msra.mxu0 0
    %4139 = vmatpush.bf16.msra.mxu0 0
    %4140 = vmatpush.bf16.msra.mxu0 %v4062
    %4141 = vmatpush.bf16.msra.mxu0 %v4058
    %4142 = vmatmul.bf16.gmra.mxu0 %v4072
    %v4143 = vpop.f32.mrf.mxu0
    %v4144 = vadd.f32 %v4026, %v4143
    %v4145 = vpop.f32.mrf.mxu0
    %v4146 = vadd.f32 %v4026, %v4145
    %4147 = vmatmul.bf16.gmra.mxu0 %v4075
    %v4148 = vpop.f32.mrf.mxu0
    %v4149 = vadd.f32 %v4026, %v4148
    %v4150 = vpop.f32.mrf.mxu0
    %v4151 = vadd.f32 %v4026, %v4150
    %4152 = vdwg.mxu0
    %v4153 = vmax.f32 %v4087, 0.0
    %v4154 = vmax.f32 %v4106, 0.0
    %v4155 = vmax.f32 %v4125, 0.0
    %v4156 = vmax.f32 %v4144, 0.0
    %v4157 = vmax.f32 %v4089, 0.0
    %v4158 = vmax.f32 %v4108, 0.0
    %v4159 = vmax.f32 %v4127, 0.0
    %v4160 = vmax.f32 %v4146, 0.0
    %v4161 = vmax.f32 %v4092, 0.0
    %v4162 = vmax.f32 %v4111, 0.0
    %v4163 = vmax.f32 %v4130, 0.0
    %v4164 = vmax.f32 %v4149, 0.0
    %v4165 = vmax.f32 %v4094, 0.0
    %v4166 = vmax.f32 %v4113, 0.0
    %v4167 = vmax.f32 %v4132, 0.0
    %v4168 = vmax.f32 %v4151, 0.0
    %v4169 = vpack.c.bf16 %v4157, %v4153
    %v4170 = vpack.c.bf16 %v4158, %v4154
    %v4171 = vpack.c.bf16 %v4159, %v4155
    %v4172 = vpack.c.bf16 %v4160, %v4156
    %v4173 = vpack.c.bf16 %v4165, %v4161
    %v4174 = vpack.c.bf16 %v4166, %v4162
    %v4175 = vpack.c.bf16 %v4167, %v4163
    %v4176 = vpack.c.bf16 %v4168, %v4164
    %s4177 = scalar_lea.vmem %s15, 1024
    %v4178 = vld [vmem:[%s4177] sm:$0xf]
    %v4179 = vld [vmem:[%s4177 + $0x4] sm:$0xf]
    %v4180 = vld [vmem:[%s4177 + $0x8] sm:$0xf]
    %v4181 = vld [vmem:[%s4177 + $0xc] sm:$0xf]
    %v4182 = vld [vmem:[%s4177 + $0x10] sm:$0xf]
    %v4183 = vld [vmem:[%s4177 + $0x14] sm:$0xf]
    %v4184 = vld [vmem:[%s4177 + $0x18] sm:$0xf]
    %v4185 = vld [vmem:[%s4177 + $0x1c] sm:$0xf]
    %v4186 = vld [vmem:[%s4177 + $0x20] sm:$0xf]
    %v4187 = vld [vmem:[%s4177 + $0x24] sm:$0xf]
    %v4188 = vld [vmem:[%s4177 + $0x28] sm:$0xf]
    %v4189 = vld [vmem:[%s4177 + $0x2c] sm:$0xf]
    %v4190 = vld [vmem:[%s4177 + $0x30] sm:$0xf]
    %v4191 = vld [vmem:[%s4177 + $0x34] sm:$0xf]
    %v4192 = vld [vmem:[%s4177 + $0x38] sm:$0xf]
    %v4193 = vld [vmem:[%s4177 + $0x3c] sm:$0xf]
    %v4194 = vld [vmem:[%s4177 + $0x40] sm:$0xf]
    %v4195 = vld [vmem:[%s4177 + $0x44] sm:$0xf]
    %v4196 = vld [vmem:[%s4177 + $0x48] sm:$0xf]
    %v4197 = vld [vmem:[%s4177 + $0x4c] sm:$0xf]
    %v4198 = vld [vmem:[%s4177 + $0x50] sm:$0xf]
    %v4199 = vld [vmem:[%s4177 + $0x54] sm:$0xf]
    %v4200 = vld [vmem:[%s4177 + $0x58] sm:$0xf]
    %v4201 = vld [vmem:[%s4177 + $0x5c] sm:$0xf]
    %v4202 = vld [vmem:[%s4177 + $0x60] sm:$0xf]
    %v4203 = vld [vmem:[%s4177 + $0x64] sm:$0xf]
    %v4204 = vld [vmem:[%s4177 + $0x68] sm:$0xf]
    %v4205 = vld [vmem:[%s4177 + $0x6c] sm:$0xf]
    %v4206 = vld [vmem:[%s4177 + $0x70] sm:$0xf]
    %v4207 = vld [vmem:[%s4177 + $0x74] sm:$0xf]
    %v4208 = vld [vmem:[%s4177 + $0x78] sm:$0xf]
    %v4209 = vld [vmem:[%s4177 + $0x7c] sm:$0xf]
    %v4210 = vld [vmem:[%s4177 + $0x80] sm:$0xf]
    %v4211 = vld [vmem:[%s4177 + $0x84] sm:$0xf]
    %v4212 = vld [vmem:[%s4177 + $0x88] sm:$0xf]
    %v4213 = vld [vmem:[%s4177 + $0x8c] sm:$0xf]
    %v4214 = vld [vmem:[%s4177 + $0x90] sm:$0xf]
    %v4215 = vld [vmem:[%s4177 + $0x94] sm:$0xf]
    %v4216 = vld [vmem:[%s4177 + $0x98] sm:$0xf]
    %v4217 = vld [vmem:[%s4177 + $0x9c] sm:$0xf]
    %v4218 = vld [vmem:[%s4177 + $0xa0] sm:$0xf]
    %v4219 = vld [vmem:[%s4177 + $0xa4] sm:$0xf]
    %v4220 = vld [vmem:[%s4177 + $0xa8] sm:$0xf]
    %v4221 = vld [vmem:[%s4177 + $0xac] sm:$0xf]
    %v4222 = vld [vmem:[%s4177 + $0xb0] sm:$0xf]
    %v4223 = vld [vmem:[%s4177 + $0xb4] sm:$0xf]
    %v4224 = vld [vmem:[%s4177 + $0xb8] sm:$0xf]
    %v4225 = vld [vmem:[%s4177 + $0xbc] sm:$0xf]
    %v4226 = vld [vmem:[%s4177 + $0xc0] sm:$0xf]
    %v4227 = vld [vmem:[%s4177 + $0xc4] sm:$0xf]
    %v4228 = vld [vmem:[%s4177 + $0xc8] sm:$0xf]
    %v4229 = vld [vmem:[%s4177 + $0xcc] sm:$0xf]
    %v4230 = vld [vmem:[%s4177 + $0xd0] sm:$0xf]
    %v4231 = vld [vmem:[%s4177 + $0xd4] sm:$0xf]
    %v4232 = vld [vmem:[%s4177 + $0xd8] sm:$0xf]
    %v4233 = vld [vmem:[%s4177 + $0xdc] sm:$0xf]
    %v4234 = vld [vmem:[%s4177 + $0xe0] sm:$0xf]
    %v4235 = vld [vmem:[%s4177 + $0xe4] sm:$0xf]
    %v4236 = vld [vmem:[%s4177 + $0xe8] sm:$0xf]
    %v4237 = vld [vmem:[%s4177 + $0xec] sm:$0xf]
    %v4238 = vld [vmem:[%s4177 + $0xf0] sm:$0xf]
    %v4239 = vld [vmem:[%s4177 + $0xf4] sm:$0xf]
    %v4240 = vld [vmem:[%s4177 + $0xf8] sm:$0xf]
    %v4241 = vld [vmem:[%s4177 + $0xfc] sm:$0xf]
    %v4242 = vld [vmem:[%s4011 + $0x10] sm:$0xff]
    %v4243 = vld [vmem:[%s4011 + $0x18] sm:$0xff]
    %v4244 = vld [vmem:[%s4011 + $0x50] sm:$0xff]
    %v4245 = vld [vmem:[%s4011 + $0x58] sm:$0xff]
    %v4246 = vld [vmem:[%s4011 + $0x90] sm:$0xff]
    %v4247 = vld [vmem:[%s4011 + $0x98] sm:$0xff]
    %v4248 = vld [vmem:[%s4011 + $0xd0] sm:$0xff]
    %v4249 = vld [vmem:[%s4011 + $0xd8] sm:$0xff]
    %v4250 = vld [vmem:[%s4020 + $0x4] sm:$0xf]
    %v4252 = vperm.slane %v4250, 0
    %v4253 = vperm.slane %v4250, 1
    %v4254 = vperm.slane %v4250, 2
    %v4255 = vperm.slane %v4250, 3
    %v4268 = vunpack.c.l.b16 %v4242
    %v4269 = vunpack.c.h.b16 %v4242
    %v4270 = vunpack.c.l.b16 %v4243
    %v4271 = vunpack.c.h.b16 %v4243
    %v4272 = vunpack.c.l.b16 %v4244
    %v4273 = vunpack.c.h.b16 %v4244
    %v4274 = vunpack.c.l.b16 %v4245
    %v4275 = vunpack.c.h.b16 %v4245
    %v4276 = vunpack.c.l.b16 %v4246
    %v4277 = vunpack.c.h.b16 %v4246
    %v4278 = vunpack.c.l.b16 %v4247
    %v4279 = vunpack.c.h.b16 %v4247
    %v4280 = vunpack.c.l.b16 %v4248
    %v4281 = vunpack.c.h.b16 %v4248
    %v4282 = vunpack.c.l.b16 %v4249
    %v4283 = vunpack.c.h.b16 %v4249
    %v4284 = vpack.c.b16 %v4272, %v4268
    %v4285 = vpack.c.b16 %v4273, %v4269
    %v4286 = vpack.c.b16 %v4274, %v4270
    %v4287 = vpack.c.b16 %v4275, %v4271
    %v4288 = vpack.c.b16 %v4280, %v4276
    %v4289 = vpack.c.b16 %v4281, %v4277
    %v4290 = vpack.c.b16 %v4282, %v4278
    %v4291 = vpack.c.b16 %v4283, %v4279
    %4300 = vmatpush.bf16.msra.mxu0 0
    %4301 = vmatpush.bf16.msra.mxu0 0
    %4302 = vmatpush.bf16.msra.mxu0 0
    %4303 = vmatpush.bf16.msra.mxu0 0
    %4304 = vmatpush.bf16.msra.mxu0 0
    %4305 = vmatpush.bf16.msra.mxu0 0
    %4306 = vmatpush.bf16.msra.mxu0 %v4288
    %4307 = vmatpush.bf16.msra.mxu0 %v4284
    %4308 = vmatmul.bf16.gmra.mxu0 %v4072
    %v4309 = vpop.f32.mrf.mxu0
    %v4310 = vadd.f32 %v4252, %v4309
    %v4311 = vpop.f32.mrf.mxu0
    %v4312 = vadd.f32 %v4252, %v4311
    %4313 = vmatmul.bf16.gmra.mxu0 %v4075
    %v4314 = vpop.f32.mrf.mxu0
    %v4315 = vadd.f32 %v4252, %v4314
    %v4316 = vpop.f32.mrf.mxu0
    %v4317 = vadd.f32 %v4252, %v4316
    %4318 = vdwg.mxu0
    %4319 = vmatpush.bf16.msra.mxu0 0
    %4320 = vmatpush.bf16.msra.mxu0 0
    %4321 = vmatpush.bf16.msra.mxu0 0
    %4322 = vmatpush.bf16.msra.mxu0 0
    %4323 = vmatpush.bf16.msra.mxu0 0
    %4324 = vmatpush.bf16.msra.mxu0 0
    %4325 = vmatpush.bf16.msra.mxu0 %v4289
    %4326 = vmatpush.bf16.msra.mxu0 %v4285
    %4327 = vmatmul.bf16.gmra.mxu0 %v4072
    %v4328 = vpop.f32.mrf.mxu0
    %v4329 = vadd.f32 %v4253, %v4328
    %v4330 = vpop.f32.mrf.mxu0
    %v4331 = vadd.f32 %v4253, %v4330
    %4332 = vmatmul.bf16.gmra.mxu0 %v4075
    %v4333 = vpop.f32.mrf.mxu0
    %v4334 = vadd.f32 %v4253, %v4333
    %v4335 = vpop.f32.mrf.mxu0
    %v4336 = vadd.f32 %v4253, %v4335
    %4337 = vdwg.mxu0
    %4338 = vmatpush.bf16.msra.mxu0 0
    %4339 = vmatpush.bf16.msra.mxu0 0
    %4340 = vmatpush.bf16.msra.mxu0 0
    %4341 = vmatpush.bf16.msra.mxu0 0
    %4342 = vmatpush.bf16.msra.mxu0 0
    %4343 = vmatpush.bf16.msra.mxu0 0
    %4344 = vmatpush.bf16.msra.mxu0 %v4290
    %4345 = vmatpush.bf16.msra.mxu0 %v4286
    %4346 = vmatmul.bf16.gmra.mxu0 %v4072
    %v4347 = vpop.f32.mrf.mxu0
    %v4348 = vadd.f32 %v4254, %v4347
    %v4349 = vpop.f32.mrf.mxu0
    %v4350 = vadd.f32 %v4254, %v4349
    %4351 = vmatmul.bf16.gmra.mxu0 %v4075
    %v4352 = vpop.f32.mrf.mxu0
    %v4353 = vadd.f32 %v4254, %v4352
    %v4354 = vpop.f32.mrf.mxu0
    %v4355 = vadd.f32 %v4254, %v4354
    %4356 = vdwg.mxu0
    %4357 = vmatpush.bf16.msra.mxu0 0
    %4358 = vmatpush.bf16.msra.mxu0 0
    %4359 = vmatpush.bf16.msra.mxu0 0
    %4360 = vmatpush.bf16.msra.mxu0 0
    %4361 = vmatpush.bf16.msra.mxu0 0
    %4362 = vmatpush.bf16.msra.mxu0 0
    %4363 = vmatpush.bf16.msra.mxu0 %v4291
    %4364 = vmatpush.bf16.msra.mxu0 %v4287
    %4365 = vmatmul.bf16.gmra.mxu0 %v4072
    %v4366 = vpop.f32.mrf.mxu0
    %v4367 = vadd.f32 %v4255, %v4366
    %v4368 = vpop.f32.mrf.mxu0
    %v4369 = vadd.f32 %v4255, %v4368
    %4370 = vmatmul.bf16.gmra.mxu0 %v4075
    %v4371 = vpop.f32.mrf.mxu0
    %v4372 = vadd.f32 %v4255, %v4371
    %v4373 = vpop.f32.mrf.mxu0
    %v4374 = vadd.f32 %v4255, %v4373
    %4375 = vdwg.mxu0
    %v4376 = vmax.f32 %v4310, 0.0
    %v4377 = vmax.f32 %v4329, 0.0
    %v4378 = vmax.f32 %v4348, 0.0
    %v4379 = vmax.f32 %v4367, 0.0
    %v4380 = vmax.f32 %v4312, 0.0
    %v4381 = vmax.f32 %v4331, 0.0
    %v4382 = vmax.f32 %v4350, 0.0
    %v4383 = vmax.f32 %v4369, 0.0
    %v4384 = vmax.f32 %v4315, 0.0
    %v4385 = vmax.f32 %v4334, 0.0
    %v4386 = vmax.f32 %v4353, 0.0
    %v4387 = vmax.f32 %v4372, 0.0
    %v4388 = vmax.f32 %v4317, 0.0
    %v4389 = vmax.f32 %v4336, 0.0
    %v4390 = vmax.f32 %v4355, 0.0
    %v4391 = vmax.f32 %v4374, 0.0
    %v4392 = vpack.c.bf16 %v4380, %v4376
    %v4393 = vpack.c.bf16 %v4381, %v4377
    %v4394 = vpack.c.bf16 %v4382, %v4378
    %v4395 = vpack.c.bf16 %v4383, %v4379
    %v4396 = vpack.c.bf16 %v4388, %v4384
    %v4397 = vpack.c.bf16 %v4389, %v4385
    %v4398 = vpack.c.bf16 %v4390, %v4386
    %v4399 = vpack.c.bf16 %v4391, %v4387
    %v4400 = vld [vmem:[%s4177 + $0x100] sm:$0xf]
    %v4401 = vld [vmem:[%s4177 + $0x104] sm:$0xf]
    %v4402 = vld [vmem:[%s4177 + $0x108] sm:$0xf]
    %v4403 = vld [vmem:[%s4177 + $0x10c] sm:$0xf]
    %v4404 = vld [vmem:[%s4177 + $0x110] sm:$0xf]
    %v4405 = vld [vmem:[%s4177 + $0x114] sm:$0xf]
    %v4406 = vld [vmem:[%s4177 + $0x118] sm:$0xf]
    %v4407 = vld [vmem:[%s4177 + $0x11c] sm:$0xf]
    %v4408 = vld [vmem:[%s4177 + $0x120] sm:$0xf]
    %v4409 = vld [vmem:[%s4177 + $0x124] sm:$0xf]
    %v4410 = vld [vmem:[%s4177 + $0x128] sm:$0xf]
    %v4411 = vld [vmem:[%s4177 + $0x12c] sm:$0xf]
    %v4412 = vld [vmem:[%s4177 + $0x130] sm:$0xf]
    %v4413 = vld [vmem:[%s4177 + $0x134] sm:$0xf]
    %v4414 = vld [vmem:[%s4177 + $0x138] sm:$0xf]
    %v4415 = vld [vmem:[%s4177 + $0x13c] sm:$0xf]
    %v4416 = vld [vmem:[%s4177 + $0x140] sm:$0xf]
    %v4417 = vld [vmem:[%s4177 + $0x144] sm:$0xf]
    %v4418 = vld [vmem:[%s4177 + $0x148] sm:$0xf]
    %v4419 = vld [vmem:[%s4177 + $0x14c] sm:$0xf]
    %v4420 = vld [vmem:[%s4177 + $0x150] sm:$0xf]
    %v4421 = vld [vmem:[%s4177 + $0x154] sm:$0xf]
    %v4422 = vld [vmem:[%s4177 + $0x158] sm:$0xf]
    %v4423 = vld [vmem:[%s4177 + $0x15c] sm:$0xf]
    %v4424 = vld [vmem:[%s4177 + $0x160] sm:$0xf]
    %v4425 = vld [vmem:[%s4177 + $0x164] sm:$0xf]
    %v4426 = vld [vmem:[%s4177 + $0x168] sm:$0xf]
    %v4427 = vld [vmem:[%s4177 + $0x16c] sm:$0xf]
    %v4428 = vld [vmem:[%s4177 + $0x170] sm:$0xf]
    %v4429 = vld [vmem:[%s4177 + $0x174] sm:$0xf]
    %v4430 = vld [vmem:[%s4177 + $0x178] sm:$0xf]
    %v4431 = vld [vmem:[%s4177 + $0x17c] sm:$0xf]
    %v4432 = vld [vmem:[%s4177 + $0x180] sm:$0xf]
    %v4433 = vld [vmem:[%s4177 + $0x184] sm:$0xf]
    %v4434 = vld [vmem:[%s4177 + $0x188] sm:$0xf]
    %v4435 = vld [vmem:[%s4177 + $0x18c] sm:$0xf]
    %v4436 = vld [vmem:[%s4177 + $0x190] sm:$0xf]
    %v4437 = vld [vmem:[%s4177 + $0x194] sm:$0xf]
    %v4438 = vld [vmem:[%s4177 + $0x198] sm:$0xf]
    %v4439 = vld [vmem:[%s4177 + $0x19c] sm:$0xf]
    %v4440 = vld [vmem:[%s4177 + $0x1a0] sm:$0xf]
    %v4441 = vld [vmem:[%s4177 + $0x1a4] sm:$0xf]
    %v4442 = vld [vmem:[%s4177 + $0x1a8] sm:$0xf]
    %v4443 = vld [vmem:[%s4177 + $0x1ac] sm:$0xf]
    %v4444 = vld [vmem:[%s4177 + $0x1b0] sm:$0xf]
    %v4445 = vld [vmem:[%s4177 + $0x1b4] sm:$0xf]
    %v4446 = vld [vmem:[%s4177 + $0x1b8] sm:$0xf]
    %v4447 = vld [vmem:[%s4177 + $0x1bc] sm:$0xf]
    %v4448 = vld [vmem:[%s4177 + $0x1c0] sm:$0xf]
    %v4449 = vld [vmem:[%s4177 + $0x1c4] sm:$0xf]
    %v4450 = vld [vmem:[%s4177 + $0x1c8] sm:$0xf]
    %v4451 = vld [vmem:[%s4177 + $0x1cc] sm:$0xf]
    %v4452 = vld [vmem:[%s4177 + $0x1d0] sm:$0xf]
    %v4453 = vld [vmem:[%s4177 + $0x1d4] sm:$0xf]
    %v4454 = vld [vmem:[%s4177 + $0x1d8] sm:$0xf]
    %v4455 = vld [vmem:[%s4177 + $0x1dc] sm:$0xf]
    %v4456 = vld [vmem:[%s4177 + $0x1e0] sm:$0xf]
    %v4457 = vld [vmem:[%s4177 + $0x1e4] sm:$0xf]
    %v4458 = vld [vmem:[%s4177 + $0x1e8] sm:$0xf]
    %v4459 = vld [vmem:[%s4177 + $0x1ec] sm:$0xf]
    %v4460 = vld [vmem:[%s4177 + $0x1f0] sm:$0xf]
    %v4461 = vld [vmem:[%s4177 + $0x1f4] sm:$0xf]
    %v4462 = vld [vmem:[%s4177 + $0x1f8] sm:$0xf]
    %v4463 = vld [vmem:[%s4177 + $0x1fc] sm:$0xf]
    %v4528 = vunpack.c.l.b16 %v4400
    %v4529 = vunpack.c.l.b16 %v4401
    %v4530 = vunpack.c.l.b16 %v4402
    %v4531 = vunpack.c.l.b16 %v4403
    %v4532 = vunpack.c.l.b16 %v4404
    %v4533 = vunpack.c.l.b16 %v4405
    %v4534 = vunpack.c.l.b16 %v4406
    %v4535 = vunpack.c.l.b16 %v4407
    %v4536 = vunpack.c.l.b16 %v4408
    %v4537 = vunpack.c.l.b16 %v4409
    %v4538 = vunpack.c.l.b16 %v4410
    %v4539 = vunpack.c.l.b16 %v4411
    %v4540 = vunpack.c.l.b16 %v4412
    %v4541 = vunpack.c.l.b16 %v4413
    %v4542 = vunpack.c.l.b16 %v4414
    %v4543 = vunpack.c.l.b16 %v4415
    %v4544 = vunpack.c.l.b16 %v4416
    %v4545 = vunpack.c.l.b16 %v4417
    %v4546 = vunpack.c.l.b16 %v4418
    %v4547 = vunpack.c.l.b16 %v4419
    %v4548 = vunpack.c.l.b16 %v4420
    %v4549 = vunpack.c.l.b16 %v4421
    %v4550 = vunpack.c.l.b16 %v4422
    %v4551 = vunpack.c.l.b16 %v4423
    %v4552 = vunpack.c.l.b16 %v4424
    %v4553 = vunpack.c.l.b16 %v4425
    %v4554 = vunpack.c.l.b16 %v4426
    %v4555 = vunpack.c.l.b16 %v4427
    %v4556 = vunpack.c.l.b16 %v4428
    %v4557 = vunpack.c.l.b16 %v4429
    %v4558 = vunpack.c.l.b16 %v4430
    %v4559 = vunpack.c.l.b16 %v4431
    %v4560 = vunpack.c.l.b16 %v4432
    %v4561 = vunpack.c.l.b16 %v4433
    %v4562 = vunpack.c.l.b16 %v4434
    %v4563 = vunpack.c.l.b16 %v4435
    %v4564 = vunpack.c.l.b16 %v4436
    %v4565 = vunpack.c.l.b16 %v4437
    %v4566 = vunpack.c.l.b16 %v4438
    %v4567 = vunpack.c.l.b16 %v4439
    %v4568 = vunpack.c.l.b16 %v4440
    %v4569 = vunpack.c.l.b16 %v4441
    %v4570 = vunpack.c.l.b16 %v4442
    %v4571 = vunpack.c.l.b16 %v4443
    %v4572 = vunpack.c.l.b16 %v4444
    %v4573 = vunpack.c.l.b16 %v4445
    %v4574 = vunpack.c.l.b16 %v4446
    %v4575 = vunpack.c.l.b16 %v4447
    %v4576 = vunpack.c.l.b16 %v4448
    %v4577 = vunpack.c.l.b16 %v4449
    %v4578 = vunpack.c.l.b16 %v4450
    %v4579 = vunpack.c.l.b16 %v4451
    %v4580 = vunpack.c.l.b16 %v4452
    %v4581 = vunpack.c.l.b16 %v4453
    %v4582 = vunpack.c.l.b16 %v4454
    %v4583 = vunpack.c.l.b16 %v4455
    %v4584 = vunpack.c.l.b16 %v4456
    %v4585 = vunpack.c.l.b16 %v4457
    %v4586 = vunpack.c.l.b16 %v4458
    %v4587 = vunpack.c.l.b16 %v4459
    %v4588 = vunpack.c.l.b16 %v4460
    %v4589 = vunpack.c.l.b16 %v4461
    %v4590 = vunpack.c.l.b16 %v4462
    %v4591 = vunpack.c.l.b16 %v4463
    %v4592 = vpack.c.b16 %v4529, %v4528
    %v4593 = vpack.c.b16 %v4531, %v4530
    %v4594 = vpack.c.b16 %v4533, %v4532
    %v4595 = vpack.c.b16 %v4535, %v4534
    %v4596 = vpack.c.b16 %v4537, %v4536
    %v4597 = vpack.c.b16 %v4539, %v4538
    %v4598 = vpack.c.b16 %v4541, %v4540
    %v4599 = vpack.c.b16 %v4543, %v4542
    %v4600 = vpack.c.b16 %v4545, %v4544
    %v4601 = vpack.c.b16 %v4547, %v4546
    %v4602 = vpack.c.b16 %v4549, %v4548
    %v4603 = vpack.c.b16 %v4551, %v4550
    %v4604 = vpack.c.b16 %v4553, %v4552
    %v4605 = vpack.c.b16 %v4555, %v4554
    %v4606 = vpack.c.b16 %v4557, %v4556
    %v4607 = vpack.c.b16 %v4559, %v4558
    %v4608 = vpack.c.b16 %v4561, %v4560
    %v4609 = vpack.c.b16 %v4563, %v4562
    %v4610 = vpack.c.b16 %v4565, %v4564
    %v4611 = vpack.c.b16 %v4567, %v4566
    %v4612 = vpack.c.b16 %v4569, %v4568
    %v4613 = vpack.c.b16 %v4571, %v4570
    %v4614 = vpack.c.b16 %v4573, %v4572
    %v4615 = vpack.c.b16 %v4575, %v4574
    %v4616 = vpack.c.b16 %v4577, %v4576
    %v4617 = vpack.c.b16 %v4579, %v4578
    %v4618 = vpack.c.b16 %v4581, %v4580
    %v4619 = vpack.c.b16 %v4583, %v4582
    %v4620 = vpack.c.b16 %v4585, %v4584
    %v4621 = vpack.c.b16 %v4587, %v4586
    %v4622 = vpack.c.b16 %v4589, %v4588
    %v4623 = vpack.c.b16 %v4591, %v4590
    %4656 = vmatpush.bf16.msra.mxu0 %v4599
    %4657 = vmatpush.bf16.msra.mxu0 %v4598
    %4658 = vmatpush.bf16.msra.mxu0 %v4597
    %4659 = vmatpush.bf16.msra.mxu0 %v4596
    %4660 = vmatpush.bf16.msra.mxu0 %v4595
    %4661 = vmatpush.bf16.msra.mxu0 %v4594
    %4662 = vmatpush.bf16.msra.mxu0 %v4593
    %4663 = vmatpush.bf16.msra.mxu0 %v4592
    %4664 = vmatmul.bf16.gmra.mxu0 %v4392
    %v4665 = vpop.f32.mrf.mxu0
    %v4666 = vpop.f32.mrf.mxu0
    %v4667 = vadd.f32 0.0, %v4666
    %4668 = vmatmul.bf16.gmra.mxu0 %v4396
    %v4669 = vpop.f32.mrf.mxu0
    %v4670 = vpop.f32.mrf.mxu0
    %v4671 = vadd.f32 0.0, %v4670
    %4672 = vdwg.mxu0
    %4673 = vmatpush.bf16.msra.mxu0 %v4607
    %4674 = vmatpush.bf16.msra.mxu0 %v4606
    %4675 = vmatpush.bf16.msra.mxu0 %v4605
    %4676 = vmatpush.bf16.msra.mxu0 %v4604
    %4677 = vmatpush.bf16.msra.mxu0 %v4603
    %4678 = vmatpush.bf16.msra.mxu0 %v4602
    %4679 = vmatpush.bf16.msra.mxu0 %v4601
    %4680 = vmatpush.bf16.msra.mxu0 %v4600
    %4681 = vmatmul.bf16.gmra.mxu0 %v4393
    %v4682 = vpop.f32.mrf.mxu0
    %v4683 = vpop.f32.mrf.mxu0
    %v4684 = vadd.f32 %v4667, %v4683
    %4685 = vmatmul.bf16.gmra.mxu0 %v4397
    %v4686 = vpop.f32.mrf.mxu0
    %v4687 = vpop.f32.mrf.mxu0
    %v4688 = vadd.f32 %v4671, %v4687
    %4689 = vdwg.mxu0
    %4690 = vmatpush.bf16.msra.mxu0 %v4615
    %4691 = vmatpush.bf16.msra.mxu0 %v4614
    %4692 = vmatpush.bf16.msra.mxu0 %v4613
    %4693 = vmatpush.bf16.msra.mxu0 %v4612
    %4694 = vmatpush.bf16.msra.mxu0 %v4611
    %4695 = vmatpush.bf16.msra.mxu0 %v4610
    %4696 = vmatpush.bf16.msra.mxu0 %v4609
    %4697 = vmatpush.bf16.msra.mxu0 %v4608
    %4698 = vmatmul.bf16.gmra.mxu0 %v4394
    %v4699 = vpop.f32.mrf.mxu0
    %v4700 = vpop.f32.mrf.mxu0
    %v4701 = vadd.f32 %v4684, %v4700
    %4702 = vmatmul.bf16.gmra.mxu0 %v4398
    %v4703 = vpop.f32.mrf.mxu0
    %v4704 = vpop.f32.mrf.mxu0
    %v4705 = vadd.f32 %v4688, %v4704
    %4706 = vdwg.mxu0
    %4707 = vmatpush.bf16.msra.mxu0 %v4623
    %4708 = vmatpush.bf16.msra.mxu0 %v4622
    %4709 = vmatpush.bf16.msra.mxu0 %v4621
    %4710 = vmatpush.bf16.msra.mxu0 %v4620
    %4711 = vmatpush.bf16.msra.mxu0 %v4619
    %4712 = vmatpush.bf16.msra.mxu0 %v4618
    %4713 = vmatpush.bf16.msra.mxu0 %v4617
    %4714 = vmatpush.bf16.msra.mxu0 %v4616
    %4715 = vmatmul.bf16.gmra.mxu0 %v4395
    %v4716 = vpop.f32.mrf.mxu0
    %v4717 = vpop.f32.mrf.mxu0
    %v4718 = vadd.f32 %v4701, %v4717
    %4719 = vmatmul.bf16.gmra.mxu0 %v4399
    %v4720 = vpop.f32.mrf.mxu0
    %v4721 = vpop.f32.mrf.mxu0
    %v4722 = vadd.f32 %v4705, %v4721
    %4723 = vdwg.mxu0
    %v4788 = vunpack.c.l.b16 %v4178
    %v4789 = vunpack.c.l.b16 %v4179
    %v4790 = vunpack.c.l.b16 %v4180
    %v4791 = vunpack.c.l.b16 %v4181
    %v4792 = vunpack.c.l.b16 %v4182
    %v4793 = vunpack.c.l.b16 %v4183
    %v4794 = vunpack.c.l.b16 %v4184
    %v4795 = vunpack.c.l.b16 %v4185
    %v4796 = vunpack.c.l.b16 %v4186
    %v4797 = vunpack.c.l.b16 %v4187
    %v4798 = vunpack.c.l.b16 %v4188
    %v4799 = vunpack.c.l.b16 %v4189
    %v4800 = vunpack.c.l.b16 %v4190
    %v4801 = vunpack.c.l.b16 %v4191
    %v4802 = vunpack.c.l.b16 %v4192
    %v4803 = vunpack.c.l.b16 %v4193
    %v4804 = vunpack.c.l.b16 %v4194
    %v4805 = vunpack.c.l.b16 %v4195
    %v4806 = vunpack.c.l.b16 %v4196
    %v4807 = vunpack.c.l.b16 %v4197
    %v4808 = vunpack.c.l.b16 %v4198
    %v4809 = vunpack.c.l.b16 %v4199
    %v4810 = vunpack.c.l.b16 %v4200
    %v4811 = vunpack.c.l.b16 %v4201
    %v4812 = vunpack.c.l.b16 %v4202
    %v4813 = vunpack.c.l.b16 %v4203
    %v4814 = vunpack.c.l.b16 %v4204
    %v4815 = vunpack.c.l.b16 %v4205
    %v4816 = vunpack.c.l.b16 %v4206
    %v4817 = vunpack.c.l.b16 %v4207
    %v4818 = vunpack.c.l.b16 %v4208
    %v4819 = vunpack.c.l.b16 %v4209
    %v4820 = vunpack.c.l.b16 %v4210
    %v4821 = vunpack.c.l.b16 %v4211
    %v4822 = vunpack.c.l.b16 %v4212
    %v4823 = vunpack.c.l.b16 %v4213
    %v4824 = vunpack.c.l.b16 %v4214
    %v4825 = vunpack.c.l.b16 %v4215
    %v4826 = vunpack.c.l.b16 %v4216
    %v4827 = vunpack.c.l.b16 %v4217
    %v4828 = vunpack.c.l.b16 %v4218
    %v4829 = vunpack.c.l.b16 %v4219
    %v4830 = vunpack.c.l.b16 %v4220
    %v4831 = vunpack.c.l.b16 %v4221
    %v4832 = vunpack.c.l.b16 %v4222
    %v4833 = vunpack.c.l.b16 %v4223
    %v4834 = vunpack.c.l.b16 %v4224
    %v4835 = vunpack.c.l.b16 %v4225
    %v4836 = vunpack.c.l.b16 %v4226
    %v4837 = vunpack.c.l.b16 %v4227
    %v4838 = vunpack.c.l.b16 %v4228
    %v4839 = vunpack.c.l.b16 %v4229
    %v4840 = vunpack.c.l.b16 %v4230
    %v4841 = vunpack.c.l.b16 %v4231
    %v4842 = vunpack.c.l.b16 %v4232
    %v4843 = vunpack.c.l.b16 %v4233
    %v4844 = vunpack.c.l.b16 %v4234
    %v4845 = vunpack.c.l.b16 %v4235
    %v4846 = vunpack.c.l.b16 %v4236
    %v4847 = vunpack.c.l.b16 %v4237
    %v4848 = vunpack.c.l.b16 %v4238
    %v4849 = vunpack.c.l.b16 %v4239
    %v4850 = vunpack.c.l.b16 %v4240
    %v4851 = vunpack.c.l.b16 %v4241
    %v4852 = vpack.c.b16 %v4789, %v4788
    %v4853 = vpack.c.b16 %v4791, %v4790
    %v4854 = vpack.c.b16 %v4793, %v4792
    %v4855 = vpack.c.b16 %v4795, %v4794
    %v4856 = vpack.c.b16 %v4797, %v4796
    %v4857 = vpack.c.b16 %v4799, %v4798
    %v4858 = vpack.c.b16 %v4801, %v4800
    %v4859 = vpack.c.b16 %v4803, %v4802
    %v4860 = vpack.c.b16 %v4805, %v4804
    %v4861 = vpack.c.b16 %v4807, %v4806
    %v4862 = vpack.c.b16 %v4809, %v4808
    %v4863 = vpack.c.b16 %v4811, %v4810
    %v4864 = vpack.c.b16 %v4813, %v4812
    %v4865 = vpack.c.b16 %v4815, %v4814
    %v4866 = vpack.c.b16 %v4817, %v4816
    %v4867 = vpack.c.b16 %v4819, %v4818
    %v4868 = vpack.c.b16 %v4821, %v4820
    %v4869 = vpack.c.b16 %v4823, %v4822
    %v4870 = vpack.c.b16 %v4825, %v4824
    %v4871 = vpack.c.b16 %v4827, %v4826
    %v4872 = vpack.c.b16 %v4829, %v4828
    %v4873 = vpack.c.b16 %v4831, %v4830
    %v4874 = vpack.c.b16 %v4833, %v4832
    %v4875 = vpack.c.b16 %v4835, %v4834
    %v4876 = vpack.c.b16 %v4837, %v4836
    %v4877 = vpack.c.b16 %v4839, %v4838
    %v4878 = vpack.c.b16 %v4841, %v4840
    %v4879 = vpack.c.b16 %v4843, %v4842
    %v4880 = vpack.c.b16 %v4845, %v4844
    %v4881 = vpack.c.b16 %v4847, %v4846
    %v4882 = vpack.c.b16 %v4849, %v4848
    %v4883 = vpack.c.b16 %v4851, %v4850
    %4916 = vmatpush.bf16.msra.mxu0 %v4859
    %4917 = vmatpush.bf16.msra.mxu0 %v4858
    %4918 = vmatpush.bf16.msra.mxu0 %v4857
    %4919 = vmatpush.bf16.msra.mxu0 %v4856
    %4920 = vmatpush.bf16.msra.mxu0 %v4855
    %4921 = vmatpush.bf16.msra.mxu0 %v4854
    %4922 = vmatpush.bf16.msra.mxu0 %v4853
    %4923 = vmatpush.bf16.msra.mxu0 %v4852
    %4924 = vmatmul.bf16.gmra.mxu0 %v4169
    %v4925 = vpop.f32.mrf.mxu0
    %v4926 = vpop.f32.mrf.mxu0
    %v4927 = vadd.f32 %v4718, %v4926
    %4928 = vmatmul.bf16.gmra.mxu0 %v4173
    %v4929 = vpop.f32.mrf.mxu0
    %v4930 = vpop.f32.mrf.mxu0
    %v4931 = vadd.f32 %v4722, %v4930
    %4932 = vdwg.mxu0
    %4933 = vmatpush.bf16.msra.mxu0 %v4867
    %4934 = vmatpush.bf16.msra.mxu0 %v4866
    %4935 = vmatpush.bf16.msra.mxu0 %v4865
    %4936 = vmatpush.bf16.msra.mxu0 %v4864
    %4937 = vmatpush.bf16.msra.mxu0 %v4863
    %4938 = vmatpush.bf16.msra.mxu0 %v4862
    %4939 = vmatpush.bf16.msra.mxu0 %v4861
    %4940 = vmatpush.bf16.msra.mxu0 %v4860
    %4941 = vmatmul.bf16.gmra.mxu0 %v4170
    %v4942 = vpop.f32.mrf.mxu0
    %v4943 = vpop.f32.mrf.mxu0
    %v4944 = vadd.f32 %v4927, %v4943
    %4945 = vmatmul.bf16.gmra.mxu0 %v4174
    %v4946 = vpop.f32.mrf.mxu0
    %v4947 = vpop.f32.mrf.mxu0
    %v4948 = vadd.f32 %v4931, %v4947
    %4949 = vdwg.mxu0
    %4950 = vmatpush.bf16.msra.mxu0 %v4875
    %4951 = vmatpush.bf16.msra.mxu0 %v4874
    %4952 = vmatpush.bf16.msra.mxu0 %v4873
    %4953 = vmatpush.bf16.msra.mxu0 %v4872
    %4954 = vmatpush.bf16.msra.mxu0 %v4871
    %4955 = vmatpush.bf16.msra.mxu0 %v4870
    %4956 = vmatpush.bf16.msra.mxu0 %v4869
    %4957 = vmatpush.bf16.msra.mxu0 %v4868
    %4958 = vmatmul.bf16.gmra.mxu0 %v4171
    %v4959 = vpop.f32.mrf.mxu0
    %v4960 = vpop.f32.mrf.mxu0
    %v4961 = vadd.f32 %v4944, %v4960
    %4962 = vmatmul.bf16.gmra.mxu0 %v4175
    %v4963 = vpop.f32.mrf.mxu0
    %v4964 = vpop.f32.mrf.mxu0
    %v4965 = vadd.f32 %v4948, %v4964
    %4966 = vdwg.mxu0
    %4967 = vmatpush.bf16.msra.mxu0 %v4883
    %4968 = vmatpush.bf16.msra.mxu0 %v4882
    %4969 = vmatpush.bf16.msra.mxu0 %v4881
    %4970 = vmatpush.bf16.msra.mxu0 %v4880
    %4971 = vmatpush.bf16.msra.mxu0 %v4879
    %4972 = vmatpush.bf16.msra.mxu0 %v4878
    %4973 = vmatpush.bf16.msra.mxu0 %v4877
    %4974 = vmatpush.bf16.msra.mxu0 %v4876
    %4975 = vmatmul.bf16.gmra.mxu0 %v4172
    %v4976 = vpop.f32.mrf.mxu0
    %v4977 = vpop.f32.mrf.mxu0
    %v4978 = vadd.f32 %v4961, %v4977
    %4979 = vmatmul.bf16.gmra.mxu0 %v4176
    %v4980 = vpop.f32.mrf.mxu0
    %v4981 = vpop.f32.mrf.mxu0
    %v4982 = vadd.f32 %v4965, %v4981
    %4983 = vdwg.mxu0
    %v4984 = vld [vmem:[%s4011 + $0x20] sm:$0xff]
    %v4985 = vld [vmem:[%s4011 + $0x28] sm:$0xff]
    %v4986 = vld [vmem:[%s4011 + $0x60] sm:$0xff]
    %v4987 = vld [vmem:[%s4011 + $0x68] sm:$0xff]
    %v4988 = vld [vmem:[%s4011 + $0xa0] sm:$0xff]
    %v4989 = vld [vmem:[%s4011 + $0xa8] sm:$0xff]
    %v4990 = vld [vmem:[%s4011 + $0xe0] sm:$0xff]
    %v4991 = vld [vmem:[%s4011 + $0xe8] sm:$0xff]
    %v4992 = vld [vmem:[%s4020 + $0x8] sm:$0xf]
    %v4994 = vperm.slane %v4992, 0
    %v4995 = vperm.slane %v4992, 1
    %v4996 = vperm.slane %v4992, 2
    %v4997 = vperm.slane %v4992, 3
    %v5010 = vunpack.c.l.b16 %v4984
    %v5011 = vunpack.c.h.b16 %v4984
    %v5012 = vunpack.c.l.b16 %v4985
    %v5013 = vunpack.c.h.b16 %v4985
    %v5014 = vunpack.c.l.b16 %v4986
    %v5015 = vunpack.c.h.b16 %v4986
    %v5016 = vunpack.c.l.b16 %v4987
    %v5017 = vunpack.c.h.b16 %v4987
    %v5018 = vunpack.c.l.b16 %v4988
    %v5019 = vunpack.c.h.b16 %v4988
    %v5020 = vunpack.c.l.b16 %v4989
    %v5021 = vunpack.c.h.b16 %v4989
    %v5022 = vunpack.c.l.b16 %v4990
    %v5023 = vunpack.c.h.b16 %v4990
    %v5024 = vunpack.c.l.b16 %v4991
    %v5025 = vunpack.c.h.b16 %v4991
    %v5026 = vpack.c.b16 %v5014, %v5010
    %v5027 = vpack.c.b16 %v5015, %v5011
    %v5028 = vpack.c.b16 %v5016, %v5012
    %v5029 = vpack.c.b16 %v5017, %v5013
    %v5030 = vpack.c.b16 %v5022, %v5018
    %v5031 = vpack.c.b16 %v5023, %v5019
    %v5032 = vpack.c.b16 %v5024, %v5020
    %v5033 = vpack.c.b16 %v5025, %v5021
    %5042 = vmatpush.bf16.msra.mxu0 0
    %5043 = vmatpush.bf16.msra.mxu0 0
    %5044 = vmatpush.bf16.msra.mxu0 0
    %5045 = vmatpush.bf16.msra.mxu0 0
    %5046 = vmatpush.bf16.msra.mxu0 0
    %5047 = vmatpush.bf16.msra.mxu0 0
    %5048 = vmatpush.bf16.msra.mxu0 %v5030
    %5049 = vmatpush.bf16.msra.mxu0 %v5026
    %5050 = vmatmul.bf16.gmra.mxu0 %v4072
    %v5051 = vpop.f32.mrf.mxu0
    %v5052 = vadd.f32 %v4994, %v5051
    %v5053 = vpop.f32.mrf.mxu0
    %v5054 = vadd.f32 %v4994, %v5053
    %5055 = vmatmul.bf16.gmra.mxu0 %v4075
    %v5056 = vpop.f32.mrf.mxu0
    %v5057 = vadd.f32 %v4994, %v5056
    %v5058 = vpop.f32.mrf.mxu0
    %v5059 = vadd.f32 %v4994, %v5058
    %5060 = vdwg.mxu0
    %5061 = vmatpush.bf16.msra.mxu0 0
    %5062 = vmatpush.bf16.msra.mxu0 0
    %5063 = vmatpush.bf16.msra.mxu0 0
    %5064 = vmatpush.bf16.msra.mxu0 0
    %5065 = vmatpush.bf16.msra.mxu0 0
    %5066 = vmatpush.bf16.msra.mxu0 0
    %5067 = vmatpush.bf16.msra.mxu0 %v5031
    %5068 = vmatpush.bf16.msra.mxu0 %v5027
    %5069 = vmatmul.bf16.gmra.mxu0 %v4072
    %v5070 = vpop.f32.mrf.mxu0
    %v5071 = vadd.f32 %v4995, %v5070
    %v5072 = vpop.f32.mrf.mxu0
    %v5073 = vadd.f32 %v4995, %v5072
    %5074 = vmatmul.bf16.gmra.mxu0 %v4075
    %v5075 = vpop.f32.mrf.mxu0
    %v5076 = vadd.f32 %v4995, %v5075
    %v5077 = vpop.f32.mrf.mxu0
    %v5078 = vadd.f32 %v4995, %v5077
    %5079 = vdwg.mxu0
    %5080 = vmatpush.bf16.msra.mxu0 0
    %5081 = vmatpush.bf16.msra.mxu0 0
    %5082 = vmatpush.bf16.msra.mxu0 0
    %5083 = vmatpush.bf16.msra.mxu0 0
    %5084 = vmatpush.bf16.msra.mxu0 0
    %5085 = vmatpush.bf16.msra.mxu0 0
    %5086 = vmatpush.bf16.msra.mxu0 %v5032
    %5087 = vmatpush.bf16.msra.mxu0 %v5028
    %5088 = vmatmul.bf16.gmra.mxu0 %v4072
    %v5089 = vpop.f32.mrf.mxu0
    %v5090 = vadd.f32 %v4996, %v5089
    %v5091 = vpop.f32.mrf.mxu0
    %v5092 = vadd.f32 %v4996, %v5091
    %5093 = vmatmul.bf16.gmra.mxu0 %v4075
    %v5094 = vpop.f32.mrf.mxu0
    %v5095 = vadd.f32 %v4996, %v5094
    %v5096 = vpop.f32.mrf.mxu0
    %v5097 = vadd.f32 %v4996, %v5096
    %5098 = vdwg.mxu0
    %5099 = vmatpush.bf16.msra.mxu0 0
    %5100 = vmatpush.bf16.msra.mxu0 0
    %5101 = vmatpush.bf16.msra.mxu0 0
    %5102 = vmatpush.bf16.msra.mxu0 0
    %5103 = vmatpush.bf16.msra.mxu0 0
    %5104 = vmatpush.bf16.msra.mxu0 0
    %5105 = vmatpush.bf16.msra.mxu0 %v5033
    %5106 = vmatpush.bf16.msra.mxu0 %v5029
    %5107 = vmatmul.bf16.gmra.mxu0 %v4072
    %v5108 = vpop.f32.mrf.mxu0
    %v5109 = vadd.f32 %v4997, %v5108
    %v5110 = vpop.f32.mrf.mxu0
    %v5111 = vadd.f32 %v4997, %v5110
    %5112 = vmatmul.bf16.gmra.mxu0 %v4075
    %v5113 = vpop.f32.mrf.mxu0
    %v5114 = vadd.f32 %v4997, %v5113
    %v5115 = vpop.f32.mrf.mxu0
    %v5116 = vadd.f32 %v4997, %v5115
    %5117 = vdwg.mxu0
    %v5118 = vmax.f32 %v5052, 0.0
    %v5119 = vmax.f32 %v5071, 0.0
    %v5120 = vmax.f32 %v5090, 0.0
    %v5121 = vmax.f32 %v5109, 0.0
    %v5122 = vmax.f32 %v5054, 0.0
    %v5123 = vmax.f32 %v5073, 0.0
    %v5124 = vmax.f32 %v5092, 0.0
    %v5125 = vmax.f32 %v5111, 0.0
    %v5126 = vmax.f32 %v5057, 0.0
    %v5127 = vmax.f32 %v5076, 0.0
    %v5128 = vmax.f32 %v5095, 0.0
    %v5129 = vmax.f32 %v5114, 0.0
    %v5130 = vmax.f32 %v5059, 0.0
    %v5131 = vmax.f32 %v5078, 0.0
    %v5132 = vmax.f32 %v5097, 0.0
    %v5133 = vmax.f32 %v5116, 0.0
    %v5134 = vpack.c.bf16 %v5122, %v5118
    %v5135 = vpack.c.bf16 %v5123, %v5119
    %v5136 = vpack.c.bf16 %v5124, %v5120
    %v5137 = vpack.c.bf16 %v5125, %v5121
    %v5138 = vpack.c.bf16 %v5130, %v5126
    %v5139 = vpack.c.bf16 %v5131, %v5127
    %v5140 = vpack.c.bf16 %v5132, %v5128
    %v5141 = vpack.c.bf16 %v5133, %v5129
    %v5142 = vld [vmem:[%s4177 + $0x200] sm:$0xf]
    %v5143 = vld [vmem:[%s4177 + $0x204] sm:$0xf]
    %v5144 = vld [vmem:[%s4177 + $0x208] sm:$0xf]
    %v5145 = vld [vmem:[%s4177 + $0x20c] sm:$0xf]
    %v5146 = vld [vmem:[%s4177 + $0x210] sm:$0xf]
    %v5147 = vld [vmem:[%s4177 + $0x214] sm:$0xf]
    %v5148 = vld [vmem:[%s4177 + $0x218] sm:$0xf]
    %v5149 = vld [vmem:[%s4177 + $0x21c] sm:$0xf]
    %v5150 = vld [vmem:[%s4177 + $0x220] sm:$0xf]
    %v5151 = vld [vmem:[%s4177 + $0x224] sm:$0xf]
    %v5152 = vld [vmem:[%s4177 + $0x228] sm:$0xf]
    %v5153 = vld [vmem:[%s4177 + $0x22c] sm:$0xf]
    %v5154 = vld [vmem:[%s4177 + $0x230] sm:$0xf]
    %v5155 = vld [vmem:[%s4177 + $0x234] sm:$0xf]
    %v5156 = vld [vmem:[%s4177 + $0x238] sm:$0xf]
    %v5157 = vld [vmem:[%s4177 + $0x23c] sm:$0xf]
    %v5158 = vld [vmem:[%s4177 + $0x240] sm:$0xf]
    %v5159 = vld [vmem:[%s4177 + $0x244] sm:$0xf]
    %v5160 = vld [vmem:[%s4177 + $0x248] sm:$0xf]
    %v5161 = vld [vmem:[%s4177 + $0x24c] sm:$0xf]
    %v5162 = vld [vmem:[%s4177 + $0x250] sm:$0xf]
    %v5163 = vld [vmem:[%s4177 + $0x254] sm:$0xf]
    %v5164 = vld [vmem:[%s4177 + $0x258] sm:$0xf]
    %v5165 = vld [vmem:[%s4177 + $0x25c] sm:$0xf]
    %v5166 = vld [vmem:[%s4177 + $0x260] sm:$0xf]
    %v5167 = vld [vmem:[%s4177 + $0x264] sm:$0xf]
    %v5168 = vld [vmem:[%s4177 + $0x268] sm:$0xf]
    %v5169 = vld [vmem:[%s4177 + $0x26c] sm:$0xf]
    %v5170 = vld [vmem:[%s4177 + $0x270] sm:$0xf]
    %v5171 = vld [vmem:[%s4177 + $0x274] sm:$0xf]
    %v5172 = vld [vmem:[%s4177 + $0x278] sm:$0xf]
    %v5173 = vld [vmem:[%s4177 + $0x27c] sm:$0xf]
    %v5174 = vld [vmem:[%s4177 + $0x280] sm:$0xf]
    %v5175 = vld [vmem:[%s4177 + $0x284] sm:$0xf]
    %v5176 = vld [vmem:[%s4177 + $0x288] sm:$0xf]
    %v5177 = vld [vmem:[%s4177 + $0x28c] sm:$0xf]
    %v5178 = vld [vmem:[%s4177 + $0x290] sm:$0xf]
    %v5179 = vld [vmem:[%s4177 + $0x294] sm:$0xf]
    %v5180 = vld [vmem:[%s4177 + $0x298] sm:$0xf]
    %v5181 = vld [vmem:[%s4177 + $0x29c] sm:$0xf]
    %v5182 = vld [vmem:[%s4177 + $0x2a0] sm:$0xf]
    %v5183 = vld [vmem:[%s4177 + $0x2a4] sm:$0xf]
    %v5184 = vld [vmem:[%s4177 + $0x2a8] sm:$0xf]
    %v5185 = vld [vmem:[%s4177 + $0x2ac] sm:$0xf]
    %v5186 = vld [vmem:[%s4177 + $0x2b0] sm:$0xf]
    %v5187 = vld [vmem:[%s4177 + $0x2b4] sm:$0xf]
    %v5188 = vld [vmem:[%s4177 + $0x2b8] sm:$0xf]
    %v5189 = vld [vmem:[%s4177 + $0x2bc] sm:$0xf]
    %v5190 = vld [vmem:[%s4177 + $0x2c0] sm:$0xf]
    %v5191 = vld [vmem:[%s4177 + $0x2c4] sm:$0xf]
    %v5192 = vld [vmem:[%s4177 + $0x2c8] sm:$0xf]
    %v5193 = vld [vmem:[%s4177 + $0x2cc] sm:$0xf]
    %v5194 = vld [vmem:[%s4177 + $0x2d0] sm:$0xf]
    %v5195 = vld [vmem:[%s4177 + $0x2d4] sm:$0xf]
    %v5196 = vld [vmem:[%s4177 + $0x2d8] sm:$0xf]
    %v5197 = vld [vmem:[%s4177 + $0x2dc] sm:$0xf]
    %v5198 = vld [vmem:[%s4177 + $0x2e0] sm:$0xf]
    %v5199 = vld [vmem:[%s4177 + $0x2e4] sm:$0xf]
    %v5200 = vld [vmem:[%s4177 + $0x2e8] sm:$0xf]
    %v5201 = vld [vmem:[%s4177 + $0x2ec] sm:$0xf]
    %v5202 = vld [vmem:[%s4177 + $0x2f0] sm:$0xf]
    %v5203 = vld [vmem:[%s4177 + $0x2f4] sm:$0xf]
    %v5204 = vld [vmem:[%s4177 + $0x2f8] sm:$0xf]
    %v5205 = vld [vmem:[%s4177 + $0x2fc] sm:$0xf]
    %v5270 = vunpack.c.l.b16 %v5142
    %v5271 = vunpack.c.l.b16 %v5143
    %v5272 = vunpack.c.l.b16 %v5144
    %v5273 = vunpack.c.l.b16 %v5145
    %v5274 = vunpack.c.l.b16 %v5146
    %v5275 = vunpack.c.l.b16 %v5147
    %v5276 = vunpack.c.l.b16 %v5148
    %v5277 = vunpack.c.l.b16 %v5149
    %v5278 = vunpack.c.l.b16 %v5150
    %v5279 = vunpack.c.l.b16 %v5151
    %v5280 = vunpack.c.l.b16 %v5152
    %v5281 = vunpack.c.l.b16 %v5153
    %v5282 = vunpack.c.l.b16 %v5154
    %v5283 = vunpack.c.l.b16 %v5155
    %v5284 = vunpack.c.l.b16 %v5156
    %v5285 = vunpack.c.l.b16 %v5157
    %v5286 = vunpack.c.l.b16 %v5158
    %v5287 = vunpack.c.l.b16 %v5159
    %v5288 = vunpack.c.l.b16 %v5160
    %v5289 = vunpack.c.l.b16 %v5161
    %v5290 = vunpack.c.l.b16 %v5162
    %v5291 = vunpack.c.l.b16 %v5163
    %v5292 = vunpack.c.l.b16 %v5164
    %v5293 = vunpack.c.l.b16 %v5165
    %v5294 = vunpack.c.l.b16 %v5166
    %v5295 = vunpack.c.l.b16 %v5167
    %v5296 = vunpack.c.l.b16 %v5168
    %v5297 = vunpack.c.l.b16 %v5169
    %v5298 = vunpack.c.l.b16 %v5170
    %v5299 = vunpack.c.l.b16 %v5171
    %v5300 = vunpack.c.l.b16 %v5172
    %v5301 = vunpack.c.l.b16 %v5173
    %v5302 = vunpack.c.l.b16 %v5174
    %v5303 = vunpack.c.l.b16 %v5175
    %v5304 = vunpack.c.l.b16 %v5176
    %v5305 = vunpack.c.l.b16 %v5177
    %v5306 = vunpack.c.l.b16 %v5178
    %v5307 = vunpack.c.l.b16 %v5179
    %v5308 = vunpack.c.l.b16 %v5180
    %v5309 = vunpack.c.l.b16 %v5181
    %v5310 = vunpack.c.l.b16 %v5182
    %v5311 = vunpack.c.l.b16 %v5183
    %v5312 = vunpack.c.l.b16 %v5184
    %v5313 = vunpack.c.l.b16 %v5185
    %v5314 = vunpack.c.l.b16 %v5186
    %v5315 = vunpack.c.l.b16 %v5187
    %v5316 = vunpack.c.l.b16 %v5188
    %v5317 = vunpack.c.l.b16 %v5189
    %v5318 = vunpack.c.l.b16 %v5190
    %v5319 = vunpack.c.l.b16 %v5191
    %v5320 = vunpack.c.l.b16 %v5192
    %v5321 = vunpack.c.l.b16 %v5193
    %v5322 = vunpack.c.l.b16 %v5194
    %v5323 = vunpack.c.l.b16 %v5195
    %v5324 = vunpack.c.l.b16 %v5196
    %v5325 = vunpack.c.l.b16 %v5197
    %v5326 = vunpack.c.l.b16 %v5198
    %v5327 = vunpack.c.l.b16 %v5199
    %v5328 = vunpack.c.l.b16 %v5200
    %v5329 = vunpack.c.l.b16 %v5201
    %v5330 = vunpack.c.l.b16 %v5202
    %v5331 = vunpack.c.l.b16 %v5203
    %v5332 = vunpack.c.l.b16 %v5204
    %v5333 = vunpack.c.l.b16 %v5205
    %v5334 = vpack.c.b16 %v5271, %v5270
    %v5335 = vpack.c.b16 %v5273, %v5272
    %v5336 = vpack.c.b16 %v5275, %v5274
    %v5337 = vpack.c.b16 %v5277, %v5276
    %v5338 = vpack.c.b16 %v5279, %v5278
    %v5339 = vpack.c.b16 %v5281, %v5280
    %v5340 = vpack.c.b16 %v5283, %v5282
    %v5341 = vpack.c.b16 %v5285, %v5284
    %v5342 = vpack.c.b16 %v5287, %v5286
    %v5343 = vpack.c.b16 %v5289, %v5288
    %v5344 = vpack.c.b16 %v5291, %v5290
    %v5345 = vpack.c.b16 %v5293, %v5292
    %v5346 = vpack.c.b16 %v5295, %v5294
    %v5347 = vpack.c.b16 %v5297, %v5296
    %v5348 = vpack.c.b16 %v5299, %v5298
    %v5349 = vpack.c.b16 %v5301, %v5300
    %v5350 = vpack.c.b16 %v5303, %v5302
    %v5351 = vpack.c.b16 %v5305, %v5304
    %v5352 = vpack.c.b16 %v5307, %v5306
    %v5353 = vpack.c.b16 %v5309, %v5308
    %v5354 = vpack.c.b16 %v5311, %v5310
    %v5355 = vpack.c.b16 %v5313, %v5312
    %v5356 = vpack.c.b16 %v5315, %v5314
    %v5357 = vpack.c.b16 %v5317, %v5316
    %v5358 = vpack.c.b16 %v5319, %v5318
    %v5359 = vpack.c.b16 %v5321, %v5320
    %v5360 = vpack.c.b16 %v5323, %v5322
    %v5361 = vpack.c.b16 %v5325, %v5324
    %v5362 = vpack.c.b16 %v5327, %v5326
    %v5363 = vpack.c.b16 %v5329, %v5328
    %v5364 = vpack.c.b16 %v5331, %v5330
    %v5365 = vpack.c.b16 %v5333, %v5332
    %5398 = vmatpush.bf16.msra.mxu0 %v5341
    %5399 = vmatpush.bf16.msra.mxu0 %v5340
    %5400 = vmatpush.bf16.msra.mxu0 %v5339
    %5401 = vmatpush.bf16.msra.mxu0 %v5338
    %5402 = vmatpush.bf16.msra.mxu0 %v5337
    %5403 = vmatpush.bf16.msra.mxu0 %v5336
    %5404 = vmatpush.bf16.msra.mxu0 %v5335
    %5405 = vmatpush.bf16.msra.mxu0 %v5334
    %5406 = vmatmul.bf16.gmra.mxu0 %v5134
    %v5407 = vpop.f32.mrf.mxu0
    %v5408 = vpop.f32.mrf.mxu0
    %v5409 = vadd.f32 0.0, %v5408
    %5410 = vmatmul.bf16.gmra.mxu0 %v5138
    %v5411 = vpop.f32.mrf.mxu0
    %v5412 = vpop.f32.mrf.mxu0
    %v5413 = vadd.f32 0.0, %v5412
    %5414 = vdwg.mxu0
    %5415 = vmatpush.bf16.msra.mxu0 %v5349
    %5416 = vmatpush.bf16.msra.mxu0 %v5348
    %5417 = vmatpush.bf16.msra.mxu0 %v5347
    %5418 = vmatpush.bf16.msra.mxu0 %v5346
    %5419 = vmatpush.bf16.msra.mxu0 %v5345
    %5420 = vmatpush.bf16.msra.mxu0 %v5344
    %5421 = vmatpush.bf16.msra.mxu0 %v5343
    %5422 = vmatpush.bf16.msra.mxu0 %v5342
    %5423 = vmatmul.bf16.gmra.mxu0 %v5135
    %v5424 = vpop.f32.mrf.mxu0
    %v5425 = vpop.f32.mrf.mxu0
    %v5426 = vadd.f32 %v5409, %v5425
    %5427 = vmatmul.bf16.gmra.mxu0 %v5139
    %v5428 = vpop.f32.mrf.mxu0
    %v5429 = vpop.f32.mrf.mxu0
    %v5430 = vadd.f32 %v5413, %v5429
    %5431 = vdwg.mxu0
    %5432 = vmatpush.bf16.msra.mxu0 %v5357
    %5433 = vmatpush.bf16.msra.mxu0 %v5356
    %5434 = vmatpush.bf16.msra.mxu0 %v5355
    %5435 = vmatpush.bf16.msra.mxu0 %v5354
    %5436 = vmatpush.bf16.msra.mxu0 %v5353
    %5437 = vmatpush.bf16.msra.mxu0 %v5352
    %5438 = vmatpush.bf16.msra.mxu0 %v5351
    %5439 = vmatpush.bf16.msra.mxu0 %v5350
    %5440 = vmatmul.bf16.gmra.mxu0 %v5136
    %v5441 = vpop.f32.mrf.mxu0
    %v5442 = vpop.f32.mrf.mxu0
    %v5443 = vadd.f32 %v5426, %v5442
    %5444 = vmatmul.bf16.gmra.mxu0 %v5140
    %v5445 = vpop.f32.mrf.mxu0
    %v5446 = vpop.f32.mrf.mxu0
    %v5447 = vadd.f32 %v5430, %v5446
    %5448 = vdwg.mxu0
    %5449 = vmatpush.bf16.msra.mxu0 %v5365
    %5450 = vmatpush.bf16.msra.mxu0 %v5364
    %5451 = vmatpush.bf16.msra.mxu0 %v5363
    %5452 = vmatpush.bf16.msra.mxu0 %v5362
    %5453 = vmatpush.bf16.msra.mxu0 %v5361
    %5454 = vmatpush.bf16.msra.mxu0 %v5360
    %5455 = vmatpush.bf16.msra.mxu0 %v5359
    %5456 = vmatpush.bf16.msra.mxu0 %v5358
    %5457 = vmatmul.bf16.gmra.mxu0 %v5137
    %v5458 = vpop.f32.mrf.mxu0
    %v5459 = vpop.f32.mrf.mxu0
    %v5460 = vadd.f32 %v5443, %v5459
    %5461 = vmatmul.bf16.gmra.mxu0 %v5141
    %v5462 = vpop.f32.mrf.mxu0
    %v5463 = vpop.f32.mrf.mxu0
    %v5464 = vadd.f32 %v5447, %v5463
    %5465 = vdwg.mxu0
    %v5466 = vadd.f32 %v4978, %v5460
    %v5467 = vadd.f32 %v4982, %v5464
    %v5468 = vld [vmem:[%s4011 + $0x30] sm:$0xff]
    %v5469 = vld [vmem:[%s4011 + $0x38] sm:$0xff]
    %v5470 = vld [vmem:[%s4011 + $0x70] sm:$0xff]
    %v5471 = vld [vmem:[%s4011 + $0x78] sm:$0xff]
    %v5472 = vld [vmem:[%s4011 + $0xb0] sm:$0xff]
    %v5473 = vld [vmem:[%s4011 + $0xb8] sm:$0xff]
    %v5474 = vld [vmem:[%s4011 + $0xf0] sm:$0xff]
    %v5475 = vld [vmem:[%s4011 + $0xf8] sm:$0xff]
    %v5476 = vld [vmem:[%s4020 + $0xc] sm:$0xf]
    %v5478 = vperm.slane %v5476, 0
    %v5479 = vperm.slane %v5476, 1
    %v5480 = vperm.slane %v5476, 2
    %v5481 = vperm.slane %v5476, 3
    %v5494 = vunpack.c.l.b16 %v5468
    %v5495 = vunpack.c.h.b16 %v5468
    %v5496 = vunpack.c.l.b16 %v5469
    %v5497 = vunpack.c.h.b16 %v5469
    %v5498 = vunpack.c.l.b16 %v5470
    %v5499 = vunpack.c.h.b16 %v5470
    %v5500 = vunpack.c.l.b16 %v5471
    %v5501 = vunpack.c.h.b16 %v5471
    %v5502 = vunpack.c.l.b16 %v5472
    %v5503 = vunpack.c.h.b16 %v5472
    %v5504 = vunpack.c.l.b16 %v5473
    %v5505 = vunpack.c.h.b16 %v5473
    %v5506 = vunpack.c.l.b16 %v5474
    %v5507 = vunpack.c.h.b16 %v5474
    %v5508 = vunpack.c.l.b16 %v5475
    %v5509 = vunpack.c.h.b16 %v5475
    %v5510 = vpack.c.b16 %v5498, %v5494
    %v5511 = vpack.c.b16 %v5499, %v5495
    %v5512 = vpack.c.b16 %v5500, %v5496
    %v5513 = vpack.c.b16 %v5501, %v5497
    %v5514 = vpack.c.b16 %v5506, %v5502
    %v5515 = vpack.c.b16 %v5507, %v5503
    %v5516 = vpack.c.b16 %v5508, %v5504
    %v5517 = vpack.c.b16 %v5509, %v5505
    %5526 = vmatpush.bf16.msra.mxu0 0
    %5527 = vmatpush.bf16.msra.mxu0 0
    %5528 = vmatpush.bf16.msra.mxu0 0
    %5529 = vmatpush.bf16.msra.mxu0 0
    %5530 = vmatpush.bf16.msra.mxu0 0
    %5531 = vmatpush.bf16.msra.mxu0 0
    %5532 = vmatpush.bf16.msra.mxu0 %v5514
    %5533 = vmatpush.bf16.msra.mxu0 %v5510
    %5534 = vmatmul.bf16.gmra.mxu0 %v4072
    %v5535 = vpop.f32.mrf.mxu0
    %v5536 = vadd.f32 %v5478, %v5535
    %v5537 = vpop.f32.mrf.mxu0
    %v5538 = vadd.f32 %v5478, %v5537
    %5539 = vmatmul.bf16.gmra.mxu0 %v4075
    %v5540 = vpop.f32.mrf.mxu0
    %v5541 = vadd.f32 %v5478, %v5540
    %v5542 = vpop.f32.mrf.mxu0
    %v5543 = vadd.f32 %v5478, %v5542
    %5544 = vdwg.mxu0
    %5545 = vmatpush.bf16.msra.mxu0 0
    %5546 = vmatpush.bf16.msra.mxu0 0
    %5547 = vmatpush.bf16.msra.mxu0 0
    %5548 = vmatpush.bf16.msra.mxu0 0
    %5549 = vmatpush.bf16.msra.mxu0 0
    %5550 = vmatpush.bf16.msra.mxu0 0
    %5551 = vmatpush.bf16.msra.mxu0 %v5515
    %5552 = vmatpush.bf16.msra.mxu0 %v5511
    %5553 = vmatmul.bf16.gmra.mxu0 %v4072
    %v5554 = vpop.f32.mrf.mxu0
    %v5555 = vadd.f32 %v5479, %v5554
    %v5556 = vpop.f32.mrf.mxu0
    %v5557 = vadd.f32 %v5479, %v5556
    %5558 = vmatmul.bf16.gmra.mxu0 %v4075
    %v5559 = vpop.f32.mrf.mxu0
    %v5560 = vadd.f32 %v5479, %v5559
    %v5561 = vpop.f32.mrf.mxu0
    %v5562 = vadd.f32 %v5479, %v5561
    %5563 = vdwg.mxu0
    %5564 = vmatpush.bf16.msra.mxu0 0
    %5565 = vmatpush.bf16.msra.mxu0 0
    %5566 = vmatpush.bf16.msra.mxu0 0
    %5567 = vmatpush.bf16.msra.mxu0 0
    %5568 = vmatpush.bf16.msra.mxu0 0
    %5569 = vmatpush.bf16.msra.mxu0 0
    %5570 = vmatpush.bf16.msra.mxu0 %v5516
    %5571 = vmatpush.bf16.msra.mxu0 %v5512
    %5572 = vmatmul.bf16.gmra.mxu0 %v4072
    %v5573 = vpop.f32.mrf.mxu0
    %v5574 = vadd.f32 %v5480, %v5573
    %v5575 = vpop.f32.mrf.mxu0
    %v5576 = vadd.f32 %v5480, %v5575
    %5577 = vmatmul.bf16.gmra.mxu0 %v4075
    %v5578 = vpop.f32.mrf.mxu0
    %v5579 = vadd.f32 %v5480, %v5578
    %v5580 = vpop.f32.mrf.mxu0
    %v5581 = vadd.f32 %v5480, %v5580
    %5582 = vdwg.mxu0
    %5583 = vmatpush.bf16.msra.mxu0 0
    %5584 = vmatpush.bf16.msra.mxu0 0
    %5585 = vmatpush.bf16.msra.mxu0 0
    %5586 = vmatpush.bf16.msra.mxu0 0
    %5587 = vmatpush.bf16.msra.mxu0 0
    %5588 = vmatpush.bf16.msra.mxu0 0
    %5589 = vmatpush.bf16.msra.mxu0 %v5517
    %5590 = vmatpush.bf16.msra.mxu0 %v5513
    %5591 = vmatmul.bf16.gmra.mxu0 %v4072
    %v5592 = vpop.f32.mrf.mxu0
    %v5593 = vadd.f32 %v5481, %v5592
    %v5594 = vpop.f32.mrf.mxu0
    %v5595 = vadd.f32 %v5481, %v5594
    %5596 = vmatmul.bf16.gmra.mxu0 %v4075
    %v5597 = vpop.f32.mrf.mxu0
    %v5598 = vadd.f32 %v5481, %v5597
    %v5599 = vpop.f32.mrf.mxu0
    %v5600 = vadd.f32 %v5481, %v5599
    %5601 = vdwg.mxu0
    %v5602 = vmax.f32 %v5536, 0.0
    %v5603 = vmax.f32 %v5555, 0.0
    %v5604 = vmax.f32 %v5574, 0.0
    %v5605 = vmax.f32 %v5593, 0.0
    %v5606 = vmax.f32 %v5538, 0.0
    %v5607 = vmax.f32 %v5557, 0.0
    %v5608 = vmax.f32 %v5576, 0.0
    %v5609 = vmax.f32 %v5595, 0.0
    %v5610 = vmax.f32 %v5541, 0.0
    %v5611 = vmax.f32 %v5560, 0.0
    %v5612 = vmax.f32 %v5579, 0.0
    %v5613 = vmax.f32 %v5598, 0.0
    %v5614 = vmax.f32 %v5543, 0.0
    %v5615 = vmax.f32 %v5562, 0.0
    %v5616 = vmax.f32 %v5581, 0.0
    %v5617 = vmax.f32 %v5600, 0.0
    %v5618 = vpack.c.bf16 %v5606, %v5602
    %v5619 = vpack.c.bf16 %v5607, %v5603
    %v5620 = vpack.c.bf16 %v5608, %v5604
    %v5621 = vpack.c.bf16 %v5609, %v5605
    %v5622 = vpack.c.bf16 %v5614, %v5610
    %v5623 = vpack.c.bf16 %v5615, %v5611
    %v5624 = vpack.c.bf16 %v5616, %v5612
    %v5625 = vpack.c.bf16 %v5617, %v5613
    %v5626 = vld [vmem:[%s4177 + $0x300] sm:$0xf]
    %v5627 = vld [vmem:[%s4177 + $0x304] sm:$0xf]
    %v5628 = vld [vmem:[%s4177 + $0x308] sm:$0xf]
    %v5629 = vld [vmem:[%s4177 + $0x30c] sm:$0xf]
    %v5630 = vld [vmem:[%s4177 + $0x310] sm:$0xf]
    %v5631 = vld [vmem:[%s4177 + $0x314] sm:$0xf]
    %v5632 = vld [vmem:[%s4177 + $0x318] sm:$0xf]
    %v5633 = vld [vmem:[%s4177 + $0x31c] sm:$0xf]
    %v5634 = vld [vmem:[%s4177 + $0x320] sm:$0xf]
    %v5635 = vld [vmem:[%s4177 + $0x324] sm:$0xf]
    %v5636 = vld [vmem:[%s4177 + $0x328] sm:$0xf]
    %v5637 = vld [vmem:[%s4177 + $0x32c] sm:$0xf]
    %v5638 = vld [vmem:[%s4177 + $0x330] sm:$0xf]
    %v5639 = vld [vmem:[%s4177 + $0x334] sm:$0xf]
    %v5640 = vld [vmem:[%s4177 + $0x338] sm:$0xf]
    %v5641 = vld [vmem:[%s4177 + $0x33c] sm:$0xf]
    %v5642 = vld [vmem:[%s4177 + $0x340] sm:$0xf]
    %v5643 = vld [vmem:[%s4177 + $0x344] sm:$0xf]
    %v5644 = vld [vmem:[%s4177 + $0x348] sm:$0xf]
    %v5645 = vld [vmem:[%s4177 + $0x34c] sm:$0xf]
    %v5646 = vld [vmem:[%s4177 + $0x350] sm:$0xf]
    %v5647 = vld [vmem:[%s4177 + $0x354] sm:$0xf]
    %v5648 = vld [vmem:[%s4177 + $0x358] sm:$0xf]
    %v5649 = vld [vmem:[%s4177 + $0x35c] sm:$0xf]
    %v5650 = vld [vmem:[%s4177 + $0x360] sm:$0xf]
    %v5651 = vld [vmem:[%s4177 + $0x364] sm:$0xf]
    %v5652 = vld [vmem:[%s4177 + $0x368] sm:$0xf]
    %v5653 = vld [vmem:[%s4177 + $0x36c] sm:$0xf]
    %v5654 = vld [vmem:[%s4177 + $0x370] sm:$0xf]
    %v5655 = vld [vmem:[%s4177 + $0x374] sm:$0xf]
    %v5656 = vld [vmem:[%s4177 + $0x378] sm:$0xf]
    %v5657 = vld [vmem:[%s4177 + $0x37c] sm:$0xf]
    %v5658 = vld [vmem:[%s4177 + $0x380] sm:$0xf]
    %v5659 = vld [vmem:[%s4177 + $0x384] sm:$0xf]
    %v5660 = vld [vmem:[%s4177 + $0x388] sm:$0xf]
    %v5661 = vld [vmem:[%s4177 + $0x38c] sm:$0xf]
    %v5662 = vld [vmem:[%s4177 + $0x390] sm:$0xf]
    %v5663 = vld [vmem:[%s4177 + $0x394] sm:$0xf]
    %v5664 = vld [vmem:[%s4177 + $0x398] sm:$0xf]
    %v5665 = vld [vmem:[%s4177 + $0x39c] sm:$0xf]
    %v5666 = vld [vmem:[%s4177 + $0x3a0] sm:$0xf]
    %v5667 = vld [vmem:[%s4177 + $0x3a4] sm:$0xf]
    %v5668 = vld [vmem:[%s4177 + $0x3a8] sm:$0xf]
    %v5669 = vld [vmem:[%s4177 + $0x3ac] sm:$0xf]
    %v5670 = vld [vmem:[%s4177 + $0x3b0] sm:$0xf]
    %v5671 = vld [vmem:[%s4177 + $0x3b4] sm:$0xf]
    %v5672 = vld [vmem:[%s4177 + $0x3b8] sm:$0xf]
    %v5673 = vld [vmem:[%s4177 + $0x3bc] sm:$0xf]
    %v5674 = vld [vmem:[%s4177 + $0x3c0] sm:$0xf]
    %v5675 = vld [vmem:[%s4177 + $0x3c4] sm:$0xf]
    %v5676 = vld [vmem:[%s4177 + $0x3c8] sm:$0xf]
    %v5677 = vld [vmem:[%s4177 + $0x3cc] sm:$0xf]
    %v5678 = vld [vmem:[%s4177 + $0x3d0] sm:$0xf]
    %v5679 = vld [vmem:[%s4177 + $0x3d4] sm:$0xf]
    %v5680 = vld [vmem:[%s4177 + $0x3d8] sm:$0xf]
    %v5681 = vld [vmem:[%s4177 + $0x3dc] sm:$0xf]
    %v5682 = vld [vmem:[%s4177 + $0x3e0] sm:$0xf]
    %v5683 = vld [vmem:[%s4177 + $0x3e4] sm:$0xf]
    %v5684 = vld [vmem:[%s4177 + $0x3e8] sm:$0xf]
    %v5685 = vld [vmem:[%s4177 + $0x3ec] sm:$0xf]
    %v5686 = vld [vmem:[%s4177 + $0x3f0] sm:$0xf]
    %v5687 = vld [vmem:[%s4177 + $0x3f4] sm:$0xf]
    %v5688 = vld [vmem:[%s4177 + $0x3f8] sm:$0xf]
    %v5689 = vld [vmem:[%s4177 + $0x3fc] sm:$0xf]
    %v5754 = vunpack.c.l.b16 %v5626
    %v5755 = vunpack.c.l.b16 %v5627
    %v5756 = vunpack.c.l.b16 %v5628
    %v5757 = vunpack.c.l.b16 %v5629
    %v5758 = vunpack.c.l.b16 %v5630
    %v5759 = vunpack.c.l.b16 %v5631
    %v5760 = vunpack.c.l.b16 %v5632
    %v5761 = vunpack.c.l.b16 %v5633
    %v5762 = vunpack.c.l.b16 %v5634
    %v5763 = vunpack.c.l.b16 %v5635
    %v5764 = vunpack.c.l.b16 %v5636
    %v5765 = vunpack.c.l.b16 %v5637
    %v5766 = vunpack.c.l.b16 %v5638
    %v5767 = vunpack.c.l.b16 %v5639
    %v5768 = vunpack.c.l.b16 %v5640
    %v5769 = vunpack.c.l.b16 %v5641
    %v5770 = vunpack.c.l.b16 %v5642
    %v5771 = vunpack.c.l.b16 %v5643
    %v5772 = vunpack.c.l.b16 %v5644
    %v5773 = vunpack.c.l.b16 %v5645
    %v5774 = vunpack.c.l.b16 %v5646
    %v5775 = vunpack.c.l.b16 %v5647
    %v5776 = vunpack.c.l.b16 %v5648
    %v5777 = vunpack.c.l.b16 %v5649
    %v5778 = vunpack.c.l.b16 %v5650
    %v5779 = vunpack.c.l.b16 %v5651
    %v5780 = vunpack.c.l.b16 %v5652
    %v5781 = vunpack.c.l.b16 %v5653
    %v5782 = vunpack.c.l.b16 %v5654
    %v5783 = vunpack.c.l.b16 %v5655
    %v5784 = vunpack.c.l.b16 %v5656
    %v5785 = vunpack.c.l.b16 %v5657
    %v5786 = vunpack.c.l.b16 %v5658
    %v5787 = vunpack.c.l.b16 %v5659
    %v5788 = vunpack.c.l.b16 %v5660
    %v5789 = vunpack.c.l.b16 %v5661
    %v5790 = vunpack.c.l.b16 %v5662
    %v5791 = vunpack.c.l.b16 %v5663
    %v5792 = vunpack.c.l.b16 %v5664
    %v5793 = vunpack.c.l.b16 %v5665
    %v5794 = vunpack.c.l.b16 %v5666
    %v5795 = vunpack.c.l.b16 %v5667
    %v5796 = vunpack.c.l.b16 %v5668
    %v5797 = vunpack.c.l.b16 %v5669
    %v5798 = vunpack.c.l.b16 %v5670
    %v5799 = vunpack.c.l.b16 %v5671
    %v5800 = vunpack.c.l.b16 %v5672
    %v5801 = vunpack.c.l.b16 %v5673
    %v5802 = vunpack.c.l.b16 %v5674
    %v5803 = vunpack.c.l.b16 %v5675
    %v5804 = vunpack.c.l.b16 %v5676
    %v5805 = vunpack.c.l.b16 %v5677
    %v5806 = vunpack.c.l.b16 %v5678
    %v5807 = vunpack.c.l.b16 %v5679
    %v5808 = vunpack.c.l.b16 %v5680
    %v5809 = vunpack.c.l.b16 %v5681
    %v5810 = vunpack.c.l.b16 %v5682
    %v5811 = vunpack.c.l.b16 %v5683
    %v5812 = vunpack.c.l.b16 %v5684
    %v5813 = vunpack.c.l.b16 %v5685
    %v5814 = vunpack.c.l.b16 %v5686
    %v5815 = vunpack.c.l.b16 %v5687
    %v5816 = vunpack.c.l.b16 %v5688
    %v5817 = vunpack.c.l.b16 %v5689
    %v5818 = vpack.c.b16 %v5755, %v5754
    %v5819 = vpack.c.b16 %v5757, %v5756
    %v5820 = vpack.c.b16 %v5759, %v5758
    %v5821 = vpack.c.b16 %v5761, %v5760
    %v5822 = vpack.c.b16 %v5763, %v5762
    %v5823 = vpack.c.b16 %v5765, %v5764
    %v5824 = vpack.c.b16 %v5767, %v5766
    %v5825 = vpack.c.b16 %v5769, %v5768
    %v5826 = vpack.c.b16 %v5771, %v5770
    %v5827 = vpack.c.b16 %v5773, %v5772
    %v5828 = vpack.c.b16 %v5775, %v5774
    %v5829 = vpack.c.b16 %v5777, %v5776
    %v5830 = vpack.c.b16 %v5779, %v5778
    %v5831 = vpack.c.b16 %v5781, %v5780
    %v5832 = vpack.c.b16 %v5783, %v5782
    %v5833 = vpack.c.b16 %v5785, %v5784
    %v5834 = vpack.c.b16 %v5787, %v5786
    %v5835 = vpack.c.b16 %v5789, %v5788
    %v5836 = vpack.c.b16 %v5791, %v5790
    %v5837 = vpack.c.b16 %v5793, %v5792
    %v5838 = vpack.c.b16 %v5795, %v5794
    %v5839 = vpack.c.b16 %v5797, %v5796
    %v5840 = vpack.c.b16 %v5799, %v5798
    %v5841 = vpack.c.b16 %v5801, %v5800
    %v5842 = vpack.c.b16 %v5803, %v5802
    %v5843 = vpack.c.b16 %v5805, %v5804
    %v5844 = vpack.c.b16 %v5807, %v5806
    %v5845 = vpack.c.b16 %v5809, %v5808
    %v5846 = vpack.c.b16 %v5811, %v5810
    %v5847 = vpack.c.b16 %v5813, %v5812
    %v5848 = vpack.c.b16 %v5815, %v5814
    %v5849 = vpack.c.b16 %v5817, %v5816
    %5882 = vmatpush.bf16.msra.mxu0 %v5825
    %5883 = vmatpush.bf16.msra.mxu0 %v5824
    %5884 = vmatpush.bf16.msra.mxu0 %v5823
    %5885 = vmatpush.bf16.msra.mxu0 %v5822
    %5886 = vmatpush.bf16.msra.mxu0 %v5821
    %5887 = vmatpush.bf16.msra.mxu0 %v5820
    %5888 = vmatpush.bf16.msra.mxu0 %v5819
    %5889 = vmatpush.bf16.msra.mxu0 %v5818
    %5890 = vmatmul.bf16.gmra.mxu0 %v5618
    %v5891 = vpop.f32.mrf.mxu0
    %v5892 = vpop.f32.mrf.mxu0
    %v5893 = vadd.f32 0.0, %v5892
    %5894 = vmatmul.bf16.gmra.mxu0 %v5622
    %v5895 = vpop.f32.mrf.mxu0
    %v5896 = vpop.f32.mrf.mxu0
    %v5897 = vadd.f32 0.0, %v5896
    %5898 = vdwg.mxu0
    %5899 = vmatpush.bf16.msra.mxu0 %v5833
    %5900 = vmatpush.bf16.msra.mxu0 %v5832
    %5901 = vmatpush.bf16.msra.mxu0 %v5831
    %5902 = vmatpush.bf16.msra.mxu0 %v5830
    %5903 = vmatpush.bf16.msra.mxu0 %v5829
    %5904 = vmatpush.bf16.msra.mxu0 %v5828
    %5905 = vmatpush.bf16.msra.mxu0 %v5827
    %5906 = vmatpush.bf16.msra.mxu0 %v5826
    %5907 = vmatmul.bf16.gmra.mxu0 %v5619
    %v5908 = vpop.f32.mrf.mxu0
    %v5909 = vpop.f32.mrf.mxu0
    %v5910 = vadd.f32 %v5893, %v5909
    %5911 = vmatmul.bf16.gmra.mxu0 %v5623
    %v5912 = vpop.f32.mrf.mxu0
    %v5913 = vpop.f32.mrf.mxu0
    %v5914 = vadd.f32 %v5897, %v5913
    %5915 = vdwg.mxu0
    %5916 = vmatpush.bf16.msra.mxu0 %v5841
    %5917 = vmatpush.bf16.msra.mxu0 %v5840
    %5918 = vmatpush.bf16.msra.mxu0 %v5839
    %5919 = vmatpush.bf16.msra.mxu0 %v5838
    %5920 = vmatpush.bf16.msra.mxu0 %v5837
    %5921 = vmatpush.bf16.msra.mxu0 %v5836
    %5922 = vmatpush.bf16.msra.mxu0 %v5835
    %5923 = vmatpush.bf16.msra.mxu0 %v5834
    %5924 = vmatmul.bf16.gmra.mxu0 %v5620
    %v5925 = vpop.f32.mrf.mxu0
    %v5926 = vpop.f32.mrf.mxu0
    %v5927 = vadd.f32 %v5910, %v5926
    %5928 = vmatmul.bf16.gmra.mxu0 %v5624
    %v5929 = vpop.f32.mrf.mxu0
    %v5930 = vpop.f32.mrf.mxu0
    %v5931 = vadd.f32 %v5914, %v5930
    %5932 = vdwg.mxu0
    %5933 = vmatpush.bf16.msra.mxu0 %v5849
    %5934 = vmatpush.bf16.msra.mxu0 %v5848
    %5935 = vmatpush.bf16.msra.mxu0 %v5847
    %5936 = vmatpush.bf16.msra.mxu0 %v5846
    %5937 = vmatpush.bf16.msra.mxu0 %v5845
    %5938 = vmatpush.bf16.msra.mxu0 %v5844
    %5939 = vmatpush.bf16.msra.mxu0 %v5843
    %5940 = vmatpush.bf16.msra.mxu0 %v5842
    %5941 = vmatmul.bf16.gmra.mxu0 %v5621
    %v5942 = vpop.f32.mrf.mxu0
    %v5943 = vpop.f32.mrf.mxu0
    %v5944 = vadd.f32 %v5927, %v5943
    %5945 = vmatmul.bf16.gmra.mxu0 %v5625
    %v5946 = vpop.f32.mrf.mxu0
    %v5947 = vpop.f32.mrf.mxu0
    %v5948 = vadd.f32 %v5931, %v5947
    %5949 = vdwg.mxu0
    %v5950 = vadd.f32 %v5466, %v5944
    %v5951 = vadd.f32 %v5467, %v5948
    %s5952 = scalar_lea.vmem %s16, 1
    %v5953 = vld [vmem:[%s5952] sm:$0x1]
    %v5955 = vperm.slane %v5953, 0
    %v5957 = vadd.f32 %v5950, %v5955
    %v5958 = vadd.f32 %v5951, %v5955
    %v5959 = vadd.f32 %v4006, %v5957
    %v5960 = vadd.f32 %v4008, %v5958
    %s5961 = scalar_lea.vmem %s11, 1
    %v5962 = vld [vmem:[%s5961] sm:$0x1]
    %s5963 = scalar_lea.vmem %s12, 1
    %v5964 = vld [vmem:[%s5963] sm:$0x1]
    %v5965 = vsel %vm102, %v5959, 0.0
    %5966 = vadd.xlane.f32.xlu0 %v5965
    %v5967 = vpop.xlane.xlu0 %5966
    %v5968 = vsel %vm102, %v5960, 0.0
    %5969 = vadd.xlane.f32.xlu0 %v5968
    %v5970 = vpop.xlane.xlu0 %5969
    %v5971 = vmul.f32 %v5967, %v932
    %v5972 = vmul.f32 %v5970, %v932
    %v5973 = vsub.f32 %v5959, %v5971
    %v5974 = vsub.f32 %v5960, %v5972
    %v5975 = vmul.f32 %v5973, %v5973
    %v5976 = vmul.f32 %v5974, %v5974
    %v5977 = vsel %vm102, %v5975, 0.0
    %5978 = vadd.xlane.f32.xlu0 %v5977
    %v5979 = vpop.xlane.xlu0 %5978
    %v5980 = vsel %vm102, %v5976, 0.0
    %5981 = vadd.xlane.f32.xlu0 %v5980
    %v5982 = vpop.xlane.xlu0 %5981
    %v5983 = vmul.f32 %v5979, %v932
    %v5984 = vmul.f32 %v5982, %v932
    %v5985 = vadd.f32 %v5983, 1e-05
    %v5986 = vadd.f32 %v5984, 1e-05
    %v5987 = vrsqrt.pop %v5985
    %v5988 = vmul.f32 %v5987, %v5985
    %v5989 = vmul.f32 %v5988, %v5987
    %v5990 = vmul.f32 0.5, %v5989
    %v5991 = vsub.f32 1.5, %v5990
    %v5992 = vmul.f32 %v5987, %v5991
    %vm5993 = vweird.f32 %v5985
    %vm5994 = vweird.f32 %v5987
    %vm5995 = vmor %vm5993, %vm5994
    %v5996 = vsel %vm5995, %v5987, %v5992
    %v5997 = vrsqrt.pop %v5986
    %v5998 = vmul.f32 %v5997, %v5986
    %v5999 = vmul.f32 %v5998, %v5997
    %v6000 = vmul.f32 0.5, %v5999
    %v6001 = vsub.f32 1.5, %v6000
    %v6002 = vmul.f32 %v5997, %v6001
    %vm6003 = vweird.f32 %v5986
    %vm6004 = vweird.f32 %v5997
    %vm6005 = vmor %vm6003, %vm6004
    %v6006 = vsel %vm6005, %v5997, %v6002
    %v6007 = vmul.f32 %v5973, %v5996
    %v6008 = vmul.f32 %v5974, %v6006
    %v6010 = vperm.slane %v5962, 0
    %v6012 = vmul.f32 %v6007, %v6010
    %v6013 = vmul.f32 %v6008, %v6010
    %v6015 = vperm.slane %v5964, 0
    %v6017 = vadd.f32 %v6012, %v6015
    %v6018 = vadd.f32 %v6013, %v6015
    %vm6019 = vcmask 257027
    %6020 = vst.msk [vmem:[#allocation3 - $0x3] sm:$0x8] %vm6019, %v6017
    %6021 = vst.msk [vmem:[#allocation3 - $0x2] sm:$0x8] %vm6019, %v6018
    // Predicated region
    $region70: #{tpu_custom_call.1} parent=1 // pred_check
      _
    $region71: #{tpu_custom_call.1} parent=1 // pred_check_branch
      %6023 = sbr.rel (0) target = $region73
    $region72: #{tpu_custom_call.1} parent=1 // pred_region
      %6025 = vsyncadd [#allocation4], 0
      %s6027 = sshll.u32 [#allocation3], 4
      %s6028 = int_to_ptr.vmem [resolvable:$true] %s6027
      %s6029 = sshll.u32 %s17, 4
      %s6030 = int_to_ptr.hbm [resolvable:$true] %s6029
      %6032 = dma.vmem_to_hbm [thread:$0]  %s6028, 32, %s6030, [#allocation4]
    $region73: #{tpu_custom_call.1} parent=1 // pred_fallthru
      _
    // Predicated region
    $region74: #{tpu_custom_call.1} parent=1 // pred_check
      _
    $region75: #{tpu_custom_call.1} parent=1 // pred_check_branch
      %6034 = sbr.rel (0) target = $region77
    $region76: #{tpu_custom_call.1} parent=1 // pred_region
      %6036 = dma.done [#allocation4], 32
    $region77: #{tpu_custom_call.1} parent=1 // pred_fallthru
      _
    %6037 = vsyncpa [#allocation4], 1

</llo_original>
